<compile_context>
chip_gen: v7x
topology: tpu7x:2x2x1
jax: 0.10.0
libtpu: 0.0.40
codegen_flags: <defaults>
</compile_context>

<pallas_src>
import math

import jax
import jax.numpy as jnp
from jax.experimental import pallas as pl
from jax.experimental.pallas import tpu as pltpu

# ----------------------------- config (small) --------------------------------
B, S, H = 2, 8, 32          # batch, seq, hidden
N_HEADS, D_HEAD = 4, 8      # H = N_HEADS * D_HEAD
FFN = 64                    # intermediate size
N_LAYERS = 3                # so hidden_states[1], [2], [-1] are distinct
PROJ = 16                   # projection_head output dim
LN_EPS = 1e-12              # BERT LayerNorm eps

# Lane/sublane padding for dense loads/stores.
QKV_PAD = 128               # 3*H = 96 -> 128
FFN_PAD = 128               # FFN = 64 -> 128
PROJ_PAD = 128              # PROJ = 16 -> 128
B_PAD = 8                   # output rows 2 -> 8 (full sublane group)


# ------------------------------- fused kernel ---------------------------------
def fused_text_encoder_kernel(x_ref, mask_ref, pos_ref, type_ref,
                              emb_g_ref, emb_b_ref,
                              wqkv_ref, bqkv_ref, wo_ref, bo_ref,
                              ln1_g_ref, ln1_b_ref,
                              w1_ref, b1_ref, w2_ref, b2_ref,
                              ln2_g_ref, ln2_b_ref,
                              wp_ref, o_ref):

    def layernorm(y, g, b):
        mu = jnp.mean(y, axis=-1, keepdims=True)
        var = jnp.mean((y - mu) ** 2, axis=-1, keepdims=True)
        return (y - mu) * jax.lax.rsqrt(var + LN_EPS) * g + b

    def gelu(y):
        # TODO(synk): HF BERT uses exact erf-GELU; tanh approximation used here for an
        # EUP-friendly lowering (small numerical drift vs. the PyTorch reference).
        return 0.5 * y * (1.0 + jnp.tanh(0.7978845608028654 *
                                         (y + 0.044715 * y * y * y)))

    # Additive attention-mask bias, broadcast ONCE to the score shape (B, S, S) and
    # reused by every head / layer (hoisted -- JAX does not CSE broadcast_in_dim).
    neg = (1.0 - mask_ref[...]) * (-1e4)                      # (B, S), 1 = keep
    bias = jnp.broadcast_to(neg[:, None, :], (B, S, S))       # (B, S, S)

    # ---- embeddings: inputs_embeds + position + token-type (broadcast), LayerNorm ----
    pe = pos_ref[...] + type_ref[...]                          # (S, H)
    x3 = x_ref[...].reshape(B, S, H)
    h = layernorm(x3 + pe[None, :, :],
                  emb_g_ref[...], emb_b_ref[...]).reshape(B * S, H)

    pooled_sum = jnp.zeros((B, H), jnp.float32)

    for l in range(N_LAYERS):          # static unroll is fine at 3 layers (scaling guard above)
        # ---- fused QKV projection: one lane-padded (B*S, 128) matmul; scale pre-folded ----
        qkv = jnp.dot(h, wqkv_ref[l],
                      preferred_element_type=jnp.float32) + bqkv_ref[l]

        # ---- attention: per-head context folded straight into the output projection ----
        attn_acc = jnp.zeros((B * S, H), jnp.float32)
        for hd in range(N_HEADS):
            q3 = qkv[:, hd * D_HEAD:(hd + 1) * D_HEAD].reshape(B, S, D_HEAD)
            k3 = qkv[:, H + hd * D_HEAD:H + (hd + 1) * D_HEAD].reshape(B, S, D_HEAD)
            v3 = qkv[:, 2 * H + hd * D_HEAD:2 * H + (hd + 1) * D_HEAD].reshape(B, S, D_HEAD)
            s = jnp.einsum('bqd,bkd->bqk', q3, k3,
                           preferred_element_type=jnp.float32) + bias
            p = jnp.exp(s - jnp.max(s, axis=-1, keepdims=True))
            p = p * pl.reciprocal(jnp.sum(p, axis=-1, keepdims=True), approx=True)
            c = jnp.einsum('bqk,bkd->bqd', p, v3,
                           preferred_element_type=jnp.float32)
            # per-head slab of Wo (D_HEAD, H): accumulate, no lane-axis concatenate.
            attn_acc = attn_acc + jnp.dot(c.reshape(B * S, D_HEAD), wo_ref[l, hd],
                                          preferred_element_type=jnp.float32)

        # ---- attention output bias + residual + LayerNorm (post-LN BERT) ----
        h1 = layernorm(attn_acc + bo_ref[l] + h, ln1_g_ref[l], ln1_b_ref[l])

        # ---- feed-forward (lane-padded intermediate) + residual + LayerNorm ----
        ffn = gelu(jnp.dot(h1, w1_ref[l],
                           preferred_element_type=jnp.float32) + b1_ref[l])
        ffn = jnp.dot(ffn, w2_ref[l],
                      preferred_element_type=jnp.float32) + b2_ref[l]
        h = layernorm(ffn + h1, ln2_g_ref[l], ln2_b_ref[l])

        # ---- on-the-fly pooling of hidden_states[1], [2], [-1] (unmasked seq mean,
        #      matching the reference .mean(2)) ----
        n_uses = (l == 0) + (l == 1) + (l == N_LAYERS - 1)
        if n_uses:
            pooled_sum = pooled_sum + float(n_uses) * jnp.mean(h.reshape(B, S, H), axis=1)

    # mean over the 3 selected hidden states, then bias-free projection head.
    embed = pooled_sum * (1.0 / 3.0)                           # (B, H)
    # Row-pad to a full sublane group so the final store is an unmasked, lane-dense tile.
    embed_pad = jnp.concatenate(
        [embed, jnp.zeros((B_PAD - B, H), jnp.float32)], axis=0)   # (8, H)
    o_ref[...] = jnp.dot(embed_pad, wp_ref[...],
                         preferred_element_type=jnp.float32)       # (8, 128)


# ------------------------------ wrapper ----------------------------------------
def text_encoder_forward(params, prompts_embeddings, attention_mask):
    x = prompts_embeddings.astype(jnp.float32).reshape(B * S, H)
    mask = attention_mask.astype(jnp.float32).reshape(B, S)

    args = (x, mask,
            params['pos_emb'], params['type_emb'],
            params['emb_ln_g'], params['emb_ln_b'],
            params['wqkv'], params['bqkv'],
            params['wo'], params['bo'],
            params['ln1_g'], params['ln1_b'],
            params['w1'], params['b1'],
            params['w2'], params['b2'],
            params['ln2_g'], params['ln2_b'],
            params['wp'])

    # Advisory cost estimate for XLA scheduling around the custom call.
    flops_per_layer = (
        2 * (B * S) * H * QKV_PAD                       # fused QKV projection
        + N_HEADS * 2 * (2 * B * S * S * D_HEAD)        # scores + context
        + N_HEADS * 2 * (B * S) * D_HEAD * H            # per-head output projection
        + 2 * (B * S) * H * FFN_PAD                     # FFN up
        + 2 * (B * S) * FFN_PAD * H                     # FFN down
    )
    flops = N_LAYERS * flops_per_layer + 2 * B_PAD * H * PROJ_PAD
    transcendentals = N_LAYERS * (N_HEADS * B * S * S + (B * S) * FFN_PAD)
    bytes_accessed = 4 * (sum(int(v.size) for v in params.values())
                          + int(x.size) + int(mask.size) + B_PAD * PROJ_PAD)

    vmem = lambda: pl.BlockSpec(memory_space=pltpu.MemorySpace.VMEM)
    out = pl.pallas_call(
        fused_text_encoder_kernel,
        out_shape=jax.ShapeDtypeStruct((B_PAD, PROJ_PAD), jnp.float32),
        in_specs=[vmem() for _ in range(len(args))],
        out_specs=vmem(),
        cost_estimate=pl.CostEstimate(flops=flops,
                                      transcendentals=transcendentals,
                                      bytes_accessed=bytes_accessed),
    )(*args)
    return out[:B, :PROJ]


# ------------------------------ parameters --------------------------------------
def init_params(key):
    def nrm(k, shape, scale=0.02):
        return scale * jax.random.normal(k, shape, dtype=jnp.float32)

    def pad_last(a, n):
        return jnp.pad(a, [(0, 0)] * (a.ndim - 1) + [(0, n - a.shape[-1])])

    keys = jax.random.split(key, 3 + 6 * N_LAYERS)
    it = iter(keys)
    params = {
        'pos_emb': nrm(next(it), (S, H)),
        'type_emb': nrm(next(it), (1, H)),
        'emb_ln_g': jnp.ones((1, H), jnp.float32),
        'emb_ln_b': jnp.zeros((1, H), jnp.float32),
        # projection_head: nn.Linear(H, PROJ, bias=False), lane-padded to 128.
        'wp': pad_last(nrm(next(it), (H, PROJ)), PROJ_PAD),
    }

    att_scale = 1.0 / math.sqrt(D_HEAD)
    wqkv, bqkv, wo, bo = [], [], [], []
    ln1_g, ln1_b, w1, b1, w2, b2, ln2_g, ln2_b = ([] for _ in range(8))
    for _ in range(N_LAYERS):
        wq = nrm(next(it), (H, H))
        wk = nrm(next(it), (H, H))
        wv = nrm(next(it), (H, H))
        bq = jnp.zeros((1, H), jnp.float32)
        bk = jnp.zeros((1, H), jnp.float32)
        bv = jnp.zeros((1, H), jnp.float32)
        # Fold 1/sqrt(D_HEAD) into the Q columns (weight AND bias); lane-pad 96 -> 128.
        wqkv.append(pad_last(jnp.concatenate([wq * att_scale, wk, wv], axis=1), QKV_PAD))
        bqkv.append(pad_last(jnp.concatenate([bq * att_scale, bk, bv], axis=1), QKV_PAD))
        # Output projection pre-split per head: (N_HEADS, D_HEAD, H) slabs.
        wo.append(nrm(next(it), (H, H)).reshape(N_HEADS, D_HEAD, H))
        bo.append(jnp.zeros((1, H), jnp.float32))
        ln1_g.append(jnp.ones((1, H), jnp.float32))
        ln1_b.append(jnp.zeros((1, H), jnp.float32))
        # FFN weights lane/row padded to 128 (exact: padded cols hit gelu(0)=0 / zero rows).
        w1.append(pad_last(nrm(next(it), (H, FFN)), FFN_PAD))
        b1.append(jnp.zeros((1, FFN_PAD), jnp.float32))
        w2.append(jnp.pad(nrm(next(it), (FFN, H)), ((0, FFN_PAD - FFN), (0, 0))))
        b2.append(jnp.zeros((1, H), jnp.float32))
        ln2_g.append(jnp.ones((1, H), jnp.float32))
        ln2_b.append(jnp.zeros((1, H), jnp.float32))

    params.update({
        'wqkv': jnp.stack(wqkv), 'bqkv': jnp.stack(bqkv),
        'wo': jnp.stack(wo), 'bo': jnp.stack(bo),
        'ln1_g': jnp.stack(ln1_g), 'ln1_b': jnp.stack(ln1_b),
        'w1': jnp.stack(w1), 'b1': jnp.stack(b1),
        'w2': jnp.stack(w2), 'b2': jnp.stack(b2),
        'ln2_g': jnp.stack(ln2_g), 'ln2_b': jnp.stack(ln2_b),
    })
    return params


# --------------------------------- main ------------------------------------------
if __name__ == "__main__":
    key = jax.random.PRNGKey(0)
    kp, ke = jax.random.split(key)
    params = init_params(kp)

    prompts_embeddings = jax.random.normal(ke, (B, S, H), dtype=jnp.float32)
    attention_mask = jnp.ones((B, S), dtype=jnp.int32).at[:, -2:].set(0)  # pad last 2 tokens

    out = text_encoder_forward(params, prompts_embeddings, attention_mask)
    jax.block_until_ready(out)
    assert out.shape == (B, PROJ) and out.dtype == jnp.float32
    print("KERNEL_OK")
</pallas_src>

<mosaic_0001>
module attributes {stable_mosaic.version = 11 : i64} {
  func.func @fused_text_encoder_kernel(%arg0: memref<16x32xf32, #tpu.memory_space<vmem>>, %arg1: memref<2x8xf32, #tpu.memory_space<vmem>>, %arg2: memref<8x32xf32, #tpu.memory_space<vmem>>, %arg3: memref<1x32xf32, #tpu.memory_space<vmem>>, %arg4: memref<1x32xf32, #tpu.memory_space<vmem>>, %arg5: memref<1x32xf32, #tpu.memory_space<vmem>>, %arg6: memref<3x32x128xf32, #tpu.memory_space<vmem>>, %arg7: memref<3x1x128xf32, #tpu.memory_space<vmem>>, %arg8: memref<3x4x8x32xf32, #tpu.memory_space<vmem>>, %arg9: memref<3x1x32xf32, #tpu.memory_space<vmem>>, %arg10: memref<3x1x32xf32, #tpu.memory_space<vmem>>, %arg11: memref<3x1x32xf32, #tpu.memory_space<vmem>>, %arg12: memref<3x32x128xf32, #tpu.memory_space<vmem>>, %arg13: memref<3x1x128xf32, #tpu.memory_space<vmem>>, %arg14: memref<3x128x32xf32, #tpu.memory_space<vmem>>, %arg15: memref<3x1x32xf32, #tpu.memory_space<vmem>>, %arg16: memref<3x1x32xf32, #tpu.memory_space<vmem>>, %arg17: memref<3x1x32xf32, #tpu.memory_space<vmem>>, %arg18: memref<32x128xf32, #tpu.memory_space<vmem>>, %arg19: memref<8x128xf32, #tpu.memory_space<vmem>>) attributes {dimension_semantics = [], scalar_prefetch = 0 : i64, scratch_operands = 0 : i64, tpu.core_type = #tpu.core_type<tc>} {
    %c0 = arith.constant 0 : index
    %c0_0 = arith.constant 0 : index
    %0 = vector.load %arg1[%c0, %c0_0] : memref<2x8xf32, #tpu.memory_space<vmem>>, vector<2x8xf32>
    %cst = arith.constant 1.000000e+00 : f32
    %1 = vector.broadcast %cst : f32 to vector<2x8xf32>
    %2 = arith.subf %1, %0 : vector<2x8xf32>
    %cst_1 = arith.constant -1.000000e+04 : f32
    %3 = vector.broadcast %cst_1 : f32 to vector<2x8xf32>
    %4 = arith.mulf %2, %3 : vector<2x8xf32>
    %5 = vector.shape_cast %4 : vector<2x8xf32> to vector<2x1x8xf32>
    %6 = vector.shape_cast %5 : vector<2x1x8xf32> to vector<2x1x8xf32>
    %7 = vector.broadcast %6 : vector<2x1x8xf32> to vector<2x8x8xf32>
    %c0_2 = arith.constant 0 : index
    %c0_3 = arith.constant 0 : index
    %8 = vector.load %arg2[%c0_2, %c0_3] : memref<8x32xf32, #tpu.memory_space<vmem>>, vector<8x32xf32>
    %c0_4 = arith.constant 0 : index
    %c0_5 = arith.constant 0 : index
    %9 = vector.load %arg3[%c0_4, %c0_5] : memref<1x32xf32, #tpu.memory_space<vmem>>, vector<1x32xf32>
    %10 = vector.broadcast %9 : vector<1x32xf32> to vector<8x32xf32>
    %11 = arith.addf %8, %10 : vector<8x32xf32>
    %c0_6 = arith.constant 0 : index
    %c0_7 = arith.constant 0 : index
    %12 = vector.load %arg0[%c0_6, %c0_7] : memref<16x32xf32, #tpu.memory_space<vmem>>, vector<16x32xf32>
    %13 = vector.shape_cast %12 : vector<16x32xf32> to vector<2x8x32xf32>
    %14 = vector.shape_cast %11 : vector<8x32xf32> to vector<1x8x32xf32>
    %15 = vector.broadcast %14 : vector<1x8x32xf32> to vector<2x8x32xf32>
    %16 = arith.addf %13, %15 : vector<2x8x32xf32>
    %c0_8 = arith.constant 0 : index
    %c0_9 = arith.constant 0 : index
    %17 = vector.load %arg4[%c0_8, %c0_9] : memref<1x32xf32, #tpu.memory_space<vmem>>, vector<1x32xf32>
    %c0_10 = arith.constant 0 : index
    %c0_11 = arith.constant 0 : index
    %18 = vector.load %arg5[%c0_10, %c0_11] : memref<1x32xf32, #tpu.memory_space<vmem>>, vector<1x32xf32>
    %cst_12 = arith.constant dense<0.000000e+00> : vector<2x8xf32>
    %19 = vector.multi_reduction <add>, %16, %cst_12 [2] : vector<2x8x32xf32> to vector<2x8xf32>
    %20 = vector.shape_cast %19 : vector<2x8xf32> to vector<2x8x1xf32>
    %cst_13 = arith.constant 3.200000e+01 : f32
    %21 = vector.broadcast %cst_13 : f32 to vector<2x8x1xf32>
    %22 = arith.divf %20, %21 : vector<2x8x1xf32>
    %23 = vector.broadcast %22 : vector<2x8x1xf32> to vector<2x8x32xf32>
    %24 = arith.subf %16, %23 : vector<2x8x32xf32>
    %25 = arith.mulf %24, %24 : vector<2x8x32xf32>
    %cst_14 = arith.constant dense<0.000000e+00> : vector<2x8xf32>
    %26 = vector.multi_reduction <add>, %25, %cst_14 [2] : vector<2x8x32xf32> to vector<2x8xf32>
    %27 = vector.shape_cast %26 : vector<2x8xf32> to vector<2x8x1xf32>
    %cst_15 = arith.constant 3.200000e+01 : f32
    %28 = vector.broadcast %cst_15 : f32 to vector<2x8x1xf32>
    %29 = arith.divf %27, %28 : vector<2x8x1xf32>
    %30 = vector.broadcast %22 : vector<2x8x1xf32> to vector<2x8x32xf32>
    %31 = arith.subf %16, %30 : vector<2x8x32xf32>
    %cst_16 = arith.constant 9.99999996E-13 : f32
    %32 = vector.broadcast %cst_16 : f32 to vector<2x8x1xf32>
    %33 = arith.addf %29, %32 : vector<2x8x1xf32>
    %34 = math.rsqrt %33 : vector<2x8x1xf32>
    %35 = vector.broadcast %34 : vector<2x8x1xf32> to vector<2x8x32xf32>
    %36 = arith.mulf %31, %35 : vector<2x8x32xf32>
    %37 = vector.shape_cast %17 : vector<1x32xf32> to vector<1x1x32xf32>
    %38 = vector.broadcast %37 : vector<1x1x32xf32> to vector<2x8x32xf32>
    %39 = arith.mulf %36, %38 : vector<2x8x32xf32>
    %40 = vector.shape_cast %18 : vector<1x32xf32> to vector<1x1x32xf32>
    %41 = vector.broadcast %40 : vector<1x1x32xf32> to vector<2x8x32xf32>
    %42 = arith.addf %39, %41 : vector<2x8x32xf32>
    %43 = vector.shape_cast %42 : vector<2x8x32xf32> to vector<16x32xf32>
    %cst_17 = arith.constant 0.000000e+00 : f32
    %44 = vector.broadcast %cst_17 : f32 to vector<2x32xf32>
    %c0_18 = arith.constant 0 : index
    %c0_19 = arith.constant 0 : index
    %c0_20 = arith.constant 0 : index
    %45 = vector.load %arg6[%c0_18, %c0_19, %c0_20] : memref<3x32x128xf32, #tpu.memory_space<vmem>>, vector<1x32x128xf32>
    %46 = vector.shape_cast %45 : vector<1x32x128xf32> to vector<32x128xf32>
    %cst_21 = arith.constant dense<0.000000e+00> : vector<16x128xf32>
    %47 = tpu.matmul %43, %46, %cst_21 {dimension_numbers = #tpu.dot_dimension_numbers<[1], [0], [0], [1], [0, 0, 1, 1], [], []>} : vector<16x32xf32>, vector<32x128xf32>, vector<16x128xf32> -> vector<16x128xf32>
    %c0_22 = arith.constant 0 : index
    %c0_23 = arith.constant 0 : index
    %c0_24 = arith.constant 0 : index
    %48 = vector.load %arg7[%c0_22, %c0_23, %c0_24] : memref<3x1x128xf32, #tpu.memory_space<vmem>>, vector<1x1x128xf32>
    %49 = vector.shape_cast %48 : vector<1x1x128xf32> to vector<1x128xf32>
    %50 = vector.broadcast %49 : vector<1x128xf32> to vector<16x128xf32>
    %51 = arith.addf %47, %50 : vector<16x128xf32>
    %cst_25 = arith.constant 0.000000e+00 : f32
    %52 = vector.broadcast %cst_25 : f32 to vector<16x32xf32>
    %53 = vector.extract_strided_slice %51 {offsets = [0, 0], sizes = [16, 8], strides = [1, 1]} : vector<16x128xf32> to vector<16x8xf32>
    %54 = vector.shape_cast %53 : vector<16x8xf32> to vector<2x8x8xf32>
    %55 = vector.extract_strided_slice %51 {offsets = [0, 32], sizes = [16, 8], strides = [1, 1]} : vector<16x128xf32> to vector<16x8xf32>
    %56 = vector.shape_cast %55 : vector<16x8xf32> to vector<2x8x8xf32>
    %57 = vector.extract_strided_slice %51 {offsets = [0, 64], sizes = [16, 8], strides = [1, 1]} : vector<16x128xf32> to vector<16x8xf32>
    %58 = vector.shape_cast %57 : vector<16x8xf32> to vector<2x8x8xf32>
    "tpu.trace_start"() <{level = 10 : i32, message = "bqd,bkd->bqk"}> : () -> ()
    %cst_26 = arith.constant dense<0.000000e+00> : vector<2x8x8xf32>
    %59 = tpu.matmul %54, %56, %cst_26 {dimension_numbers = #tpu.dot_dimension_numbers<[2], [2], [1], [1], [0, 0, 0, 1, 1, 1], [0], [0]>} : vector<2x8x8xf32>, vector<2x8x8xf32>, vector<2x8x8xf32> -> vector<2x8x8xf32>
    "tpu.trace_stop"() : () -> ()
    %60 = arith.addf %59, %7 : vector<2x8x8xf32>
    %cst_27 = arith.constant dense<0xFF800000> : vector<2x8xf32>
    %61 = vector.multi_reduction <maximumf>, %60, %cst_27 [2] : vector<2x8x8xf32> to vector<2x8xf32>
    %62 = vector.shape_cast %61 : vector<2x8xf32> to vector<2x8x1xf32>
    %63 = vector.broadcast %62 : vector<2x8x1xf32> to vector<2x8x8xf32>
    %64 = arith.subf %60, %63 : vector<2x8x8xf32>
    %65 = math.exp %64 : vector<2x8x8xf32>
    %cst_28 = arith.constant dense<0.000000e+00> : vector<2x8xf32>
    %66 = vector.multi_reduction <add>, %65, %cst_28 [2] : vector<2x8x8xf32> to vector<2x8xf32>
    %67 = vector.shape_cast %66 : vector<2x8xf32> to vector<2x8x1xf32>
    %68 = tpu.reciprocal %67 {approx = true} : vector<2x8x1xf32> -> vector<2x8x1xf32>
    %69 = vector.broadcast %68 : vector<2x8x1xf32> to vector<2x8x8xf32>
    %70 = arith.mulf %65, %69 : vector<2x8x8xf32>
    "tpu.trace_start"() <{level = 10 : i32, message = "bqk,bkd->bqd"}> : () -> ()
    %cst_29 = arith.constant dense<0.000000e+00> : vector<2x8x8xf32>
    %71 = tpu.matmul %70, %58, %cst_29 {dimension_numbers = #tpu.dot_dimension_numbers<[2], [1], [1], [2], [0, 0, 0, 1, 1, 2], [0], [0]>} : vector<2x8x8xf32>, vector<2x8x8xf32>, vector<2x8x8xf32> -> vector<2x8x8xf32>
    "tpu.trace_stop"() : () -> ()
    %72 = vector.shape_cast %71 : vector<2x8x8xf32> to vector<16x8xf32>
    %c0_30 = arith.constant 0 : index
    %c0_31 = arith.constant 0 : index
    %c0_32 = arith.constant 0 : index
    %c0_33 = arith.constant 0 : index
    %73 = vector.load %arg8[%c0_30, %c0_31, %c0_32, %c0_33] : memref<3x4x8x32xf32, #tpu.memory_space<vmem>>, vector<1x1x8x32xf32>
    %74 = vector.shape_cast %73 : vector<1x1x8x32xf32> to vector<8x32xf32>
    %cst_34 = arith.constant dense<0.000000e+00> : vector<16x32xf32>
    %75 = tpu.matmul %72, %74, %cst_34 {dimension_numbers = #tpu.dot_dimension_numbers<[1], [0], [0], [1], [0, 0, 1, 1], [], []>} : vector<16x8xf32>, vector<8x32xf32>, vector<16x32xf32> -> vector<16x32xf32>
    %76 = arith.addf %52, %75 : vector<16x32xf32>
    %77 = vector.extract_strided_slice %51 {offsets = [0, 8], sizes = [16, 8], strides = [1, 1]} : vector<16x128xf32> to vector<16x8xf32>
    %78 = vector.shape_cast %77 : vector<16x8xf32> to vector<2x8x8xf32>
    %79 = vector.extract_strided_slice %51 {offsets = [0, 40], sizes = [16, 8], strides = [1, 1]} : vector<16x128xf32> to vector<16x8xf32>
    %80 = vector.shape_cast %79 : vector<16x8xf32> to vector<2x8x8xf32>
    %81 = vector.extract_strided_slice %51 {offsets = [0, 72], sizes = [16, 8], strides = [1, 1]} : vector<16x128xf32> to vector<16x8xf32>
    %82 = vector.shape_cast %81 : vector<16x8xf32> to vector<2x8x8xf32>
    "tpu.trace_start"() <{level = 10 : i32, message = "bqd,bkd->bqk"}> : () -> ()
    %cst_35 = arith.constant dense<0.000000e+00> : vector<2x8x8xf32>
    %83 = tpu.matmul %78, %80, %cst_35 {dimension_numbers = #tpu.dot_dimension_numbers<[2], [2], [1], [1], [0, 0, 0, 1, 1, 1], [0], [0]>} : vector<2x8x8xf32>, vector<2x8x8xf32>, vector<2x8x8xf32> -> vector<2x8x8xf32>
    "tpu.trace_stop"() : () -> ()
    %84 = arith.addf %83, %7 : vector<2x8x8xf32>
    %cst_36 = arith.constant dense<0xFF800000> : vector<2x8xf32>
    %85 = vector.multi_reduction <maximumf>, %84, %cst_36 [2] : vector<2x8x8xf32> to vector<2x8xf32>
    %86 = vector.shape_cast %85 : vector<2x8xf32> to vector<2x8x1xf32>
    %87 = vector.broadcast %86 : vector<2x8x1xf32> to vector<2x8x8xf32>
    %88 = arith.subf %84, %87 : vector<2x8x8xf32>
    %89 = math.exp %88 : vector<2x8x8xf32>
    %cst_37 = arith.constant dense<0.000000e+00> : vector<2x8xf32>
    %90 = vector.multi_reduction <add>, %89, %cst_37 [2] : vector<2x8x8xf32> to vector<2x8xf32>
    %91 = vector.shape_cast %90 : vector<2x8xf32> to vector<2x8x1xf32>
    %92 = tpu.reciprocal %91 {approx = true} : vector<2x8x1xf32> -> vector<2x8x1xf32>
    %93 = vector.broadcast %92 : vector<2x8x1xf32> to vector<2x8x8xf32>
    %94 = arith.mulf %89, %93 : vector<2x8x8xf32>
    "tpu.trace_start"() <{level = 10 : i32, message = "bqk,bkd->bqd"}> : () -> ()
    %cst_38 = arith.constant dense<0.000000e+00> : vector<2x8x8xf32>
    %95 = tpu.matmul %94, %82, %cst_38 {dimension_numbers = #tpu.dot_dimension_numbers<[2], [1], [1], [2], [0, 0, 0, 1, 1, 2], [0], [0]>} : vector<2x8x8xf32>, vector<2x8x8xf32>, vector<2x8x8xf32> -> vector<2x8x8xf32>
    "tpu.trace_stop"() : () -> ()
    %96 = vector.shape_cast %95 : vector<2x8x8xf32> to vector<16x8xf32>
    %c0_39 = arith.constant 0 : index
    %c1 = arith.constant 1 : index
    %c0_40 = arith.constant 0 : index
    %c0_41 = arith.constant 0 : index
    %97 = vector.load %arg8[%c0_39, %c1, %c0_40, %c0_41] : memref<3x4x8x32xf32, #tpu.memory_space<vmem>>, vector<1x1x8x32xf32>
    %98 = vector.shape_cast %97 : vector<1x1x8x32xf32> to vector<8x32xf32>
    %cst_42 = arith.constant dense<0.000000e+00> : vector<16x32xf32>
    %99 = tpu.matmul %96, %98, %cst_42 {dimension_numbers = #tpu.dot_dimension_numbers<[1], [0], [0], [1], [0, 0, 1, 1], [], []>} : vector<16x8xf32>, vector<8x32xf32>, vector<16x32xf32> -> vector<16x32xf32>
    %100 = arith.addf %76, %99 : vector<16x32xf32>
    %101 = vector.extract_strided_slice %51 {offsets = [0, 16], sizes = [16, 8], strides = [1, 1]} : vector<16x128xf32> to vector<16x8xf32>
    %102 = vector.shape_cast %101 : vector<16x8xf32> to vector<2x8x8xf32>
    %103 = vector.extract_strided_slice %51 {offsets = [0, 48], sizes = [16, 8], strides = [1, 1]} : vector<16x128xf32> to vector<16x8xf32>
    %104 = vector.shape_cast %103 : vector<16x8xf32> to vector<2x8x8xf32>
    %105 = vector.extract_strided_slice %51 {offsets = [0, 80], sizes = [16, 8], strides = [1, 1]} : vector<16x128xf32> to vector<16x8xf32>
    %106 = vector.shape_cast %105 : vector<16x8xf32> to vector<2x8x8xf32>
    "tpu.trace_start"() <{level = 10 : i32, message = "bqd,bkd->bqk"}> : () -> ()
    %cst_43 = arith.constant dense<0.000000e+00> : vector<2x8x8xf32>
    %107 = tpu.matmul %102, %104, %cst_43 {dimension_numbers = #tpu.dot_dimension_numbers<[2], [2], [1], [1], [0, 0, 0, 1, 1, 1], [0], [0]>} : vector<2x8x8xf32>, vector<2x8x8xf32>, vector<2x8x8xf32> -> vector<2x8x8xf32>
    "tpu.trace_stop"() : () -> ()
    %108 = arith.addf %107, %7 : vector<2x8x8xf32>
    %cst_44 = arith.constant dense<0xFF800000> : vector<2x8xf32>
    %109 = vector.multi_reduction <maximumf>, %108, %cst_44 [2] : vector<2x8x8xf32> to vector<2x8xf32>
    %110 = vector.shape_cast %109 : vector<2x8xf32> to vector<2x8x1xf32>
    %111 = vector.broadcast %110 : vector<2x8x1xf32> to vector<2x8x8xf32>
    %112 = arith.subf %108, %111 : vector<2x8x8xf32>
    %113 = math.exp %112 : vector<2x8x8xf32>
    %cst_45 = arith.constant dense<0.000000e+00> : vector<2x8xf32>
    %114 = vector.multi_reduction <add>, %113, %cst_45 [2] : vector<2x8x8xf32> to vector<2x8xf32>
    %115 = vector.shape_cast %114 : vector<2x8xf32> to vector<2x8x1xf32>
    %116 = tpu.reciprocal %115 {approx = true} : vector<2x8x1xf32> -> vector<2x8x1xf32>
    %117 = vector.broadcast %116 : vector<2x8x1xf32> to vector<2x8x8xf32>
    %118 = arith.mulf %113, %117 : vector<2x8x8xf32>
    "tpu.trace_start"() <{level = 10 : i32, message = "bqk,bkd->bqd"}> : () -> ()
    %cst_46 = arith.constant dense<0.000000e+00> : vector<2x8x8xf32>
    %119 = tpu.matmul %118, %106, %cst_46 {dimension_numbers = #tpu.dot_dimension_numbers<[2], [1], [1], [2], [0, 0, 0, 1, 1, 2], [0], [0]>} : vector<2x8x8xf32>, vector<2x8x8xf32>, vector<2x8x8xf32> -> vector<2x8x8xf32>
    "tpu.trace_stop"() : () -> ()
    %120 = vector.shape_cast %119 : vector<2x8x8xf32> to vector<16x8xf32>
    %c0_47 = arith.constant 0 : index
    %c2 = arith.constant 2 : index
    %c0_48 = arith.constant 0 : index
    %c0_49 = arith.constant 0 : index
    %121 = vector.load %arg8[%c0_47, %c2, %c0_48, %c0_49] : memref<3x4x8x32xf32, #tpu.memory_space<vmem>>, vector<1x1x8x32xf32>
    %122 = vector.shape_cast %121 : vector<1x1x8x32xf32> to vector<8x32xf32>
    %cst_50 = arith.constant dense<0.000000e+00> : vector<16x32xf32>
    %123 = tpu.matmul %120, %122, %cst_50 {dimension_numbers = #tpu.dot_dimension_numbers<[1], [0], [0], [1], [0, 0, 1, 1], [], []>} : vector<16x8xf32>, vector<8x32xf32>, vector<16x32xf32> -> vector<16x32xf32>
    %124 = arith.addf %100, %123 : vector<16x32xf32>
    %125 = vector.extract_strided_slice %51 {offsets = [0, 24], sizes = [16, 8], strides = [1, 1]} : vector<16x128xf32> to vector<16x8xf32>
    %126 = vector.shape_cast %125 : vector<16x8xf32> to vector<2x8x8xf32>
    %127 = vector.extract_strided_slice %51 {offsets = [0, 56], sizes = [16, 8], strides = [1, 1]} : vector<16x128xf32> to vector<16x8xf32>
    %128 = vector.shape_cast %127 : vector<16x8xf32> to vector<2x8x8xf32>
    %129 = vector.extract_strided_slice %51 {offsets = [0, 88], sizes = [16, 8], strides = [1, 1]} : vector<16x128xf32> to vector<16x8xf32>
    %130 = vector.shape_cast %129 : vector<16x8xf32> to vector<2x8x8xf32>
    "tpu.trace_start"() <{level = 10 : i32, message = "bqd,bkd->bqk"}> : () -> ()
    %cst_51 = arith.constant dense<0.000000e+00> : vector<2x8x8xf32>
    %131 = tpu.matmul %126, %128, %cst_51 {dimension_numbers = #tpu.dot_dimension_numbers<[2], [2], [1], [1], [0, 0, 0, 1, 1, 1], [0], [0]>} : vector<2x8x8xf32>, vector<2x8x8xf32>, vector<2x8x8xf32> -> vector<2x8x8xf32>
    "tpu.trace_stop"() : () -> ()
    %132 = arith.addf %131, %7 : vector<2x8x8xf32>
    %cst_52 = arith.constant dense<0xFF800000> : vector<2x8xf32>
    %133 = vector.multi_reduction <maximumf>, %132, %cst_52 [2] : vector<2x8x8xf32> to vector<2x8xf32>
    %134 = vector.shape_cast %133 : vector<2x8xf32> to vector<2x8x1xf32>
    %135 = vector.broadcast %134 : vector<2x8x1xf32> to vector<2x8x8xf32>
    %136 = arith.subf %132, %135 : vector<2x8x8xf32>
    %137 = math.exp %136 : vector<2x8x8xf32>
    %cst_53 = arith.constant dense<0.000000e+00> : vector<2x8xf32>
    %138 = vector.multi_reduction <add>, %137, %cst_53 [2] : vector<2x8x8xf32> to vector<2x8xf32>
    %139 = vector.shape_cast %138 : vector<2x8xf32> to vector<2x8x1xf32>
    %140 = tpu.reciprocal %139 {approx = true} : vector<2x8x1xf32> -> vector<2x8x1xf32>
    %141 = vector.broadcast %140 : vector<2x8x1xf32> to vector<2x8x8xf32>
    %142 = arith.mulf %137, %141 : vector<2x8x8xf32>
    "tpu.trace_start"() <{level = 10 : i32, message = "bqk,bkd->bqd"}> : () -> ()
    %cst_54 = arith.constant dense<0.000000e+00> : vector<2x8x8xf32>
    %143 = tpu.matmul %142, %130, %cst_54 {dimension_numbers = #tpu.dot_dimension_numbers<[2], [1], [1], [2], [0, 0, 0, 1, 1, 2], [0], [0]>} : vector<2x8x8xf32>, vector<2x8x8xf32>, vector<2x8x8xf32> -> vector<2x8x8xf32>
    "tpu.trace_stop"() : () -> ()
    %144 = vector.shape_cast %143 : vector<2x8x8xf32> to vector<16x8xf32>
    %c0_55 = arith.constant 0 : index
    %c3 = arith.constant 3 : index
    %c0_56 = arith.constant 0 : index
    %c0_57 = arith.constant 0 : index
    %145 = vector.load %arg8[%c0_55, %c3, %c0_56, %c0_57] : memref<3x4x8x32xf32, #tpu.memory_space<vmem>>, vector<1x1x8x32xf32>
    %146 = vector.shape_cast %145 : vector<1x1x8x32xf32> to vector<8x32xf32>
    %cst_58 = arith.constant dense<0.000000e+00> : vector<16x32xf32>
    %147 = tpu.matmul %144, %146, %cst_58 {dimension_numbers = #tpu.dot_dimension_numbers<[1], [0], [0], [1], [0, 0, 1, 1], [], []>} : vector<16x8xf32>, vector<8x32xf32>, vector<16x32xf32> -> vector<16x32xf32>
    %148 = arith.addf %124, %147 : vector<16x32xf32>
    %c0_59 = arith.constant 0 : index
    %c0_60 = arith.constant 0 : index
    %c0_61 = arith.constant 0 : index
    %149 = vector.load %arg9[%c0_59, %c0_60, %c0_61] : memref<3x1x32xf32, #tpu.memory_space<vmem>>, vector<1x1x32xf32>
    %150 = vector.shape_cast %149 : vector<1x1x32xf32> to vector<1x32xf32>
    %151 = vector.broadcast %150 : vector<1x32xf32> to vector<16x32xf32>
    %152 = arith.addf %148, %151 : vector<16x32xf32>
    %153 = arith.addf %152, %43 : vector<16x32xf32>
    %c0_62 = arith.constant 0 : index
    %c0_63 = arith.constant 0 : index
    %c0_64 = arith.constant 0 : index
    %154 = vector.load %arg10[%c0_62, %c0_63, %c0_64] : memref<3x1x32xf32, #tpu.memory_space<vmem>>, vector<1x1x32xf32>
    %155 = vector.shape_cast %154 : vector<1x1x32xf32> to vector<1x32xf32>
    %c0_65 = arith.constant 0 : index
    %c0_66 = arith.constant 0 : index
    %c0_67 = arith.constant 0 : index
    %156 = vector.load %arg11[%c0_65, %c0_66, %c0_67] : memref<3x1x32xf32, #tpu.memory_space<vmem>>, vector<1x1x32xf32>
    %157 = vector.shape_cast %156 : vector<1x1x32xf32> to vector<1x32xf32>
    %cst_68 = arith.constant dense<0.000000e+00> : vector<16xf32>
    %158 = vector.multi_reduction <add>, %153, %cst_68 [1] : vector<16x32xf32> to vector<16xf32>
    %159 = vector.shape_cast %158 : vector<16xf32> to vector<16x1xf32>
    %cst_69 = arith.constant 3.200000e+01 : f32
    %160 = vector.broadcast %cst_69 : f32 to vector<16x1xf32>
    %161 = arith.divf %159, %160 : vector<16x1xf32>
    %162 = vector.broadcast %161 : vector<16x1xf32> to vector<16x32xf32>
    %163 = arith.subf %153, %162 : vector<16x32xf32>
    %164 = arith.mulf %163, %163 : vector<16x32xf32>
    %cst_70 = arith.constant dense<0.000000e+00> : vector<16xf32>
    %165 = vector.multi_reduction <add>, %164, %cst_70 [1] : vector<16x32xf32> to vector<16xf32>
    %166 = vector.shape_cast %165 : vector<16xf32> to vector<16x1xf32>
    %cst_71 = arith.constant 3.200000e+01 : f32
    %167 = vector.broadcast %cst_71 : f32 to vector<16x1xf32>
    %168 = arith.divf %166, %167 : vector<16x1xf32>
    %169 = vector.broadcast %161 : vector<16x1xf32> to vector<16x32xf32>
    %170 = arith.subf %153, %169 : vector<16x32xf32>
    %cst_72 = arith.constant 9.99999996E-13 : f32
    %171 = vector.broadcast %cst_72 : f32 to vector<16x1xf32>
    %172 = arith.addf %168, %171 : vector<16x1xf32>
    %173 = math.rsqrt %172 : vector<16x1xf32>
    %174 = vector.broadcast %173 : vector<16x1xf32> to vector<16x32xf32>
    %175 = arith.mulf %170, %174 : vector<16x32xf32>
    %176 = vector.broadcast %155 : vector<1x32xf32> to vector<16x32xf32>
    %177 = arith.mulf %175, %176 : vector<16x32xf32>
    %178 = vector.broadcast %157 : vector<1x32xf32> to vector<16x32xf32>
    %179 = arith.addf %177, %178 : vector<16x32xf32>
    %c0_73 = arith.constant 0 : index
    %c0_74 = arith.constant 0 : index
    %c0_75 = arith.constant 0 : index
    %180 = vector.load %arg12[%c0_73, %c0_74, %c0_75] : memref<3x32x128xf32, #tpu.memory_space<vmem>>, vector<1x32x128xf32>
    %181 = vector.shape_cast %180 : vector<1x32x128xf32> to vector<32x128xf32>
    %cst_76 = arith.constant dense<0.000000e+00> : vector<16x128xf32>
    %182 = tpu.matmul %179, %181, %cst_76 {dimension_numbers = #tpu.dot_dimension_numbers<[1], [0], [0], [1], [0, 0, 1, 1], [], []>} : vector<16x32xf32>, vector<32x128xf32>, vector<16x128xf32> -> vector<16x128xf32>
    %c0_77 = arith.constant 0 : index
    %c0_78 = arith.constant 0 : index
    %c0_79 = arith.constant 0 : index
    %183 = vector.load %arg13[%c0_77, %c0_78, %c0_79] : memref<3x1x128xf32, #tpu.memory_space<vmem>>, vector<1x1x128xf32>
    %184 = vector.shape_cast %183 : vector<1x1x128xf32> to vector<1x128xf32>
    %185 = vector.broadcast %184 : vector<1x128xf32> to vector<16x128xf32>
    %186 = arith.addf %182, %185 : vector<16x128xf32>
    %cst_80 = arith.constant 5.000000e-01 : f32
    %187 = vector.broadcast %cst_80 : f32 to vector<16x128xf32>
    %188 = arith.mulf %187, %186 : vector<16x128xf32>
    %cst_81 = arith.constant 4.471500e-02 : f32
    %189 = vector.broadcast %cst_81 : f32 to vector<16x128xf32>
    %190 = arith.mulf %189, %186 : vector<16x128xf32>
    %191 = arith.mulf %190, %186 : vector<16x128xf32>
    %192 = arith.mulf %191, %186 : vector<16x128xf32>
    %193 = arith.addf %186, %192 : vector<16x128xf32>
    %cst_82 = arith.constant 0.797884583 : f32
    %194 = vector.broadcast %cst_82 : f32 to vector<16x128xf32>
    %195 = arith.mulf %194, %193 : vector<16x128xf32>
    %196 = math.tanh %195 : vector<16x128xf32>
    %cst_83 = arith.constant 1.000000e+00 : f32
    %197 = vector.broadcast %cst_83 : f32 to vector<16x128xf32>
    %198 = arith.addf %197, %196 : vector<16x128xf32>
    %199 = arith.mulf %188, %198 : vector<16x128xf32>
    %c0_84 = arith.constant 0 : index
    %c0_85 = arith.constant 0 : index
    %c0_86 = arith.constant 0 : index
    %200 = vector.load %arg14[%c0_84, %c0_85, %c0_86] : memref<3x128x32xf32, #tpu.memory_space<vmem>>, vector<1x128x32xf32>
    %201 = vector.shape_cast %200 : vector<1x128x32xf32> to vector<128x32xf32>
    %cst_87 = arith.constant dense<0.000000e+00> : vector<16x32xf32>
    %202 = tpu.matmul %199, %201, %cst_87 {dimension_numbers = #tpu.dot_dimension_numbers<[1], [0], [0], [1], [0, 0, 1, 1], [], []>} : vector<16x128xf32>, vector<128x32xf32>, vector<16x32xf32> -> vector<16x32xf32>
    %c0_88 = arith.constant 0 : index
    %c0_89 = arith.constant 0 : index
    %c0_90 = arith.constant 0 : index
    %203 = vector.load %arg15[%c0_88, %c0_89, %c0_90] : memref<3x1x32xf32, #tpu.memory_space<vmem>>, vector<1x1x32xf32>
    %204 = vector.shape_cast %203 : vector<1x1x32xf32> to vector<1x32xf32>
    %205 = vector.broadcast %204 : vector<1x32xf32> to vector<16x32xf32>
    %206 = arith.addf %202, %205 : vector<16x32xf32>
    %207 = arith.addf %206, %179 : vector<16x32xf32>
    %c0_91 = arith.constant 0 : index
    %c0_92 = arith.constant 0 : index
    %c0_93 = arith.constant 0 : index
    %208 = vector.load %arg16[%c0_91, %c0_92, %c0_93] : memref<3x1x32xf32, #tpu.memory_space<vmem>>, vector<1x1x32xf32>
    %209 = vector.shape_cast %208 : vector<1x1x32xf32> to vector<1x32xf32>
    %c0_94 = arith.constant 0 : index
    %c0_95 = arith.constant 0 : index
    %c0_96 = arith.constant 0 : index
    %210 = vector.load %arg17[%c0_94, %c0_95, %c0_96] : memref<3x1x32xf32, #tpu.memory_space<vmem>>, vector<1x1x32xf32>
    %211 = vector.shape_cast %210 : vector<1x1x32xf32> to vector<1x32xf32>
    %cst_97 = arith.constant dense<0.000000e+00> : vector<16xf32>
    %212 = vector.multi_reduction <add>, %207, %cst_97 [1] : vector<16x32xf32> to vector<16xf32>
    %213 = vector.shape_cast %212 : vector<16xf32> to vector<16x1xf32>
    %cst_98 = arith.constant 3.200000e+01 : f32
    %214 = vector.broadcast %cst_98 : f32 to vector<16x1xf32>
    %215 = arith.divf %213, %214 : vector<16x1xf32>
    %216 = vector.broadcast %215 : vector<16x1xf32> to vector<16x32xf32>
    %217 = arith.subf %207, %216 : vector<16x32xf32>
    %218 = arith.mulf %217, %217 : vector<16x32xf32>
    %cst_99 = arith.constant dense<0.000000e+00> : vector<16xf32>
    %219 = vector.multi_reduction <add>, %218, %cst_99 [1] : vector<16x32xf32> to vector<16xf32>
    %220 = vector.shape_cast %219 : vector<16xf32> to vector<16x1xf32>
    %cst_100 = arith.constant 3.200000e+01 : f32
    %221 = vector.broadcast %cst_100 : f32 to vector<16x1xf32>
    %222 = arith.divf %220, %221 : vector<16x1xf32>
    %223 = vector.broadcast %215 : vector<16x1xf32> to vector<16x32xf32>
    %224 = arith.subf %207, %223 : vector<16x32xf32>
    %cst_101 = arith.constant 9.99999996E-13 : f32
    %225 = vector.broadcast %cst_101 : f32 to vector<16x1xf32>
    %226 = arith.addf %222, %225 : vector<16x1xf32>
    %227 = math.rsqrt %226 : vector<16x1xf32>
    %228 = vector.broadcast %227 : vector<16x1xf32> to vector<16x32xf32>
    %229 = arith.mulf %224, %228 : vector<16x32xf32>
    %230 = vector.broadcast %209 : vector<1x32xf32> to vector<16x32xf32>
    %231 = arith.mulf %229, %230 : vector<16x32xf32>
    %232 = vector.broadcast %211 : vector<1x32xf32> to vector<16x32xf32>
    %233 = arith.addf %231, %232 : vector<16x32xf32>
    %234 = vector.shape_cast %233 : vector<16x32xf32> to vector<2x8x32xf32>
    %cst_102 = arith.constant dense<0.000000e+00> : vector<2x32xf32>
    %235 = vector.multi_reduction <add>, %234, %cst_102 [1] : vector<2x8x32xf32> to vector<2x32xf32>
    %cst_103 = arith.constant 8.000000e+00 : f32
    %236 = vector.broadcast %cst_103 : f32 to vector<2x32xf32>
    %237 = arith.divf %235, %236 : vector<2x32xf32>
    %cst_104 = arith.constant 1.000000e+00 : f32
    %238 = vector.broadcast %cst_104 : f32 to vector<2x32xf32>
    %239 = arith.mulf %238, %237 : vector<2x32xf32>
    %240 = arith.addf %44, %239 : vector<2x32xf32>
    %c1_105 = arith.constant 1 : index
    %c0_106 = arith.constant 0 : index
    %c0_107 = arith.constant 0 : index
    %241 = vector.load %arg6[%c1_105, %c0_106, %c0_107] : memref<3x32x128xf32, #tpu.memory_space<vmem>>, vector<1x32x128xf32>
    %242 = vector.shape_cast %241 : vector<1x32x128xf32> to vector<32x128xf32>
    %cst_108 = arith.constant dense<0.000000e+00> : vector<16x128xf32>
    %243 = tpu.matmul %233, %242, %cst_108 {dimension_numbers = #tpu.dot_dimension_numbers<[1], [0], [0], [1], [0, 0, 1, 1], [], []>} : vector<16x32xf32>, vector<32x128xf32>, vector<16x128xf32> -> vector<16x128xf32>
    %c1_109 = arith.constant 1 : index
    %c0_110 = arith.constant 0 : index
    %c0_111 = arith.constant 0 : index
    %244 = vector.load %arg7[%c1_109, %c0_110, %c0_111] : memref<3x1x128xf32, #tpu.memory_space<vmem>>, vector<1x1x128xf32>
    %245 = vector.shape_cast %244 : vector<1x1x128xf32> to vector<1x128xf32>
    %246 = vector.broadcast %245 : vector<1x128xf32> to vector<16x128xf32>
    %247 = arith.addf %243, %246 : vector<16x128xf32>
    %cst_112 = arith.constant 0.000000e+00 : f32
    %248 = vector.broadcast %cst_112 : f32 to vector<16x32xf32>
    %249 = vector.extract_strided_slice %247 {offsets = [0, 0], sizes = [16, 8], strides = [1, 1]} : vector<16x128xf32> to vector<16x8xf32>
    %250 = vector.shape_cast %249 : vector<16x8xf32> to vector<2x8x8xf32>
    %251 = vector.extract_strided_slice %247 {offsets = [0, 32], sizes = [16, 8], strides = [1, 1]} : vector<16x128xf32> to vector<16x8xf32>
    %252 = vector.shape_cast %251 : vector<16x8xf32> to vector<2x8x8xf32>
    %253 = vector.extract_strided_slice %247 {offsets = [0, 64], sizes = [16, 8], strides = [1, 1]} : vector<16x128xf32> to vector<16x8xf32>
    %254 = vector.shape_cast %253 : vector<16x8xf32> to vector<2x8x8xf32>
    "tpu.trace_start"() <{level = 10 : i32, message = "bqd,bkd->bqk"}> : () -> ()
    %cst_113 = arith.constant dense<0.000000e+00> : vector<2x8x8xf32>
    %255 = tpu.matmul %250, %252, %cst_113 {dimension_numbers = #tpu.dot_dimension_numbers<[2], [2], [1], [1], [0, 0, 0, 1, 1, 1], [0], [0]>} : vector<2x8x8xf32>, vector<2x8x8xf32>, vector<2x8x8xf32> -> vector<2x8x8xf32>
    "tpu.trace_stop"() : () -> ()
    %256 = arith.addf %255, %7 : vector<2x8x8xf32>
    %cst_114 = arith.constant dense<0xFF800000> : vector<2x8xf32>
    %257 = vector.multi_reduction <maximumf>, %256, %cst_114 [2] : vector<2x8x8xf32> to vector<2x8xf32>
    %258 = vector.shape_cast %257 : vector<2x8xf32> to vector<2x8x1xf32>
    %259 = vector.broadcast %258 : vector<2x8x1xf32> to vector<2x8x8xf32>
    %260 = arith.subf %256, %259 : vector<2x8x8xf32>
    %261 = math.exp %260 : vector<2x8x8xf32>
    %cst_115 = arith.constant dense<0.000000e+00> : vector<2x8xf32>
    %262 = vector.multi_reduction <add>, %261, %cst_115 [2] : vector<2x8x8xf32> to vector<2x8xf32>
    %263 = vector.shape_cast %262 : vector<2x8xf32> to vector<2x8x1xf32>
    %264 = tpu.reciprocal %263 {approx = true} : vector<2x8x1xf32> -> vector<2x8x1xf32>
    %265 = vector.broadcast %264 : vector<2x8x1xf32> to vector<2x8x8xf32>
    %266 = arith.mulf %261, %265 : vector<2x8x8xf32>
    "tpu.trace_start"() <{level = 10 : i32, message = "bqk,bkd->bqd"}> : () -> ()
    %cst_116 = arith.constant dense<0.000000e+00> : vector<2x8x8xf32>
    %267 = tpu.matmul %266, %254, %cst_116 {dimension_numbers = #tpu.dot_dimension_numbers<[2], [1], [1], [2], [0, 0, 0, 1, 1, 2], [0], [0]>} : vector<2x8x8xf32>, vector<2x8x8xf32>, vector<2x8x8xf32> -> vector<2x8x8xf32>
    "tpu.trace_stop"() : () -> ()
    %268 = vector.shape_cast %267 : vector<2x8x8xf32> to vector<16x8xf32>
    %c1_117 = arith.constant 1 : index
    %c0_118 = arith.constant 0 : index
    %c0_119 = arith.constant 0 : index
    %c0_120 = arith.constant 0 : index
    %269 = vector.load %arg8[%c1_117, %c0_118, %c0_119, %c0_120] : memref<3x4x8x32xf32, #tpu.memory_space<vmem>>, vector<1x1x8x32xf32>
    %270 = vector.shape_cast %269 : vector<1x1x8x32xf32> to vector<8x32xf32>
    %cst_121 = arith.constant dense<0.000000e+00> : vector<16x32xf32>
    %271 = tpu.matmul %268, %270, %cst_121 {dimension_numbers = #tpu.dot_dimension_numbers<[1], [0], [0], [1], [0, 0, 1, 1], [], []>} : vector<16x8xf32>, vector<8x32xf32>, vector<16x32xf32> -> vector<16x32xf32>
    %272 = arith.addf %248, %271 : vector<16x32xf32>
    %273 = vector.extract_strided_slice %247 {offsets = [0, 8], sizes = [16, 8], strides = [1, 1]} : vector<16x128xf32> to vector<16x8xf32>
    %274 = vector.shape_cast %273 : vector<16x8xf32> to vector<2x8x8xf32>
    %275 = vector.extract_strided_slice %247 {offsets = [0, 40], sizes = [16, 8], strides = [1, 1]} : vector<16x128xf32> to vector<16x8xf32>
    %276 = vector.shape_cast %275 : vector<16x8xf32> to vector<2x8x8xf32>
    %277 = vector.extract_strided_slice %247 {offsets = [0, 72], sizes = [16, 8], strides = [1, 1]} : vector<16x128xf32> to vector<16x8xf32>
    %278 = vector.shape_cast %277 : vector<16x8xf32> to vector<2x8x8xf32>
    "tpu.trace_start"() <{level = 10 : i32, message = "bqd,bkd->bqk"}> : () -> ()
    %cst_122 = arith.constant dense<0.000000e+00> : vector<2x8x8xf32>
    %279 = tpu.matmul %274, %276, %cst_122 {dimension_numbers = #tpu.dot_dimension_numbers<[2], [2], [1], [1], [0, 0, 0, 1, 1, 1], [0], [0]>} : vector<2x8x8xf32>, vector<2x8x8xf32>, vector<2x8x8xf32> -> vector<2x8x8xf32>
    "tpu.trace_stop"() : () -> ()
    %280 = arith.addf %279, %7 : vector<2x8x8xf32>
    %cst_123 = arith.constant dense<0xFF800000> : vector<2x8xf32>
    %281 = vector.multi_reduction <maximumf>, %280, %cst_123 [2] : vector<2x8x8xf32> to vector<2x8xf32>
    %282 = vector.shape_cast %281 : vector<2x8xf32> to vector<2x8x1xf32>
    %283 = vector.broadcast %282 : vector<2x8x1xf32> to vector<2x8x8xf32>
    %284 = arith.subf %280, %283 : vector<2x8x8xf32>
    %285 = math.exp %284 : vector<2x8x8xf32>
    %cst_124 = arith.constant dense<0.000000e+00> : vector<2x8xf32>
    %286 = vector.multi_reduction <add>, %285, %cst_124 [2] : vector<2x8x8xf32> to vector<2x8xf32>
    %287 = vector.shape_cast %286 : vector<2x8xf32> to vector<2x8x1xf32>
    %288 = tpu.reciprocal %287 {approx = true} : vector<2x8x1xf32> -> vector<2x8x1xf32>
    %289 = vector.broadcast %288 : vector<2x8x1xf32> to vector<2x8x8xf32>
    %290 = arith.mulf %285, %289 : vector<2x8x8xf32>
    "tpu.trace_start"() <{level = 10 : i32, message = "bqk,bkd->bqd"}> : () -> ()
    %cst_125 = arith.constant dense<0.000000e+00> : vector<2x8x8xf32>
    %291 = tpu.matmul %290, %278, %cst_125 {dimension_numbers = #tpu.dot_dimension_numbers<[2], [1], [1], [2], [0, 0, 0, 1, 1, 2], [0], [0]>} : vector<2x8x8xf32>, vector<2x8x8xf32>, vector<2x8x8xf32> -> vector<2x8x8xf32>
    "tpu.trace_stop"() : () -> ()
    %292 = vector.shape_cast %291 : vector<2x8x8xf32> to vector<16x8xf32>
    %c1_126 = arith.constant 1 : index
    %c1_127 = arith.constant 1 : index
    %c0_128 = arith.constant 0 : index
    %c0_129 = arith.constant 0 : index
    %293 = vector.load %arg8[%c1_126, %c1_127, %c0_128, %c0_129] : memref<3x4x8x32xf32, #tpu.memory_space<vmem>>, vector<1x1x8x32xf32>
    %294 = vector.shape_cast %293 : vector<1x1x8x32xf32> to vector<8x32xf32>
    %cst_130 = arith.constant dense<0.000000e+00> : vector<16x32xf32>
    %295 = tpu.matmul %292, %294, %cst_130 {dimension_numbers = #tpu.dot_dimension_numbers<[1], [0], [0], [1], [0, 0, 1, 1], [], []>} : vector<16x8xf32>, vector<8x32xf32>, vector<16x32xf32> -> vector<16x32xf32>
    %296 = arith.addf %272, %295 : vector<16x32xf32>
    %297 = vector.extract_strided_slice %247 {offsets = [0, 16], sizes = [16, 8], strides = [1, 1]} : vector<16x128xf32> to vector<16x8xf32>
    %298 = vector.shape_cast %297 : vector<16x8xf32> to vector<2x8x8xf32>
    %299 = vector.extract_strided_slice %247 {offsets = [0, 48], sizes = [16, 8], strides = [1, 1]} : vector<16x128xf32> to vector<16x8xf32>
    %300 = vector.shape_cast %299 : vector<16x8xf32> to vector<2x8x8xf32>
    %301 = vector.extract_strided_slice %247 {offsets = [0, 80], sizes = [16, 8], strides = [1, 1]} : vector<16x128xf32> to vector<16x8xf32>
    %302 = vector.shape_cast %301 : vector<16x8xf32> to vector<2x8x8xf32>
    "tpu.trace_start"() <{level = 10 : i32, message = "bqd,bkd->bqk"}> : () -> ()
    %cst_131 = arith.constant dense<0.000000e+00> : vector<2x8x8xf32>
    %303 = tpu.matmul %298, %300, %cst_131 {dimension_numbers = #tpu.dot_dimension_numbers<[2], [2], [1], [1], [0, 0, 0, 1, 1, 1], [0], [0]>} : vector<2x8x8xf32>, vector<2x8x8xf32>, vector<2x8x8xf32> -> vector<2x8x8xf32>
    "tpu.trace_stop"() : () -> ()
    %304 = arith.addf %303, %7 : vector<2x8x8xf32>
    %cst_132 = arith.constant dense<0xFF800000> : vector<2x8xf32>
    %305 = vector.multi_reduction <maximumf>, %304, %cst_132 [2] : vector<2x8x8xf32> to vector<2x8xf32>
    %306 = vector.shape_cast %305 : vector<2x8xf32> to vector<2x8x1xf32>
    %307 = vector.broadcast %306 : vector<2x8x1xf32> to vector<2x8x8xf32>
    %308 = arith.subf %304, %307 : vector<2x8x8xf32>
    %309 = math.exp %308 : vector<2x8x8xf32>
    %cst_133 = arith.constant dense<0.000000e+00> : vector<2x8xf32>
    %310 = vector.multi_reduction <add>, %309, %cst_133 [2] : vector<2x8x8xf32> to vector<2x8xf32>
    %311 = vector.shape_cast %310 : vector<2x8xf32> to vector<2x8x1xf32>
    %312 = tpu.reciprocal %311 {approx = true} : vector<2x8x1xf32> -> vector<2x8x1xf32>
    %313 = vector.broadcast %312 : vector<2x8x1xf32> to vector<2x8x8xf32>
    %314 = arith.mulf %309, %313 : vector<2x8x8xf32>
    "tpu.trace_start"() <{level = 10 : i32, message = "bqk,bkd->bqd"}> : () -> ()
    %cst_134 = arith.constant dense<0.000000e+00> : vector<2x8x8xf32>
    %315 = tpu.matmul %314, %302, %cst_134 {dimension_numbers = #tpu.dot_dimension_numbers<[2], [1], [1], [2], [0, 0, 0, 1, 1, 2], [0], [0]>} : vector<2x8x8xf32>, vector<2x8x8xf32>, vector<2x8x8xf32> -> vector<2x8x8xf32>
    "tpu.trace_stop"() : () -> ()
    %316 = vector.shape_cast %315 : vector<2x8x8xf32> to vector<16x8xf32>
    %c1_135 = arith.constant 1 : index
    %c2_136 = arith.constant 2 : index
    %c0_137 = arith.constant 0 : index
    %c0_138 = arith.constant 0 : index
    %317 = vector.load %arg8[%c1_135, %c2_136, %c0_137, %c0_138] : memref<3x4x8x32xf32, #tpu.memory_space<vmem>>, vector<1x1x8x32xf32>
    %318 = vector.shape_cast %317 : vector<1x1x8x32xf32> to vector<8x32xf32>
    %cst_139 = arith.constant dense<0.000000e+00> : vector<16x32xf32>
    %319 = tpu.matmul %316, %318, %cst_139 {dimension_numbers = #tpu.dot_dimension_numbers<[1], [0], [0], [1], [0, 0, 1, 1], [], []>} : vector<16x8xf32>, vector<8x32xf32>, vector<16x32xf32> -> vector<16x32xf32>
    %320 = arith.addf %296, %319 : vector<16x32xf32>
    %321 = vector.extract_strided_slice %247 {offsets = [0, 24], sizes = [16, 8], strides = [1, 1]} : vector<16x128xf32> to vector<16x8xf32>
    %322 = vector.shape_cast %321 : vector<16x8xf32> to vector<2x8x8xf32>
    %323 = vector.extract_strided_slice %247 {offsets = [0, 56], sizes = [16, 8], strides = [1, 1]} : vector<16x128xf32> to vector<16x8xf32>
    %324 = vector.shape_cast %323 : vector<16x8xf32> to vector<2x8x8xf32>
    %325 = vector.extract_strided_slice %247 {offsets = [0, 88], sizes = [16, 8], strides = [1, 1]} : vector<16x128xf32> to vector<16x8xf32>
    %326 = vector.shape_cast %325 : vector<16x8xf32> to vector<2x8x8xf32>
    "tpu.trace_start"() <{level = 10 : i32, message = "bqd,bkd->bqk"}> : () -> ()
    %cst_140 = arith.constant dense<0.000000e+00> : vector<2x8x8xf32>
    %327 = tpu.matmul %322, %324, %cst_140 {dimension_numbers = #tpu.dot_dimension_numbers<[2], [2], [1], [1], [0, 0, 0, 1, 1, 1], [0], [0]>} : vector<2x8x8xf32>, vector<2x8x8xf32>, vector<2x8x8xf32> -> vector<2x8x8xf32>
    "tpu.trace_stop"() : () -> ()
    %328 = arith.addf %327, %7 : vector<2x8x8xf32>
    %cst_141 = arith.constant dense<0xFF800000> : vector<2x8xf32>
    %329 = vector.multi_reduction <maximumf>, %328, %cst_141 [2] : vector<2x8x8xf32> to vector<2x8xf32>
    %330 = vector.shape_cast %329 : vector<2x8xf32> to vector<2x8x1xf32>
    %331 = vector.broadcast %330 : vector<2x8x1xf32> to vector<2x8x8xf32>
    %332 = arith.subf %328, %331 : vector<2x8x8xf32>
    %333 = math.exp %332 : vector<2x8x8xf32>
    %cst_142 = arith.constant dense<0.000000e+00> : vector<2x8xf32>
    %334 = vector.multi_reduction <add>, %333, %cst_142 [2] : vector<2x8x8xf32> to vector<2x8xf32>
    %335 = vector.shape_cast %334 : vector<2x8xf32> to vector<2x8x1xf32>
    %336 = tpu.reciprocal %335 {approx = true} : vector<2x8x1xf32> -> vector<2x8x1xf32>
    %337 = vector.broadcast %336 : vector<2x8x1xf32> to vector<2x8x8xf32>
    %338 = arith.mulf %333, %337 : vector<2x8x8xf32>
    "tpu.trace_start"() <{level = 10 : i32, message = "bqk,bkd->bqd"}> : () -> ()
    %cst_143 = arith.constant dense<0.000000e+00> : vector<2x8x8xf32>
    %339 = tpu.matmul %338, %326, %cst_143 {dimension_numbers = #tpu.dot_dimension_numbers<[2], [1], [1], [2], [0, 0, 0, 1, 1, 2], [0], [0]>} : vector<2x8x8xf32>, vector<2x8x8xf32>, vector<2x8x8xf32> -> vector<2x8x8xf32>
    "tpu.trace_stop"() : () -> ()
    %340 = vector.shape_cast %339 : vector<2x8x8xf32> to vector<16x8xf32>
    %c1_144 = arith.constant 1 : index
    %c3_145 = arith.constant 3 : index
    %c0_146 = arith.constant 0 : index
    %c0_147 = arith.constant 0 : index
    %341 = vector.load %arg8[%c1_144, %c3_145, %c0_146, %c0_147] : memref<3x4x8x32xf32, #tpu.memory_space<vmem>>, vector<1x1x8x32xf32>
    %342 = vector.shape_cast %341 : vector<1x1x8x32xf32> to vector<8x32xf32>
    %cst_148 = arith.constant dense<0.000000e+00> : vector<16x32xf32>
    %343 = tpu.matmul %340, %342, %cst_148 {dimension_numbers = #tpu.dot_dimension_numbers<[1], [0], [0], [1], [0, 0, 1, 1], [], []>} : vector<16x8xf32>, vector<8x32xf32>, vector<16x32xf32> -> vector<16x32xf32>
    %344 = arith.addf %320, %343 : vector<16x32xf32>
    %c1_149 = arith.constant 1 : index
    %c0_150 = arith.constant 0 : index
    %c0_151 = arith.constant 0 : index
    %345 = vector.load %arg9[%c1_149, %c0_150, %c0_151] : memref<3x1x32xf32, #tpu.memory_space<vmem>>, vector<1x1x32xf32>
    %346 = vector.shape_cast %345 : vector<1x1x32xf32> to vector<1x32xf32>
    %347 = vector.broadcast %346 : vector<1x32xf32> to vector<16x32xf32>
    %348 = arith.addf %344, %347 : vector<16x32xf32>
    %349 = arith.addf %348, %233 : vector<16x32xf32>
    %c1_152 = arith.constant 1 : index
    %c0_153 = arith.constant 0 : index
    %c0_154 = arith.constant 0 : index
    %350 = vector.load %arg10[%c1_152, %c0_153, %c0_154] : memref<3x1x32xf32, #tpu.memory_space<vmem>>, vector<1x1x32xf32>
    %351 = vector.shape_cast %350 : vector<1x1x32xf32> to vector<1x32xf32>
    %c1_155 = arith.constant 1 : index
    %c0_156 = arith.constant 0 : index
    %c0_157 = arith.constant 0 : index
    %352 = vector.load %arg11[%c1_155, %c0_156, %c0_157] : memref<3x1x32xf32, #tpu.memory_space<vmem>>, vector<1x1x32xf32>
    %353 = vector.shape_cast %352 : vector<1x1x32xf32> to vector<1x32xf32>
    %cst_158 = arith.constant dense<0.000000e+00> : vector<16xf32>
    %354 = vector.multi_reduction <add>, %349, %cst_158 [1] : vector<16x32xf32> to vector<16xf32>
    %355 = vector.shape_cast %354 : vector<16xf32> to vector<16x1xf32>
    %cst_159 = arith.constant 3.200000e+01 : f32
    %356 = vector.broadcast %cst_159 : f32 to vector<16x1xf32>
    %357 = arith.divf %355, %356 : vector<16x1xf32>
    %358 = vector.broadcast %357 : vector<16x1xf32> to vector<16x32xf32>
    %359 = arith.subf %349, %358 : vector<16x32xf32>
    %360 = arith.mulf %359, %359 : vector<16x32xf32>
    %cst_160 = arith.constant dense<0.000000e+00> : vector<16xf32>
    %361 = vector.multi_reduction <add>, %360, %cst_160 [1] : vector<16x32xf32> to vector<16xf32>
    %362 = vector.shape_cast %361 : vector<16xf32> to vector<16x1xf32>
    %cst_161 = arith.constant 3.200000e+01 : f32
    %363 = vector.broadcast %cst_161 : f32 to vector<16x1xf32>
    %364 = arith.divf %362, %363 : vector<16x1xf32>
    %365 = vector.broadcast %357 : vector<16x1xf32> to vector<16x32xf32>
    %366 = arith.subf %349, %365 : vector<16x32xf32>
    %cst_162 = arith.constant 9.99999996E-13 : f32
    %367 = vector.broadcast %cst_162 : f32 to vector<16x1xf32>
    %368 = arith.addf %364, %367 : vector<16x1xf32>
    %369 = math.rsqrt %368 : vector<16x1xf32>
    %370 = vector.broadcast %369 : vector<16x1xf32> to vector<16x32xf32>
    %371 = arith.mulf %366, %370 : vector<16x32xf32>
    %372 = vector.broadcast %351 : vector<1x32xf32> to vector<16x32xf32>
    %373 = arith.mulf %371, %372 : vector<16x32xf32>
    %374 = vector.broadcast %353 : vector<1x32xf32> to vector<16x32xf32>
    %375 = arith.addf %373, %374 : vector<16x32xf32>
    %c1_163 = arith.constant 1 : index
    %c0_164 = arith.constant 0 : index
    %c0_165 = arith.constant 0 : index
    %376 = vector.load %arg12[%c1_163, %c0_164, %c0_165] : memref<3x32x128xf32, #tpu.memory_space<vmem>>, vector<1x32x128xf32>
    %377 = vector.shape_cast %376 : vector<1x32x128xf32> to vector<32x128xf32>
    %cst_166 = arith.constant dense<0.000000e+00> : vector<16x128xf32>
    %378 = tpu.matmul %375, %377, %cst_166 {dimension_numbers = #tpu.dot_dimension_numbers<[1], [0], [0], [1], [0, 0, 1, 1], [], []>} : vector<16x32xf32>, vector<32x128xf32>, vector<16x128xf32> -> vector<16x128xf32>
    %c1_167 = arith.constant 1 : index
    %c0_168 = arith.constant 0 : index
    %c0_169 = arith.constant 0 : index
    %379 = vector.load %arg13[%c1_167, %c0_168, %c0_169] : memref<3x1x128xf32, #tpu.memory_space<vmem>>, vector<1x1x128xf32>
    %380 = vector.shape_cast %379 : vector<1x1x128xf32> to vector<1x128xf32>
    %381 = vector.broadcast %380 : vector<1x128xf32> to vector<16x128xf32>
    %382 = arith.addf %378, %381 : vector<16x128xf32>
    %cst_170 = arith.constant 5.000000e-01 : f32
    %383 = vector.broadcast %cst_170 : f32 to vector<16x128xf32>
    %384 = arith.mulf %383, %382 : vector<16x128xf32>
    %cst_171 = arith.constant 4.471500e-02 : f32
    %385 = vector.broadcast %cst_171 : f32 to vector<16x128xf32>
    %386 = arith.mulf %385, %382 : vector<16x128xf32>
    %387 = arith.mulf %386, %382 : vector<16x128xf32>
    %388 = arith.mulf %387, %382 : vector<16x128xf32>
    %389 = arith.addf %382, %388 : vector<16x128xf32>
    %cst_172 = arith.constant 0.797884583 : f32
    %390 = vector.broadcast %cst_172 : f32 to vector<16x128xf32>
    %391 = arith.mulf %390, %389 : vector<16x128xf32>
    %392 = math.tanh %391 : vector<16x128xf32>
    %cst_173 = arith.constant 1.000000e+00 : f32
    %393 = vector.broadcast %cst_173 : f32 to vector<16x128xf32>
    %394 = arith.addf %393, %392 : vector<16x128xf32>
    %395 = arith.mulf %384, %394 : vector<16x128xf32>
    %c1_174 = arith.constant 1 : index
    %c0_175 = arith.constant 0 : index
    %c0_176 = arith.constant 0 : index
    %396 = vector.load %arg14[%c1_174, %c0_175, %c0_176] : memref<3x128x32xf32, #tpu.memory_space<vmem>>, vector<1x128x32xf32>
    %397 = vector.shape_cast %396 : vector<1x128x32xf32> to vector<128x32xf32>
    %cst_177 = arith.constant dense<0.000000e+00> : vector<16x32xf32>
    %398 = tpu.matmul %395, %397, %cst_177 {dimension_numbers = #tpu.dot_dimension_numbers<[1], [0], [0], [1], [0, 0, 1, 1], [], []>} : vector<16x128xf32>, vector<128x32xf32>, vector<16x32xf32> -> vector<16x32xf32>
    %c1_178 = arith.constant 1 : index
    %c0_179 = arith.constant 0 : index
    %c0_180 = arith.constant 0 : index
    %399 = vector.load %arg15[%c1_178, %c0_179, %c0_180] : memref<3x1x32xf32, #tpu.memory_space<vmem>>, vector<1x1x32xf32>
    %400 = vector.shape_cast %399 : vector<1x1x32xf32> to vector<1x32xf32>
    %401 = vector.broadcast %400 : vector<1x32xf32> to vector<16x32xf32>
    %402 = arith.addf %398, %401 : vector<16x32xf32>
    %403 = arith.addf %402, %375 : vector<16x32xf32>
    %c1_181 = arith.constant 1 : index
    %c0_182 = arith.constant 0 : index
    %c0_183 = arith.constant 0 : index
    %404 = vector.load %arg16[%c1_181, %c0_182, %c0_183] : memref<3x1x32xf32, #tpu.memory_space<vmem>>, vector<1x1x32xf32>
    %405 = vector.shape_cast %404 : vector<1x1x32xf32> to vector<1x32xf32>
    %c1_184 = arith.constant 1 : index
    %c0_185 = arith.constant 0 : index
    %c0_186 = arith.constant 0 : index
    %406 = vector.load %arg17[%c1_184, %c0_185, %c0_186] : memref<3x1x32xf32, #tpu.memory_space<vmem>>, vector<1x1x32xf32>
    %407 = vector.shape_cast %406 : vector<1x1x32xf32> to vector<1x32xf32>
    %cst_187 = arith.constant dense<0.000000e+00> : vector<16xf32>
    %408 = vector.multi_reduction <add>, %403, %cst_187 [1] : vector<16x32xf32> to vector<16xf32>
    %409 = vector.shape_cast %408 : vector<16xf32> to vector<16x1xf32>
    %cst_188 = arith.constant 3.200000e+01 : f32
    %410 = vector.broadcast %cst_188 : f32 to vector<16x1xf32>
    %411 = arith.divf %409, %410 : vector<16x1xf32>
    %412 = vector.broadcast %411 : vector<16x1xf32> to vector<16x32xf32>
    %413 = arith.subf %403, %412 : vector<16x32xf32>
    %414 = arith.mulf %413, %413 : vector<16x32xf32>
    %cst_189 = arith.constant dense<0.000000e+00> : vector<16xf32>
    %415 = vector.multi_reduction <add>, %414, %cst_189 [1] : vector<16x32xf32> to vector<16xf32>
    %416 = vector.shape_cast %415 : vector<16xf32> to vector<16x1xf32>
    %cst_190 = arith.constant 3.200000e+01 : f32
    %417 = vector.broadcast %cst_190 : f32 to vector<16x1xf32>
    %418 = arith.divf %416, %417 : vector<16x1xf32>
    %419 = vector.broadcast %411 : vector<16x1xf32> to vector<16x32xf32>
    %420 = arith.subf %403, %419 : vector<16x32xf32>
    %cst_191 = arith.constant 9.99999996E-13 : f32
    %421 = vector.broadcast %cst_191 : f32 to vector<16x1xf32>
    %422 = arith.addf %418, %421 : vector<16x1xf32>
    %423 = math.rsqrt %422 : vector<16x1xf32>
    %424 = vector.broadcast %423 : vector<16x1xf32> to vector<16x32xf32>
    %425 = arith.mulf %420, %424 : vector<16x32xf32>
    %426 = vector.broadcast %405 : vector<1x32xf32> to vector<16x32xf32>
    %427 = arith.mulf %425, %426 : vector<16x32xf32>
    %428 = vector.broadcast %407 : vector<1x32xf32> to vector<16x32xf32>
    %429 = arith.addf %427, %428 : vector<16x32xf32>
    %430 = vector.shape_cast %429 : vector<16x32xf32> to vector<2x8x32xf32>
    %cst_192 = arith.constant dense<0.000000e+00> : vector<2x32xf32>
    %431 = vector.multi_reduction <add>, %430, %cst_192 [1] : vector<2x8x32xf32> to vector<2x32xf32>
    %cst_193 = arith.constant 8.000000e+00 : f32
    %432 = vector.broadcast %cst_193 : f32 to vector<2x32xf32>
    %433 = arith.divf %431, %432 : vector<2x32xf32>
    %cst_194 = arith.constant 1.000000e+00 : f32
    %434 = vector.broadcast %cst_194 : f32 to vector<2x32xf32>
    %435 = arith.mulf %434, %433 : vector<2x32xf32>
    %436 = arith.addf %240, %435 : vector<2x32xf32>
    %c2_195 = arith.constant 2 : index
    %c0_196 = arith.constant 0 : index
    %c0_197 = arith.constant 0 : index
    %437 = vector.load %arg6[%c2_195, %c0_196, %c0_197] : memref<3x32x128xf32, #tpu.memory_space<vmem>>, vector<1x32x128xf32>
    %438 = vector.shape_cast %437 : vector<1x32x128xf32> to vector<32x128xf32>
    %cst_198 = arith.constant dense<0.000000e+00> : vector<16x128xf32>
    %439 = tpu.matmul %429, %438, %cst_198 {dimension_numbers = #tpu.dot_dimension_numbers<[1], [0], [0], [1], [0, 0, 1, 1], [], []>} : vector<16x32xf32>, vector<32x128xf32>, vector<16x128xf32> -> vector<16x128xf32>
    %c2_199 = arith.constant 2 : index
    %c0_200 = arith.constant 0 : index
    %c0_201 = arith.constant 0 : index
    %440 = vector.load %arg7[%c2_199, %c0_200, %c0_201] : memref<3x1x128xf32, #tpu.memory_space<vmem>>, vector<1x1x128xf32>
    %441 = vector.shape_cast %440 : vector<1x1x128xf32> to vector<1x128xf32>
    %442 = vector.broadcast %441 : vector<1x128xf32> to vector<16x128xf32>
    %443 = arith.addf %439, %442 : vector<16x128xf32>
    %cst_202 = arith.constant 0.000000e+00 : f32
    %444 = vector.broadcast %cst_202 : f32 to vector<16x32xf32>
    %445 = vector.extract_strided_slice %443 {offsets = [0, 0], sizes = [16, 8], strides = [1, 1]} : vector<16x128xf32> to vector<16x8xf32>
    %446 = vector.shape_cast %445 : vector<16x8xf32> to vector<2x8x8xf32>
    %447 = vector.extract_strided_slice %443 {offsets = [0, 32], sizes = [16, 8], strides = [1, 1]} : vector<16x128xf32> to vector<16x8xf32>
    %448 = vector.shape_cast %447 : vector<16x8xf32> to vector<2x8x8xf32>
    %449 = vector.extract_strided_slice %443 {offsets = [0, 64], sizes = [16, 8], strides = [1, 1]} : vector<16x128xf32> to vector<16x8xf32>
    %450 = vector.shape_cast %449 : vector<16x8xf32> to vector<2x8x8xf32>
    "tpu.trace_start"() <{level = 10 : i32, message = "bqd,bkd->bqk"}> : () -> ()
    %cst_203 = arith.constant dense<0.000000e+00> : vector<2x8x8xf32>
    %451 = tpu.matmul %446, %448, %cst_203 {dimension_numbers = #tpu.dot_dimension_numbers<[2], [2], [1], [1], [0, 0, 0, 1, 1, 1], [0], [0]>} : vector<2x8x8xf32>, vector<2x8x8xf32>, vector<2x8x8xf32> -> vector<2x8x8xf32>
    "tpu.trace_stop"() : () -> ()
    %452 = arith.addf %451, %7 : vector<2x8x8xf32>
    %cst_204 = arith.constant dense<0xFF800000> : vector<2x8xf32>
    %453 = vector.multi_reduction <maximumf>, %452, %cst_204 [2] : vector<2x8x8xf32> to vector<2x8xf32>
    %454 = vector.shape_cast %453 : vector<2x8xf32> to vector<2x8x1xf32>
    %455 = vector.broadcast %454 : vector<2x8x1xf32> to vector<2x8x8xf32>
    %456 = arith.subf %452, %455 : vector<2x8x8xf32>
    %457 = math.exp %456 : vector<2x8x8xf32>
    %cst_205 = arith.constant dense<0.000000e+00> : vector<2x8xf32>
    %458 = vector.multi_reduction <add>, %457, %cst_205 [2] : vector<2x8x8xf32> to vector<2x8xf32>
    %459 = vector.shape_cast %458 : vector<2x8xf32> to vector<2x8x1xf32>
    %460 = tpu.reciprocal %459 {approx = true} : vector<2x8x1xf32> -> vector<2x8x1xf32>
    %461 = vector.broadcast %460 : vector<2x8x1xf32> to vector<2x8x8xf32>
    %462 = arith.mulf %457, %461 : vector<2x8x8xf32>
    "tpu.trace_start"() <{level = 10 : i32, message = "bqk,bkd->bqd"}> : () -> ()
    %cst_206 = arith.constant dense<0.000000e+00> : vector<2x8x8xf32>
    %463 = tpu.matmul %462, %450, %cst_206 {dimension_numbers = #tpu.dot_dimension_numbers<[2], [1], [1], [2], [0, 0, 0, 1, 1, 2], [0], [0]>} : vector<2x8x8xf32>, vector<2x8x8xf32>, vector<2x8x8xf32> -> vector<2x8x8xf32>
    "tpu.trace_stop"() : () -> ()
    %464 = vector.shape_cast %463 : vector<2x8x8xf32> to vector<16x8xf32>
    %c2_207 = arith.constant 2 : index
    %c0_208 = arith.constant 0 : index
    %c0_209 = arith.constant 0 : index
    %c0_210 = arith.constant 0 : index
    %465 = vector.load %arg8[%c2_207, %c0_208, %c0_209, %c0_210] : memref<3x4x8x32xf32, #tpu.memory_space<vmem>>, vector<1x1x8x32xf32>
    %466 = vector.shape_cast %465 : vector<1x1x8x32xf32> to vector<8x32xf32>
    %cst_211 = arith.constant dense<0.000000e+00> : vector<16x32xf32>
    %467 = tpu.matmul %464, %466, %cst_211 {dimension_numbers = #tpu.dot_dimension_numbers<[1], [0], [0], [1], [0, 0, 1, 1], [], []>} : vector<16x8xf32>, vector<8x32xf32>, vector<16x32xf32> -> vector<16x32xf32>
    %468 = arith.addf %444, %467 : vector<16x32xf32>
    %469 = vector.extract_strided_slice %443 {offsets = [0, 8], sizes = [16, 8], strides = [1, 1]} : vector<16x128xf32> to vector<16x8xf32>
    %470 = vector.shape_cast %469 : vector<16x8xf32> to vector<2x8x8xf32>
    %471 = vector.extract_strided_slice %443 {offsets = [0, 40], sizes = [16, 8], strides = [1, 1]} : vector<16x128xf32> to vector<16x8xf32>
    %472 = vector.shape_cast %471 : vector<16x8xf32> to vector<2x8x8xf32>
    %473 = vector.extract_strided_slice %443 {offsets = [0, 72], sizes = [16, 8], strides = [1, 1]} : vector<16x128xf32> to vector<16x8xf32>
    %474 = vector.shape_cast %473 : vector<16x8xf32> to vector<2x8x8xf32>
    "tpu.trace_start"() <{level = 10 : i32, message = "bqd,bkd->bqk"}> : () -> ()
    %cst_212 = arith.constant dense<0.000000e+00> : vector<2x8x8xf32>
    %475 = tpu.matmul %470, %472, %cst_212 {dimension_numbers = #tpu.dot_dimension_numbers<[2], [2], [1], [1], [0, 0, 0, 1, 1, 1], [0], [0]>} : vector<2x8x8xf32>, vector<2x8x8xf32>, vector<2x8x8xf32> -> vector<2x8x8xf32>
    "tpu.trace_stop"() : () -> ()
    %476 = arith.addf %475, %7 : vector<2x8x8xf32>
    %cst_213 = arith.constant dense<0xFF800000> : vector<2x8xf32>
    %477 = vector.multi_reduction <maximumf>, %476, %cst_213 [2] : vector<2x8x8xf32> to vector<2x8xf32>
    %478 = vector.shape_cast %477 : vector<2x8xf32> to vector<2x8x1xf32>
    %479 = vector.broadcast %478 : vector<2x8x1xf32> to vector<2x8x8xf32>
    %480 = arith.subf %476, %479 : vector<2x8x8xf32>
    %481 = math.exp %480 : vector<2x8x8xf32>
    %cst_214 = arith.constant dense<0.000000e+00> : vector<2x8xf32>
    %482 = vector.multi_reduction <add>, %481, %cst_214 [2] : vector<2x8x8xf32> to vector<2x8xf32>
    %483 = vector.shape_cast %482 : vector<2x8xf32> to vector<2x8x1xf32>
    %484 = tpu.reciprocal %483 {approx = true} : vector<2x8x1xf32> -> vector<2x8x1xf32>
    %485 = vector.broadcast %484 : vector<2x8x1xf32> to vector<2x8x8xf32>
    %486 = arith.mulf %481, %485 : vector<2x8x8xf32>
    "tpu.trace_start"() <{level = 10 : i32, message = "bqk,bkd->bqd"}> : () -> ()
    %cst_215 = arith.constant dense<0.000000e+00> : vector<2x8x8xf32>
    %487 = tpu.matmul %486, %474, %cst_215 {dimension_numbers = #tpu.dot_dimension_numbers<[2], [1], [1], [2], [0, 0, 0, 1, 1, 2], [0], [0]>} : vector<2x8x8xf32>, vector<2x8x8xf32>, vector<2x8x8xf32> -> vector<2x8x8xf32>
    "tpu.trace_stop"() : () -> ()
    %488 = vector.shape_cast %487 : vector<2x8x8xf32> to vector<16x8xf32>
    %c2_216 = arith.constant 2 : index
    %c1_217 = arith.constant 1 : index
    %c0_218 = arith.constant 0 : index
    %c0_219 = arith.constant 0 : index
    %489 = vector.load %arg8[%c2_216, %c1_217, %c0_218, %c0_219] : memref<3x4x8x32xf32, #tpu.memory_space<vmem>>, vector<1x1x8x32xf32>
    %490 = vector.shape_cast %489 : vector<1x1x8x32xf32> to vector<8x32xf32>
    %cst_220 = arith.constant dense<0.000000e+00> : vector<16x32xf32>
    %491 = tpu.matmul %488, %490, %cst_220 {dimension_numbers = #tpu.dot_dimension_numbers<[1], [0], [0], [1], [0, 0, 1, 1], [], []>} : vector<16x8xf32>, vector<8x32xf32>, vector<16x32xf32> -> vector<16x32xf32>
    %492 = arith.addf %468, %491 : vector<16x32xf32>
    %493 = vector.extract_strided_slice %443 {offsets = [0, 16], sizes = [16, 8], strides = [1, 1]} : vector<16x128xf32> to vector<16x8xf32>
    %494 = vector.shape_cast %493 : vector<16x8xf32> to vector<2x8x8xf32>
    %495 = vector.extract_strided_slice %443 {offsets = [0, 48], sizes = [16, 8], strides = [1, 1]} : vector<16x128xf32> to vector<16x8xf32>
    %496 = vector.shape_cast %495 : vector<16x8xf32> to vector<2x8x8xf32>
    %497 = vector.extract_strided_slice %443 {offsets = [0, 80], sizes = [16, 8], strides = [1, 1]} : vector<16x128xf32> to vector<16x8xf32>
    %498 = vector.shape_cast %497 : vector<16x8xf32> to vector<2x8x8xf32>
    "tpu.trace_start"() <{level = 10 : i32, message = "bqd,bkd->bqk"}> : () -> ()
    %cst_221 = arith.constant dense<0.000000e+00> : vector<2x8x8xf32>
    %499 = tpu.matmul %494, %496, %cst_221 {dimension_numbers = #tpu.dot_dimension_numbers<[2], [2], [1], [1], [0, 0, 0, 1, 1, 1], [0], [0]>} : vector<2x8x8xf32>, vector<2x8x8xf32>, vector<2x8x8xf32> -> vector<2x8x8xf32>
    "tpu.trace_stop"() : () -> ()
    %500 = arith.addf %499, %7 : vector<2x8x8xf32>
    %cst_222 = arith.constant dense<0xFF800000> : vector<2x8xf32>
    %501 = vector.multi_reduction <maximumf>, %500, %cst_222 [2] : vector<2x8x8xf32> to vector<2x8xf32>
    %502 = vector.shape_cast %501 : vector<2x8xf32> to vector<2x8x1xf32>
    %503 = vector.broadcast %502 : vector<2x8x1xf32> to vector<2x8x8xf32>
    %504 = arith.subf %500, %503 : vector<2x8x8xf32>
    %505 = math.exp %504 : vector<2x8x8xf32>
    %cst_223 = arith.constant dense<0.000000e+00> : vector<2x8xf32>
    %506 = vector.multi_reduction <add>, %505, %cst_223 [2] : vector<2x8x8xf32> to vector<2x8xf32>
    %507 = vector.shape_cast %506 : vector<2x8xf32> to vector<2x8x1xf32>
    %508 = tpu.reciprocal %507 {approx = true} : vector<2x8x1xf32> -> vector<2x8x1xf32>
    %509 = vector.broadcast %508 : vector<2x8x1xf32> to vector<2x8x8xf32>
    %510 = arith.mulf %505, %509 : vector<2x8x8xf32>
    "tpu.trace_start"() <{level = 10 : i32, message = "bqk,bkd->bqd"}> : () -> ()
    %cst_224 = arith.constant dense<0.000000e+00> : vector<2x8x8xf32>
    %511 = tpu.matmul %510, %498, %cst_224 {dimension_numbers = #tpu.dot_dimension_numbers<[2], [1], [1], [2], [0, 0, 0, 1, 1, 2], [0], [0]>} : vector<2x8x8xf32>, vector<2x8x8xf32>, vector<2x8x8xf32> -> vector<2x8x8xf32>
    "tpu.trace_stop"() : () -> ()
    %512 = vector.shape_cast %511 : vector<2x8x8xf32> to vector<16x8xf32>
    %c2_225 = arith.constant 2 : index
    %c2_226 = arith.constant 2 : index
    %c0_227 = arith.constant 0 : index
    %c0_228 = arith.constant 0 : index
    %513 = vector.load %arg8[%c2_225, %c2_226, %c0_227, %c0_228] : memref<3x4x8x32xf32, #tpu.memory_space<vmem>>, vector<1x1x8x32xf32>
    %514 = vector.shape_cast %513 : vector<1x1x8x32xf32> to vector<8x32xf32>
    %cst_229 = arith.constant dense<0.000000e+00> : vector<16x32xf32>
    %515 = tpu.matmul %512, %514, %cst_229 {dimension_numbers = #tpu.dot_dimension_numbers<[1], [0], [0], [1], [0, 0, 1, 1], [], []>} : vector<16x8xf32>, vector<8x32xf32>, vector<16x32xf32> -> vector<16x32xf32>
    %516 = arith.addf %492, %515 : vector<16x32xf32>
    %517 = vector.extract_strided_slice %443 {offsets = [0, 24], sizes = [16, 8], strides = [1, 1]} : vector<16x128xf32> to vector<16x8xf32>
    %518 = vector.shape_cast %517 : vector<16x8xf32> to vector<2x8x8xf32>
    %519 = vector.extract_strided_slice %443 {offsets = [0, 56], sizes = [16, 8], strides = [1, 1]} : vector<16x128xf32> to vector<16x8xf32>
    %520 = vector.shape_cast %519 : vector<16x8xf32> to vector<2x8x8xf32>
    %521 = vector.extract_strided_slice %443 {offsets = [0, 88], sizes = [16, 8], strides = [1, 1]} : vector<16x128xf32> to vector<16x8xf32>
    %522 = vector.shape_cast %521 : vector<16x8xf32> to vector<2x8x8xf32>
    "tpu.trace_start"() <{level = 10 : i32, message = "bqd,bkd->bqk"}> : () -> ()
    %cst_230 = arith.constant dense<0.000000e+00> : vector<2x8x8xf32>
    %523 = tpu.matmul %518, %520, %cst_230 {dimension_numbers = #tpu.dot_dimension_numbers<[2], [2], [1], [1], [0, 0, 0, 1, 1, 1], [0], [0]>} : vector<2x8x8xf32>, vector<2x8x8xf32>, vector<2x8x8xf32> -> vector<2x8x8xf32>
    "tpu.trace_stop"() : () -> ()
    %524 = arith.addf %523, %7 : vector<2x8x8xf32>
    %cst_231 = arith.constant dense<0xFF800000> : vector<2x8xf32>
    %525 = vector.multi_reduction <maximumf>, %524, %cst_231 [2] : vector<2x8x8xf32> to vector<2x8xf32>
    %526 = vector.shape_cast %525 : vector<2x8xf32> to vector<2x8x1xf32>
    %527 = vector.broadcast %526 : vector<2x8x1xf32> to vector<2x8x8xf32>
    %528 = arith.subf %524, %527 : vector<2x8x8xf32>
    %529 = math.exp %528 : vector<2x8x8xf32>
    %cst_232 = arith.constant dense<0.000000e+00> : vector<2x8xf32>
    %530 = vector.multi_reduction <add>, %529, %cst_232 [2] : vector<2x8x8xf32> to vector<2x8xf32>
    %531 = vector.shape_cast %530 : vector<2x8xf32> to vector<2x8x1xf32>
    %532 = tpu.reciprocal %531 {approx = true} : vector<2x8x1xf32> -> vector<2x8x1xf32>
    %533 = vector.broadcast %532 : vector<2x8x1xf32> to vector<2x8x8xf32>
    %534 = arith.mulf %529, %533 : vector<2x8x8xf32>
    "tpu.trace_start"() <{level = 10 : i32, message = "bqk,bkd->bqd"}> : () -> ()
    %cst_233 = arith.constant dense<0.000000e+00> : vector<2x8x8xf32>
    %535 = tpu.matmul %534, %522, %cst_233 {dimension_numbers = #tpu.dot_dimension_numbers<[2], [1], [1], [2], [0, 0, 0, 1, 1, 2], [0], [0]>} : vector<2x8x8xf32>, vector<2x8x8xf32>, vector<2x8x8xf32> -> vector<2x8x8xf32>
    "tpu.trace_stop"() : () -> ()
    %536 = vector.shape_cast %535 : vector<2x8x8xf32> to vector<16x8xf32>
    %c2_234 = arith.constant 2 : index
    %c3_235 = arith.constant 3 : index
    %c0_236 = arith.constant 0 : index
    %c0_237 = arith.constant 0 : index
    %537 = vector.load %arg8[%c2_234, %c3_235, %c0_236, %c0_237] : memref<3x4x8x32xf32, #tpu.memory_space<vmem>>, vector<1x1x8x32xf32>
    %538 = vector.shape_cast %537 : vector<1x1x8x32xf32> to vector<8x32xf32>
    %cst_238 = arith.constant dense<0.000000e+00> : vector<16x32xf32>
    %539 = tpu.matmul %536, %538, %cst_238 {dimension_numbers = #tpu.dot_dimension_numbers<[1], [0], [0], [1], [0, 0, 1, 1], [], []>} : vector<16x8xf32>, vector<8x32xf32>, vector<16x32xf32> -> vector<16x32xf32>
    %540 = arith.addf %516, %539 : vector<16x32xf32>
    %c2_239 = arith.constant 2 : index
    %c0_240 = arith.constant 0 : index
    %c0_241 = arith.constant 0 : index
    %541 = vector.load %arg9[%c2_239, %c0_240, %c0_241] : memref<3x1x32xf32, #tpu.memory_space<vmem>>, vector<1x1x32xf32>
    %542 = vector.shape_cast %541 : vector<1x1x32xf32> to vector<1x32xf32>
    %543 = vector.broadcast %542 : vector<1x32xf32> to vector<16x32xf32>
    %544 = arith.addf %540, %543 : vector<16x32xf32>
    %545 = arith.addf %544, %429 : vector<16x32xf32>
    %c2_242 = arith.constant 2 : index
    %c0_243 = arith.constant 0 : index
    %c0_244 = arith.constant 0 : index
    %546 = vector.load %arg10[%c2_242, %c0_243, %c0_244] : memref<3x1x32xf32, #tpu.memory_space<vmem>>, vector<1x1x32xf32>
    %547 = vector.shape_cast %546 : vector<1x1x32xf32> to vector<1x32xf32>
    %c2_245 = arith.constant 2 : index
    %c0_246 = arith.constant 0 : index
    %c0_247 = arith.constant 0 : index
    %548 = vector.load %arg11[%c2_245, %c0_246, %c0_247] : memref<3x1x32xf32, #tpu.memory_space<vmem>>, vector<1x1x32xf32>
    %549 = vector.shape_cast %548 : vector<1x1x32xf32> to vector<1x32xf32>
    %cst_248 = arith.constant dense<0.000000e+00> : vector<16xf32>
    %550 = vector.multi_reduction <add>, %545, %cst_248 [1] : vector<16x32xf32> to vector<16xf32>
    %551 = vector.shape_cast %550 : vector<16xf32> to vector<16x1xf32>
    %cst_249 = arith.constant 3.200000e+01 : f32
    %552 = vector.broadcast %cst_249 : f32 to vector<16x1xf32>
    %553 = arith.divf %551, %552 : vector<16x1xf32>
    %554 = vector.broadcast %553 : vector<16x1xf32> to vector<16x32xf32>
    %555 = arith.subf %545, %554 : vector<16x32xf32>
    %556 = arith.mulf %555, %555 : vector<16x32xf32>
    %cst_250 = arith.constant dense<0.000000e+00> : vector<16xf32>
    %557 = vector.multi_reduction <add>, %556, %cst_250 [1] : vector<16x32xf32> to vector<16xf32>
    %558 = vector.shape_cast %557 : vector<16xf32> to vector<16x1xf32>
    %cst_251 = arith.constant 3.200000e+01 : f32
    %559 = vector.broadcast %cst_251 : f32 to vector<16x1xf32>
    %560 = arith.divf %558, %559 : vector<16x1xf32>
    %561 = vector.broadcast %553 : vector<16x1xf32> to vector<16x32xf32>
    %562 = arith.subf %545, %561 : vector<16x32xf32>
    %cst_252 = arith.constant 9.99999996E-13 : f32
    %563 = vector.broadcast %cst_252 : f32 to vector<16x1xf32>
    %564 = arith.addf %560, %563 : vector<16x1xf32>
    %565 = math.rsqrt %564 : vector<16x1xf32>
    %566 = vector.broadcast %565 : vector<16x1xf32> to vector<16x32xf32>
    %567 = arith.mulf %562, %566 : vector<16x32xf32>
    %568 = vector.broadcast %547 : vector<1x32xf32> to vector<16x32xf32>
    %569 = arith.mulf %567, %568 : vector<16x32xf32>
    %570 = vector.broadcast %549 : vector<1x32xf32> to vector<16x32xf32>
    %571 = arith.addf %569, %570 : vector<16x32xf32>
    %c2_253 = arith.constant 2 : index
    %c0_254 = arith.constant 0 : index
    %c0_255 = arith.constant 0 : index
    %572 = vector.load %arg12[%c2_253, %c0_254, %c0_255] : memref<3x32x128xf32, #tpu.memory_space<vmem>>, vector<1x32x128xf32>
    %573 = vector.shape_cast %572 : vector<1x32x128xf32> to vector<32x128xf32>
    %cst_256 = arith.constant dense<0.000000e+00> : vector<16x128xf32>
    %574 = tpu.matmul %571, %573, %cst_256 {dimension_numbers = #tpu.dot_dimension_numbers<[1], [0], [0], [1], [0, 0, 1, 1], [], []>} : vector<16x32xf32>, vector<32x128xf32>, vector<16x128xf32> -> vector<16x128xf32>
    %c2_257 = arith.constant 2 : index
    %c0_258 = arith.constant 0 : index
    %c0_259 = arith.constant 0 : index
    %575 = vector.load %arg13[%c2_257, %c0_258, %c0_259] : memref<3x1x128xf32, #tpu.memory_space<vmem>>, vector<1x1x128xf32>
    %576 = vector.shape_cast %575 : vector<1x1x128xf32> to vector<1x128xf32>
    %577 = vector.broadcast %576 : vector<1x128xf32> to vector<16x128xf32>
    %578 = arith.addf %574, %577 : vector<16x128xf32>
    %cst_260 = arith.constant 5.000000e-01 : f32
    %579 = vector.broadcast %cst_260 : f32 to vector<16x128xf32>
    %580 = arith.mulf %579, %578 : vector<16x128xf32>
    %cst_261 = arith.constant 4.471500e-02 : f32
    %581 = vector.broadcast %cst_261 : f32 to vector<16x128xf32>
    %582 = arith.mulf %581, %578 : vector<16x128xf32>
    %583 = arith.mulf %582, %578 : vector<16x128xf32>
    %584 = arith.mulf %583, %578 : vector<16x128xf32>
    %585 = arith.addf %578, %584 : vector<16x128xf32>
    %cst_262 = arith.constant 0.797884583 : f32
    %586 = vector.broadcast %cst_262 : f32 to vector<16x128xf32>
    %587 = arith.mulf %586, %585 : vector<16x128xf32>
    %588 = math.tanh %587 : vector<16x128xf32>
    %cst_263 = arith.constant 1.000000e+00 : f32
    %589 = vector.broadcast %cst_263 : f32 to vector<16x128xf32>
    %590 = arith.addf %589, %588 : vector<16x128xf32>
    %591 = arith.mulf %580, %590 : vector<16x128xf32>
    %c2_264 = arith.constant 2 : index
    %c0_265 = arith.constant 0 : index
    %c0_266 = arith.constant 0 : index
    %592 = vector.load %arg14[%c2_264, %c0_265, %c0_266] : memref<3x128x32xf32, #tpu.memory_space<vmem>>, vector<1x128x32xf32>
    %593 = vector.shape_cast %592 : vector<1x128x32xf32> to vector<128x32xf32>
    %cst_267 = arith.constant dense<0.000000e+00> : vector<16x32xf32>
    %594 = tpu.matmul %591, %593, %cst_267 {dimension_numbers = #tpu.dot_dimension_numbers<[1], [0], [0], [1], [0, 0, 1, 1], [], []>} : vector<16x128xf32>, vector<128x32xf32>, vector<16x32xf32> -> vector<16x32xf32>
    %c2_268 = arith.constant 2 : index
    %c0_269 = arith.constant 0 : index
    %c0_270 = arith.constant 0 : index
    %595 = vector.load %arg15[%c2_268, %c0_269, %c0_270] : memref<3x1x32xf32, #tpu.memory_space<vmem>>, vector<1x1x32xf32>
    %596 = vector.shape_cast %595 : vector<1x1x32xf32> to vector<1x32xf32>
    %597 = vector.broadcast %596 : vector<1x32xf32> to vector<16x32xf32>
    %598 = arith.addf %594, %597 : vector<16x32xf32>
    %599 = arith.addf %598, %571 : vector<16x32xf32>
    %c2_271 = arith.constant 2 : index
    %c0_272 = arith.constant 0 : index
    %c0_273 = arith.constant 0 : index
    %600 = vector.load %arg16[%c2_271, %c0_272, %c0_273] : memref<3x1x32xf32, #tpu.memory_space<vmem>>, vector<1x1x32xf32>
    %601 = vector.shape_cast %600 : vector<1x1x32xf32> to vector<1x32xf32>
    %c2_274 = arith.constant 2 : index
    %c0_275 = arith.constant 0 : index
    %c0_276 = arith.constant 0 : index
    %602 = vector.load %arg17[%c2_274, %c0_275, %c0_276] : memref<3x1x32xf32, #tpu.memory_space<vmem>>, vector<1x1x32xf32>
    %603 = vector.shape_cast %602 : vector<1x1x32xf32> to vector<1x32xf32>
    %cst_277 = arith.constant dense<0.000000e+00> : vector<16xf32>
    %604 = vector.multi_reduction <add>, %599, %cst_277 [1] : vector<16x32xf32> to vector<16xf32>
    %605 = vector.shape_cast %604 : vector<16xf32> to vector<16x1xf32>
    %cst_278 = arith.constant 3.200000e+01 : f32
    %606 = vector.broadcast %cst_278 : f32 to vector<16x1xf32>
    %607 = arith.divf %605, %606 : vector<16x1xf32>
    %608 = vector.broadcast %607 : vector<16x1xf32> to vector<16x32xf32>
    %609 = arith.subf %599, %608 : vector<16x32xf32>
    %610 = arith.mulf %609, %609 : vector<16x32xf32>
    %cst_279 = arith.constant dense<0.000000e+00> : vector<16xf32>
    %611 = vector.multi_reduction <add>, %610, %cst_279 [1] : vector<16x32xf32> to vector<16xf32>
    %612 = vector.shape_cast %611 : vector<16xf32> to vector<16x1xf32>
    %cst_280 = arith.constant 3.200000e+01 : f32
    %613 = vector.broadcast %cst_280 : f32 to vector<16x1xf32>
    %614 = arith.divf %612, %613 : vector<16x1xf32>
    %615 = vector.broadcast %607 : vector<16x1xf32> to vector<16x32xf32>
    %616 = arith.subf %599, %615 : vector<16x32xf32>
    %cst_281 = arith.constant 9.99999996E-13 : f32
    %617 = vector.broadcast %cst_281 : f32 to vector<16x1xf32>
    %618 = arith.addf %614, %617 : vector<16x1xf32>
    %619 = math.rsqrt %618 : vector<16x1xf32>
    %620 = vector.broadcast %619 : vector<16x1xf32> to vector<16x32xf32>
    %621 = arith.mulf %616, %620 : vector<16x32xf32>
    %622 = vector.broadcast %601 : vector<1x32xf32> to vector<16x32xf32>
    %623 = arith.mulf %621, %622 : vector<16x32xf32>
    %624 = vector.broadcast %603 : vector<1x32xf32> to vector<16x32xf32>
    %625 = arith.addf %623, %624 : vector<16x32xf32>
    %626 = vector.shape_cast %625 : vector<16x32xf32> to vector<2x8x32xf32>
    %cst_282 = arith.constant dense<0.000000e+00> : vector<2x32xf32>
    %627 = vector.multi_reduction <add>, %626, %cst_282 [1] : vector<2x8x32xf32> to vector<2x32xf32>
    %cst_283 = arith.constant 8.000000e+00 : f32
    %628 = vector.broadcast %cst_283 : f32 to vector<2x32xf32>
    %629 = arith.divf %627, %628 : vector<2x32xf32>
    %cst_284 = arith.constant 1.000000e+00 : f32
    %630 = vector.broadcast %cst_284 : f32 to vector<2x32xf32>
    %631 = arith.mulf %630, %629 : vector<2x32xf32>
    %632 = arith.addf %436, %631 : vector<2x32xf32>
    %cst_285 = arith.constant 0.333333343 : f32
    %633 = vector.broadcast %cst_285 : f32 to vector<2x32xf32>
    %634 = arith.mulf %632, %633 : vector<2x32xf32>
    %cst_286 = arith.constant 0.000000e+00 : f32
    %635 = vector.broadcast %cst_286 : f32 to vector<6x32xf32>
    %636 = tpu.concatenate %634, %635 in 0 : vector<2x32xf32>, vector<6x32xf32> -> vector<8x32xf32>
    %c0_287 = arith.constant 0 : index
    %c0_288 = arith.constant 0 : index
    %637 = vector.load %arg18[%c0_287, %c0_288] : memref<32x128xf32, #tpu.memory_space<vmem>>, vector<32x128xf32>
    %cst_289 = arith.constant dense<0.000000e+00> : vector<8x128xf32>
    %638 = tpu.matmul %636, %637, %cst_289 {dimension_numbers = #tpu.dot_dimension_numbers<[1], [0], [0], [1], [0, 0, 1, 1], [], []>} : vector<8x32xf32>, vector<32x128xf32>, vector<8x128xf32> -> vector<8x128xf32>
    %c0_290 = arith.constant 0 : index
    %c0_291 = arith.constant 0 : index
    %639 = vector.load %arg19[%c0_290, %c0_291] : memref<8x128xf32, #tpu.memory_space<vmem>>, vector<8x128xf32>
    tpu.vector_store %arg19[%c0_290, %c0_291], %638 {strides = array<i32>} : memref<8x128xf32, #tpu.memory_space<vmem>>, vector<8x128xf32>,
    return
  }
}

</mosaic_0001>

<llo_original>
// kernel: tpu_custom_call.1
$region0: #{tpu_custom_call.1}
  #allocation0 [shape = 'u32[]', space=smem, size = 0x4, offset = 0x4, fixed_abs, tag = 'smem constant byte address 0x4 - core index']
  #allocation1 [shape = 'u32[144,128]{1,0:T(1,128)}', space=vmem, size = 0x12000, scoped, tag = 'internal scratch']
  %s0 = inlined_call_operand.vmem [shape: f32[16,32], index: 0, kind: input, shape index: {}]
  %s1 = inlined_call_operand.vmem [shape: f32[2,8], index: 1, kind: input, shape index: {}]
  %s2 = inlined_call_operand.vmem [shape: f32[8,32], index: 2, kind: input, shape index: {}]
  %s3 = inlined_call_operand.vmem [shape: f32[1,32], index: 3, kind: input, shape index: {}]
  %s4 = inlined_call_operand.vmem [shape: f32[1,32], index: 4, kind: input, shape index: {}]
  %s5 = inlined_call_operand.vmem [shape: f32[1,32], index: 5, kind: input, shape index: {}]
  %s6 = inlined_call_operand.vmem [shape: f32[3,32,128], index: 6, kind: input, shape index: {}]
  %s7 = inlined_call_operand.vmem [shape: f32[3,1,128], index: 7, kind: input, shape index: {}]
  %s8 = inlined_call_operand.vmem [shape: f32[3,4,8,32], index: 8, kind: input, shape index: {}]
  %s9 = inlined_call_operand.vmem [shape: f32[3,1,32], index: 9, kind: input, shape index: {}]
  %s10 = inlined_call_operand.vmem [shape: f32[3,1,32], index: 10, kind: input, shape index: {}]
  %s11 = inlined_call_operand.vmem [shape: f32[3,1,32], index: 11, kind: input, shape index: {}]
  %s12 = inlined_call_operand.vmem [shape: f32[3,32,128], index: 12, kind: input, shape index: {}]
  %s13 = inlined_call_operand.vmem [shape: f32[3,1,128], index: 13, kind: input, shape index: {}]
  %s14 = inlined_call_operand.vmem [shape: f32[3,128,32], index: 14, kind: input, shape index: {}]
  %s15 = inlined_call_operand.vmem [shape: f32[3,1,32], index: 15, kind: input, shape index: {}]
  %s16 = inlined_call_operand.vmem [shape: f32[3,1,32], index: 16, kind: input, shape index: {}]
  %s17 = inlined_call_operand.vmem [shape: f32[3,1,32], index: 17, kind: input, shape index: {}]
  %s18 = inlined_call_operand.vmem [shape: f32[32,128], index: 18, kind: input, shape index: {}]
  %s19 = inlined_call_operand.hbm [shape: f32[8,128], index: 19, kind: output, shape index: {}]
  %s20 = sld [smem:[#allocation0]]
  $region86: #{tpu_custom_call.1} parent=0
    _
  %s22 = ssub.s32 1, %s20
  %s23 = scalar_select 0, %s22, %s20
  $region1: #{tpu_custom_call.1} parent=0
    #allocation2 [shape = 'u8[4096]{0}', space=vmem, size = 0x1000, scoped, tag = 'output window, operand 0, single buffered']
    #allocation3 [shape = 's32[1]{0}', space=sflag, size = 0x4, scoped, tag = 'scoped memory for tpu_custom_call.1']
    %24 = vsyncpa [#allocation3], 0
    // Predicated region
    $region2: #{tpu_custom_call.1} parent=1 // pred_check
      _
    $region3: #{tpu_custom_call.1} parent=1 // pred_check_branch
      %26 = sbr.rel (0) target = $region5
    $region4: #{tpu_custom_call.1} parent=1 // pred_region
      _
    $region5: #{tpu_custom_call.1} parent=1 // pred_fallthru
      _
    // Predicated region
    $region6: #{tpu_custom_call.1} parent=1 // pred_check
      _
    $region7: #{tpu_custom_call.1} parent=1 // pred_check_branch
      %28 = sbr.rel (0) target = $region9
    $region8: #{tpu_custom_call.1} parent=1 // pred_region
      _
    $region9: #{tpu_custom_call.1} parent=1 // pred_fallthru
      _
    // Predicated region
    $region10: #{tpu_custom_call.1} parent=1 // pred_check
      _
    $region11: #{tpu_custom_call.1} parent=1 // pred_check_branch
      %30 = sbr.rel (0) target = $region13
    $region12: #{tpu_custom_call.1} parent=1 // pred_region
      _
    $region13: #{tpu_custom_call.1} parent=1 // pred_fallthru
      _
    // Predicated region
    $region14: #{tpu_custom_call.1} parent=1 // pred_check
      _
    $region15: #{tpu_custom_call.1} parent=1 // pred_check_branch
      %32 = sbr.rel (0) target = $region17
    $region16: #{tpu_custom_call.1} parent=1 // pred_region
      _
    $region17: #{tpu_custom_call.1} parent=1 // pred_fallthru
      _
    // Predicated region
    $region18: #{tpu_custom_call.1} parent=1 // pred_check
      _
    $region19: #{tpu_custom_call.1} parent=1 // pred_check_branch
      %34 = sbr.rel (0) target = $region21
    $region20: #{tpu_custom_call.1} parent=1 // pred_region
      _
    $region21: #{tpu_custom_call.1} parent=1 // pred_fallthru
      _
    // Predicated region
    $region22: #{tpu_custom_call.1} parent=1 // pred_check
      _
    $region23: #{tpu_custom_call.1} parent=1 // pred_check_branch
      %36 = sbr.rel (0) target = $region25
    $region24: #{tpu_custom_call.1} parent=1 // pred_region
      _
    $region25: #{tpu_custom_call.1} parent=1 // pred_fallthru
      _
    // Predicated region
    $region26: #{tpu_custom_call.1} parent=1 // pred_check
      _
    $region27: #{tpu_custom_call.1} parent=1 // pred_check_branch
      %38 = sbr.rel (0) target = $region29
    $region28: #{tpu_custom_call.1} parent=1 // pred_region
      _
    $region29: #{tpu_custom_call.1} parent=1 // pred_fallthru
      _
    // Predicated region
    $region30: #{tpu_custom_call.1} parent=1 // pred_check
      _
    $region31: #{tpu_custom_call.1} parent=1 // pred_check_branch
      %40 = sbr.rel (0) target = $region33
    $region32: #{tpu_custom_call.1} parent=1 // pred_region
      _
    $region33: #{tpu_custom_call.1} parent=1 // pred_fallthru
      _
    // Predicated region
    $region34: #{tpu_custom_call.1} parent=1 // pred_check
      _
    $region35: #{tpu_custom_call.1} parent=1 // pred_check_branch
      %42 = sbr.rel (0) target = $region37
    $region36: #{tpu_custom_call.1} parent=1 // pred_region
      _
    $region37: #{tpu_custom_call.1} parent=1 // pred_fallthru
      _
    // Predicated region
    $region38: #{tpu_custom_call.1} parent=1 // pred_check
      _
    $region39: #{tpu_custom_call.1} parent=1 // pred_check_branch
      %44 = sbr.rel (0) target = $region41
    $region40: #{tpu_custom_call.1} parent=1 // pred_region
      _
    $region41: #{tpu_custom_call.1} parent=1 // pred_fallthru
      _
    // Predicated region
    $region42: #{tpu_custom_call.1} parent=1 // pred_check
      _
    $region43: #{tpu_custom_call.1} parent=1 // pred_check_branch
      %46 = sbr.rel (0) target = $region45
    $region44: #{tpu_custom_call.1} parent=1 // pred_region
      _
    $region45: #{tpu_custom_call.1} parent=1 // pred_fallthru
      _
    // Predicated region
    $region46: #{tpu_custom_call.1} parent=1 // pred_check
      _
    $region47: #{tpu_custom_call.1} parent=1 // pred_check_branch
      %48 = sbr.rel (0) target = $region49
    $region48: #{tpu_custom_call.1} parent=1 // pred_region
      _
    $region49: #{tpu_custom_call.1} parent=1 // pred_fallthru
      _
    // Predicated region
    $region50: #{tpu_custom_call.1} parent=1 // pred_check
      _
    $region51: #{tpu_custom_call.1} parent=1 // pred_check_branch
      %50 = sbr.rel (0) target = $region53
    $region52: #{tpu_custom_call.1} parent=1 // pred_region
      _
    $region53: #{tpu_custom_call.1} parent=1 // pred_fallthru
      _
    // Predicated region
    $region54: #{tpu_custom_call.1} parent=1 // pred_check
      _
    $region55: #{tpu_custom_call.1} parent=1 // pred_check_branch
      %52 = sbr.rel (0) target = $region57
    $region56: #{tpu_custom_call.1} parent=1 // pred_region
      _
    $region57: #{tpu_custom_call.1} parent=1 // pred_fallthru
      _
    // Predicated region
    $region58: #{tpu_custom_call.1} parent=1 // pred_check
      _
    $region59: #{tpu_custom_call.1} parent=1 // pred_check_branch
      %54 = sbr.rel (0) target = $region61
    $region60: #{tpu_custom_call.1} parent=1 // pred_region
      _
    $region61: #{tpu_custom_call.1} parent=1 // pred_fallthru
      _
    // Predicated region
    $region62: #{tpu_custom_call.1} parent=1 // pred_check
      _
    $region63: #{tpu_custom_call.1} parent=1 // pred_check_branch
      %56 = sbr.rel (0) target = $region65
    $region64: #{tpu_custom_call.1} parent=1 // pred_region
      _
    $region65: #{tpu_custom_call.1} parent=1 // pred_fallthru
      _
    // Predicated region
    $region66: #{tpu_custom_call.1} parent=1 // pred_check
      _
    $region67: #{tpu_custom_call.1} parent=1 // pred_check_branch
      %58 = sbr.rel (0) target = $region69
    $region68: #{tpu_custom_call.1} parent=1 // pred_region
      _
    $region69: #{tpu_custom_call.1} parent=1 // pred_fallthru
      _
    // Predicated region
    $region70: #{tpu_custom_call.1} parent=1 // pred_check
      _
    $region71: #{tpu_custom_call.1} parent=1 // pred_check_branch
      %60 = sbr.rel (0) target = $region73
    $region72: #{tpu_custom_call.1} parent=1 // pred_region
      _
    $region73: #{tpu_custom_call.1} parent=1 // pred_fallthru
      _
    // Predicated region
    $region74: #{tpu_custom_call.1} parent=1 // pred_check
      _
    $region75: #{tpu_custom_call.1} parent=1 // pred_check_branch
      %62 = sbr.rel (0) target = $region77
    $region76: #{tpu_custom_call.1} parent=1 // pred_region
      _
    $region77: #{tpu_custom_call.1} parent=1 // pred_fallthru
      _
    %v63 = vld [vmem:[%s1] sm:$0x3]
    %v64 = vsub.f32 1.0, %v63
    %v65 = vmul.f32 %v64, -10000.0
    %v68 = vunpack.c.l.s4 1966171168
    %v69 = vunpack.c.0.s8 %v68
    %v70 = vlaneseq
    %v71 = vshrl.u32 %v70, 7
    %v72 = vsub.s32 %v69, %v71
    %v73 = vrot.slane %v65, %v72
    %v74 = vcombine.high %v73, %v73
    %v76 = vunpack.c.l.s4 1966171168
    %v77 = vunpack.c.0.s8 %v76
    %v78 = vlaneseq
    %v79 = vshrl.u32 %v78, 7
    %v80 = vsub.s32 %v77, %v79
    %v81 = vrot.slane %v73, %v80
    %v83 = vunpack.c.l.s4 1966171168
    %v84 = vunpack.c.0.s8 %v83
    %v85 = vlaneseq
    %v86 = vshrl.u32 %v85, 7
    %v87 = vsub.s32 %v84, %v86
    %v88 = vrot.slane %v74, %v87
    %v89 = vlaneseq
    %v90 = vshrl.u32 %v89, 7
    %v91 = vsub.s32 0, %v90
    %v92 = vrot.slane %v81, %v91
    %v93 = vlaneseq
    %v94 = vshrl.u32 %v93, 7
    %v95 = vsub.s32 0, %v94
    %v96 = vrot.slane %v88, %v95
    %v99 = vld [vmem:[%s2] sm:$0xff]
    %v100 = vld [vmem:[%s3] sm:$0x1]
    %v102 = vlaneseq
    %v103 = vshrl.u32 %v102, 7
    %v104 = vsub.s32 0, %v103
    %v105 = vrot.slane %v100, %v104
    %v107 = vadd.f32 %v99, %v105
    %v108 = vld [vmem:[%s0] sm:$0xff]
    %v109 = vld [vmem:[%s0 + $0x8] sm:$0xff]
    %v110 = vadd.f32 %v108, %v107
    %v111 = vadd.f32 %v109, %v107
    %v112 = vld [vmem:[%s4] sm:$0x1]
    %v113 = vld [vmem:[%s5] sm:$0x1]
    %vm114 = vcmask 261120
    %v115 = vsel %vm114, %v110, 0.0
    %116 = vadd.xlane.f32.xlu0 %v115
    %v117 = vpop.xlane.xlu0 %116
    %v118 = vsel %vm114, %v111, 0.0
    %119 = vadd.xlane.f32.xlu0 %v118
    %v120 = vpop.xlane.xlu0 %119
    %v121 = vrcp.pop 32.0
    %v122 = vmul.f32 %v117, %v121
    %v123 = vmul.f32 %v120, %v121
    %v124 = vsub.f32 %v110, %v122
    %v125 = vsub.f32 %v111, %v123
    %v126 = vmul.f32 %v124, %v124
    %v127 = vmul.f32 %v125, %v125
    %v128 = vsel %vm114, %v126, 0.0
    %129 = vadd.xlane.f32.xlu0 %v128
    %v130 = vpop.xlane.xlu0 %129
    %v131 = vsel %vm114, %v127, 0.0
    %132 = vadd.xlane.f32.xlu0 %v131
    %v133 = vpop.xlane.xlu0 %132
    %v134 = vmul.f32 %v130, %v121
    %v135 = vmul.f32 %v133, %v121
    %v136 = vadd.f32 %v134, 1e-12
    %v137 = vadd.f32 %v135, 1e-12
    %v138 = vrsqrt.pop %v136
    %v139 = vrsqrt.pop %v137
    %v140 = vmul.f32 %v124, %v138
    %v141 = vmul.f32 %v125, %v139
    %v143 = vlaneseq
    %v144 = vshrl.u32 %v143, 7
    %v145 = vsub.s32 0, %v144
    %v146 = vrot.slane %v112, %v145
    %v148 = vmul.f32 %v140, %v146
    %v149 = vmul.f32 %v141, %v146
    %v151 = vlaneseq
    %v152 = vshrl.u32 %v151, 7
    %v153 = vsub.s32 0, %v152
    %v154 = vrot.slane %v113, %v153
    %v156 = vadd.f32 %v148, %v154
    %v157 = vadd.f32 %v149, %v154
    %v158 = vld [vmem:[%s6] sm:$0xff]
    %v159 = vld [vmem:[%s6 + $0x8] sm:$0xff]
    %v160 = vld [vmem:[%s6 + $0x10] sm:$0xff]
    %v161 = vld [vmem:[%s6 + $0x18] sm:$0xff]
    %v162 = vld [vmem:[%s7] sm:$0x1]
    %v164 = vlaneseq
    %v165 = vshrl.u32 %v164, 7
    %v166 = vsub.s32 0, %v165
    %v167 = vrot.slane %v162, %v166
    %v170 = vsel %vm114, %v156, 0
    %v173 = vsel %vm114, %v157, 0
    %175 = vmatprep.subr.mxu0 0.0
    %176 = vmatpush1.msra.mxu0 %v158
    %177 = vmatprep.subr.mxu0 0.0
    %178 = vmatpush1.msra.mxu0 %v159
    %179 = vmatprep.subr.mxu0 0.0
    %180 = vmatpush1.msra.mxu0 %v160
    %181 = vmatprep.subr.mxu0 0.0
    %182 = vmatpush1.msra.mxu0 %v161
    %183 = vmatprep.subr.mxu0 0.0
    %184 = vmatpush1.msra.mxu0 0.0
    %185 = vmatprep.subr.mxu0 0.0
    %186 = vmatpush1.msra.mxu0 0.0
    %187 = vmatprep.subr.mxu0 0.0
    %188 = vmatpush1.msra.mxu0 0.0
    %189 = vmatprep.subr.mxu0 0.0
    %190 = vmatpush1.msra.mxu0 0.0
    %191 = vmatprep.subr.mxu0 0.0
    %192 = vmatpush1.msra.mxu0 0.0
    %193 = vmatprep.subr.mxu0 0.0
    %194 = vmatpush1.msra.mxu0 0.0
    %195 = vmatprep.subr.mxu0 0.0
    %196 = vmatpush1.msra.mxu0 0.0
    %197 = vmatprep.subr.mxu0 0.0
    %198 = vmatpush1.msra.mxu0 0.0
    %199 = vmatprep.subr.mxu0 0.0
    %200 = vmatpush1.msra.mxu0 0.0
    %201 = vmatprep.subr.mxu0 0.0
    %202 = vmatpush1.msra.mxu0 0.0
    %203 = vmatprep.subr.mxu0 0.0
    %204 = vmatpush1.msra.mxu0 0.0
    %205 = vmatprep.subr.mxu0 0.0
    %206 = vmatpush1.msra.mxu0 0.0
    %207 = vmatprep.subr.mxu0 0.0
    %208 = vmatpush1.msra.mxu0 0.0
    %209 = vmatprep.subr.mxu0 0.0
    %210 = vmatpush1.msra.mxu0 0.0
    %211 = vmatprep.subr.mxu0 0.0
    %212 = vmatpush1.msra.mxu0 0.0
    %213 = vmatprep.subr.mxu0 0.0
    %214 = vmatpush1.msra.mxu0 0.0
    %215 = vmatprep.subr.mxu0 0.0
    %216 = vmatpush1.msra.mxu0 0.0
    %217 = vmatprep.subr.mxu0 0.0
    %218 = vmatpush1.msra.mxu0 0.0
    %219 = vmatprep.subr.mxu0 0.0
    %220 = vmatpush1.msra.mxu0 0.0
    %221 = vmatprep.subr.mxu0 0.0
    %222 = vmatpush1.msra.mxu0 0.0
    %223 = vmatprep.subr.mxu0 0.0
    %224 = vmatpush1.msra.mxu0 0.0
    %225 = vmatprep.subr.mxu0 0.0
    %226 = vmatpush1.msra.mxu0 0.0
    %227 = vmatprep.subr.mxu0 0.0
    %228 = vmatpush1.msra.mxu0 0.0
    %229 = vmatprep.subr.mxu0 0.0
    %230 = vmatpush1.msra.mxu0 0.0
    %231 = vmatprep.subr.mxu0 0.0
    %232 = vmatpush1.msra.mxu0 0.0
    %233 = vmatprep.subr.mxu0 0.0
    %234 = vmatpush1.msra.mxu0 0.0
    %235 = vmatprep.subr.mxu0 0.0
    %236 = vmatpush1.msra.mxu0 0.0
    %237 = vmatprep.subr.mxu0 0.0
    %238 = vmatpush1.msra.mxu0 0.0
    %239 = vmatprep.mubr.f32.mxu0 0.0
    %240 = vmatmul.mubr.f32.gmra.mrb[0].mxu0 %v170
    %v241 = vpop.f32.mrb[0].mxu0
    %v242 = vadd.f32 %v167, %v241
    %v243 = vpop.f32.mrb[0].mxu0
    %244 = vmatprep.mubr.f32.mxu0 0.0
    %245 = vmatmul.mubr.f32.gmra.mrb[0].mxu0 %v173
    %v246 = vpop.f32.mrb[0].mxu0
    %v247 = vadd.f32 %v167, %v246
    %v248 = vpop.f32.mrb[0].mxu0
    %249 = vdwg.mxu0
    %251 = vrot.lane.b32.xlu0 %v242, 96
    %v252 = vpop.permute.xlu0 %251
    %vm253 = vcmask 64512
    %v254 = vsel %vm253, %v242, 0
    %v256 = vsel %vm253, %v252, 0
    %258 = vmatprep.subr.mxu0 0.0
    %259 = vmatpush1.xpose.msra.mxu0 %v256
    %260 = vmatprep.subr.mxu0 0.0
    %261 = vmatpush1.xpose.msra.mxu0 0.0
    %262 = vmatprep.subr.mxu0 0.0
    %263 = vmatpush1.xpose.msra.mxu0 0.0
    %264 = vmatprep.subr.mxu0 0.0
    %265 = vmatpush1.xpose.msra.mxu0 0.0
    %266 = vmatprep.subr.mxu0 0.0
    %267 = vmatpush1.xpose.msra.mxu0 0.0
    %268 = vmatprep.subr.mxu0 0.0
    %269 = vmatpush1.xpose.msra.mxu0 0.0
    %270 = vmatprep.subr.mxu0 0.0
    %271 = vmatpush1.xpose.msra.mxu0 0.0
    %272 = vmatprep.subr.mxu0 0.0
    %273 = vmatpush1.xpose.msra.mxu0 0.0
    %274 = vmatprep.subr.mxu0 0.0
    %275 = vmatpush1.xpose.msra.mxu0 0.0
    %276 = vmatprep.subr.mxu0 0.0
    %277 = vmatpush1.xpose.msra.mxu0 0.0
    %278 = vmatprep.subr.mxu0 0.0
    %279 = vmatpush1.xpose.msra.mxu0 0.0
    %280 = vmatprep.subr.mxu0 0.0
    %281 = vmatpush1.xpose.msra.mxu0 0.0
    %282 = vmatprep.subr.mxu0 0.0
    %283 = vmatpush1.xpose.msra.mxu0 0.0
    %284 = vmatprep.subr.mxu0 0.0
    %285 = vmatpush1.xpose.msra.mxu0 0.0
    %286 = vmatprep.subr.mxu0 0.0
    %287 = vmatpush1.xpose.msra.mxu0 0.0
    %288 = vmatprep.subr.mxu0 0.0
    %289 = vmatpush1.xpose.msra.mxu0 0.0
    %290 = vmatprep.subr.mxu0 0.0
    %291 = vmatpush1.xpose.msra.mxu0 0.0
    %292 = vmatprep.subr.mxu0 0.0
    %293 = vmatpush1.xpose.msra.mxu0 0.0
    %294 = vmatprep.subr.mxu0 0.0
    %295 = vmatpush1.xpose.msra.mxu0 0.0
    %296 = vmatprep.subr.mxu0 0.0
    %297 = vmatpush1.xpose.msra.mxu0 0.0
    %298 = vmatprep.subr.mxu0 0.0
    %299 = vmatpush1.xpose.msra.mxu0 0.0
    %300 = vmatprep.subr.mxu0 0.0
    %301 = vmatpush1.xpose.msra.mxu0 0.0
    %302 = vmatprep.subr.mxu0 0.0
    %303 = vmatpush1.xpose.msra.mxu0 0.0
    %304 = vmatprep.subr.mxu0 0.0
    %305 = vmatpush1.xpose.msra.mxu0 0.0
    %306 = vmatprep.subr.mxu0 0.0
    %307 = vmatpush1.xpose.msra.mxu0 0.0
    %308 = vmatprep.subr.mxu0 0.0
    %309 = vmatpush1.xpose.msra.mxu0 0.0
    %310 = vmatprep.subr.mxu0 0.0
    %311 = vmatpush1.xpose.msra.mxu0 0.0
    %312 = vmatprep.subr.mxu0 0.0
    %313 = vmatpush1.xpose.msra.mxu0 0.0
    %314 = vmatprep.subr.mxu0 0.0
    %315 = vmatpush1.xpose.msra.mxu0 0.0
    %316 = vmatprep.subr.mxu0 0.0
    %317 = vmatpush1.xpose.msra.mxu0 0.0
    %318 = vmatprep.subr.mxu0 0.0
    %319 = vmatpush1.xpose.msra.mxu0 0.0
    %320 = vmatprep.subr.mxu0 0.0
    %321 = vmatpush1.xpose.msra.mxu0 0.0
    %322 = vmatprep.mubr.f32.mxu0 0.0
    %323 = vmatmul.mubr.f32.gmra.mrb[0].mxu0 %v254
    %v324 = vpop.f32.mrb[0].mxu0
    %v325 = vadd.f32 %v92, %v324
    %v326 = vpop.f32.mrb[0].mxu0
    %327 = vdwg.mxu0
    %329 = vrot.lane.b32.xlu0 %v247, 96
    %v330 = vpop.permute.xlu0 %329
    %v331 = vsel %vm253, %v247, 0
    %v333 = vsel %vm253, %v330, 0
    %335 = vmatprep.subr.mxu0 0.0
    %336 = vmatpush1.xpose.msra.mxu0 %v333
    %337 = vmatprep.subr.mxu0 0.0
    %338 = vmatpush1.xpose.msra.mxu0 0.0
    %339 = vmatprep.subr.mxu0 0.0
    %340 = vmatpush1.xpose.msra.mxu0 0.0
    %341 = vmatprep.subr.mxu0 0.0
    %342 = vmatpush1.xpose.msra.mxu0 0.0
    %343 = vmatprep.subr.mxu0 0.0
    %344 = vmatpush1.xpose.msra.mxu0 0.0
    %345 = vmatprep.subr.mxu0 0.0
    %346 = vmatpush1.xpose.msra.mxu0 0.0
    %347 = vmatprep.subr.mxu0 0.0
    %348 = vmatpush1.xpose.msra.mxu0 0.0
    %349 = vmatprep.subr.mxu0 0.0
    %350 = vmatpush1.xpose.msra.mxu0 0.0
    %351 = vmatprep.subr.mxu0 0.0
    %352 = vmatpush1.xpose.msra.mxu0 0.0
    %353 = vmatprep.subr.mxu0 0.0
    %354 = vmatpush1.xpose.msra.mxu0 0.0
    %355 = vmatprep.subr.mxu0 0.0
    %356 = vmatpush1.xpose.msra.mxu0 0.0
    %357 = vmatprep.subr.mxu0 0.0
    %358 = vmatpush1.xpose.msra.mxu0 0.0
    %359 = vmatprep.subr.mxu0 0.0
    %360 = vmatpush1.xpose.msra.mxu0 0.0
    %361 = vmatprep.subr.mxu0 0.0
    %362 = vmatpush1.xpose.msra.mxu0 0.0
    %363 = vmatprep.subr.mxu0 0.0
    %364 = vmatpush1.xpose.msra.mxu0 0.0
    %365 = vmatprep.subr.mxu0 0.0
    %366 = vmatpush1.xpose.msra.mxu0 0.0
    %367 = vmatprep.subr.mxu0 0.0
    %368 = vmatpush1.xpose.msra.mxu0 0.0
    %369 = vmatprep.subr.mxu0 0.0
    %370 = vmatpush1.xpose.msra.mxu0 0.0
    %371 = vmatprep.subr.mxu0 0.0
    %372 = vmatpush1.xpose.msra.mxu0 0.0
    %373 = vmatprep.subr.mxu0 0.0
    %374 = vmatpush1.xpose.msra.mxu0 0.0
    %375 = vmatprep.subr.mxu0 0.0
    %376 = vmatpush1.xpose.msra.mxu0 0.0
    %377 = vmatprep.subr.mxu0 0.0
    %378 = vmatpush1.xpose.msra.mxu0 0.0
    %379 = vmatprep.subr.mxu0 0.0
    %380 = vmatpush1.xpose.msra.mxu0 0.0
    %381 = vmatprep.subr.mxu0 0.0
    %382 = vmatpush1.xpose.msra.mxu0 0.0
    %383 = vmatprep.subr.mxu0 0.0
    %384 = vmatpush1.xpose.msra.mxu0 0.0
    %385 = vmatprep.subr.mxu0 0.0
    %386 = vmatpush1.xpose.msra.mxu0 0.0
    %387 = vmatprep.subr.mxu0 0.0
    %388 = vmatpush1.xpose.msra.mxu0 0.0
    %389 = vmatprep.subr.mxu0 0.0
    %390 = vmatpush1.xpose.msra.mxu0 0.0
    %391 = vmatprep.subr.mxu0 0.0
    %392 = vmatpush1.xpose.msra.mxu0 0.0
    %393 = vmatprep.subr.mxu0 0.0
    %394 = vmatpush1.xpose.msra.mxu0 0.0
    %395 = vmatprep.subr.mxu0 0.0
    %396 = vmatpush1.xpose.msra.mxu0 0.0
    %397 = vmatprep.subr.mxu0 0.0
    %398 = vmatpush1.xpose.msra.mxu0 0.0
    %399 = vmatprep.mubr.f32.mxu0 0.0
    %400 = vmatmul.mubr.f32.gmra.mrb[0].mxu0 %v331
    %v401 = vpop.f32.mrb[0].mxu0
    %v402 = vadd.f32 %v96, %v401
    %v403 = vpop.f32.mrb[0].mxu0
    %404 = vdwg.mxu0
    %v405 = vsel %vm253, %v325, -inf
    %406 = vmax.xlane.f32.xlu0 %v405
    %v407 = vpop.xlane.xlu0 %406
    %v408 = vsel %vm253, %v402, -inf
    %409 = vmax.xlane.f32.xlu0 %v408
    %v410 = vpop.xlane.xlu0 %409
    %v411 = vsub.f32 %v325, %v407
    %v412 = vsub.f32 %v402, %v410
    %v413 = vmul.f32 %v411, 1.442695
    %v414 = vpow.pop %v413
    %v415 = vmul.f32 %v412, 1.442695
    %v416 = vpow.pop %v415
    %v417 = vsel %vm253, %v414, 0.0
    %418 = vadd.xlane.f32.xlu0 %v417
    %v419 = vpop.xlane.xlu0 %418
    %v420 = vsel %vm253, %v416, 0.0
    %421 = vadd.xlane.f32.xlu0 %v420
    %v422 = vpop.xlane.xlu0 %421
    %v423 = vrcp.pop %v419
    %v424 = vrcp.pop %v422
    %v425 = vmul.f32 %v414, %v423
    %v426 = vmul.f32 %v416, %v424
    %427 = vrot.lane.b32.xlu0 %v242, 64
    %v428 = vpop.permute.xlu0 %427
    %v431 = vsel %vm253, %v425, 0
    %433 = vmatprep.subr.mxu0 0.0
    %434 = vmatpush1.msra.mxu0 %v428
    %435 = vmatprep.subr.mxu0 0.0
    %436 = vmatpush1.msra.mxu0 0.0
    %437 = vmatprep.subr.mxu0 0.0
    %438 = vmatpush1.msra.mxu0 0.0
    %439 = vmatprep.subr.mxu0 0.0
    %440 = vmatpush1.msra.mxu0 0.0
    %441 = vmatprep.subr.mxu0 0.0
    %442 = vmatpush1.msra.mxu0 0.0
    %443 = vmatprep.subr.mxu0 0.0
    %444 = vmatpush1.msra.mxu0 0.0
    %445 = vmatprep.subr.mxu0 0.0
    %446 = vmatpush1.msra.mxu0 0.0
    %447 = vmatprep.subr.mxu0 0.0
    %448 = vmatpush1.msra.mxu0 0.0
    %449 = vmatprep.subr.mxu0 0.0
    %450 = vmatpush1.msra.mxu0 0.0
    %451 = vmatprep.subr.mxu0 0.0
    %452 = vmatpush1.msra.mxu0 0.0
    %453 = vmatprep.subr.mxu0 0.0
    %454 = vmatpush1.msra.mxu0 0.0
    %455 = vmatprep.subr.mxu0 0.0
    %456 = vmatpush1.msra.mxu0 0.0
    %457 = vmatprep.subr.mxu0 0.0
    %458 = vmatpush1.msra.mxu0 0.0
    %459 = vmatprep.subr.mxu0 0.0
    %460 = vmatpush1.msra.mxu0 0.0
    %461 = vmatprep.subr.mxu0 0.0
    %462 = vmatpush1.msra.mxu0 0.0
    %463 = vmatprep.subr.mxu0 0.0
    %464 = vmatpush1.msra.mxu0 0.0
    %465 = vmatprep.subr.mxu0 0.0
    %466 = vmatpush1.msra.mxu0 0.0
    %467 = vmatprep.subr.mxu0 0.0
    %468 = vmatpush1.msra.mxu0 0.0
    %469 = vmatprep.subr.mxu0 0.0
    %470 = vmatpush1.msra.mxu0 0.0
    %471 = vmatprep.subr.mxu0 0.0
    %472 = vmatpush1.msra.mxu0 0.0
    %473 = vmatprep.subr.mxu0 0.0
    %474 = vmatpush1.msra.mxu0 0.0
    %475 = vmatprep.subr.mxu0 0.0
    %476 = vmatpush1.msra.mxu0 0.0
    %477 = vmatprep.subr.mxu0 0.0
    %478 = vmatpush1.msra.mxu0 0.0
    %479 = vmatprep.subr.mxu0 0.0
    %480 = vmatpush1.msra.mxu0 0.0
    %481 = vmatprep.subr.mxu0 0.0
    %482 = vmatpush1.msra.mxu0 0.0
    %483 = vmatprep.subr.mxu0 0.0
    %484 = vmatpush1.msra.mxu0 0.0
    %485 = vmatprep.subr.mxu0 0.0
    %486 = vmatpush1.msra.mxu0 0.0
    %487 = vmatprep.subr.mxu0 0.0
    %488 = vmatpush1.msra.mxu0 0.0
    %489 = vmatprep.subr.mxu0 0.0
    %490 = vmatpush1.msra.mxu0 0.0
    %491 = vmatprep.subr.mxu0 0.0
    %492 = vmatpush1.msra.mxu0 0.0
    %493 = vmatprep.subr.mxu0 0.0
    %494 = vmatpush1.msra.mxu0 0.0
    %495 = vmatprep.subr.mxu0 0.0
    %496 = vmatpush1.msra.mxu0 0.0
    %497 = vmatprep.mubr.f32.mxu0 0.0
    %498 = vmatmul.mubr.f32.gmra.mrb[0].mxu0 %v431
    %v499 = vpop.f32.mrb[0].mxu0
    %v500 = vadd.f32 0.0, %v499
    %v501 = vpop.f32.mrb[0].mxu0
    %502 = vdwg.mxu0
    %503 = vrot.lane.b32.xlu0 %v247, 64
    %v504 = vpop.permute.xlu0 %503
    %v507 = vsel %vm253, %v426, 0
    %509 = vmatprep.subr.mxu0 0.0
    %510 = vmatpush1.msra.mxu0 %v504
    %511 = vmatprep.subr.mxu0 0.0
    %512 = vmatpush1.msra.mxu0 0.0
    %513 = vmatprep.subr.mxu0 0.0
    %514 = vmatpush1.msra.mxu0 0.0
    %515 = vmatprep.subr.mxu0 0.0
    %516 = vmatpush1.msra.mxu0 0.0
    %517 = vmatprep.subr.mxu0 0.0
    %518 = vmatpush1.msra.mxu0 0.0
    %519 = vmatprep.subr.mxu0 0.0
    %520 = vmatpush1.msra.mxu0 0.0
    %521 = vmatprep.subr.mxu0 0.0
    %522 = vmatpush1.msra.mxu0 0.0
    %523 = vmatprep.subr.mxu0 0.0
    %524 = vmatpush1.msra.mxu0 0.0
    %525 = vmatprep.subr.mxu0 0.0
    %526 = vmatpush1.msra.mxu0 0.0
    %527 = vmatprep.subr.mxu0 0.0
    %528 = vmatpush1.msra.mxu0 0.0
    %529 = vmatprep.subr.mxu0 0.0
    %530 = vmatpush1.msra.mxu0 0.0
    %531 = vmatprep.subr.mxu0 0.0
    %532 = vmatpush1.msra.mxu0 0.0
    %533 = vmatprep.subr.mxu0 0.0
    %534 = vmatpush1.msra.mxu0 0.0
    %535 = vmatprep.subr.mxu0 0.0
    %536 = vmatpush1.msra.mxu0 0.0
    %537 = vmatprep.subr.mxu0 0.0
    %538 = vmatpush1.msra.mxu0 0.0
    %539 = vmatprep.subr.mxu0 0.0
    %540 = vmatpush1.msra.mxu0 0.0
    %541 = vmatprep.subr.mxu0 0.0
    %542 = vmatpush1.msra.mxu0 0.0
    %543 = vmatprep.subr.mxu0 0.0
    %544 = vmatpush1.msra.mxu0 0.0
    %545 = vmatprep.subr.mxu0 0.0
    %546 = vmatpush1.msra.mxu0 0.0
    %547 = vmatprep.subr.mxu0 0.0
    %548 = vmatpush1.msra.mxu0 0.0
    %549 = vmatprep.subr.mxu0 0.0
    %550 = vmatpush1.msra.mxu0 0.0
    %551 = vmatprep.subr.mxu0 0.0
    %552 = vmatpush1.msra.mxu0 0.0
    %553 = vmatprep.subr.mxu0 0.0
    %554 = vmatpush1.msra.mxu0 0.0
    %555 = vmatprep.subr.mxu0 0.0
    %556 = vmatpush1.msra.mxu0 0.0
    %557 = vmatprep.subr.mxu0 0.0
    %558 = vmatpush1.msra.mxu0 0.0
    %559 = vmatprep.subr.mxu0 0.0
    %560 = vmatpush1.msra.mxu0 0.0
    %561 = vmatprep.subr.mxu0 0.0
    %562 = vmatpush1.msra.mxu0 0.0
    %563 = vmatprep.subr.mxu0 0.0
    %564 = vmatpush1.msra.mxu0 0.0
    %565 = vmatprep.subr.mxu0 0.0
    %566 = vmatpush1.msra.mxu0 0.0
    %567 = vmatprep.subr.mxu0 0.0
    %568 = vmatpush1.msra.mxu0 0.0
    %569 = vmatprep.subr.mxu0 0.0
    %570 = vmatpush1.msra.mxu0 0.0
    %571 = vmatprep.subr.mxu0 0.0
    %572 = vmatpush1.msra.mxu0 0.0
    %573 = vmatprep.mubr.f32.mxu0 0.0
    %574 = vmatmul.mubr.f32.gmra.mrb[0].mxu0 %v507
    %v575 = vpop.f32.mrb[0].mxu0
    %v576 = vadd.f32 0.0, %v575
    %v577 = vpop.f32.mrb[0].mxu0
    %578 = vdwg.mxu0
    %v579 = vld [vmem:[%s8] sm:$0xff]
    %580 = vrot.lane.b32.xlu0 %v242, 120
    %v581 = vpop.permute.xlu0 %580
    %582 = vrot.lane.b32.xlu0 %v242, 88
    %v583 = vpop.permute.xlu0 %582
    %v584 = vsel %vm253, %v581, 0
    %v586 = vsel %vm253, %v583, 0
    %588 = vmatprep.subr.mxu0 0.0
    %589 = vmatpush1.xpose.msra.mxu0 %v586
    %590 = vmatprep.subr.mxu0 0.0
    %591 = vmatpush1.xpose.msra.mxu0 0.0
    %592 = vmatprep.subr.mxu0 0.0
    %593 = vmatpush1.xpose.msra.mxu0 0.0
    %594 = vmatprep.subr.mxu0 0.0
    %595 = vmatpush1.xpose.msra.mxu0 0.0
    %596 = vmatprep.subr.mxu0 0.0
    %597 = vmatpush1.xpose.msra.mxu0 0.0
    %598 = vmatprep.subr.mxu0 0.0
    %599 = vmatpush1.xpose.msra.mxu0 0.0
    %600 = vmatprep.subr.mxu0 0.0
    %601 = vmatpush1.xpose.msra.mxu0 0.0
    %602 = vmatprep.subr.mxu0 0.0
    %603 = vmatpush1.xpose.msra.mxu0 0.0
    %604 = vmatprep.subr.mxu0 0.0
    %605 = vmatpush1.xpose.msra.mxu0 0.0
    %606 = vmatprep.subr.mxu0 0.0
    %607 = vmatpush1.xpose.msra.mxu0 0.0
    %608 = vmatprep.subr.mxu0 0.0
    %609 = vmatpush1.xpose.msra.mxu0 0.0
    %610 = vmatprep.subr.mxu0 0.0
    %611 = vmatpush1.xpose.msra.mxu0 0.0
    %612 = vmatprep.subr.mxu0 0.0
    %613 = vmatpush1.xpose.msra.mxu0 0.0
    %614 = vmatprep.subr.mxu0 0.0
    %615 = vmatpush1.xpose.msra.mxu0 0.0
    %616 = vmatprep.subr.mxu0 0.0
    %617 = vmatpush1.xpose.msra.mxu0 0.0
    %618 = vmatprep.subr.mxu0 0.0
    %619 = vmatpush1.xpose.msra.mxu0 0.0
    %620 = vmatprep.subr.mxu0 0.0
    %621 = vmatpush1.xpose.msra.mxu0 0.0
    %622 = vmatprep.subr.mxu0 0.0
    %623 = vmatpush1.xpose.msra.mxu0 0.0
    %624 = vmatprep.subr.mxu0 0.0
    %625 = vmatpush1.xpose.msra.mxu0 0.0
    %626 = vmatprep.subr.mxu0 0.0
    %627 = vmatpush1.xpose.msra.mxu0 0.0
    %628 = vmatprep.subr.mxu0 0.0
    %629 = vmatpush1.xpose.msra.mxu0 0.0
    %630 = vmatprep.subr.mxu0 0.0
    %631 = vmatpush1.xpose.msra.mxu0 0.0
    %632 = vmatprep.subr.mxu0 0.0
    %633 = vmatpush1.xpose.msra.mxu0 0.0
    %634 = vmatprep.subr.mxu0 0.0
    %635 = vmatpush1.xpose.msra.mxu0 0.0
    %636 = vmatprep.subr.mxu0 0.0
    %637 = vmatpush1.xpose.msra.mxu0 0.0
    %638 = vmatprep.subr.mxu0 0.0
    %639 = vmatpush1.xpose.msra.mxu0 0.0
    %640 = vmatprep.subr.mxu0 0.0
    %641 = vmatpush1.xpose.msra.mxu0 0.0
    %642 = vmatprep.subr.mxu0 0.0
    %643 = vmatpush1.xpose.msra.mxu0 0.0
    %644 = vmatprep.subr.mxu0 0.0
    %645 = vmatpush1.xpose.msra.mxu0 0.0
    %646 = vmatprep.subr.mxu0 0.0
    %647 = vmatpush1.xpose.msra.mxu0 0.0
    %648 = vmatprep.subr.mxu0 0.0
    %649 = vmatpush1.xpose.msra.mxu0 0.0
    %650 = vmatprep.subr.mxu0 0.0
    %651 = vmatpush1.xpose.msra.mxu0 0.0
    %652 = vmatprep.mubr.f32.mxu0 0.0
    %653 = vmatmul.mubr.f32.gmra.mrb[0].mxu0 %v584
    %v654 = vpop.f32.mrb[0].mxu0
    %v655 = vadd.f32 %v92, %v654
    %v656 = vpop.f32.mrb[0].mxu0
    %657 = vdwg.mxu0
    %658 = vrot.lane.b32.xlu0 %v247, 120
    %v659 = vpop.permute.xlu0 %658
    %660 = vrot.lane.b32.xlu0 %v247, 88
    %v661 = vpop.permute.xlu0 %660
    %v662 = vsel %vm253, %v659, 0
    %v664 = vsel %vm253, %v661, 0
    %666 = vmatprep.subr.mxu0 0.0
    %667 = vmatpush1.xpose.msra.mxu0 %v664
    %668 = vmatprep.subr.mxu0 0.0
    %669 = vmatpush1.xpose.msra.mxu0 0.0
    %670 = vmatprep.subr.mxu0 0.0
    %671 = vmatpush1.xpose.msra.mxu0 0.0
    %672 = vmatprep.subr.mxu0 0.0
    %673 = vmatpush1.xpose.msra.mxu0 0.0
    %674 = vmatprep.subr.mxu0 0.0
    %675 = vmatpush1.xpose.msra.mxu0 0.0
    %676 = vmatprep.subr.mxu0 0.0
    %677 = vmatpush1.xpose.msra.mxu0 0.0
    %678 = vmatprep.subr.mxu0 0.0
    %679 = vmatpush1.xpose.msra.mxu0 0.0
    %680 = vmatprep.subr.mxu0 0.0
    %681 = vmatpush1.xpose.msra.mxu0 0.0
    %682 = vmatprep.subr.mxu0 0.0
    %683 = vmatpush1.xpose.msra.mxu0 0.0
    %684 = vmatprep.subr.mxu0 0.0
    %685 = vmatpush1.xpose.msra.mxu0 0.0
    %686 = vmatprep.subr.mxu0 0.0
    %687 = vmatpush1.xpose.msra.mxu0 0.0
    %688 = vmatprep.subr.mxu0 0.0
    %689 = vmatpush1.xpose.msra.mxu0 0.0
    %690 = vmatprep.subr.mxu0 0.0
    %691 = vmatpush1.xpose.msra.mxu0 0.0
    %692 = vmatprep.subr.mxu0 0.0
    %693 = vmatpush1.xpose.msra.mxu0 0.0
    %694 = vmatprep.subr.mxu0 0.0
    %695 = vmatpush1.xpose.msra.mxu0 0.0
    %696 = vmatprep.subr.mxu0 0.0
    %697 = vmatpush1.xpose.msra.mxu0 0.0
    %698 = vmatprep.subr.mxu0 0.0
    %699 = vmatpush1.xpose.msra.mxu0 0.0
    %700 = vmatprep.subr.mxu0 0.0
    %701 = vmatpush1.xpose.msra.mxu0 0.0
    %702 = vmatprep.subr.mxu0 0.0
    %703 = vmatpush1.xpose.msra.mxu0 0.0
    %704 = vmatprep.subr.mxu0 0.0
    %705 = vmatpush1.xpose.msra.mxu0 0.0
    %706 = vmatprep.subr.mxu0 0.0
    %707 = vmatpush1.xpose.msra.mxu0 0.0
    %708 = vmatprep.subr.mxu0 0.0
    %709 = vmatpush1.xpose.msra.mxu0 0.0
    %710 = vmatprep.subr.mxu0 0.0
    %711 = vmatpush1.xpose.msra.mxu0 0.0
    %712 = vmatprep.subr.mxu0 0.0
    %713 = vmatpush1.xpose.msra.mxu0 0.0
    %714 = vmatprep.subr.mxu0 0.0
    %715 = vmatpush1.xpose.msra.mxu0 0.0
    %716 = vmatprep.subr.mxu0 0.0
    %717 = vmatpush1.xpose.msra.mxu0 0.0
    %718 = vmatprep.subr.mxu0 0.0
    %719 = vmatpush1.xpose.msra.mxu0 0.0
    %720 = vmatprep.subr.mxu0 0.0
    %721 = vmatpush1.xpose.msra.mxu0 0.0
    %722 = vmatprep.subr.mxu0 0.0
    %723 = vmatpush1.xpose.msra.mxu0 0.0
    %724 = vmatprep.subr.mxu0 0.0
    %725 = vmatpush1.xpose.msra.mxu0 0.0
    %726 = vmatprep.subr.mxu0 0.0
    %727 = vmatpush1.xpose.msra.mxu0 0.0
    %728 = vmatprep.subr.mxu0 0.0
    %729 = vmatpush1.xpose.msra.mxu0 0.0
    %730 = vmatprep.mubr.f32.mxu0 0.0
    %731 = vmatmul.mubr.f32.gmra.mrb[0].mxu0 %v662
    %v732 = vpop.f32.mrb[0].mxu0
    %v733 = vadd.f32 %v96, %v732
    %v734 = vpop.f32.mrb[0].mxu0
    %735 = vdwg.mxu0
    %v736 = vsel %vm253, %v655, -inf
    %737 = vmax.xlane.f32.xlu0 %v736
    %v738 = vpop.xlane.xlu0 %737
    %v739 = vsel %vm253, %v733, -inf
    %740 = vmax.xlane.f32.xlu0 %v739
    %v741 = vpop.xlane.xlu0 %740
    %v742 = vsub.f32 %v655, %v738
    %v743 = vsub.f32 %v733, %v741
    %v744 = vmul.f32 %v742, 1.442695
    %v745 = vpow.pop %v744
    %v746 = vmul.f32 %v743, 1.442695
    %v747 = vpow.pop %v746
    %v748 = vsel %vm253, %v745, 0.0
    %749 = vadd.xlane.f32.xlu0 %v748
    %v750 = vpop.xlane.xlu0 %749
    %v751 = vsel %vm253, %v747, 0.0
    %752 = vadd.xlane.f32.xlu0 %v751
    %v753 = vpop.xlane.xlu0 %752
    %v754 = vrcp.pop %v750
    %v755 = vrcp.pop %v753
    %v756 = vmul.f32 %v745, %v754
    %v757 = vmul.f32 %v747, %v755
    %758 = vrot.lane.b32.xlu0 %v242, 56
    %v759 = vpop.permute.xlu0 %758
    %v762 = vsel %vm253, %v756, 0
    %764 = vmatprep.subr.mxu0 0.0
    %765 = vmatpush1.msra.mxu0 %v759
    %766 = vmatprep.subr.mxu0 0.0
    %767 = vmatpush1.msra.mxu0 0.0
    %768 = vmatprep.subr.mxu0 0.0
    %769 = vmatpush1.msra.mxu0 0.0
    %770 = vmatprep.subr.mxu0 0.0
    %771 = vmatpush1.msra.mxu0 0.0
    %772 = vmatprep.subr.mxu0 0.0
    %773 = vmatpush1.msra.mxu0 0.0
    %774 = vmatprep.subr.mxu0 0.0
    %775 = vmatpush1.msra.mxu0 0.0
    %776 = vmatprep.subr.mxu0 0.0
    %777 = vmatpush1.msra.mxu0 0.0
    %778 = vmatprep.subr.mxu0 0.0
    %779 = vmatpush1.msra.mxu0 0.0
    %780 = vmatprep.subr.mxu0 0.0
    %781 = vmatpush1.msra.mxu0 0.0
    %782 = vmatprep.subr.mxu0 0.0
    %783 = vmatpush1.msra.mxu0 0.0
    %784 = vmatprep.subr.mxu0 0.0
    %785 = vmatpush1.msra.mxu0 0.0
    %786 = vmatprep.subr.mxu0 0.0
    %787 = vmatpush1.msra.mxu0 0.0
    %788 = vmatprep.subr.mxu0 0.0
    %789 = vmatpush1.msra.mxu0 0.0
    %790 = vmatprep.subr.mxu0 0.0
    %791 = vmatpush1.msra.mxu0 0.0
    %792 = vmatprep.subr.mxu0 0.0
    %793 = vmatpush1.msra.mxu0 0.0
    %794 = vmatprep.subr.mxu0 0.0
    %795 = vmatpush1.msra.mxu0 0.0
    %796 = vmatprep.subr.mxu0 0.0
    %797 = vmatpush1.msra.mxu0 0.0
    %798 = vmatprep.subr.mxu0 0.0
    %799 = vmatpush1.msra.mxu0 0.0
    %800 = vmatprep.subr.mxu0 0.0
    %801 = vmatpush1.msra.mxu0 0.0
    %802 = vmatprep.subr.mxu0 0.0
    %803 = vmatpush1.msra.mxu0 0.0
    %804 = vmatprep.subr.mxu0 0.0
    %805 = vmatpush1.msra.mxu0 0.0
    %806 = vmatprep.subr.mxu0 0.0
    %807 = vmatpush1.msra.mxu0 0.0
    %808 = vmatprep.subr.mxu0 0.0
    %809 = vmatpush1.msra.mxu0 0.0
    %810 = vmatprep.subr.mxu0 0.0
    %811 = vmatpush1.msra.mxu0 0.0
    %812 = vmatprep.subr.mxu0 0.0
    %813 = vmatpush1.msra.mxu0 0.0
    %814 = vmatprep.subr.mxu0 0.0
    %815 = vmatpush1.msra.mxu0 0.0
    %816 = vmatprep.subr.mxu0 0.0
    %817 = vmatpush1.msra.mxu0 0.0
    %818 = vmatprep.subr.mxu0 0.0
    %819 = vmatpush1.msra.mxu0 0.0
    %820 = vmatprep.subr.mxu0 0.0
    %821 = vmatpush1.msra.mxu0 0.0
    %822 = vmatprep.subr.mxu0 0.0
    %823 = vmatpush1.msra.mxu0 0.0
    %824 = vmatprep.subr.mxu0 0.0
    %825 = vmatpush1.msra.mxu0 0.0
    %826 = vmatprep.subr.mxu0 0.0
    %827 = vmatpush1.msra.mxu0 0.0
    %828 = vmatprep.mubr.f32.mxu0 0.0
    %829 = vmatmul.mubr.f32.gmra.mrb[0].mxu0 %v762
    %v830 = vpop.f32.mrb[0].mxu0
    %v831 = vadd.f32 0.0, %v830
    %v832 = vpop.f32.mrb[0].mxu0
    %833 = vdwg.mxu0
    %834 = vrot.lane.b32.xlu0 %v247, 56
    %v835 = vpop.permute.xlu0 %834
    %v838 = vsel %vm253, %v757, 0
    %840 = vmatprep.subr.mxu0 0.0
    %841 = vmatpush1.msra.mxu0 %v835
    %842 = vmatprep.subr.mxu0 0.0
    %843 = vmatpush1.msra.mxu0 0.0
    %844 = vmatprep.subr.mxu0 0.0
    %845 = vmatpush1.msra.mxu0 0.0
    %846 = vmatprep.subr.mxu0 0.0
    %847 = vmatpush1.msra.mxu0 0.0
    %848 = vmatprep.subr.mxu0 0.0
    %849 = vmatpush1.msra.mxu0 0.0
    %850 = vmatprep.subr.mxu0 0.0
    %851 = vmatpush1.msra.mxu0 0.0
    %852 = vmatprep.subr.mxu0 0.0
    %853 = vmatpush1.msra.mxu0 0.0
    %854 = vmatprep.subr.mxu0 0.0
    %855 = vmatpush1.msra.mxu0 0.0
    %856 = vmatprep.subr.mxu0 0.0
    %857 = vmatpush1.msra.mxu0 0.0
    %858 = vmatprep.subr.mxu0 0.0
    %859 = vmatpush1.msra.mxu0 0.0
    %860 = vmatprep.subr.mxu0 0.0
    %861 = vmatpush1.msra.mxu0 0.0
    %862 = vmatprep.subr.mxu0 0.0
    %863 = vmatpush1.msra.mxu0 0.0
    %864 = vmatprep.subr.mxu0 0.0
    %865 = vmatpush1.msra.mxu0 0.0
    %866 = vmatprep.subr.mxu0 0.0
    %867 = vmatpush1.msra.mxu0 0.0
    %868 = vmatprep.subr.mxu0 0.0
    %869 = vmatpush1.msra.mxu0 0.0
    %870 = vmatprep.subr.mxu0 0.0
    %871 = vmatpush1.msra.mxu0 0.0
    %872 = vmatprep.subr.mxu0 0.0
    %873 = vmatpush1.msra.mxu0 0.0
    %874 = vmatprep.subr.mxu0 0.0
    %875 = vmatpush1.msra.mxu0 0.0
    %876 = vmatprep.subr.mxu0 0.0
    %877 = vmatpush1.msra.mxu0 0.0
    %878 = vmatprep.subr.mxu0 0.0
    %879 = vmatpush1.msra.mxu0 0.0
    %880 = vmatprep.subr.mxu0 0.0
    %881 = vmatpush1.msra.mxu0 0.0
    %882 = vmatprep.subr.mxu0 0.0
    %883 = vmatpush1.msra.mxu0 0.0
    %884 = vmatprep.subr.mxu0 0.0
    %885 = vmatpush1.msra.mxu0 0.0
    %886 = vmatprep.subr.mxu0 0.0
    %887 = vmatpush1.msra.mxu0 0.0
    %888 = vmatprep.subr.mxu0 0.0
    %889 = vmatpush1.msra.mxu0 0.0
    %890 = vmatprep.subr.mxu0 0.0
    %891 = vmatpush1.msra.mxu0 0.0
    %892 = vmatprep.subr.mxu0 0.0
    %893 = vmatpush1.msra.mxu0 0.0
    %894 = vmatprep.subr.mxu0 0.0
    %895 = vmatpush1.msra.mxu0 0.0
    %896 = vmatprep.subr.mxu0 0.0
    %897 = vmatpush1.msra.mxu0 0.0
    %898 = vmatprep.subr.mxu0 0.0
    %899 = vmatpush1.msra.mxu0 0.0
    %900 = vmatprep.subr.mxu0 0.0
    %901 = vmatpush1.msra.mxu0 0.0
    %902 = vmatprep.subr.mxu0 0.0
    %903 = vmatpush1.msra.mxu0 0.0
    %904 = vmatprep.mubr.f32.mxu0 0.0
    %905 = vmatmul.mubr.f32.gmra.mrb[0].mxu0 %v838
    %v906 = vpop.f32.mrb[0].mxu0
    %v907 = vadd.f32 0.0, %v906
    %v908 = vpop.f32.mrb[0].mxu0
    %909 = vdwg.mxu0
    %s910 = scalar_lea.vmem %s8, 8
    %v911 = vld [vmem:[%s910] sm:$0xff]
    %v913 = vsel %vm253, %v831, 0
    %v916 = vsel %vm253, %v907, 0
    %918 = vmatprep.subr.mxu0 0.0
    %919 = vmatpush1.msra.mxu0 %v911
    %920 = vmatprep.subr.mxu0 0.0
    %921 = vmatpush1.msra.mxu0 0.0
    %922 = vmatprep.subr.mxu0 0.0
    %923 = vmatpush1.msra.mxu0 0.0
    %924 = vmatprep.subr.mxu0 0.0
    %925 = vmatpush1.msra.mxu0 0.0
    %926 = vmatprep.subr.mxu0 0.0
    %927 = vmatpush1.msra.mxu0 0.0
    %928 = vmatprep.subr.mxu0 0.0
    %929 = vmatpush1.msra.mxu0 0.0
    %930 = vmatprep.subr.mxu0 0.0
    %931 = vmatpush1.msra.mxu0 0.0
    %932 = vmatprep.subr.mxu0 0.0
    %933 = vmatpush1.msra.mxu0 0.0
    %934 = vmatprep.subr.mxu0 0.0
    %935 = vmatpush1.msra.mxu0 0.0
    %936 = vmatprep.subr.mxu0 0.0
    %937 = vmatpush1.msra.mxu0 0.0
    %938 = vmatprep.subr.mxu0 0.0
    %939 = vmatpush1.msra.mxu0 0.0
    %940 = vmatprep.subr.mxu0 0.0
    %941 = vmatpush1.msra.mxu0 0.0
    %942 = vmatprep.subr.mxu0 0.0
    %943 = vmatpush1.msra.mxu0 0.0
    %944 = vmatprep.subr.mxu0 0.0
    %945 = vmatpush1.msra.mxu0 0.0
    %946 = vmatprep.subr.mxu0 0.0
    %947 = vmatpush1.msra.mxu0 0.0
    %948 = vmatprep.subr.mxu0 0.0
    %949 = vmatpush1.msra.mxu0 0.0
    %950 = vmatprep.subr.mxu0 0.0
    %951 = vmatpush1.msra.mxu0 0.0
    %952 = vmatprep.subr.mxu0 0.0
    %953 = vmatpush1.msra.mxu0 0.0
    %954 = vmatprep.subr.mxu0 0.0
    %955 = vmatpush1.msra.mxu0 0.0
    %956 = vmatprep.subr.mxu0 0.0
    %957 = vmatpush1.msra.mxu0 0.0
    %958 = vmatprep.subr.mxu0 0.0
    %959 = vmatpush1.msra.mxu0 0.0
    %960 = vmatprep.subr.mxu0 0.0
    %961 = vmatpush1.msra.mxu0 0.0
    %962 = vmatprep.subr.mxu0 0.0
    %963 = vmatpush1.msra.mxu0 0.0
    %964 = vmatprep.subr.mxu0 0.0
    %965 = vmatpush1.msra.mxu0 0.0
    %966 = vmatprep.subr.mxu0 0.0
    %967 = vmatpush1.msra.mxu0 0.0
    %968 = vmatprep.subr.mxu0 0.0
    %969 = vmatpush1.msra.mxu0 0.0
    %970 = vmatprep.subr.mxu0 0.0
    %971 = vmatpush1.msra.mxu0 0.0
    %972 = vmatprep.subr.mxu0 0.0
    %973 = vmatpush1.msra.mxu0 0.0
    %974 = vmatprep.subr.mxu0 0.0
    %975 = vmatpush1.msra.mxu0 0.0
    %976 = vmatprep.subr.mxu0 0.0
    %977 = vmatpush1.msra.mxu0 0.0
    %978 = vmatprep.subr.mxu0 0.0
    %979 = vmatpush1.msra.mxu0 0.0
    %980 = vmatprep.subr.mxu0 0.0
    %981 = vmatpush1.msra.mxu0 0.0
    %982 = vmatprep.mubr.f32.mxu0 0.0
    %983 = vmatmul.mubr.f32.gmra.mrb[0].mxu0 %v913
    %v984 = vpop.f32.mrb[0].mxu0
    %v985 = vadd.f32 0.0, %v984
    %v986 = vpop.f32.mrb[0].mxu0
    %987 = vmatprep.mubr.f32.mxu0 0.0
    %988 = vmatmul.mubr.f32.gmra.mrb[0].mxu0 %v916
    %v989 = vpop.f32.mrb[0].mxu0
    %v990 = vadd.f32 0.0, %v989
    %v991 = vpop.f32.mrb[0].mxu0
    %992 = vdwg.mxu0
    %v994 = vsel %vm253, %v500, 0
    %v997 = vsel %vm253, %v576, 0
    %999 = vmatprep.subr.mxu0 0.0
    %1000 = vmatpush1.msra.mxu0 %v579
    %1001 = vmatprep.subr.mxu0 0.0
    %1002 = vmatpush1.msra.mxu0 0.0
    %1003 = vmatprep.subr.mxu0 0.0
    %1004 = vmatpush1.msra.mxu0 0.0
    %1005 = vmatprep.subr.mxu0 0.0
    %1006 = vmatpush1.msra.mxu0 0.0
    %1007 = vmatprep.subr.mxu0 0.0
    %1008 = vmatpush1.msra.mxu0 0.0
    %1009 = vmatprep.subr.mxu0 0.0
    %1010 = vmatpush1.msra.mxu0 0.0
    %1011 = vmatprep.subr.mxu0 0.0
    %1012 = vmatpush1.msra.mxu0 0.0
    %1013 = vmatprep.subr.mxu0 0.0
    %1014 = vmatpush1.msra.mxu0 0.0
    %1015 = vmatprep.subr.mxu0 0.0
    %1016 = vmatpush1.msra.mxu0 0.0
    %1017 = vmatprep.subr.mxu0 0.0
    %1018 = vmatpush1.msra.mxu0 0.0
    %1019 = vmatprep.subr.mxu0 0.0
    %1020 = vmatpush1.msra.mxu0 0.0
    %1021 = vmatprep.subr.mxu0 0.0
    %1022 = vmatpush1.msra.mxu0 0.0
    %1023 = vmatprep.subr.mxu0 0.0
    %1024 = vmatpush1.msra.mxu0 0.0
    %1025 = vmatprep.subr.mxu0 0.0
    %1026 = vmatpush1.msra.mxu0 0.0
    %1027 = vmatprep.subr.mxu0 0.0
    %1028 = vmatpush1.msra.mxu0 0.0
    %1029 = vmatprep.subr.mxu0 0.0
    %1030 = vmatpush1.msra.mxu0 0.0
    %1031 = vmatprep.subr.mxu0 0.0
    %1032 = vmatpush1.msra.mxu0 0.0
    %1033 = vmatprep.subr.mxu0 0.0
    %1034 = vmatpush1.msra.mxu0 0.0
    %1035 = vmatprep.subr.mxu0 0.0
    %1036 = vmatpush1.msra.mxu0 0.0
    %1037 = vmatprep.subr.mxu0 0.0
    %1038 = vmatpush1.msra.mxu0 0.0
    %1039 = vmatprep.subr.mxu0 0.0
    %1040 = vmatpush1.msra.mxu0 0.0
    %1041 = vmatprep.subr.mxu0 0.0
    %1042 = vmatpush1.msra.mxu0 0.0
    %1043 = vmatprep.subr.mxu0 0.0
    %1044 = vmatpush1.msra.mxu0 0.0
    %1045 = vmatprep.subr.mxu0 0.0
    %1046 = vmatpush1.msra.mxu0 0.0
    %1047 = vmatprep.subr.mxu0 0.0
    %1048 = vmatpush1.msra.mxu0 0.0
    %1049 = vmatprep.subr.mxu0 0.0
    %1050 = vmatpush1.msra.mxu0 0.0
    %1051 = vmatprep.subr.mxu0 0.0
    %1052 = vmatpush1.msra.mxu0 0.0
    %1053 = vmatprep.subr.mxu0 0.0
    %1054 = vmatpush1.msra.mxu0 0.0
    %1055 = vmatprep.subr.mxu0 0.0
    %1056 = vmatpush1.msra.mxu0 0.0
    %1057 = vmatprep.subr.mxu0 0.0
    %1058 = vmatpush1.msra.mxu0 0.0
    %1059 = vmatprep.subr.mxu0 0.0
    %1060 = vmatpush1.msra.mxu0 0.0
    %1061 = vmatprep.subr.mxu0 0.0
    %1062 = vmatpush1.msra.mxu0 0.0
    %1063 = vmatprep.mubr.f32.mxu0 0.0
    %1064 = vmatmul.mubr.f32.gmra.mrb[0].mxu0 %v994
    %v1065 = vpop.f32.mrb[0].mxu0
    %v1066 = vadd.f32 %v985, %v1065
    %v1067 = vpop.f32.mrb[0].mxu0
    %1068 = vmatprep.mubr.f32.mxu0 0.0
    %1069 = vmatmul.mubr.f32.gmra.mrb[0].mxu0 %v997
    %v1070 = vpop.f32.mrb[0].mxu0
    %v1071 = vadd.f32 %v990, %v1070
    %v1072 = vpop.f32.mrb[0].mxu0
    %1073 = vdwg.mxu0
    %1074 = vrot.lane.b32.xlu0 %v242, 112
    %v1075 = vpop.permute.xlu0 %1074
    %1076 = vrot.lane.b32.xlu0 %v242, 80
    %v1077 = vpop.permute.xlu0 %1076
    %v1078 = vsel %vm253, %v1075, 0
    %v1080 = vsel %vm253, %v1077, 0
    %1082 = vmatprep.subr.mxu0 0.0
    %1083 = vmatpush1.xpose.msra.mxu0 %v1080
    %1084 = vmatprep.subr.mxu0 0.0
    %1085 = vmatpush1.xpose.msra.mxu0 0.0
    %1086 = vmatprep.subr.mxu0 0.0
    %1087 = vmatpush1.xpose.msra.mxu0 0.0
    %1088 = vmatprep.subr.mxu0 0.0
    %1089 = vmatpush1.xpose.msra.mxu0 0.0
    %1090 = vmatprep.subr.mxu0 0.0
    %1091 = vmatpush1.xpose.msra.mxu0 0.0
    %1092 = vmatprep.subr.mxu0 0.0
    %1093 = vmatpush1.xpose.msra.mxu0 0.0
    %1094 = vmatprep.subr.mxu0 0.0
    %1095 = vmatpush1.xpose.msra.mxu0 0.0
    %1096 = vmatprep.subr.mxu0 0.0
    %1097 = vmatpush1.xpose.msra.mxu0 0.0
    %1098 = vmatprep.subr.mxu0 0.0
    %1099 = vmatpush1.xpose.msra.mxu0 0.0
    %1100 = vmatprep.subr.mxu0 0.0
    %1101 = vmatpush1.xpose.msra.mxu0 0.0
    %1102 = vmatprep.subr.mxu0 0.0
    %1103 = vmatpush1.xpose.msra.mxu0 0.0
    %1104 = vmatprep.subr.mxu0 0.0
    %1105 = vmatpush1.xpose.msra.mxu0 0.0
    %1106 = vmatprep.subr.mxu0 0.0
    %1107 = vmatpush1.xpose.msra.mxu0 0.0
    %1108 = vmatprep.subr.mxu0 0.0
    %1109 = vmatpush1.xpose.msra.mxu0 0.0
    %1110 = vmatprep.subr.mxu0 0.0
    %1111 = vmatpush1.xpose.msra.mxu0 0.0
    %1112 = vmatprep.subr.mxu0 0.0
    %1113 = vmatpush1.xpose.msra.mxu0 0.0
    %1114 = vmatprep.subr.mxu0 0.0
    %1115 = vmatpush1.xpose.msra.mxu0 0.0
    %1116 = vmatprep.subr.mxu0 0.0
    %1117 = vmatpush1.xpose.msra.mxu0 0.0
    %1118 = vmatprep.subr.mxu0 0.0
    %1119 = vmatpush1.xpose.msra.mxu0 0.0
    %1120 = vmatprep.subr.mxu0 0.0
    %1121 = vmatpush1.xpose.msra.mxu0 0.0
    %1122 = vmatprep.subr.mxu0 0.0
    %1123 = vmatpush1.xpose.msra.mxu0 0.0
    %1124 = vmatprep.subr.mxu0 0.0
    %1125 = vmatpush1.xpose.msra.mxu0 0.0
    %1126 = vmatprep.subr.mxu0 0.0
    %1127 = vmatpush1.xpose.msra.mxu0 0.0
    %1128 = vmatprep.subr.mxu0 0.0
    %1129 = vmatpush1.xpose.msra.mxu0 0.0
    %1130 = vmatprep.subr.mxu0 0.0
    %1131 = vmatpush1.xpose.msra.mxu0 0.0
    %1132 = vmatprep.subr.mxu0 0.0
    %1133 = vmatpush1.xpose.msra.mxu0 0.0
    %1134 = vmatprep.subr.mxu0 0.0
    %1135 = vmatpush1.xpose.msra.mxu0 0.0
    %1136 = vmatprep.subr.mxu0 0.0
    %1137 = vmatpush1.xpose.msra.mxu0 0.0
    %1138 = vmatprep.subr.mxu0 0.0
    %1139 = vmatpush1.xpose.msra.mxu0 0.0
    %1140 = vmatprep.subr.mxu0 0.0
    %1141 = vmatpush1.xpose.msra.mxu0 0.0
    %1142 = vmatprep.subr.mxu0 0.0
    %1143 = vmatpush1.xpose.msra.mxu0 0.0
    %1144 = vmatprep.subr.mxu0 0.0
    %1145 = vmatpush1.xpose.msra.mxu0 0.0
    %1146 = vmatprep.mubr.f32.mxu0 0.0
    %1147 = vmatmul.mubr.f32.gmra.mrb[0].mxu0 %v1078
    %v1148 = vpop.f32.mrb[0].mxu0
    %v1149 = vadd.f32 %v92, %v1148
    %v1150 = vpop.f32.mrb[0].mxu0
    %1151 = vdwg.mxu0
    %1152 = vrot.lane.b32.xlu0 %v247, 112
    %v1153 = vpop.permute.xlu0 %1152
    %1154 = vrot.lane.b32.xlu0 %v247, 80
    %v1155 = vpop.permute.xlu0 %1154
    %v1156 = vsel %vm253, %v1153, 0
    %v1158 = vsel %vm253, %v1155, 0
    %1160 = vmatprep.subr.mxu0 0.0
    %1161 = vmatpush1.xpose.msra.mxu0 %v1158
    %1162 = vmatprep.subr.mxu0 0.0
    %1163 = vmatpush1.xpose.msra.mxu0 0.0
    %1164 = vmatprep.subr.mxu0 0.0
    %1165 = vmatpush1.xpose.msra.mxu0 0.0
    %1166 = vmatprep.subr.mxu0 0.0
    %1167 = vmatpush1.xpose.msra.mxu0 0.0
    %1168 = vmatprep.subr.mxu0 0.0
    %1169 = vmatpush1.xpose.msra.mxu0 0.0
    %1170 = vmatprep.subr.mxu0 0.0
    %1171 = vmatpush1.xpose.msra.mxu0 0.0
    %1172 = vmatprep.subr.mxu0 0.0
    %1173 = vmatpush1.xpose.msra.mxu0 0.0
    %1174 = vmatprep.subr.mxu0 0.0
    %1175 = vmatpush1.xpose.msra.mxu0 0.0
    %1176 = vmatprep.subr.mxu0 0.0
    %1177 = vmatpush1.xpose.msra.mxu0 0.0
    %1178 = vmatprep.subr.mxu0 0.0
    %1179 = vmatpush1.xpose.msra.mxu0 0.0
    %1180 = vmatprep.subr.mxu0 0.0
    %1181 = vmatpush1.xpose.msra.mxu0 0.0
    %1182 = vmatprep.subr.mxu0 0.0
    %1183 = vmatpush1.xpose.msra.mxu0 0.0
    %1184 = vmatprep.subr.mxu0 0.0
    %1185 = vmatpush1.xpose.msra.mxu0 0.0
    %1186 = vmatprep.subr.mxu0 0.0
    %1187 = vmatpush1.xpose.msra.mxu0 0.0
    %1188 = vmatprep.subr.mxu0 0.0
    %1189 = vmatpush1.xpose.msra.mxu0 0.0
    %1190 = vmatprep.subr.mxu0 0.0
    %1191 = vmatpush1.xpose.msra.mxu0 0.0
    %1192 = vmatprep.subr.mxu0 0.0
    %1193 = vmatpush1.xpose.msra.mxu0 0.0
    %1194 = vmatprep.subr.mxu0 0.0
    %1195 = vmatpush1.xpose.msra.mxu0 0.0
    %1196 = vmatprep.subr.mxu0 0.0
    %1197 = vmatpush1.xpose.msra.mxu0 0.0
    %1198 = vmatprep.subr.mxu0 0.0
    %1199 = vmatpush1.xpose.msra.mxu0 0.0
    %1200 = vmatprep.subr.mxu0 0.0
    %1201 = vmatpush1.xpose.msra.mxu0 0.0
    %1202 = vmatprep.subr.mxu0 0.0
    %1203 = vmatpush1.xpose.msra.mxu0 0.0
    %1204 = vmatprep.subr.mxu0 0.0
    %1205 = vmatpush1.xpose.msra.mxu0 0.0
    %1206 = vmatprep.subr.mxu0 0.0
    %1207 = vmatpush1.xpose.msra.mxu0 0.0
    %1208 = vmatprep.subr.mxu0 0.0
    %1209 = vmatpush1.xpose.msra.mxu0 0.0
    %1210 = vmatprep.subr.mxu0 0.0
    %1211 = vmatpush1.xpose.msra.mxu0 0.0
    %1212 = vmatprep.subr.mxu0 0.0
    %1213 = vmatpush1.xpose.msra.mxu0 0.0
    %1214 = vmatprep.subr.mxu0 0.0
    %1215 = vmatpush1.xpose.msra.mxu0 0.0
    %1216 = vmatprep.subr.mxu0 0.0
    %1217 = vmatpush1.xpose.msra.mxu0 0.0
    %1218 = vmatprep.subr.mxu0 0.0
    %1219 = vmatpush1.xpose.msra.mxu0 0.0
    %1220 = vmatprep.subr.mxu0 0.0
    %1221 = vmatpush1.xpose.msra.mxu0 0.0
    %1222 = vmatprep.subr.mxu0 0.0
    %1223 = vmatpush1.xpose.msra.mxu0 0.0
    %1224 = vmatprep.mubr.f32.mxu0 0.0
    %1225 = vmatmul.mubr.f32.gmra.mrb[0].mxu0 %v1156
    %v1226 = vpop.f32.mrb[0].mxu0
    %v1227 = vadd.f32 %v96, %v1226
    %v1228 = vpop.f32.mrb[0].mxu0
    %1229 = vdwg.mxu0
    %v1230 = vsel %vm253, %v1149, -inf
    %1231 = vmax.xlane.f32.xlu0 %v1230
    %v1232 = vpop.xlane.xlu0 %1231
    %v1233 = vsel %vm253, %v1227, -inf
    %1234 = vmax.xlane.f32.xlu0 %v1233
    %v1235 = vpop.xlane.xlu0 %1234
    %v1236 = vsub.f32 %v1149, %v1232
    %v1237 = vsub.f32 %v1227, %v1235
    %v1238 = vmul.f32 %v1236, 1.442695
    %v1239 = vpow.pop %v1238
    %v1240 = vmul.f32 %v1237, 1.442695
    %v1241 = vpow.pop %v1240
    %v1242 = vsel %vm253, %v1239, 0.0
    %1243 = vadd.xlane.f32.xlu0 %v1242
    %v1244 = vpop.xlane.xlu0 %1243
    %v1245 = vsel %vm253, %v1241, 0.0
    %1246 = vadd.xlane.f32.xlu0 %v1245
    %v1247 = vpop.xlane.xlu0 %1246
    %v1248 = vrcp.pop %v1244
    %v1249 = vrcp.pop %v1247
    %v1250 = vmul.f32 %v1239, %v1248
    %v1251 = vmul.f32 %v1241, %v1249
    %1252 = vrot.lane.b32.xlu0 %v242, 48
    %v1253 = vpop.permute.xlu0 %1252
    %v1256 = vsel %vm253, %v1250, 0
    %1258 = vmatprep.subr.mxu0 0.0
    %1259 = vmatpush1.msra.mxu0 %v1253
    %1260 = vmatprep.subr.mxu0 0.0
    %1261 = vmatpush1.msra.mxu0 0.0
    %1262 = vmatprep.subr.mxu0 0.0
    %1263 = vmatpush1.msra.mxu0 0.0
    %1264 = vmatprep.subr.mxu0 0.0
    %1265 = vmatpush1.msra.mxu0 0.0
    %1266 = vmatprep.subr.mxu0 0.0
    %1267 = vmatpush1.msra.mxu0 0.0
    %1268 = vmatprep.subr.mxu0 0.0
    %1269 = vmatpush1.msra.mxu0 0.0
    %1270 = vmatprep.subr.mxu0 0.0
    %1271 = vmatpush1.msra.mxu0 0.0
    %1272 = vmatprep.subr.mxu0 0.0
    %1273 = vmatpush1.msra.mxu0 0.0
    %1274 = vmatprep.subr.mxu0 0.0
    %1275 = vmatpush1.msra.mxu0 0.0
    %1276 = vmatprep.subr.mxu0 0.0
    %1277 = vmatpush1.msra.mxu0 0.0
    %1278 = vmatprep.subr.mxu0 0.0
    %1279 = vmatpush1.msra.mxu0 0.0
    %1280 = vmatprep.subr.mxu0 0.0
    %1281 = vmatpush1.msra.mxu0 0.0
    %1282 = vmatprep.subr.mxu0 0.0
    %1283 = vmatpush1.msra.mxu0 0.0
    %1284 = vmatprep.subr.mxu0 0.0
    %1285 = vmatpush1.msra.mxu0 0.0
    %1286 = vmatprep.subr.mxu0 0.0
    %1287 = vmatpush1.msra.mxu0 0.0
    %1288 = vmatprep.subr.mxu0 0.0
    %1289 = vmatpush1.msra.mxu0 0.0
    %1290 = vmatprep.subr.mxu0 0.0
    %1291 = vmatpush1.msra.mxu0 0.0
    %1292 = vmatprep.subr.mxu0 0.0
    %1293 = vmatpush1.msra.mxu0 0.0
    %1294 = vmatprep.subr.mxu0 0.0
    %1295 = vmatpush1.msra.mxu0 0.0
    %1296 = vmatprep.subr.mxu0 0.0
    %1297 = vmatpush1.msra.mxu0 0.0
    %1298 = vmatprep.subr.mxu0 0.0
    %1299 = vmatpush1.msra.mxu0 0.0
    %1300 = vmatprep.subr.mxu0 0.0
    %1301 = vmatpush1.msra.mxu0 0.0
    %1302 = vmatprep.subr.mxu0 0.0
    %1303 = vmatpush1.msra.mxu0 0.0
    %1304 = vmatprep.subr.mxu0 0.0
    %1305 = vmatpush1.msra.mxu0 0.0
    %1306 = vmatprep.subr.mxu0 0.0
    %1307 = vmatpush1.msra.mxu0 0.0
    %1308 = vmatprep.subr.mxu0 0.0
    %1309 = vmatpush1.msra.mxu0 0.0
    %1310 = vmatprep.subr.mxu0 0.0
    %1311 = vmatpush1.msra.mxu0 0.0
    %1312 = vmatprep.subr.mxu0 0.0
    %1313 = vmatpush1.msra.mxu0 0.0
    %1314 = vmatprep.subr.mxu0 0.0
    %1315 = vmatpush1.msra.mxu0 0.0
    %1316 = vmatprep.subr.mxu0 0.0
    %1317 = vmatpush1.msra.mxu0 0.0
    %1318 = vmatprep.subr.mxu0 0.0
    %1319 = vmatpush1.msra.mxu0 0.0
    %1320 = vmatprep.subr.mxu0 0.0
    %1321 = vmatpush1.msra.mxu0 0.0
    %1322 = vmatprep.mubr.f32.mxu0 0.0
    %1323 = vmatmul.mubr.f32.gmra.mrb[0].mxu0 %v1256
    %v1324 = vpop.f32.mrb[0].mxu0
    %v1325 = vadd.f32 0.0, %v1324
    %v1326 = vpop.f32.mrb[0].mxu0
    %1327 = vdwg.mxu0
    %1328 = vrot.lane.b32.xlu0 %v247, 48
    %v1329 = vpop.permute.xlu0 %1328
    %v1332 = vsel %vm253, %v1251, 0
    %1334 = vmatprep.subr.mxu0 0.0
    %1335 = vmatpush1.msra.mxu0 %v1329
    %1336 = vmatprep.subr.mxu0 0.0
    %1337 = vmatpush1.msra.mxu0 0.0
    %1338 = vmatprep.subr.mxu0 0.0
    %1339 = vmatpush1.msra.mxu0 0.0
    %1340 = vmatprep.subr.mxu0 0.0
    %1341 = vmatpush1.msra.mxu0 0.0
    %1342 = vmatprep.subr.mxu0 0.0
    %1343 = vmatpush1.msra.mxu0 0.0
    %1344 = vmatprep.subr.mxu0 0.0
    %1345 = vmatpush1.msra.mxu0 0.0
    %1346 = vmatprep.subr.mxu0 0.0
    %1347 = vmatpush1.msra.mxu0 0.0
    %1348 = vmatprep.subr.mxu0 0.0
    %1349 = vmatpush1.msra.mxu0 0.0
    %1350 = vmatprep.subr.mxu0 0.0
    %1351 = vmatpush1.msra.mxu0 0.0
    %1352 = vmatprep.subr.mxu0 0.0
    %1353 = vmatpush1.msra.mxu0 0.0
    %1354 = vmatprep.subr.mxu0 0.0
    %1355 = vmatpush1.msra.mxu0 0.0
    %1356 = vmatprep.subr.mxu0 0.0
    %1357 = vmatpush1.msra.mxu0 0.0
    %1358 = vmatprep.subr.mxu0 0.0
    %1359 = vmatpush1.msra.mxu0 0.0
    %1360 = vmatprep.subr.mxu0 0.0
    %1361 = vmatpush1.msra.mxu0 0.0
    %1362 = vmatprep.subr.mxu0 0.0
    %1363 = vmatpush1.msra.mxu0 0.0
    %1364 = vmatprep.subr.mxu0 0.0
    %1365 = vmatpush1.msra.mxu0 0.0
    %1366 = vmatprep.subr.mxu0 0.0
    %1367 = vmatpush1.msra.mxu0 0.0
    %1368 = vmatprep.subr.mxu0 0.0
    %1369 = vmatpush1.msra.mxu0 0.0
    %1370 = vmatprep.subr.mxu0 0.0
    %1371 = vmatpush1.msra.mxu0 0.0
    %1372 = vmatprep.subr.mxu0 0.0
    %1373 = vmatpush1.msra.mxu0 0.0
    %1374 = vmatprep.subr.mxu0 0.0
    %1375 = vmatpush1.msra.mxu0 0.0
    %1376 = vmatprep.subr.mxu0 0.0
    %1377 = vmatpush1.msra.mxu0 0.0
    %1378 = vmatprep.subr.mxu0 0.0
    %1379 = vmatpush1.msra.mxu0 0.0
    %1380 = vmatprep.subr.mxu0 0.0
    %1381 = vmatpush1.msra.mxu0 0.0
    %1382 = vmatprep.subr.mxu0 0.0
    %1383 = vmatpush1.msra.mxu0 0.0
    %1384 = vmatprep.subr.mxu0 0.0
    %1385 = vmatpush1.msra.mxu0 0.0
    %1386 = vmatprep.subr.mxu0 0.0
    %1387 = vmatpush1.msra.mxu0 0.0
    %1388 = vmatprep.subr.mxu0 0.0
    %1389 = vmatpush1.msra.mxu0 0.0
    %1390 = vmatprep.subr.mxu0 0.0
    %1391 = vmatpush1.msra.mxu0 0.0
    %1392 = vmatprep.subr.mxu0 0.0
    %1393 = vmatpush1.msra.mxu0 0.0
    %1394 = vmatprep.subr.mxu0 0.0
    %1395 = vmatpush1.msra.mxu0 0.0
    %1396 = vmatprep.subr.mxu0 0.0
    %1397 = vmatpush1.msra.mxu0 0.0
    %1398 = vmatprep.mubr.f32.mxu0 0.0
    %1399 = vmatmul.mubr.f32.gmra.mrb[0].mxu0 %v1332
    %v1400 = vpop.f32.mrb[0].mxu0
    %v1401 = vadd.f32 0.0, %v1400
    %v1402 = vpop.f32.mrb[0].mxu0
    %1403 = vdwg.mxu0
    %s1404 = scalar_lea.vmem %s8, 16
    %v1405 = vld [vmem:[%s1404] sm:$0xff]
    %v1407 = vsel %vm253, %v1325, 0
    %v1410 = vsel %vm253, %v1401, 0
    %1412 = vmatprep.subr.mxu0 0.0
    %1413 = vmatpush1.msra.mxu0 %v1405
    %1414 = vmatprep.subr.mxu0 0.0
    %1415 = vmatpush1.msra.mxu0 0.0
    %1416 = vmatprep.subr.mxu0 0.0
    %1417 = vmatpush1.msra.mxu0 0.0
    %1418 = vmatprep.subr.mxu0 0.0
    %1419 = vmatpush1.msra.mxu0 0.0
    %1420 = vmatprep.subr.mxu0 0.0
    %1421 = vmatpush1.msra.mxu0 0.0
    %1422 = vmatprep.subr.mxu0 0.0
    %1423 = vmatpush1.msra.mxu0 0.0
    %1424 = vmatprep.subr.mxu0 0.0
    %1425 = vmatpush1.msra.mxu0 0.0
    %1426 = vmatprep.subr.mxu0 0.0
    %1427 = vmatpush1.msra.mxu0 0.0
    %1428 = vmatprep.subr.mxu0 0.0
    %1429 = vmatpush1.msra.mxu0 0.0
    %1430 = vmatprep.subr.mxu0 0.0
    %1431 = vmatpush1.msra.mxu0 0.0
    %1432 = vmatprep.subr.mxu0 0.0
    %1433 = vmatpush1.msra.mxu0 0.0
    %1434 = vmatprep.subr.mxu0 0.0
    %1435 = vmatpush1.msra.mxu0 0.0
    %1436 = vmatprep.subr.mxu0 0.0
    %1437 = vmatpush1.msra.mxu0 0.0
    %1438 = vmatprep.subr.mxu0 0.0
    %1439 = vmatpush1.msra.mxu0 0.0
    %1440 = vmatprep.subr.mxu0 0.0
    %1441 = vmatpush1.msra.mxu0 0.0
    %1442 = vmatprep.subr.mxu0 0.0
    %1443 = vmatpush1.msra.mxu0 0.0
    %1444 = vmatprep.subr.mxu0 0.0
    %1445 = vmatpush1.msra.mxu0 0.0
    %1446 = vmatprep.subr.mxu0 0.0
    %1447 = vmatpush1.msra.mxu0 0.0
    %1448 = vmatprep.subr.mxu0 0.0
    %1449 = vmatpush1.msra.mxu0 0.0
    %1450 = vmatprep.subr.mxu0 0.0
    %1451 = vmatpush1.msra.mxu0 0.0
    %1452 = vmatprep.subr.mxu0 0.0
    %1453 = vmatpush1.msra.mxu0 0.0
    %1454 = vmatprep.subr.mxu0 0.0
    %1455 = vmatpush1.msra.mxu0 0.0
    %1456 = vmatprep.subr.mxu0 0.0
    %1457 = vmatpush1.msra.mxu0 0.0
    %1458 = vmatprep.subr.mxu0 0.0
    %1459 = vmatpush1.msra.mxu0 0.0
    %1460 = vmatprep.subr.mxu0 0.0
    %1461 = vmatpush1.msra.mxu0 0.0
    %1462 = vmatprep.subr.mxu0 0.0
    %1463 = vmatpush1.msra.mxu0 0.0
    %1464 = vmatprep.subr.mxu0 0.0
    %1465 = vmatpush1.msra.mxu0 0.0
    %1466 = vmatprep.subr.mxu0 0.0
    %1467 = vmatpush1.msra.mxu0 0.0
    %1468 = vmatprep.subr.mxu0 0.0
    %1469 = vmatpush1.msra.mxu0 0.0
    %1470 = vmatprep.subr.mxu0 0.0
    %1471 = vmatpush1.msra.mxu0 0.0
    %1472 = vmatprep.subr.mxu0 0.0
    %1473 = vmatpush1.msra.mxu0 0.0
    %1474 = vmatprep.subr.mxu0 0.0
    %1475 = vmatpush1.msra.mxu0 0.0
    %1476 = vmatprep.mubr.f32.mxu0 0.0
    %1477 = vmatmul.mubr.f32.gmra.mrb[0].mxu0 %v1407
    %v1478 = vpop.f32.mrb[0].mxu0
    %v1479 = vadd.f32 0.0, %v1478
    %v1480 = vpop.f32.mrb[0].mxu0
    %1481 = vmatprep.mubr.f32.mxu0 0.0
    %1482 = vmatmul.mubr.f32.gmra.mrb[0].mxu0 %v1410
    %v1483 = vpop.f32.mrb[0].mxu0
    %v1484 = vadd.f32 0.0, %v1483
    %v1485 = vpop.f32.mrb[0].mxu0
    %1486 = vdwg.mxu0
    %v1487 = vadd.f32 %v1066, %v1479
    %v1488 = vadd.f32 %v1071, %v1484
    %1489 = vrot.lane.b32.xlu0 %v242, 104
    %v1490 = vpop.permute.xlu0 %1489
    %1491 = vrot.lane.b32.xlu0 %v242, 72
    %v1492 = vpop.permute.xlu0 %1491
    %v1493 = vsel %vm253, %v1490, 0
    %v1495 = vsel %vm253, %v1492, 0
    %1497 = vmatprep.subr.mxu0 0.0
    %1498 = vmatpush1.xpose.msra.mxu0 %v1495
    %1499 = vmatprep.subr.mxu0 0.0
    %1500 = vmatpush1.xpose.msra.mxu0 0.0
    %1501 = vmatprep.subr.mxu0 0.0
    %1502 = vmatpush1.xpose.msra.mxu0 0.0
    %1503 = vmatprep.subr.mxu0 0.0
    %1504 = vmatpush1.xpose.msra.mxu0 0.0
    %1505 = vmatprep.subr.mxu0 0.0
    %1506 = vmatpush1.xpose.msra.mxu0 0.0
    %1507 = vmatprep.subr.mxu0 0.0
    %1508 = vmatpush1.xpose.msra.mxu0 0.0
    %1509 = vmatprep.subr.mxu0 0.0
    %1510 = vmatpush1.xpose.msra.mxu0 0.0
    %1511 = vmatprep.subr.mxu0 0.0
    %1512 = vmatpush1.xpose.msra.mxu0 0.0
    %1513 = vmatprep.subr.mxu0 0.0
    %1514 = vmatpush1.xpose.msra.mxu0 0.0
    %1515 = vmatprep.subr.mxu0 0.0
    %1516 = vmatpush1.xpose.msra.mxu0 0.0
    %1517 = vmatprep.subr.mxu0 0.0
    %1518 = vmatpush1.xpose.msra.mxu0 0.0
    %1519 = vmatprep.subr.mxu0 0.0
    %1520 = vmatpush1.xpose.msra.mxu0 0.0
    %1521 = vmatprep.subr.mxu0 0.0
    %1522 = vmatpush1.xpose.msra.mxu0 0.0
    %1523 = vmatprep.subr.mxu0 0.0
    %1524 = vmatpush1.xpose.msra.mxu0 0.0
    %1525 = vmatprep.subr.mxu0 0.0
    %1526 = vmatpush1.xpose.msra.mxu0 0.0
    %1527 = vmatprep.subr.mxu0 0.0
    %1528 = vmatpush1.xpose.msra.mxu0 0.0
    %1529 = vmatprep.subr.mxu0 0.0
    %1530 = vmatpush1.xpose.msra.mxu0 0.0
    %1531 = vmatprep.subr.mxu0 0.0
    %1532 = vmatpush1.xpose.msra.mxu0 0.0
    %1533 = vmatprep.subr.mxu0 0.0
    %1534 = vmatpush1.xpose.msra.mxu0 0.0
    %1535 = vmatprep.subr.mxu0 0.0
    %1536 = vmatpush1.xpose.msra.mxu0 0.0
    %1537 = vmatprep.subr.mxu0 0.0
    %1538 = vmatpush1.xpose.msra.mxu0 0.0
    %1539 = vmatprep.subr.mxu0 0.0
    %1540 = vmatpush1.xpose.msra.mxu0 0.0
    %1541 = vmatprep.subr.mxu0 0.0
    %1542 = vmatpush1.xpose.msra.mxu0 0.0
    %1543 = vmatprep.subr.mxu0 0.0
    %1544 = vmatpush1.xpose.msra.mxu0 0.0
    %1545 = vmatprep.subr.mxu0 0.0
    %1546 = vmatpush1.xpose.msra.mxu0 0.0
    %1547 = vmatprep.subr.mxu0 0.0
    %1548 = vmatpush1.xpose.msra.mxu0 0.0
    %1549 = vmatprep.subr.mxu0 0.0
    %1550 = vmatpush1.xpose.msra.mxu0 0.0
    %1551 = vmatprep.subr.mxu0 0.0
    %1552 = vmatpush1.xpose.msra.mxu0 0.0
    %1553 = vmatprep.subr.mxu0 0.0
    %1554 = vmatpush1.xpose.msra.mxu0 0.0
    %1555 = vmatprep.subr.mxu0 0.0
    %1556 = vmatpush1.xpose.msra.mxu0 0.0
    %1557 = vmatprep.subr.mxu0 0.0
    %1558 = vmatpush1.xpose.msra.mxu0 0.0
    %1559 = vmatprep.subr.mxu0 0.0
    %1560 = vmatpush1.xpose.msra.mxu0 0.0
    %1561 = vmatprep.mubr.f32.mxu0 0.0
    %1562 = vmatmul.mubr.f32.gmra.mrb[0].mxu0 %v1493
    %v1563 = vpop.f32.mrb[0].mxu0
    %v1564 = vadd.f32 %v92, %v1563
    %v1565 = vpop.f32.mrb[0].mxu0
    %1566 = vdwg.mxu0
    %1567 = vrot.lane.b32.xlu0 %v247, 104
    %v1568 = vpop.permute.xlu0 %1567
    %1569 = vrot.lane.b32.xlu0 %v247, 72
    %v1570 = vpop.permute.xlu0 %1569
    %v1571 = vsel %vm253, %v1568, 0
    %v1573 = vsel %vm253, %v1570, 0
    %1575 = vmatprep.subr.mxu0 0.0
    %1576 = vmatpush1.xpose.msra.mxu0 %v1573
    %1577 = vmatprep.subr.mxu0 0.0
    %1578 = vmatpush1.xpose.msra.mxu0 0.0
    %1579 = vmatprep.subr.mxu0 0.0
    %1580 = vmatpush1.xpose.msra.mxu0 0.0
    %1581 = vmatprep.subr.mxu0 0.0
    %1582 = vmatpush1.xpose.msra.mxu0 0.0
    %1583 = vmatprep.subr.mxu0 0.0
    %1584 = vmatpush1.xpose.msra.mxu0 0.0
    %1585 = vmatprep.subr.mxu0 0.0
    %1586 = vmatpush1.xpose.msra.mxu0 0.0
    %1587 = vmatprep.subr.mxu0 0.0
    %1588 = vmatpush1.xpose.msra.mxu0 0.0
    %1589 = vmatprep.subr.mxu0 0.0
    %1590 = vmatpush1.xpose.msra.mxu0 0.0
    %1591 = vmatprep.subr.mxu0 0.0
    %1592 = vmatpush1.xpose.msra.mxu0 0.0
    %1593 = vmatprep.subr.mxu0 0.0
    %1594 = vmatpush1.xpose.msra.mxu0 0.0
    %1595 = vmatprep.subr.mxu0 0.0
    %1596 = vmatpush1.xpose.msra.mxu0 0.0
    %1597 = vmatprep.subr.mxu0 0.0
    %1598 = vmatpush1.xpose.msra.mxu0 0.0
    %1599 = vmatprep.subr.mxu0 0.0
    %1600 = vmatpush1.xpose.msra.mxu0 0.0
    %1601 = vmatprep.subr.mxu0 0.0
    %1602 = vmatpush1.xpose.msra.mxu0 0.0
    %1603 = vmatprep.subr.mxu0 0.0
    %1604 = vmatpush1.xpose.msra.mxu0 0.0
    %1605 = vmatprep.subr.mxu0 0.0
    %1606 = vmatpush1.xpose.msra.mxu0 0.0
    %1607 = vmatprep.subr.mxu0 0.0
    %1608 = vmatpush1.xpose.msra.mxu0 0.0
    %1609 = vmatprep.subr.mxu0 0.0
    %1610 = vmatpush1.xpose.msra.mxu0 0.0
    %1611 = vmatprep.subr.mxu0 0.0
    %1612 = vmatpush1.xpose.msra.mxu0 0.0
    %1613 = vmatprep.subr.mxu0 0.0
    %1614 = vmatpush1.xpose.msra.mxu0 0.0
    %1615 = vmatprep.subr.mxu0 0.0
    %1616 = vmatpush1.xpose.msra.mxu0 0.0
    %1617 = vmatprep.subr.mxu0 0.0
    %1618 = vmatpush1.xpose.msra.mxu0 0.0
    %1619 = vmatprep.subr.mxu0 0.0
    %1620 = vmatpush1.xpose.msra.mxu0 0.0
    %1621 = vmatprep.subr.mxu0 0.0
    %1622 = vmatpush1.xpose.msra.mxu0 0.0
    %1623 = vmatprep.subr.mxu0 0.0
    %1624 = vmatpush1.xpose.msra.mxu0 0.0
    %1625 = vmatprep.subr.mxu0 0.0
    %1626 = vmatpush1.xpose.msra.mxu0 0.0
    %1627 = vmatprep.subr.mxu0 0.0
    %1628 = vmatpush1.xpose.msra.mxu0 0.0
    %1629 = vmatprep.subr.mxu0 0.0
    %1630 = vmatpush1.xpose.msra.mxu0 0.0
    %1631 = vmatprep.subr.mxu0 0.0
    %1632 = vmatpush1.xpose.msra.mxu0 0.0
    %1633 = vmatprep.subr.mxu0 0.0
    %1634 = vmatpush1.xpose.msra.mxu0 0.0
    %1635 = vmatprep.subr.mxu0 0.0
    %1636 = vmatpush1.xpose.msra.mxu0 0.0
    %1637 = vmatprep.subr.mxu0 0.0
    %1638 = vmatpush1.xpose.msra.mxu0 0.0
    %1639 = vmatprep.mubr.f32.mxu0 0.0
    %1640 = vmatmul.mubr.f32.gmra.mrb[0].mxu0 %v1571
    %v1641 = vpop.f32.mrb[0].mxu0
    %v1642 = vadd.f32 %v96, %v1641
    %v1643 = vpop.f32.mrb[0].mxu0
    %1644 = vdwg.mxu0
    %v1645 = vsel %vm253, %v1564, -inf
    %1646 = vmax.xlane.f32.xlu0 %v1645
    %v1647 = vpop.xlane.xlu0 %1646
    %v1648 = vsel %vm253, %v1642, -inf
    %1649 = vmax.xlane.f32.xlu0 %v1648
    %v1650 = vpop.xlane.xlu0 %1649
    %v1651 = vsub.f32 %v1564, %v1647
    %v1652 = vsub.f32 %v1642, %v1650
    %v1653 = vmul.f32 %v1651, 1.442695
    %v1654 = vpow.pop %v1653
    %v1655 = vmul.f32 %v1652, 1.442695
    %v1656 = vpow.pop %v1655
    %v1657 = vsel %vm253, %v1654, 0.0
    %1658 = vadd.xlane.f32.xlu0 %v1657
    %v1659 = vpop.xlane.xlu0 %1658
    %v1660 = vsel %vm253, %v1656, 0.0
    %1661 = vadd.xlane.f32.xlu0 %v1660
    %v1662 = vpop.xlane.xlu0 %1661
    %v1663 = vrcp.pop %v1659
    %v1664 = vrcp.pop %v1662
    %v1665 = vmul.f32 %v1654, %v1663
    %v1666 = vmul.f32 %v1656, %v1664
    %1667 = vrot.lane.b32.xlu0 %v242, 40
    %v1668 = vpop.permute.xlu0 %1667
    %v1671 = vsel %vm253, %v1665, 0
    %1673 = vmatprep.subr.mxu0 0.0
    %1674 = vmatpush1.msra.mxu0 %v1668
    %1675 = vmatprep.subr.mxu0 0.0
    %1676 = vmatpush1.msra.mxu0 0.0
    %1677 = vmatprep.subr.mxu0 0.0
    %1678 = vmatpush1.msra.mxu0 0.0
    %1679 = vmatprep.subr.mxu0 0.0
    %1680 = vmatpush1.msra.mxu0 0.0
    %1681 = vmatprep.subr.mxu0 0.0
    %1682 = vmatpush1.msra.mxu0 0.0
    %1683 = vmatprep.subr.mxu0 0.0
    %1684 = vmatpush1.msra.mxu0 0.0
    %1685 = vmatprep.subr.mxu0 0.0
    %1686 = vmatpush1.msra.mxu0 0.0
    %1687 = vmatprep.subr.mxu0 0.0
    %1688 = vmatpush1.msra.mxu0 0.0
    %1689 = vmatprep.subr.mxu0 0.0
    %1690 = vmatpush1.msra.mxu0 0.0
    %1691 = vmatprep.subr.mxu0 0.0
    %1692 = vmatpush1.msra.mxu0 0.0
    %1693 = vmatprep.subr.mxu0 0.0
    %1694 = vmatpush1.msra.mxu0 0.0
    %1695 = vmatprep.subr.mxu0 0.0
    %1696 = vmatpush1.msra.mxu0 0.0
    %1697 = vmatprep.subr.mxu0 0.0
    %1698 = vmatpush1.msra.mxu0 0.0
    %1699 = vmatprep.subr.mxu0 0.0
    %1700 = vmatpush1.msra.mxu0 0.0
    %1701 = vmatprep.subr.mxu0 0.0
    %1702 = vmatpush1.msra.mxu0 0.0
    %1703 = vmatprep.subr.mxu0 0.0
    %1704 = vmatpush1.msra.mxu0 0.0
    %1705 = vmatprep.subr.mxu0 0.0
    %1706 = vmatpush1.msra.mxu0 0.0
    %1707 = vmatprep.subr.mxu0 0.0
    %1708 = vmatpush1.msra.mxu0 0.0
    %1709 = vmatprep.subr.mxu0 0.0
    %1710 = vmatpush1.msra.mxu0 0.0
    %1711 = vmatprep.subr.mxu0 0.0
    %1712 = vmatpush1.msra.mxu0 0.0
    %1713 = vmatprep.subr.mxu0 0.0
    %1714 = vmatpush1.msra.mxu0 0.0
    %1715 = vmatprep.subr.mxu0 0.0
    %1716 = vmatpush1.msra.mxu0 0.0
    %1717 = vmatprep.subr.mxu0 0.0
    %1718 = vmatpush1.msra.mxu0 0.0
    %1719 = vmatprep.subr.mxu0 0.0
    %1720 = vmatpush1.msra.mxu0 0.0
    %1721 = vmatprep.subr.mxu0 0.0
    %1722 = vmatpush1.msra.mxu0 0.0
    %1723 = vmatprep.subr.mxu0 0.0
    %1724 = vmatpush1.msra.mxu0 0.0
    %1725 = vmatprep.subr.mxu0 0.0
    %1726 = vmatpush1.msra.mxu0 0.0
    %1727 = vmatprep.subr.mxu0 0.0
    %1728 = vmatpush1.msra.mxu0 0.0
    %1729 = vmatprep.subr.mxu0 0.0
    %1730 = vmatpush1.msra.mxu0 0.0
    %1731 = vmatprep.subr.mxu0 0.0
    %1732 = vmatpush1.msra.mxu0 0.0
    %1733 = vmatprep.subr.mxu0 0.0
    %1734 = vmatpush1.msra.mxu0 0.0
    %1735 = vmatprep.subr.mxu0 0.0
    %1736 = vmatpush1.msra.mxu0 0.0
    %1737 = vmatprep.mubr.f32.mxu0 0.0
    %1738 = vmatmul.mubr.f32.gmra.mrb[0].mxu0 %v1671
    %v1739 = vpop.f32.mrb[0].mxu0
    %v1740 = vadd.f32 0.0, %v1739
    %v1741 = vpop.f32.mrb[0].mxu0
    %1742 = vdwg.mxu0
    %1743 = vrot.lane.b32.xlu0 %v247, 40
    %v1744 = vpop.permute.xlu0 %1743
    %v1747 = vsel %vm253, %v1666, 0
    %1749 = vmatprep.subr.mxu0 0.0
    %1750 = vmatpush1.msra.mxu0 %v1744
    %1751 = vmatprep.subr.mxu0 0.0
    %1752 = vmatpush1.msra.mxu0 0.0
    %1753 = vmatprep.subr.mxu0 0.0
    %1754 = vmatpush1.msra.mxu0 0.0
    %1755 = vmatprep.subr.mxu0 0.0
    %1756 = vmatpush1.msra.mxu0 0.0
    %1757 = vmatprep.subr.mxu0 0.0
    %1758 = vmatpush1.msra.mxu0 0.0
    %1759 = vmatprep.subr.mxu0 0.0
    %1760 = vmatpush1.msra.mxu0 0.0
    %1761 = vmatprep.subr.mxu0 0.0
    %1762 = vmatpush1.msra.mxu0 0.0
    %1763 = vmatprep.subr.mxu0 0.0
    %1764 = vmatpush1.msra.mxu0 0.0
    %1765 = vmatprep.subr.mxu0 0.0
    %1766 = vmatpush1.msra.mxu0 0.0
    %1767 = vmatprep.subr.mxu0 0.0
    %1768 = vmatpush1.msra.mxu0 0.0
    %1769 = vmatprep.subr.mxu0 0.0
    %1770 = vmatpush1.msra.mxu0 0.0
    %1771 = vmatprep.subr.mxu0 0.0
    %1772 = vmatpush1.msra.mxu0 0.0
    %1773 = vmatprep.subr.mxu0 0.0
    %1774 = vmatpush1.msra.mxu0 0.0
    %1775 = vmatprep.subr.mxu0 0.0
    %1776 = vmatpush1.msra.mxu0 0.0
    %1777 = vmatprep.subr.mxu0 0.0
    %1778 = vmatpush1.msra.mxu0 0.0
    %1779 = vmatprep.subr.mxu0 0.0
    %1780 = vmatpush1.msra.mxu0 0.0
    %1781 = vmatprep.subr.mxu0 0.0
    %1782 = vmatpush1.msra.mxu0 0.0
    %1783 = vmatprep.subr.mxu0 0.0
    %1784 = vmatpush1.msra.mxu0 0.0
    %1785 = vmatprep.subr.mxu0 0.0
    %1786 = vmatpush1.msra.mxu0 0.0
    %1787 = vmatprep.subr.mxu0 0.0
    %1788 = vmatpush1.msra.mxu0 0.0
    %1789 = vmatprep.subr.mxu0 0.0
    %1790 = vmatpush1.msra.mxu0 0.0
    %1791 = vmatprep.subr.mxu0 0.0
    %1792 = vmatpush1.msra.mxu0 0.0
    %1793 = vmatprep.subr.mxu0 0.0
    %1794 = vmatpush1.msra.mxu0 0.0
    %1795 = vmatprep.subr.mxu0 0.0
    %1796 = vmatpush1.msra.mxu0 0.0
    %1797 = vmatprep.subr.mxu0 0.0
    %1798 = vmatpush1.msra.mxu0 0.0
    %1799 = vmatprep.subr.mxu0 0.0
    %1800 = vmatpush1.msra.mxu0 0.0
    %1801 = vmatprep.subr.mxu0 0.0
    %1802 = vmatpush1.msra.mxu0 0.0
    %1803 = vmatprep.subr.mxu0 0.0
    %1804 = vmatpush1.msra.mxu0 0.0
    %1805 = vmatprep.subr.mxu0 0.0
    %1806 = vmatpush1.msra.mxu0 0.0
    %1807 = vmatprep.subr.mxu0 0.0
    %1808 = vmatpush1.msra.mxu0 0.0
    %1809 = vmatprep.subr.mxu0 0.0
    %1810 = vmatpush1.msra.mxu0 0.0
    %1811 = vmatprep.subr.mxu0 0.0
    %1812 = vmatpush1.msra.mxu0 0.0
    %1813 = vmatprep.mubr.f32.mxu0 0.0
    %1814 = vmatmul.mubr.f32.gmra.mrb[0].mxu0 %v1747
    %v1815 = vpop.f32.mrb[0].mxu0
    %v1816 = vadd.f32 0.0, %v1815
    %v1817 = vpop.f32.mrb[0].mxu0
    %1818 = vdwg.mxu0
    %s1819 = scalar_lea.vmem %s8, 24
    %v1820 = vld [vmem:[%s1819] sm:$0xff]
    %v1822 = vsel %vm253, %v1740, 0
    %v1825 = vsel %vm253, %v1816, 0
    %1827 = vmatprep.subr.mxu0 0.0
    %1828 = vmatpush1.msra.mxu0 %v1820
    %1829 = vmatprep.subr.mxu0 0.0
    %1830 = vmatpush1.msra.mxu0 0.0
    %1831 = vmatprep.subr.mxu0 0.0
    %1832 = vmatpush1.msra.mxu0 0.0
    %1833 = vmatprep.subr.mxu0 0.0
    %1834 = vmatpush1.msra.mxu0 0.0
    %1835 = vmatprep.subr.mxu0 0.0
    %1836 = vmatpush1.msra.mxu0 0.0
    %1837 = vmatprep.subr.mxu0 0.0
    %1838 = vmatpush1.msra.mxu0 0.0
    %1839 = vmatprep.subr.mxu0 0.0
    %1840 = vmatpush1.msra.mxu0 0.0
    %1841 = vmatprep.subr.mxu0 0.0
    %1842 = vmatpush1.msra.mxu0 0.0
    %1843 = vmatprep.subr.mxu0 0.0
    %1844 = vmatpush1.msra.mxu0 0.0
    %1845 = vmatprep.subr.mxu0 0.0
    %1846 = vmatpush1.msra.mxu0 0.0
    %1847 = vmatprep.subr.mxu0 0.0
    %1848 = vmatpush1.msra.mxu0 0.0
    %1849 = vmatprep.subr.mxu0 0.0
    %1850 = vmatpush1.msra.mxu0 0.0
    %1851 = vmatprep.subr.mxu0 0.0
    %1852 = vmatpush1.msra.mxu0 0.0
    %1853 = vmatprep.subr.mxu0 0.0
    %1854 = vmatpush1.msra.mxu0 0.0
    %1855 = vmatprep.subr.mxu0 0.0
    %1856 = vmatpush1.msra.mxu0 0.0
    %1857 = vmatprep.subr.mxu0 0.0
    %1858 = vmatpush1.msra.mxu0 0.0
    %1859 = vmatprep.subr.mxu0 0.0
    %1860 = vmatpush1.msra.mxu0 0.0
    %1861 = vmatprep.subr.mxu0 0.0
    %1862 = vmatpush1.msra.mxu0 0.0
    %1863 = vmatprep.subr.mxu0 0.0
    %1864 = vmatpush1.msra.mxu0 0.0
    %1865 = vmatprep.subr.mxu0 0.0
    %1866 = vmatpush1.msra.mxu0 0.0
    %1867 = vmatprep.subr.mxu0 0.0
    %1868 = vmatpush1.msra.mxu0 0.0
    %1869 = vmatprep.subr.mxu0 0.0
    %1870 = vmatpush1.msra.mxu0 0.0
    %1871 = vmatprep.subr.mxu0 0.0
    %1872 = vmatpush1.msra.mxu0 0.0
    %1873 = vmatprep.subr.mxu0 0.0
    %1874 = vmatpush1.msra.mxu0 0.0
    %1875 = vmatprep.subr.mxu0 0.0
    %1876 = vmatpush1.msra.mxu0 0.0
    %1877 = vmatprep.subr.mxu0 0.0
    %1878 = vmatpush1.msra.mxu0 0.0
    %1879 = vmatprep.subr.mxu0 0.0
    %1880 = vmatpush1.msra.mxu0 0.0
    %1881 = vmatprep.subr.mxu0 0.0
    %1882 = vmatpush1.msra.mxu0 0.0
    %1883 = vmatprep.subr.mxu0 0.0
    %1884 = vmatpush1.msra.mxu0 0.0
    %1885 = vmatprep.subr.mxu0 0.0
    %1886 = vmatpush1.msra.mxu0 0.0
    %1887 = vmatprep.subr.mxu0 0.0
    %1888 = vmatpush1.msra.mxu0 0.0
    %1889 = vmatprep.subr.mxu0 0.0
    %1890 = vmatpush1.msra.mxu0 0.0
    %1891 = vmatprep.mubr.f32.mxu0 0.0
    %1892 = vmatmul.mubr.f32.gmra.mrb[0].mxu0 %v1822
    %v1893 = vpop.f32.mrb[0].mxu0
    %v1894 = vadd.f32 0.0, %v1893
    %v1895 = vpop.f32.mrb[0].mxu0
    %1896 = vmatprep.mubr.f32.mxu0 0.0
    %1897 = vmatmul.mubr.f32.gmra.mrb[0].mxu0 %v1825
    %v1898 = vpop.f32.mrb[0].mxu0
    %v1899 = vadd.f32 0.0, %v1898
    %v1900 = vpop.f32.mrb[0].mxu0
    %1901 = vdwg.mxu0
    %v1902 = vadd.f32 %v1487, %v1894
    %v1903 = vadd.f32 %v1488, %v1899
    %v1904 = vld [vmem:[%s9] sm:$0x1]
    %v1906 = vlaneseq
    %v1907 = vshrl.u32 %v1906, 7
    %v1908 = vsub.s32 0, %v1907
    %v1909 = vrot.slane %v1904, %v1908
    %v1911 = vadd.f32 %v1902, %v1909
    %v1912 = vadd.f32 %v1903, %v1909
    %v1913 = vadd.f32 %v1911, %v156
    %v1914 = vadd.f32 %v1912, %v157
    %v1915 = vld [vmem:[%s10] sm:$0x1]
    %v1916 = vld [vmem:[%s11] sm:$0x1]
    %v1917 = vsel %vm114, %v1913, 0.0
    %1918 = vadd.xlane.f32.xlu0 %v1917
    %v1919 = vpop.xlane.xlu0 %1918
    %v1920 = vsel %vm114, %v1914, 0.0
    %1921 = vadd.xlane.f32.xlu0 %v1920
    %v1922 = vpop.xlane.xlu0 %1921
    %v1923 = vmul.f32 %v1919, %v121
    %v1924 = vmul.f32 %v1922, %v121
    %v1925 = vsub.f32 %v1913, %v1923
    %v1926 = vsub.f32 %v1914, %v1924
    %v1927 = vmul.f32 %v1925, %v1925
    %v1928 = vmul.f32 %v1926, %v1926
    %v1929 = vsel %vm114, %v1927, 0.0
    %1930 = vadd.xlane.f32.xlu0 %v1929
    %v1931 = vpop.xlane.xlu0 %1930
    %v1932 = vsel %vm114, %v1928, 0.0
    %1933 = vadd.xlane.f32.xlu0 %v1932
    %v1934 = vpop.xlane.xlu0 %1933
    %v1935 = vmul.f32 %v1931, %v121
    %v1936 = vmul.f32 %v1934, %v121
    %v1937 = vadd.f32 %v1935, 1e-12
    %v1938 = vadd.f32 %v1936, 1e-12
    %v1939 = vrsqrt.pop %v1937
    %v1940 = vrsqrt.pop %v1938
    %v1941 = vmul.f32 %v1925, %v1939
    %v1942 = vmul.f32 %v1926, %v1940
    %v1944 = vlaneseq
    %v1945 = vshrl.u32 %v1944, 7
    %v1946 = vsub.s32 0, %v1945
    %v1947 = vrot.slane %v1915, %v1946
    %v1949 = vmul.f32 %v1941, %v1947
    %v1950 = vmul.f32 %v1942, %v1947
    %v1952 = vlaneseq
    %v1953 = vshrl.u32 %v1952, 7
    %v1954 = vsub.s32 0, %v1953
    %v1955 = vrot.slane %v1916, %v1954
    %v1957 = vadd.f32 %v1949, %v1955
    %v1958 = vadd.f32 %v1950, %v1955
    %v1959 = vld [vmem:[%s12] sm:$0xff]
    %v1960 = vld [vmem:[%s12 + $0x8] sm:$0xff]
    %v1961 = vld [vmem:[%s12 + $0x10] sm:$0xff]
    %v1962 = vld [vmem:[%s12 + $0x18] sm:$0xff]
    %v1963 = vld [vmem:[%s13] sm:$0x1]
    %v1965 = vlaneseq
    %v1966 = vshrl.u32 %v1965, 7
    %v1967 = vsub.s32 0, %v1966
    %v1968 = vrot.slane %v1963, %v1967
    %v1971 = vsel %vm114, %v1957, 0
    %v1974 = vsel %vm114, %v1958, 0
    %1976 = vmatprep.subr.mxu0 0.0
    %1977 = vmatpush1.msra.mxu0 %v1959
    %1978 = vmatprep.subr.mxu0 0.0
    %1979 = vmatpush1.msra.mxu0 %v1960
    %1980 = vmatprep.subr.mxu0 0.0
    %1981 = vmatpush1.msra.mxu0 %v1961
    %1982 = vmatprep.subr.mxu0 0.0
    %1983 = vmatpush1.msra.mxu0 %v1962
    %1984 = vmatprep.subr.mxu0 0.0
    %1985 = vmatpush1.msra.mxu0 0.0
    %1986 = vmatprep.subr.mxu0 0.0
    %1987 = vmatpush1.msra.mxu0 0.0
    %1988 = vmatprep.subr.mxu0 0.0
    %1989 = vmatpush1.msra.mxu0 0.0
    %1990 = vmatprep.subr.mxu0 0.0
    %1991 = vmatpush1.msra.mxu0 0.0
    %1992 = vmatprep.subr.mxu0 0.0
    %1993 = vmatpush1.msra.mxu0 0.0
    %1994 = vmatprep.subr.mxu0 0.0
    %1995 = vmatpush1.msra.mxu0 0.0
    %1996 = vmatprep.subr.mxu0 0.0
    %1997 = vmatpush1.msra.mxu0 0.0
    %1998 = vmatprep.subr.mxu0 0.0
    %1999 = vmatpush1.msra.mxu0 0.0
    %2000 = vmatprep.subr.mxu0 0.0
    %2001 = vmatpush1.msra.mxu0 0.0
    %2002 = vmatprep.subr.mxu0 0.0
    %2003 = vmatpush1.msra.mxu0 0.0
    %2004 = vmatprep.subr.mxu0 0.0
    %2005 = vmatpush1.msra.mxu0 0.0
    %2006 = vmatprep.subr.mxu0 0.0
    %2007 = vmatpush1.msra.mxu0 0.0
    %2008 = vmatprep.subr.mxu0 0.0
    %2009 = vmatpush1.msra.mxu0 0.0
    %2010 = vmatprep.subr.mxu0 0.0
    %2011 = vmatpush1.msra.mxu0 0.0
    %2012 = vmatprep.subr.mxu0 0.0
    %2013 = vmatpush1.msra.mxu0 0.0
    %2014 = vmatprep.subr.mxu0 0.0
    %2015 = vmatpush1.msra.mxu0 0.0
    %2016 = vmatprep.subr.mxu0 0.0
    %2017 = vmatpush1.msra.mxu0 0.0
    %2018 = vmatprep.subr.mxu0 0.0
    %2019 = vmatpush1.msra.mxu0 0.0
    %2020 = vmatprep.subr.mxu0 0.0
    %2021 = vmatpush1.msra.mxu0 0.0
    %2022 = vmatprep.subr.mxu0 0.0
    %2023 = vmatpush1.msra.mxu0 0.0
    %2024 = vmatprep.subr.mxu0 0.0
    %2025 = vmatpush1.msra.mxu0 0.0
    %2026 = vmatprep.subr.mxu0 0.0
    %2027 = vmatpush1.msra.mxu0 0.0
    %2028 = vmatprep.subr.mxu0 0.0
    %2029 = vmatpush1.msra.mxu0 0.0
    %2030 = vmatprep.subr.mxu0 0.0
    %2031 = vmatpush1.msra.mxu0 0.0
    %2032 = vmatprep.subr.mxu0 0.0
    %2033 = vmatpush1.msra.mxu0 0.0
    %2034 = vmatprep.subr.mxu0 0.0
    %2035 = vmatpush1.msra.mxu0 0.0
    %2036 = vmatprep.subr.mxu0 0.0
    %2037 = vmatpush1.msra.mxu0 0.0
    %2038 = vmatprep.subr.mxu0 0.0
    %2039 = vmatpush1.msra.mxu0 0.0
    %2040 = vmatprep.mubr.f32.mxu0 0.0
    %2041 = vmatmul.mubr.f32.gmra.mrb[0].mxu0 %v1971
    %v2042 = vpop.f32.mrb[0].mxu0
    %v2043 = vadd.f32 %v1968, %v2042
    %v2044 = vpop.f32.mrb[0].mxu0
    %2045 = vmatprep.mubr.f32.mxu0 0.0
    %2046 = vmatmul.mubr.f32.gmra.mrb[0].mxu0 %v1974
    %v2047 = vpop.f32.mrb[0].mxu0
    %v2048 = vadd.f32 %v1968, %v2047
    %v2049 = vpop.f32.mrb[0].mxu0
    %2050 = vdwg.mxu0
    %v2051 = vmul.f32 %v2043, 0.5
    %v2052 = vmul.f32 %v2048, 0.5
    %v2053 = vmul.f32 %v2043, 0.044715
    %v2054 = vmul.f32 %v2048, 0.044715
    %v2055 = vmul.f32 %v2053, %v2043
    %v2056 = vmul.f32 %v2054, %v2048
    %v2057 = vmul.f32 %v2055, %v2043
    %v2058 = vmul.f32 %v2056, %v2048
    %v2059 = vadd.f32 %v2043, %v2057
    %v2060 = vadd.f32 %v2048, %v2058
    %v2061 = vmul.f32 %v2059, 0.7978846
    %v2062 = vmul.f32 %v2060, 0.7978846
    %v2063 = vtanh.pop %v2061
    %v2064 = vtanh.pop %v2062
    %v2065 = vadd.f32 %v2063, 1.0
    %v2066 = vadd.f32 %v2064, 1.0
    %v2067 = vmul.f32 %v2051, %v2065
    %v2068 = vmul.f32 %v2052, %v2066
    %v2069 = vld [vmem:[%s14] sm:$0xff]
    %v2070 = vld [vmem:[%s14 + $0x8] sm:$0xff]
    %v2071 = vld [vmem:[%s14 + $0x10] sm:$0xff]
    %v2072 = vld [vmem:[%s14 + $0x18] sm:$0xff]
    %v2073 = vld [vmem:[%s14 + $0x20] sm:$0xff]
    %v2074 = vld [vmem:[%s14 + $0x28] sm:$0xff]
    %v2075 = vld [vmem:[%s14 + $0x30] sm:$0xff]
    %v2076 = vld [vmem:[%s14 + $0x38] sm:$0xff]
    %v2077 = vld [vmem:[%s14 + $0x40] sm:$0xff]
    %v2078 = vld [vmem:[%s14 + $0x48] sm:$0xff]
    %v2079 = vld [vmem:[%s14 + $0x50] sm:$0xff]
    %v2080 = vld [vmem:[%s14 + $0x58] sm:$0xff]
    %v2081 = vld [vmem:[%s14 + $0x60] sm:$0xff]
    %v2082 = vld [vmem:[%s14 + $0x68] sm:$0xff]
    %v2083 = vld [vmem:[%s14 + $0x70] sm:$0xff]
    %v2084 = vld [vmem:[%s14 + $0x78] sm:$0xff]
    %v2085 = vld [vmem:[%s15] sm:$0x1]
    %v2087 = vlaneseq
    %v2088 = vshrl.u32 %v2087, 7
    %v2089 = vsub.s32 0, %v2088
    %v2090 = vrot.slane %v2085, %v2089
    %2092 = vmatprep.subr.mxu0 0.0
    %2093 = vmatpush1.msra.mxu0 %v2069
    %2094 = vmatprep.subr.mxu0 0.0
    %2095 = vmatpush1.msra.mxu0 %v2070
    %2096 = vmatprep.subr.mxu0 0.0
    %2097 = vmatpush1.msra.mxu0 %v2071
    %2098 = vmatprep.subr.mxu0 0.0
    %2099 = vmatpush1.msra.mxu0 %v2072
    %2100 = vmatprep.subr.mxu0 0.0
    %2101 = vmatpush1.msra.mxu0 %v2073
    %2102 = vmatprep.subr.mxu0 0.0
    %2103 = vmatpush1.msra.mxu0 %v2074
    %2104 = vmatprep.subr.mxu0 0.0
    %2105 = vmatpush1.msra.mxu0 %v2075
    %2106 = vmatprep.subr.mxu0 0.0
    %2107 = vmatpush1.msra.mxu0 %v2076
    %2108 = vmatprep.subr.mxu0 0.0
    %2109 = vmatpush1.msra.mxu0 %v2077
    %2110 = vmatprep.subr.mxu0 0.0
    %2111 = vmatpush1.msra.mxu0 %v2078
    %2112 = vmatprep.subr.mxu0 0.0
    %2113 = vmatpush1.msra.mxu0 %v2079
    %2114 = vmatprep.subr.mxu0 0.0
    %2115 = vmatpush1.msra.mxu0 %v2080
    %2116 = vmatprep.subr.mxu0 0.0
    %2117 = vmatpush1.msra.mxu0 %v2081
    %2118 = vmatprep.subr.mxu0 0.0
    %2119 = vmatpush1.msra.mxu0 %v2082
    %2120 = vmatprep.subr.mxu0 0.0
    %2121 = vmatpush1.msra.mxu0 %v2083
    %2122 = vmatprep.subr.mxu0 0.0
    %2123 = vmatpush1.msra.mxu0 %v2084
    %2124 = vmatprep.subr.mxu0 0.0
    %2125 = vmatpush1.msra.mxu0 0.0
    %2126 = vmatprep.subr.mxu0 0.0
    %2127 = vmatpush1.msra.mxu0 0.0
    %2128 = vmatprep.subr.mxu0 0.0
    %2129 = vmatpush1.msra.mxu0 0.0
    %2130 = vmatprep.subr.mxu0 0.0
    %2131 = vmatpush1.msra.mxu0 0.0
    %2132 = vmatprep.subr.mxu0 0.0
    %2133 = vmatpush1.msra.mxu0 0.0
    %2134 = vmatprep.subr.mxu0 0.0
    %2135 = vmatpush1.msra.mxu0 0.0
    %2136 = vmatprep.subr.mxu0 0.0
    %2137 = vmatpush1.msra.mxu0 0.0
    %2138 = vmatprep.subr.mxu0 0.0
    %2139 = vmatpush1.msra.mxu0 0.0
    %2140 = vmatprep.subr.mxu0 0.0
    %2141 = vmatpush1.msra.mxu0 0.0
    %2142 = vmatprep.subr.mxu0 0.0
    %2143 = vmatpush1.msra.mxu0 0.0
    %2144 = vmatprep.subr.mxu0 0.0
    %2145 = vmatpush1.msra.mxu0 0.0
    %2146 = vmatprep.subr.mxu0 0.0
    %2147 = vmatpush1.msra.mxu0 0.0
    %2148 = vmatprep.subr.mxu0 0.0
    %2149 = vmatpush1.msra.mxu0 0.0
    %2150 = vmatprep.subr.mxu0 0.0
    %2151 = vmatpush1.msra.mxu0 0.0
    %2152 = vmatprep.subr.mxu0 0.0
    %2153 = vmatpush1.msra.mxu0 0.0
    %2154 = vmatprep.subr.mxu0 0.0
    %2155 = vmatpush1.msra.mxu0 0.0
    %2156 = vmatprep.mubr.f32.mxu0 0.0
    %2157 = vmatmul.mubr.f32.gmra.mrb[0].mxu0 %v2067
    %v2158 = vpop.f32.mrb[0].mxu0
    %v2159 = vadd.f32 %v2090, %v2158
    %v2160 = vpop.f32.mrb[0].mxu0
    %2161 = vmatprep.mubr.f32.mxu0 0.0
    %2162 = vmatmul.mubr.f32.gmra.mrb[0].mxu0 %v2068
    %v2163 = vpop.f32.mrb[0].mxu0
    %v2164 = vadd.f32 %v2090, %v2163
    %v2165 = vpop.f32.mrb[0].mxu0
    %2166 = vdwg.mxu0
    %v2167 = vadd.f32 %v2159, %v1957
    %v2168 = vadd.f32 %v2164, %v1958
    %v2169 = vld [vmem:[%s16] sm:$0x1]
    %v2170 = vld [vmem:[%s17] sm:$0x1]
    %v2171 = vsel %vm114, %v2167, 0.0
    %2172 = vadd.xlane.f32.xlu0 %v2171
    %v2173 = vpop.xlane.xlu0 %2172
    %v2174 = vsel %vm114, %v2168, 0.0
    %2175 = vadd.xlane.f32.xlu0 %v2174
    %v2176 = vpop.xlane.xlu0 %2175
    %v2177 = vmul.f32 %v2173, %v121
    %v2178 = vmul.f32 %v2176, %v121
    %v2179 = vsub.f32 %v2167, %v2177
    %v2180 = vsub.f32 %v2168, %v2178
    %v2181 = vmul.f32 %v2179, %v2179
    %v2182 = vmul.f32 %v2180, %v2180
    %v2183 = vsel %vm114, %v2181, 0.0
    %2184 = vadd.xlane.f32.xlu0 %v2183
    %v2185 = vpop.xlane.xlu0 %2184
    %v2186 = vsel %vm114, %v2182, 0.0
    %2187 = vadd.xlane.f32.xlu0 %v2186
    %v2188 = vpop.xlane.xlu0 %2187
    %v2189 = vmul.f32 %v2185, %v121
    %v2190 = vmul.f32 %v2188, %v121
    %v2191 = vadd.f32 %v2189, 1e-12
    %v2192 = vadd.f32 %v2190, 1e-12
    %v2193 = vrsqrt.pop %v2191
    %v2194 = vrsqrt.pop %v2192
    %v2195 = vmul.f32 %v2179, %v2193
    %v2196 = vmul.f32 %v2180, %v2194
    %v2198 = vlaneseq
    %v2199 = vshrl.u32 %v2198, 7
    %v2200 = vsub.s32 0, %v2199
    %v2201 = vrot.slane %v2169, %v2200
    %v2203 = vmul.f32 %v2195, %v2201
    %v2204 = vmul.f32 %v2196, %v2201
    %v2206 = vlaneseq
    %v2207 = vshrl.u32 %v2206, 7
    %v2208 = vsub.s32 0, %v2207
    %v2209 = vrot.slane %v2170, %v2208
    %v2211 = vadd.f32 %v2203, %v2209
    %v2212 = vadd.f32 %v2204, %v2209
    %v2213 = vsel %vm114, %v2211, 0.0
    %v2214 = vrot.slane %v2213, 4
    %v2215 = vadd.f32 %v2213, %v2214
    %v2216 = vrot.slane %v2215, 2
    %v2217 = vadd.f32 %v2215, %v2216
    %v2218 = vrot.slane %v2217, 1
    %v2219 = vadd.f32 %v2217, %v2218
    %v2220 = vsel %vm114, %v2212, 0.0
    %v2221 = vrot.slane %v2220, 4
    %v2222 = vadd.f32 %v2220, %v2221
    %v2223 = vrot.slane %v2222, 2
    %v2224 = vadd.f32 %v2222, %v2223
    %v2225 = vrot.slane %v2224, 1
    %v2226 = vadd.f32 %v2224, %v2225
    %v2227 = vrcp.pop 8.0
    %v2228 = vmul.f32 %v2219, %v2227
    %v2229 = vmul.f32 %v2226, %v2227
    %v2230 = vadd.f32 %v2228, 0.0
    %v2231 = vadd.f32 %v2229, 0.0
    %s2232 = scalar_lea.vmem %s6, 32
    %v2233 = vld [vmem:[%s2232] sm:$0xff]
    %v2234 = vld [vmem:[%s2232 + $0x8] sm:$0xff]
    %v2235 = vld [vmem:[%s2232 + $0x10] sm:$0xff]
    %v2236 = vld [vmem:[%s2232 + $0x18] sm:$0xff]
    %s2237 = scalar_lea.vmem %s7, 1
    %v2238 = vld [vmem:[%s2237] sm:$0x1]
    %v2240 = vlaneseq
    %v2241 = vshrl.u32 %v2240, 7
    %v2242 = vsub.s32 0, %v2241
    %v2243 = vrot.slane %v2238, %v2242
    %v2246 = vsel %vm114, %v2211, 0
    %v2249 = vsel %vm114, %v2212, 0
    %2251 = vmatprep.subr.mxu0 0.0
    %2252 = vmatpush1.msra.mxu0 %v2233
    %2253 = vmatprep.subr.mxu0 0.0
    %2254 = vmatpush1.msra.mxu0 %v2234
    %2255 = vmatprep.subr.mxu0 0.0
    %2256 = vmatpush1.msra.mxu0 %v2235
    %2257 = vmatprep.subr.mxu0 0.0
    %2258 = vmatpush1.msra.mxu0 %v2236
    %2259 = vmatprep.subr.mxu0 0.0
    %2260 = vmatpush1.msra.mxu0 0.0
    %2261 = vmatprep.subr.mxu0 0.0
    %2262 = vmatpush1.msra.mxu0 0.0
    %2263 = vmatprep.subr.mxu0 0.0
    %2264 = vmatpush1.msra.mxu0 0.0
    %2265 = vmatprep.subr.mxu0 0.0
    %2266 = vmatpush1.msra.mxu0 0.0
    %2267 = vmatprep.subr.mxu0 0.0
    %2268 = vmatpush1.msra.mxu0 0.0
    %2269 = vmatprep.subr.mxu0 0.0
    %2270 = vmatpush1.msra.mxu0 0.0
    %2271 = vmatprep.subr.mxu0 0.0
    %2272 = vmatpush1.msra.mxu0 0.0
    %2273 = vmatprep.subr.mxu0 0.0
    %2274 = vmatpush1.msra.mxu0 0.0
    %2275 = vmatprep.subr.mxu0 0.0
    %2276 = vmatpush1.msra.mxu0 0.0
    %2277 = vmatprep.subr.mxu0 0.0
    %2278 = vmatpush1.msra.mxu0 0.0
    %2279 = vmatprep.subr.mxu0 0.0
    %2280 = vmatpush1.msra.mxu0 0.0
    %2281 = vmatprep.subr.mxu0 0.0
    %2282 = vmatpush1.msra.mxu0 0.0
    %2283 = vmatprep.subr.mxu0 0.0
    %2284 = vmatpush1.msra.mxu0 0.0
    %2285 = vmatprep.subr.mxu0 0.0
    %2286 = vmatpush1.msra.mxu0 0.0
    %2287 = vmatprep.subr.mxu0 0.0
    %2288 = vmatpush1.msra.mxu0 0.0
    %2289 = vmatprep.subr.mxu0 0.0
    %2290 = vmatpush1.msra.mxu0 0.0
    %2291 = vmatprep.subr.mxu0 0.0
    %2292 = vmatpush1.msra.mxu0 0.0
    %2293 = vmatprep.subr.mxu0 0.0
    %2294 = vmatpush1.msra.mxu0 0.0
    %2295 = vmatprep.subr.mxu0 0.0
    %2296 = vmatpush1.msra.mxu0 0.0
    %2297 = vmatprep.subr.mxu0 0.0
    %2298 = vmatpush1.msra.mxu0 0.0
    %2299 = vmatprep.subr.mxu0 0.0
    %2300 = vmatpush1.msra.mxu0 0.0
    %2301 = vmatprep.subr.mxu0 0.0
    %2302 = vmatpush1.msra.mxu0 0.0
    %2303 = vmatprep.subr.mxu0 0.0
    %2304 = vmatpush1.msra.mxu0 0.0
    %2305 = vmatprep.subr.mxu0 0.0
    %2306 = vmatpush1.msra.mxu0 0.0
    %2307 = vmatprep.subr.mxu0 0.0
    %2308 = vmatpush1.msra.mxu0 0.0
    %2309 = vmatprep.subr.mxu0 0.0
    %2310 = vmatpush1.msra.mxu0 0.0
    %2311 = vmatprep.subr.mxu0 0.0
    %2312 = vmatpush1.msra.mxu0 0.0
    %2313 = vmatprep.subr.mxu0 0.0
    %2314 = vmatpush1.msra.mxu0 0.0
    %2315 = vmatprep.mubr.f32.mxu0 0.0
    %2316 = vmatmul.mubr.f32.gmra.mrb[0].mxu0 %v2246
    %v2317 = vpop.f32.mrb[0].mxu0
    %v2318 = vadd.f32 %v2243, %v2317
    %v2319 = vpop.f32.mrb[0].mxu0
    %2320 = vmatprep.mubr.f32.mxu0 0.0
    %2321 = vmatmul.mubr.f32.gmra.mrb[0].mxu0 %v2249
    %v2322 = vpop.f32.mrb[0].mxu0
    %v2323 = vadd.f32 %v2243, %v2322
    %v2324 = vpop.f32.mrb[0].mxu0
    %2325 = vdwg.mxu0
    %2327 = vrot.lane.b32.xlu0 %v2318, 96
    %v2328 = vpop.permute.xlu0 %2327
    %v2329 = vsel %vm253, %v2318, 0
    %v2331 = vsel %vm253, %v2328, 0
    %2333 = vmatprep.subr.mxu0 0.0
    %2334 = vmatpush1.xpose.msra.mxu0 %v2331
    %2335 = vmatprep.subr.mxu0 0.0
    %2336 = vmatpush1.xpose.msra.mxu0 0.0
    %2337 = vmatprep.subr.mxu0 0.0
    %2338 = vmatpush1.xpose.msra.mxu0 0.0
    %2339 = vmatprep.subr.mxu0 0.0
    %2340 = vmatpush1.xpose.msra.mxu0 0.0
    %2341 = vmatprep.subr.mxu0 0.0
    %2342 = vmatpush1.xpose.msra.mxu0 0.0
    %2343 = vmatprep.subr.mxu0 0.0
    %2344 = vmatpush1.xpose.msra.mxu0 0.0
    %2345 = vmatprep.subr.mxu0 0.0
    %2346 = vmatpush1.xpose.msra.mxu0 0.0
    %2347 = vmatprep.subr.mxu0 0.0
    %2348 = vmatpush1.xpose.msra.mxu0 0.0
    %2349 = vmatprep.subr.mxu0 0.0
    %2350 = vmatpush1.xpose.msra.mxu0 0.0
    %2351 = vmatprep.subr.mxu0 0.0
    %2352 = vmatpush1.xpose.msra.mxu0 0.0
    %2353 = vmatprep.subr.mxu0 0.0
    %2354 = vmatpush1.xpose.msra.mxu0 0.0
    %2355 = vmatprep.subr.mxu0 0.0
    %2356 = vmatpush1.xpose.msra.mxu0 0.0
    %2357 = vmatprep.subr.mxu0 0.0
    %2358 = vmatpush1.xpose.msra.mxu0 0.0
    %2359 = vmatprep.subr.mxu0 0.0
    %2360 = vmatpush1.xpose.msra.mxu0 0.0
    %2361 = vmatprep.subr.mxu0 0.0
    %2362 = vmatpush1.xpose.msra.mxu0 0.0
    %2363 = vmatprep.subr.mxu0 0.0
    %2364 = vmatpush1.xpose.msra.mxu0 0.0
    %2365 = vmatprep.subr.mxu0 0.0
    %2366 = vmatpush1.xpose.msra.mxu0 0.0
    %2367 = vmatprep.subr.mxu0 0.0
    %2368 = vmatpush1.xpose.msra.mxu0 0.0
    %2369 = vmatprep.subr.mxu0 0.0
    %2370 = vmatpush1.xpose.msra.mxu0 0.0
    %2371 = vmatprep.subr.mxu0 0.0
    %2372 = vmatpush1.xpose.msra.mxu0 0.0
    %2373 = vmatprep.subr.mxu0 0.0
    %2374 = vmatpush1.xpose.msra.mxu0 0.0
    %2375 = vmatprep.subr.mxu0 0.0
    %2376 = vmatpush1.xpose.msra.mxu0 0.0
    %2377 = vmatprep.subr.mxu0 0.0
    %2378 = vmatpush1.xpose.msra.mxu0 0.0
    %2379 = vmatprep.subr.mxu0 0.0
    %2380 = vmatpush1.xpose.msra.mxu0 0.0
    %2381 = vmatprep.subr.mxu0 0.0
    %2382 = vmatpush1.xpose.msra.mxu0 0.0
    %2383 = vmatprep.subr.mxu0 0.0
    %2384 = vmatpush1.xpose.msra.mxu0 0.0
    %2385 = vmatprep.subr.mxu0 0.0
    %2386 = vmatpush1.xpose.msra.mxu0 0.0
    %2387 = vmatprep.subr.mxu0 0.0
    %2388 = vmatpush1.xpose.msra.mxu0 0.0
    %2389 = vmatprep.subr.mxu0 0.0
    %2390 = vmatpush1.xpose.msra.mxu0 0.0
    %2391 = vmatprep.subr.mxu0 0.0
    %2392 = vmatpush1.xpose.msra.mxu0 0.0
    %2393 = vmatprep.subr.mxu0 0.0
    %2394 = vmatpush1.xpose.msra.mxu0 0.0
    %2395 = vmatprep.subr.mxu0 0.0
    %2396 = vmatpush1.xpose.msra.mxu0 0.0
    %2397 = vmatprep.mubr.f32.mxu0 0.0
    %2398 = vmatmul.mubr.f32.gmra.mrb[0].mxu0 %v2329
    %v2399 = vpop.f32.mrb[0].mxu0
    %v2400 = vadd.f32 %v92, %v2399
    %v2401 = vpop.f32.mrb[0].mxu0
    %2402 = vdwg.mxu0
    %2404 = vrot.lane.b32.xlu0 %v2323, 96
    %v2405 = vpop.permute.xlu0 %2404
    %v2406 = vsel %vm253, %v2323, 0
    %v2408 = vsel %vm253, %v2405, 0
    %2410 = vmatprep.subr.mxu0 0.0
    %2411 = vmatpush1.xpose.msra.mxu0 %v2408
    %2412 = vmatprep.subr.mxu0 0.0
    %2413 = vmatpush1.xpose.msra.mxu0 0.0
    %2414 = vmatprep.subr.mxu0 0.0
    %2415 = vmatpush1.xpose.msra.mxu0 0.0
    %2416 = vmatprep.subr.mxu0 0.0
    %2417 = vmatpush1.xpose.msra.mxu0 0.0
    %2418 = vmatprep.subr.mxu0 0.0
    %2419 = vmatpush1.xpose.msra.mxu0 0.0
    %2420 = vmatprep.subr.mxu0 0.0
    %2421 = vmatpush1.xpose.msra.mxu0 0.0
    %2422 = vmatprep.subr.mxu0 0.0
    %2423 = vmatpush1.xpose.msra.mxu0 0.0
    %2424 = vmatprep.subr.mxu0 0.0
    %2425 = vmatpush1.xpose.msra.mxu0 0.0
    %2426 = vmatprep.subr.mxu0 0.0
    %2427 = vmatpush1.xpose.msra.mxu0 0.0
    %2428 = vmatprep.subr.mxu0 0.0
    %2429 = vmatpush1.xpose.msra.mxu0 0.0
    %2430 = vmatprep.subr.mxu0 0.0
    %2431 = vmatpush1.xpose.msra.mxu0 0.0
    %2432 = vmatprep.subr.mxu0 0.0
    %2433 = vmatpush1.xpose.msra.mxu0 0.0
    %2434 = vmatprep.subr.mxu0 0.0
    %2435 = vmatpush1.xpose.msra.mxu0 0.0
    %2436 = vmatprep.subr.mxu0 0.0
    %2437 = vmatpush1.xpose.msra.mxu0 0.0
    %2438 = vmatprep.subr.mxu0 0.0
    %2439 = vmatpush1.xpose.msra.mxu0 0.0
    %2440 = vmatprep.subr.mxu0 0.0
    %2441 = vmatpush1.xpose.msra.mxu0 0.0
    %2442 = vmatprep.subr.mxu0 0.0
    %2443 = vmatpush1.xpose.msra.mxu0 0.0
    %2444 = vmatprep.subr.mxu0 0.0
    %2445 = vmatpush1.xpose.msra.mxu0 0.0
    %2446 = vmatprep.subr.mxu0 0.0
    %2447 = vmatpush1.xpose.msra.mxu0 0.0
    %2448 = vmatprep.subr.mxu0 0.0
    %2449 = vmatpush1.xpose.msra.mxu0 0.0
    %2450 = vmatprep.subr.mxu0 0.0
    %2451 = vmatpush1.xpose.msra.mxu0 0.0
    %2452 = vmatprep.subr.mxu0 0.0
    %2453 = vmatpush1.xpose.msra.mxu0 0.0
    %2454 = vmatprep.subr.mxu0 0.0
    %2455 = vmatpush1.xpose.msra.mxu0 0.0
    %2456 = vmatprep.subr.mxu0 0.0
    %2457 = vmatpush1.xpose.msra.mxu0 0.0
    %2458 = vmatprep.subr.mxu0 0.0
    %2459 = vmatpush1.xpose.msra.mxu0 0.0
    %2460 = vmatprep.subr.mxu0 0.0
    %2461 = vmatpush1.xpose.msra.mxu0 0.0
    %2462 = vmatprep.subr.mxu0 0.0
    %2463 = vmatpush1.xpose.msra.mxu0 0.0
    %2464 = vmatprep.subr.mxu0 0.0
    %2465 = vmatpush1.xpose.msra.mxu0 0.0
    %2466 = vmatprep.subr.mxu0 0.0
    %2467 = vmatpush1.xpose.msra.mxu0 0.0
    %2468 = vmatprep.subr.mxu0 0.0
    %2469 = vmatpush1.xpose.msra.mxu0 0.0
    %2470 = vmatprep.subr.mxu0 0.0
    %2471 = vmatpush1.xpose.msra.mxu0 0.0
    %2472 = vmatprep.subr.mxu0 0.0
    %2473 = vmatpush1.xpose.msra.mxu0 0.0
    %2474 = vmatprep.mubr.f32.mxu0 0.0
    %2475 = vmatmul.mubr.f32.gmra.mrb[0].mxu0 %v2406
    %v2476 = vpop.f32.mrb[0].mxu0
    %v2477 = vadd.f32 %v96, %v2476
    %v2478 = vpop.f32.mrb[0].mxu0
    %2479 = vdwg.mxu0
    %v2480 = vsel %vm253, %v2400, -inf
    %2481 = vmax.xlane.f32.xlu0 %v2480
    %v2482 = vpop.xlane.xlu0 %2481
    %v2483 = vsel %vm253, %v2477, -inf
    %2484 = vmax.xlane.f32.xlu0 %v2483
    %v2485 = vpop.xlane.xlu0 %2484
    %v2486 = vsub.f32 %v2400, %v2482
    %v2487 = vsub.f32 %v2477, %v2485
    %v2488 = vmul.f32 %v2486, 1.442695
    %v2489 = vpow.pop %v2488
    %v2490 = vmul.f32 %v2487, 1.442695
    %v2491 = vpow.pop %v2490
    %v2492 = vsel %vm253, %v2489, 0.0
    %2493 = vadd.xlane.f32.xlu0 %v2492
    %v2494 = vpop.xlane.xlu0 %2493
    %v2495 = vsel %vm253, %v2491, 0.0
    %2496 = vadd.xlane.f32.xlu0 %v2495
    %v2497 = vpop.xlane.xlu0 %2496
    %v2498 = vrcp.pop %v2494
    %v2499 = vrcp.pop %v2497
    %v2500 = vmul.f32 %v2489, %v2498
    %v2501 = vmul.f32 %v2491, %v2499
    %2502 = vrot.lane.b32.xlu0 %v2318, 64
    %v2503 = vpop.permute.xlu0 %2502
    %v2506 = vsel %vm253, %v2500, 0
    %2508 = vmatprep.subr.mxu0 0.0
    %2509 = vmatpush1.msra.mxu0 %v2503
    %2510 = vmatprep.subr.mxu0 0.0
    %2511 = vmatpush1.msra.mxu0 0.0
    %2512 = vmatprep.subr.mxu0 0.0
    %2513 = vmatpush1.msra.mxu0 0.0
    %2514 = vmatprep.subr.mxu0 0.0
    %2515 = vmatpush1.msra.mxu0 0.0
    %2516 = vmatprep.subr.mxu0 0.0
    %2517 = vmatpush1.msra.mxu0 0.0
    %2518 = vmatprep.subr.mxu0 0.0
    %2519 = vmatpush1.msra.mxu0 0.0
    %2520 = vmatprep.subr.mxu0 0.0
    %2521 = vmatpush1.msra.mxu0 0.0
    %2522 = vmatprep.subr.mxu0 0.0
    %2523 = vmatpush1.msra.mxu0 0.0
    %2524 = vmatprep.subr.mxu0 0.0
    %2525 = vmatpush1.msra.mxu0 0.0
    %2526 = vmatprep.subr.mxu0 0.0
    %2527 = vmatpush1.msra.mxu0 0.0
    %2528 = vmatprep.subr.mxu0 0.0
    %2529 = vmatpush1.msra.mxu0 0.0
    %2530 = vmatprep.subr.mxu0 0.0
    %2531 = vmatpush1.msra.mxu0 0.0
    %2532 = vmatprep.subr.mxu0 0.0
    %2533 = vmatpush1.msra.mxu0 0.0
    %2534 = vmatprep.subr.mxu0 0.0
    %2535 = vmatpush1.msra.mxu0 0.0
    %2536 = vmatprep.subr.mxu0 0.0
    %2537 = vmatpush1.msra.mxu0 0.0
    %2538 = vmatprep.subr.mxu0 0.0
    %2539 = vmatpush1.msra.mxu0 0.0
    %2540 = vmatprep.subr.mxu0 0.0
    %2541 = vmatpush1.msra.mxu0 0.0
    %2542 = vmatprep.subr.mxu0 0.0
    %2543 = vmatpush1.msra.mxu0 0.0
    %2544 = vmatprep.subr.mxu0 0.0
    %2545 = vmatpush1.msra.mxu0 0.0
    %2546 = vmatprep.subr.mxu0 0.0
    %2547 = vmatpush1.msra.mxu0 0.0
    %2548 = vmatprep.subr.mxu0 0.0
    %2549 = vmatpush1.msra.mxu0 0.0
    %2550 = vmatprep.subr.mxu0 0.0
    %2551 = vmatpush1.msra.mxu0 0.0
    %2552 = vmatprep.subr.mxu0 0.0
    %2553 = vmatpush1.msra.mxu0 0.0
    %2554 = vmatprep.subr.mxu0 0.0
    %2555 = vmatpush1.msra.mxu0 0.0
    %2556 = vmatprep.subr.mxu0 0.0
    %2557 = vmatpush1.msra.mxu0 0.0
    %2558 = vmatprep.subr.mxu0 0.0
    %2559 = vmatpush1.msra.mxu0 0.0
    %2560 = vmatprep.subr.mxu0 0.0
    %2561 = vmatpush1.msra.mxu0 0.0
    %2562 = vmatprep.subr.mxu0 0.0
    %2563 = vmatpush1.msra.mxu0 0.0
    %2564 = vmatprep.subr.mxu0 0.0
    %2565 = vmatpush1.msra.mxu0 0.0
    %2566 = vmatprep.subr.mxu0 0.0
    %2567 = vmatpush1.msra.mxu0 0.0
    %2568 = vmatprep.subr.mxu0 0.0
    %2569 = vmatpush1.msra.mxu0 0.0
    %2570 = vmatprep.subr.mxu0 0.0
    %2571 = vmatpush1.msra.mxu0 0.0
    %2572 = vmatprep.mubr.f32.mxu0 0.0
    %2573 = vmatmul.mubr.f32.gmra.mrb[0].mxu0 %v2506
    %v2574 = vpop.f32.mrb[0].mxu0
    %v2575 = vadd.f32 0.0, %v2574
    %v2576 = vpop.f32.mrb[0].mxu0
    %2577 = vdwg.mxu0
    %2578 = vrot.lane.b32.xlu0 %v2323, 64
    %v2579 = vpop.permute.xlu0 %2578
    %v2582 = vsel %vm253, %v2501, 0
    %2584 = vmatprep.subr.mxu0 0.0
    %2585 = vmatpush1.msra.mxu0 %v2579
    %2586 = vmatprep.subr.mxu0 0.0
    %2587 = vmatpush1.msra.mxu0 0.0
    %2588 = vmatprep.subr.mxu0 0.0
    %2589 = vmatpush1.msra.mxu0 0.0
    %2590 = vmatprep.subr.mxu0 0.0
    %2591 = vmatpush1.msra.mxu0 0.0
    %2592 = vmatprep.subr.mxu0 0.0
    %2593 = vmatpush1.msra.mxu0 0.0
    %2594 = vmatprep.subr.mxu0 0.0
    %2595 = vmatpush1.msra.mxu0 0.0
    %2596 = vmatprep.subr.mxu0 0.0
    %2597 = vmatpush1.msra.mxu0 0.0
    %2598 = vmatprep.subr.mxu0 0.0
    %2599 = vmatpush1.msra.mxu0 0.0
    %2600 = vmatprep.subr.mxu0 0.0
    %2601 = vmatpush1.msra.mxu0 0.0
    %2602 = vmatprep.subr.mxu0 0.0
    %2603 = vmatpush1.msra.mxu0 0.0
    %2604 = vmatprep.subr.mxu0 0.0
    %2605 = vmatpush1.msra.mxu0 0.0
    %2606 = vmatprep.subr.mxu0 0.0
    %2607 = vmatpush1.msra.mxu0 0.0
    %2608 = vmatprep.subr.mxu0 0.0
    %2609 = vmatpush1.msra.mxu0 0.0
    %2610 = vmatprep.subr.mxu0 0.0
    %2611 = vmatpush1.msra.mxu0 0.0
    %2612 = vmatprep.subr.mxu0 0.0
    %2613 = vmatpush1.msra.mxu0 0.0
    %2614 = vmatprep.subr.mxu0 0.0
    %2615 = vmatpush1.msra.mxu0 0.0
    %2616 = vmatprep.subr.mxu0 0.0
    %2617 = vmatpush1.msra.mxu0 0.0
    %2618 = vmatprep.subr.mxu0 0.0
    %2619 = vmatpush1.msra.mxu0 0.0
    %2620 = vmatprep.subr.mxu0 0.0
    %2621 = vmatpush1.msra.mxu0 0.0
    %2622 = vmatprep.subr.mxu0 0.0
    %2623 = vmatpush1.msra.mxu0 0.0
    %2624 = vmatprep.subr.mxu0 0.0
    %2625 = vmatpush1.msra.mxu0 0.0
    %2626 = vmatprep.subr.mxu0 0.0
    %2627 = vmatpush1.msra.mxu0 0.0
    %2628 = vmatprep.subr.mxu0 0.0
    %2629 = vmatpush1.msra.mxu0 0.0
    %2630 = vmatprep.subr.mxu0 0.0
    %2631 = vmatpush1.msra.mxu0 0.0
    %2632 = vmatprep.subr.mxu0 0.0
    %2633 = vmatpush1.msra.mxu0 0.0
    %2634 = vmatprep.subr.mxu0 0.0
    %2635 = vmatpush1.msra.mxu0 0.0
    %2636 = vmatprep.subr.mxu0 0.0
    %2637 = vmatpush1.msra.mxu0 0.0
    %2638 = vmatprep.subr.mxu0 0.0
    %2639 = vmatpush1.msra.mxu0 0.0
    %2640 = vmatprep.subr.mxu0 0.0
    %2641 = vmatpush1.msra.mxu0 0.0
    %2642 = vmatprep.subr.mxu0 0.0
    %2643 = vmatpush1.msra.mxu0 0.0
    %2644 = vmatprep.subr.mxu0 0.0
    %2645 = vmatpush1.msra.mxu0 0.0
    %2646 = vmatprep.subr.mxu0 0.0
    %2647 = vmatpush1.msra.mxu0 0.0
    %2648 = vmatprep.mubr.f32.mxu0 0.0
    %2649 = vmatmul.mubr.f32.gmra.mrb[0].mxu0 %v2582
    %v2650 = vpop.f32.mrb[0].mxu0
    %v2651 = vadd.f32 0.0, %v2650
    %v2652 = vpop.f32.mrb[0].mxu0
    %2653 = vdwg.mxu0
    %s2654 = scalar_lea.vmem %s8, 32
    %v2655 = vld [vmem:[%s2654] sm:$0xff]
    %2656 = vrot.lane.b32.xlu0 %v2318, 120
    %v2657 = vpop.permute.xlu0 %2656
    %2658 = vrot.lane.b32.xlu0 %v2318, 88
    %v2659 = vpop.permute.xlu0 %2658
    %v2660 = vsel %vm253, %v2657, 0
    %v2662 = vsel %vm253, %v2659, 0
    %2664 = vmatprep.subr.mxu0 0.0
    %2665 = vmatpush1.xpose.msra.mxu0 %v2662
    %2666 = vmatprep.subr.mxu0 0.0
    %2667 = vmatpush1.xpose.msra.mxu0 0.0
    %2668 = vmatprep.subr.mxu0 0.0
    %2669 = vmatpush1.xpose.msra.mxu0 0.0
    %2670 = vmatprep.subr.mxu0 0.0
    %2671 = vmatpush1.xpose.msra.mxu0 0.0
    %2672 = vmatprep.subr.mxu0 0.0
    %2673 = vmatpush1.xpose.msra.mxu0 0.0
    %2674 = vmatprep.subr.mxu0 0.0
    %2675 = vmatpush1.xpose.msra.mxu0 0.0
    %2676 = vmatprep.subr.mxu0 0.0
    %2677 = vmatpush1.xpose.msra.mxu0 0.0
    %2678 = vmatprep.subr.mxu0 0.0
    %2679 = vmatpush1.xpose.msra.mxu0 0.0
    %2680 = vmatprep.subr.mxu0 0.0
    %2681 = vmatpush1.xpose.msra.mxu0 0.0
    %2682 = vmatprep.subr.mxu0 0.0
    %2683 = vmatpush1.xpose.msra.mxu0 0.0
    %2684 = vmatprep.subr.mxu0 0.0
    %2685 = vmatpush1.xpose.msra.mxu0 0.0
    %2686 = vmatprep.subr.mxu0 0.0
    %2687 = vmatpush1.xpose.msra.mxu0 0.0
    %2688 = vmatprep.subr.mxu0 0.0
    %2689 = vmatpush1.xpose.msra.mxu0 0.0
    %2690 = vmatprep.subr.mxu0 0.0
    %2691 = vmatpush1.xpose.msra.mxu0 0.0
    %2692 = vmatprep.subr.mxu0 0.0
    %2693 = vmatpush1.xpose.msra.mxu0 0.0
    %2694 = vmatprep.subr.mxu0 0.0
    %2695 = vmatpush1.xpose.msra.mxu0 0.0
    %2696 = vmatprep.subr.mxu0 0.0
    %2697 = vmatpush1.xpose.msra.mxu0 0.0
    %2698 = vmatprep.subr.mxu0 0.0
    %2699 = vmatpush1.xpose.msra.mxu0 0.0
    %2700 = vmatprep.subr.mxu0 0.0
    %2701 = vmatpush1.xpose.msra.mxu0 0.0
    %2702 = vmatprep.subr.mxu0 0.0
    %2703 = vmatpush1.xpose.msra.mxu0 0.0
    %2704 = vmatprep.subr.mxu0 0.0
    %2705 = vmatpush1.xpose.msra.mxu0 0.0
    %2706 = vmatprep.subr.mxu0 0.0
    %2707 = vmatpush1.xpose.msra.mxu0 0.0
    %2708 = vmatprep.subr.mxu0 0.0
    %2709 = vmatpush1.xpose.msra.mxu0 0.0
    %2710 = vmatprep.subr.mxu0 0.0
    %2711 = vmatpush1.xpose.msra.mxu0 0.0
    %2712 = vmatprep.subr.mxu0 0.0
    %2713 = vmatpush1.xpose.msra.mxu0 0.0
    %2714 = vmatprep.subr.mxu0 0.0
    %2715 = vmatpush1.xpose.msra.mxu0 0.0
    %2716 = vmatprep.subr.mxu0 0.0
    %2717 = vmatpush1.xpose.msra.mxu0 0.0
    %2718 = vmatprep.subr.mxu0 0.0
    %2719 = vmatpush1.xpose.msra.mxu0 0.0
    %2720 = vmatprep.subr.mxu0 0.0
    %2721 = vmatpush1.xpose.msra.mxu0 0.0
    %2722 = vmatprep.subr.mxu0 0.0
    %2723 = vmatpush1.xpose.msra.mxu0 0.0
    %2724 = vmatprep.subr.mxu0 0.0
    %2725 = vmatpush1.xpose.msra.mxu0 0.0
    %2726 = vmatprep.subr.mxu0 0.0
    %2727 = vmatpush1.xpose.msra.mxu0 0.0
    %2728 = vmatprep.mubr.f32.mxu0 0.0
    %2729 = vmatmul.mubr.f32.gmra.mrb[0].mxu0 %v2660
    %v2730 = vpop.f32.mrb[0].mxu0
    %v2731 = vadd.f32 %v92, %v2730
    %v2732 = vpop.f32.mrb[0].mxu0
    %2733 = vdwg.mxu0
    %2734 = vrot.lane.b32.xlu0 %v2323, 120
    %v2735 = vpop.permute.xlu0 %2734
    %2736 = vrot.lane.b32.xlu0 %v2323, 88
    %v2737 = vpop.permute.xlu0 %2736
    %v2738 = vsel %vm253, %v2735, 0
    %v2740 = vsel %vm253, %v2737, 0
    %2742 = vmatprep.subr.mxu0 0.0
    %2743 = vmatpush1.xpose.msra.mxu0 %v2740
    %2744 = vmatprep.subr.mxu0 0.0
    %2745 = vmatpush1.xpose.msra.mxu0 0.0
    %2746 = vmatprep.subr.mxu0 0.0
    %2747 = vmatpush1.xpose.msra.mxu0 0.0
    %2748 = vmatprep.subr.mxu0 0.0
    %2749 = vmatpush1.xpose.msra.mxu0 0.0
    %2750 = vmatprep.subr.mxu0 0.0
    %2751 = vmatpush1.xpose.msra.mxu0 0.0
    %2752 = vmatprep.subr.mxu0 0.0
    %2753 = vmatpush1.xpose.msra.mxu0 0.0
    %2754 = vmatprep.subr.mxu0 0.0
    %2755 = vmatpush1.xpose.msra.mxu0 0.0
    %2756 = vmatprep.subr.mxu0 0.0
    %2757 = vmatpush1.xpose.msra.mxu0 0.0
    %2758 = vmatprep.subr.mxu0 0.0
    %2759 = vmatpush1.xpose.msra.mxu0 0.0
    %2760 = vmatprep.subr.mxu0 0.0
    %2761 = vmatpush1.xpose.msra.mxu0 0.0
    %2762 = vmatprep.subr.mxu0 0.0
    %2763 = vmatpush1.xpose.msra.mxu0 0.0
    %2764 = vmatprep.subr.mxu0 0.0
    %2765 = vmatpush1.xpose.msra.mxu0 0.0
    %2766 = vmatprep.subr.mxu0 0.0
    %2767 = vmatpush1.xpose.msra.mxu0 0.0
    %2768 = vmatprep.subr.mxu0 0.0
    %2769 = vmatpush1.xpose.msra.mxu0 0.0
    %2770 = vmatprep.subr.mxu0 0.0
    %2771 = vmatpush1.xpose.msra.mxu0 0.0
    %2772 = vmatprep.subr.mxu0 0.0
    %2773 = vmatpush1.xpose.msra.mxu0 0.0
    %2774 = vmatprep.subr.mxu0 0.0
    %2775 = vmatpush1.xpose.msra.mxu0 0.0
    %2776 = vmatprep.subr.mxu0 0.0
    %2777 = vmatpush1.xpose.msra.mxu0 0.0
    %2778 = vmatprep.subr.mxu0 0.0
    %2779 = vmatpush1.xpose.msra.mxu0 0.0
    %2780 = vmatprep.subr.mxu0 0.0
    %2781 = vmatpush1.xpose.msra.mxu0 0.0
    %2782 = vmatprep.subr.mxu0 0.0
    %2783 = vmatpush1.xpose.msra.mxu0 0.0
    %2784 = vmatprep.subr.mxu0 0.0
    %2785 = vmatpush1.xpose.msra.mxu0 0.0
    %2786 = vmatprep.subr.mxu0 0.0
    %2787 = vmatpush1.xpose.msra.mxu0 0.0
    %2788 = vmatprep.subr.mxu0 0.0
    %2789 = vmatpush1.xpose.msra.mxu0 0.0
    %2790 = vmatprep.subr.mxu0 0.0
    %2791 = vmatpush1.xpose.msra.mxu0 0.0
    %2792 = vmatprep.subr.mxu0 0.0
    %2793 = vmatpush1.xpose.msra.mxu0 0.0
    %2794 = vmatprep.subr.mxu0 0.0
    %2795 = vmatpush1.xpose.msra.mxu0 0.0
    %2796 = vmatprep.subr.mxu0 0.0
    %2797 = vmatpush1.xpose.msra.mxu0 0.0
    %2798 = vmatprep.subr.mxu0 0.0
    %2799 = vmatpush1.xpose.msra.mxu0 0.0
    %2800 = vmatprep.subr.mxu0 0.0
    %2801 = vmatpush1.xpose.msra.mxu0 0.0
    %2802 = vmatprep.subr.mxu0 0.0
    %2803 = vmatpush1.xpose.msra.mxu0 0.0
    %2804 = vmatprep.subr.mxu0 0.0
    %2805 = vmatpush1.xpose.msra.mxu0 0.0
    %2806 = vmatprep.mubr.f32.mxu0 0.0
    %2807 = vmatmul.mubr.f32.gmra.mrb[0].mxu0 %v2738
    %v2808 = vpop.f32.mrb[0].mxu0
    %v2809 = vadd.f32 %v96, %v2808
    %v2810 = vpop.f32.mrb[0].mxu0
    %2811 = vdwg.mxu0
    %v2812 = vsel %vm253, %v2731, -inf
    %2813 = vmax.xlane.f32.xlu0 %v2812
    %v2814 = vpop.xlane.xlu0 %2813
    %v2815 = vsel %vm253, %v2809, -inf
    %2816 = vmax.xlane.f32.xlu0 %v2815
    %v2817 = vpop.xlane.xlu0 %2816
    %v2818 = vsub.f32 %v2731, %v2814
    %v2819 = vsub.f32 %v2809, %v2817
    %v2820 = vmul.f32 %v2818, 1.442695
    %v2821 = vpow.pop %v2820
    %v2822 = vmul.f32 %v2819, 1.442695
    %v2823 = vpow.pop %v2822
    %v2824 = vsel %vm253, %v2821, 0.0
    %2825 = vadd.xlane.f32.xlu0 %v2824
    %v2826 = vpop.xlane.xlu0 %2825
    %v2827 = vsel %vm253, %v2823, 0.0
    %2828 = vadd.xlane.f32.xlu0 %v2827
    %v2829 = vpop.xlane.xlu0 %2828
    %v2830 = vrcp.pop %v2826
    %v2831 = vrcp.pop %v2829
    %v2832 = vmul.f32 %v2821, %v2830
    %v2833 = vmul.f32 %v2823, %v2831
    %2834 = vrot.lane.b32.xlu0 %v2318, 56
    %v2835 = vpop.permute.xlu0 %2834
    %v2838 = vsel %vm253, %v2832, 0
    %2840 = vmatprep.subr.mxu0 0.0
    %2841 = vmatpush1.msra.mxu0 %v2835
    %2842 = vmatprep.subr.mxu0 0.0
    %2843 = vmatpush1.msra.mxu0 0.0
    %2844 = vmatprep.subr.mxu0 0.0
    %2845 = vmatpush1.msra.mxu0 0.0
    %2846 = vmatprep.subr.mxu0 0.0
    %2847 = vmatpush1.msra.mxu0 0.0
    %2848 = vmatprep.subr.mxu0 0.0
    %2849 = vmatpush1.msra.mxu0 0.0
    %2850 = vmatprep.subr.mxu0 0.0
    %2851 = vmatpush1.msra.mxu0 0.0
    %2852 = vmatprep.subr.mxu0 0.0
    %2853 = vmatpush1.msra.mxu0 0.0
    %2854 = vmatprep.subr.mxu0 0.0
    %2855 = vmatpush1.msra.mxu0 0.0
    %2856 = vmatprep.subr.mxu0 0.0
    %2857 = vmatpush1.msra.mxu0 0.0
    %2858 = vmatprep.subr.mxu0 0.0
    %2859 = vmatpush1.msra.mxu0 0.0
    %2860 = vmatprep.subr.mxu0 0.0
    %2861 = vmatpush1.msra.mxu0 0.0
    %2862 = vmatprep.subr.mxu0 0.0
    %2863 = vmatpush1.msra.mxu0 0.0
    %2864 = vmatprep.subr.mxu0 0.0
    %2865 = vmatpush1.msra.mxu0 0.0
    %2866 = vmatprep.subr.mxu0 0.0
    %2867 = vmatpush1.msra.mxu0 0.0
    %2868 = vmatprep.subr.mxu0 0.0
    %2869 = vmatpush1.msra.mxu0 0.0
    %2870 = vmatprep.subr.mxu0 0.0
    %2871 = vmatpush1.msra.mxu0 0.0
    %2872 = vmatprep.subr.mxu0 0.0
    %2873 = vmatpush1.msra.mxu0 0.0
    %2874 = vmatprep.subr.mxu0 0.0
    %2875 = vmatpush1.msra.mxu0 0.0
    %2876 = vmatprep.subr.mxu0 0.0
    %2877 = vmatpush1.msra.mxu0 0.0
    %2878 = vmatprep.subr.mxu0 0.0
    %2879 = vmatpush1.msra.mxu0 0.0
    %2880 = vmatprep.subr.mxu0 0.0
    %2881 = vmatpush1.msra.mxu0 0.0
    %2882 = vmatprep.subr.mxu0 0.0
    %2883 = vmatpush1.msra.mxu0 0.0
    %2884 = vmatprep.subr.mxu0 0.0
    %2885 = vmatpush1.msra.mxu0 0.0
    %2886 = vmatprep.subr.mxu0 0.0
    %2887 = vmatpush1.msra.mxu0 0.0
    %2888 = vmatprep.subr.mxu0 0.0
    %2889 = vmatpush1.msra.mxu0 0.0
    %2890 = vmatprep.subr.mxu0 0.0
    %2891 = vmatpush1.msra.mxu0 0.0
    %2892 = vmatprep.subr.mxu0 0.0
    %2893 = vmatpush1.msra.mxu0 0.0
    %2894 = vmatprep.subr.mxu0 0.0
    %2895 = vmatpush1.msra.mxu0 0.0
    %2896 = vmatprep.subr.mxu0 0.0
    %2897 = vmatpush1.msra.mxu0 0.0
    %2898 = vmatprep.subr.mxu0 0.0
    %2899 = vmatpush1.msra.mxu0 0.0
    %2900 = vmatprep.subr.mxu0 0.0
    %2901 = vmatpush1.msra.mxu0 0.0
    %2902 = vmatprep.subr.mxu0 0.0
    %2903 = vmatpush1.msra.mxu0 0.0
    %2904 = vmatprep.mubr.f32.mxu0 0.0
    %2905 = vmatmul.mubr.f32.gmra.mrb[0].mxu0 %v2838
    %v2906 = vpop.f32.mrb[0].mxu0
    %v2907 = vadd.f32 0.0, %v2906
    %v2908 = vpop.f32.mrb[0].mxu0
    %2909 = vdwg.mxu0
    %2910 = vrot.lane.b32.xlu0 %v2323, 56
    %v2911 = vpop.permute.xlu0 %2910
    %v2914 = vsel %vm253, %v2833, 0
    %2916 = vmatprep.subr.mxu0 0.0
    %2917 = vmatpush1.msra.mxu0 %v2911
    %2918 = vmatprep.subr.mxu0 0.0
    %2919 = vmatpush1.msra.mxu0 0.0
    %2920 = vmatprep.subr.mxu0 0.0
    %2921 = vmatpush1.msra.mxu0 0.0
    %2922 = vmatprep.subr.mxu0 0.0
    %2923 = vmatpush1.msra.mxu0 0.0
    %2924 = vmatprep.subr.mxu0 0.0
    %2925 = vmatpush1.msra.mxu0 0.0
    %2926 = vmatprep.subr.mxu0 0.0
    %2927 = vmatpush1.msra.mxu0 0.0
    %2928 = vmatprep.subr.mxu0 0.0
    %2929 = vmatpush1.msra.mxu0 0.0
    %2930 = vmatprep.subr.mxu0 0.0
    %2931 = vmatpush1.msra.mxu0 0.0
    %2932 = vmatprep.subr.mxu0 0.0
    %2933 = vmatpush1.msra.mxu0 0.0
    %2934 = vmatprep.subr.mxu0 0.0
    %2935 = vmatpush1.msra.mxu0 0.0
    %2936 = vmatprep.subr.mxu0 0.0
    %2937 = vmatpush1.msra.mxu0 0.0
    %2938 = vmatprep.subr.mxu0 0.0
    %2939 = vmatpush1.msra.mxu0 0.0
    %2940 = vmatprep.subr.mxu0 0.0
    %2941 = vmatpush1.msra.mxu0 0.0
    %2942 = vmatprep.subr.mxu0 0.0
    %2943 = vmatpush1.msra.mxu0 0.0
    %2944 = vmatprep.subr.mxu0 0.0
    %2945 = vmatpush1.msra.mxu0 0.0
    %2946 = vmatprep.subr.mxu0 0.0
    %2947 = vmatpush1.msra.mxu0 0.0
    %2948 = vmatprep.subr.mxu0 0.0
    %2949 = vmatpush1.msra.mxu0 0.0
    %2950 = vmatprep.subr.mxu0 0.0
    %2951 = vmatpush1.msra.mxu0 0.0
    %2952 = vmatprep.subr.mxu0 0.0
    %2953 = vmatpush1.msra.mxu0 0.0
    %2954 = vmatprep.subr.mxu0 0.0
    %2955 = vmatpush1.msra.mxu0 0.0
    %2956 = vmatprep.subr.mxu0 0.0
    %2957 = vmatpush1.msra.mxu0 0.0
    %2958 = vmatprep.subr.mxu0 0.0
    %2959 = vmatpush1.msra.mxu0 0.0
    %2960 = vmatprep.subr.mxu0 0.0
    %2961 = vmatpush1.msra.mxu0 0.0
    %2962 = vmatprep.subr.mxu0 0.0
    %2963 = vmatpush1.msra.mxu0 0.0
    %2964 = vmatprep.subr.mxu0 0.0
    %2965 = vmatpush1.msra.mxu0 0.0
    %2966 = vmatprep.subr.mxu0 0.0
    %2967 = vmatpush1.msra.mxu0 0.0
    %2968 = vmatprep.subr.mxu0 0.0
    %2969 = vmatpush1.msra.mxu0 0.0
    %2970 = vmatprep.subr.mxu0 0.0
    %2971 = vmatpush1.msra.mxu0 0.0
    %2972 = vmatprep.subr.mxu0 0.0
    %2973 = vmatpush1.msra.mxu0 0.0
    %2974 = vmatprep.subr.mxu0 0.0
    %2975 = vmatpush1.msra.mxu0 0.0
    %2976 = vmatprep.subr.mxu0 0.0
    %2977 = vmatpush1.msra.mxu0 0.0
    %2978 = vmatprep.subr.mxu0 0.0
    %2979 = vmatpush1.msra.mxu0 0.0
    %2980 = vmatprep.mubr.f32.mxu0 0.0
    %2981 = vmatmul.mubr.f32.gmra.mrb[0].mxu0 %v2914
    %v2982 = vpop.f32.mrb[0].mxu0
    %v2983 = vadd.f32 0.0, %v2982
    %v2984 = vpop.f32.mrb[0].mxu0
    %2985 = vdwg.mxu0
    %s2986 = scalar_lea.vmem %s8, 40
    %v2987 = vld [vmem:[%s2986] sm:$0xff]
    %v2989 = vsel %vm253, %v2907, 0
    %v2992 = vsel %vm253, %v2983, 0
    %2994 = vmatprep.subr.mxu0 0.0
    %2995 = vmatpush1.msra.mxu0 %v2987
    %2996 = vmatprep.subr.mxu0 0.0
    %2997 = vmatpush1.msra.mxu0 0.0
    %2998 = vmatprep.subr.mxu0 0.0
    %2999 = vmatpush1.msra.mxu0 0.0
    %3000 = vmatprep.subr.mxu0 0.0
    %3001 = vmatpush1.msra.mxu0 0.0
    %3002 = vmatprep.subr.mxu0 0.0
    %3003 = vmatpush1.msra.mxu0 0.0
    %3004 = vmatprep.subr.mxu0 0.0
    %3005 = vmatpush1.msra.mxu0 0.0
    %3006 = vmatprep.subr.mxu0 0.0
    %3007 = vmatpush1.msra.mxu0 0.0
    %3008 = vmatprep.subr.mxu0 0.0
    %3009 = vmatpush1.msra.mxu0 0.0
    %3010 = vmatprep.subr.mxu0 0.0
    %3011 = vmatpush1.msra.mxu0 0.0
    %3012 = vmatprep.subr.mxu0 0.0
    %3013 = vmatpush1.msra.mxu0 0.0
    %3014 = vmatprep.subr.mxu0 0.0
    %3015 = vmatpush1.msra.mxu0 0.0
    %3016 = vmatprep.subr.mxu0 0.0
    %3017 = vmatpush1.msra.mxu0 0.0
    %3018 = vmatprep.subr.mxu0 0.0
    %3019 = vmatpush1.msra.mxu0 0.0
    %3020 = vmatprep.subr.mxu0 0.0
    %3021 = vmatpush1.msra.mxu0 0.0
    %3022 = vmatprep.subr.mxu0 0.0
    %3023 = vmatpush1.msra.mxu0 0.0
    %3024 = vmatprep.subr.mxu0 0.0
    %3025 = vmatpush1.msra.mxu0 0.0
    %3026 = vmatprep.subr.mxu0 0.0
    %3027 = vmatpush1.msra.mxu0 0.0
    %3028 = vmatprep.subr.mxu0 0.0
    %3029 = vmatpush1.msra.mxu0 0.0
    %3030 = vmatprep.subr.mxu0 0.0
    %3031 = vmatpush1.msra.mxu0 0.0
    %3032 = vmatprep.subr.mxu0 0.0
    %3033 = vmatpush1.msra.mxu0 0.0
    %3034 = vmatprep.subr.mxu0 0.0
    %3035 = vmatpush1.msra.mxu0 0.0
    %3036 = vmatprep.subr.mxu0 0.0
    %3037 = vmatpush1.msra.mxu0 0.0
    %3038 = vmatprep.subr.mxu0 0.0
    %3039 = vmatpush1.msra.mxu0 0.0
    %3040 = vmatprep.subr.mxu0 0.0
    %3041 = vmatpush1.msra.mxu0 0.0
    %3042 = vmatprep.subr.mxu0 0.0
    %3043 = vmatpush1.msra.mxu0 0.0
    %3044 = vmatprep.subr.mxu0 0.0
    %3045 = vmatpush1.msra.mxu0 0.0
    %3046 = vmatprep.subr.mxu0 0.0
    %3047 = vmatpush1.msra.mxu0 0.0
    %3048 = vmatprep.subr.mxu0 0.0
    %3049 = vmatpush1.msra.mxu0 0.0
    %3050 = vmatprep.subr.mxu0 0.0
    %3051 = vmatpush1.msra.mxu0 0.0
    %3052 = vmatprep.subr.mxu0 0.0
    %3053 = vmatpush1.msra.mxu0 0.0
    %3054 = vmatprep.subr.mxu0 0.0
    %3055 = vmatpush1.msra.mxu0 0.0
    %3056 = vmatprep.subr.mxu0 0.0
    %3057 = vmatpush1.msra.mxu0 0.0
    %3058 = vmatprep.mubr.f32.mxu0 0.0
    %3059 = vmatmul.mubr.f32.gmra.mrb[0].mxu0 %v2989
    %v3060 = vpop.f32.mrb[0].mxu0
    %v3061 = vadd.f32 0.0, %v3060
    %v3062 = vpop.f32.mrb[0].mxu0
    %3063 = vmatprep.mubr.f32.mxu0 0.0
    %3064 = vmatmul.mubr.f32.gmra.mrb[0].mxu0 %v2992
    %v3065 = vpop.f32.mrb[0].mxu0
    %v3066 = vadd.f32 0.0, %v3065
    %v3067 = vpop.f32.mrb[0].mxu0
    %3068 = vdwg.mxu0
    %v3070 = vsel %vm253, %v2575, 0
    %v3073 = vsel %vm253, %v2651, 0
    %3075 = vmatprep.subr.mxu0 0.0
    %3076 = vmatpush1.msra.mxu0 %v2655
    %3077 = vmatprep.subr.mxu0 0.0
    %3078 = vmatpush1.msra.mxu0 0.0
    %3079 = vmatprep.subr.mxu0 0.0
    %3080 = vmatpush1.msra.mxu0 0.0
    %3081 = vmatprep.subr.mxu0 0.0
    %3082 = vmatpush1.msra.mxu0 0.0
    %3083 = vmatprep.subr.mxu0 0.0
    %3084 = vmatpush1.msra.mxu0 0.0
    %3085 = vmatprep.subr.mxu0 0.0
    %3086 = vmatpush1.msra.mxu0 0.0
    %3087 = vmatprep.subr.mxu0 0.0
    %3088 = vmatpush1.msra.mxu0 0.0
    %3089 = vmatprep.subr.mxu0 0.0
    %3090 = vmatpush1.msra.mxu0 0.0
    %3091 = vmatprep.subr.mxu0 0.0
    %3092 = vmatpush1.msra.mxu0 0.0
    %3093 = vmatprep.subr.mxu0 0.0
    %3094 = vmatpush1.msra.mxu0 0.0
    %3095 = vmatprep.subr.mxu0 0.0
    %3096 = vmatpush1.msra.mxu0 0.0
    %3097 = vmatprep.subr.mxu0 0.0
    %3098 = vmatpush1.msra.mxu0 0.0
    %3099 = vmatprep.subr.mxu0 0.0
    %3100 = vmatpush1.msra.mxu0 0.0
    %3101 = vmatprep.subr.mxu0 0.0
    %3102 = vmatpush1.msra.mxu0 0.0
    %3103 = vmatprep.subr.mxu0 0.0
    %3104 = vmatpush1.msra.mxu0 0.0
    %3105 = vmatprep.subr.mxu0 0.0
    %3106 = vmatpush1.msra.mxu0 0.0
    %3107 = vmatprep.subr.mxu0 0.0
    %3108 = vmatpush1.msra.mxu0 0.0
    %3109 = vmatprep.subr.mxu0 0.0
    %3110 = vmatpush1.msra.mxu0 0.0
    %3111 = vmatprep.subr.mxu0 0.0
    %3112 = vmatpush1.msra.mxu0 0.0
    %3113 = vmatprep.subr.mxu0 0.0
    %3114 = vmatpush1.msra.mxu0 0.0
    %3115 = vmatprep.subr.mxu0 0.0
    %3116 = vmatpush1.msra.mxu0 0.0
    %3117 = vmatprep.subr.mxu0 0.0
    %3118 = vmatpush1.msra.mxu0 0.0
    %3119 = vmatprep.subr.mxu0 0.0
    %3120 = vmatpush1.msra.mxu0 0.0
    %3121 = vmatprep.subr.mxu0 0.0
    %3122 = vmatpush1.msra.mxu0 0.0
    %3123 = vmatprep.subr.mxu0 0.0
    %3124 = vmatpush1.msra.mxu0 0.0
    %3125 = vmatprep.subr.mxu0 0.0
    %3126 = vmatpush1.msra.mxu0 0.0
    %3127 = vmatprep.subr.mxu0 0.0
    %3128 = vmatpush1.msra.mxu0 0.0
    %3129 = vmatprep.subr.mxu0 0.0
    %3130 = vmatpush1.msra.mxu0 0.0
    %3131 = vmatprep.subr.mxu0 0.0
    %3132 = vmatpush1.msra.mxu0 0.0
    %3133 = vmatprep.subr.mxu0 0.0
    %3134 = vmatpush1.msra.mxu0 0.0
    %3135 = vmatprep.subr.mxu0 0.0
    %3136 = vmatpush1.msra.mxu0 0.0
    %3137 = vmatprep.subr.mxu0 0.0
    %3138 = vmatpush1.msra.mxu0 0.0
    %3139 = vmatprep.mubr.f32.mxu0 0.0
    %3140 = vmatmul.mubr.f32.gmra.mrb[0].mxu0 %v3070
    %v3141 = vpop.f32.mrb[0].mxu0
    %v3142 = vadd.f32 %v3061, %v3141
    %v3143 = vpop.f32.mrb[0].mxu0
    %3144 = vmatprep.mubr.f32.mxu0 0.0
    %3145 = vmatmul.mubr.f32.gmra.mrb[0].mxu0 %v3073
    %v3146 = vpop.f32.mrb[0].mxu0
    %v3147 = vadd.f32 %v3066, %v3146
    %v3148 = vpop.f32.mrb[0].mxu0
    %3149 = vdwg.mxu0
    %3150 = vrot.lane.b32.xlu0 %v2318, 112
    %v3151 = vpop.permute.xlu0 %3150
    %3152 = vrot.lane.b32.xlu0 %v2318, 80
    %v3153 = vpop.permute.xlu0 %3152
    %v3154 = vsel %vm253, %v3151, 0
    %v3156 = vsel %vm253, %v3153, 0
    %3158 = vmatprep.subr.mxu0 0.0
    %3159 = vmatpush1.xpose.msra.mxu0 %v3156
    %3160 = vmatprep.subr.mxu0 0.0
    %3161 = vmatpush1.xpose.msra.mxu0 0.0
    %3162 = vmatprep.subr.mxu0 0.0
    %3163 = vmatpush1.xpose.msra.mxu0 0.0
    %3164 = vmatprep.subr.mxu0 0.0
    %3165 = vmatpush1.xpose.msra.mxu0 0.0
    %3166 = vmatprep.subr.mxu0 0.0
    %3167 = vmatpush1.xpose.msra.mxu0 0.0
    %3168 = vmatprep.subr.mxu0 0.0
    %3169 = vmatpush1.xpose.msra.mxu0 0.0
    %3170 = vmatprep.subr.mxu0 0.0
    %3171 = vmatpush1.xpose.msra.mxu0 0.0
    %3172 = vmatprep.subr.mxu0 0.0
    %3173 = vmatpush1.xpose.msra.mxu0 0.0
    %3174 = vmatprep.subr.mxu0 0.0
    %3175 = vmatpush1.xpose.msra.mxu0 0.0
    %3176 = vmatprep.subr.mxu0 0.0
    %3177 = vmatpush1.xpose.msra.mxu0 0.0
    %3178 = vmatprep.subr.mxu0 0.0
    %3179 = vmatpush1.xpose.msra.mxu0 0.0
    %3180 = vmatprep.subr.mxu0 0.0
    %3181 = vmatpush1.xpose.msra.mxu0 0.0
    %3182 = vmatprep.subr.mxu0 0.0
    %3183 = vmatpush1.xpose.msra.mxu0 0.0
    %3184 = vmatprep.subr.mxu0 0.0
    %3185 = vmatpush1.xpose.msra.mxu0 0.0
    %3186 = vmatprep.subr.mxu0 0.0
    %3187 = vmatpush1.xpose.msra.mxu0 0.0
    %3188 = vmatprep.subr.mxu0 0.0
    %3189 = vmatpush1.xpose.msra.mxu0 0.0
    %3190 = vmatprep.subr.mxu0 0.0
    %3191 = vmatpush1.xpose.msra.mxu0 0.0
    %3192 = vmatprep.subr.mxu0 0.0
    %3193 = vmatpush1.xpose.msra.mxu0 0.0
    %3194 = vmatprep.subr.mxu0 0.0
    %3195 = vmatpush1.xpose.msra.mxu0 0.0
    %3196 = vmatprep.subr.mxu0 0.0
    %3197 = vmatpush1.xpose.msra.mxu0 0.0
    %3198 = vmatprep.subr.mxu0 0.0
    %3199 = vmatpush1.xpose.msra.mxu0 0.0
    %3200 = vmatprep.subr.mxu0 0.0
    %3201 = vmatpush1.xpose.msra.mxu0 0.0
    %3202 = vmatprep.subr.mxu0 0.0
    %3203 = vmatpush1.xpose.msra.mxu0 0.0
    %3204 = vmatprep.subr.mxu0 0.0
    %3205 = vmatpush1.xpose.msra.mxu0 0.0
    %3206 = vmatprep.subr.mxu0 0.0
    %3207 = vmatpush1.xpose.msra.mxu0 0.0
    %3208 = vmatprep.subr.mxu0 0.0
    %3209 = vmatpush1.xpose.msra.mxu0 0.0
    %3210 = vmatprep.subr.mxu0 0.0
    %3211 = vmatpush1.xpose.msra.mxu0 0.0
    %3212 = vmatprep.subr.mxu0 0.0
    %3213 = vmatpush1.xpose.msra.mxu0 0.0
    %3214 = vmatprep.subr.mxu0 0.0
    %3215 = vmatpush1.xpose.msra.mxu0 0.0
    %3216 = vmatprep.subr.mxu0 0.0
    %3217 = vmatpush1.xpose.msra.mxu0 0.0
    %3218 = vmatprep.subr.mxu0 0.0
    %3219 = vmatpush1.xpose.msra.mxu0 0.0
    %3220 = vmatprep.subr.mxu0 0.0
    %3221 = vmatpush1.xpose.msra.mxu0 0.0
    %3222 = vmatprep.mubr.f32.mxu0 0.0
    %3223 = vmatmul.mubr.f32.gmra.mrb[0].mxu0 %v3154
    %v3224 = vpop.f32.mrb[0].mxu0
    %v3225 = vadd.f32 %v92, %v3224
    %v3226 = vpop.f32.mrb[0].mxu0
    %3227 = vdwg.mxu0
    %3228 = vrot.lane.b32.xlu0 %v2323, 112
    %v3229 = vpop.permute.xlu0 %3228
    %3230 = vrot.lane.b32.xlu0 %v2323, 80
    %v3231 = vpop.permute.xlu0 %3230
    %v3232 = vsel %vm253, %v3229, 0
    %v3234 = vsel %vm253, %v3231, 0
    %3236 = vmatprep.subr.mxu0 0.0
    %3237 = vmatpush1.xpose.msra.mxu0 %v3234
    %3238 = vmatprep.subr.mxu0 0.0
    %3239 = vmatpush1.xpose.msra.mxu0 0.0
    %3240 = vmatprep.subr.mxu0 0.0
    %3241 = vmatpush1.xpose.msra.mxu0 0.0
    %3242 = vmatprep.subr.mxu0 0.0
    %3243 = vmatpush1.xpose.msra.mxu0 0.0
    %3244 = vmatprep.subr.mxu0 0.0
    %3245 = vmatpush1.xpose.msra.mxu0 0.0
    %3246 = vmatprep.subr.mxu0 0.0
    %3247 = vmatpush1.xpose.msra.mxu0 0.0
    %3248 = vmatprep.subr.mxu0 0.0
    %3249 = vmatpush1.xpose.msra.mxu0 0.0
    %3250 = vmatprep.subr.mxu0 0.0
    %3251 = vmatpush1.xpose.msra.mxu0 0.0
    %3252 = vmatprep.subr.mxu0 0.0
    %3253 = vmatpush1.xpose.msra.mxu0 0.0
    %3254 = vmatprep.subr.mxu0 0.0
    %3255 = vmatpush1.xpose.msra.mxu0 0.0
    %3256 = vmatprep.subr.mxu0 0.0
    %3257 = vmatpush1.xpose.msra.mxu0 0.0
    %3258 = vmatprep.subr.mxu0 0.0
    %3259 = vmatpush1.xpose.msra.mxu0 0.0
    %3260 = vmatprep.subr.mxu0 0.0
    %3261 = vmatpush1.xpose.msra.mxu0 0.0
    %3262 = vmatprep.subr.mxu0 0.0
    %3263 = vmatpush1.xpose.msra.mxu0 0.0
    %3264 = vmatprep.subr.mxu0 0.0
    %3265 = vmatpush1.xpose.msra.mxu0 0.0
    %3266 = vmatprep.subr.mxu0 0.0
    %3267 = vmatpush1.xpose.msra.mxu0 0.0
    %3268 = vmatprep.subr.mxu0 0.0
    %3269 = vmatpush1.xpose.msra.mxu0 0.0
    %3270 = vmatprep.subr.mxu0 0.0
    %3271 = vmatpush1.xpose.msra.mxu0 0.0
    %3272 = vmatprep.subr.mxu0 0.0
    %3273 = vmatpush1.xpose.msra.mxu0 0.0
    %3274 = vmatprep.subr.mxu0 0.0
    %3275 = vmatpush1.xpose.msra.mxu0 0.0
    %3276 = vmatprep.subr.mxu0 0.0
    %3277 = vmatpush1.xpose.msra.mxu0 0.0
    %3278 = vmatprep.subr.mxu0 0.0
    %3279 = vmatpush1.xpose.msra.mxu0 0.0
    %3280 = vmatprep.subr.mxu0 0.0
    %3281 = vmatpush1.xpose.msra.mxu0 0.0
    %3282 = vmatprep.subr.mxu0 0.0
    %3283 = vmatpush1.xpose.msra.mxu0 0.0
    %3284 = vmatprep.subr.mxu0 0.0
    %3285 = vmatpush1.xpose.msra.mxu0 0.0
    %3286 = vmatprep.subr.mxu0 0.0
    %3287 = vmatpush1.xpose.msra.mxu0 0.0
    %3288 = vmatprep.subr.mxu0 0.0
    %3289 = vmatpush1.xpose.msra.mxu0 0.0
    %3290 = vmatprep.subr.mxu0 0.0
    %3291 = vmatpush1.xpose.msra.mxu0 0.0
    %3292 = vmatprep.subr.mxu0 0.0
    %3293 = vmatpush1.xpose.msra.mxu0 0.0
    %3294 = vmatprep.subr.mxu0 0.0
    %3295 = vmatpush1.xpose.msra.mxu0 0.0
    %3296 = vmatprep.subr.mxu0 0.0
    %3297 = vmatpush1.xpose.msra.mxu0 0.0
    %3298 = vmatprep.subr.mxu0 0.0
    %3299 = vmatpush1.xpose.msra.mxu0 0.0
    %3300 = vmatprep.mubr.f32.mxu0 0.0
    %3301 = vmatmul.mubr.f32.gmra.mrb[0].mxu0 %v3232
    %v3302 = vpop.f32.mrb[0].mxu0
    %v3303 = vadd.f32 %v96, %v3302
    %v3304 = vpop.f32.mrb[0].mxu0
    %3305 = vdwg.mxu0
    %v3306 = vsel %vm253, %v3225, -inf
    %3307 = vmax.xlane.f32.xlu0 %v3306
    %v3308 = vpop.xlane.xlu0 %3307
    %v3309 = vsel %vm253, %v3303, -inf
    %3310 = vmax.xlane.f32.xlu0 %v3309
    %v3311 = vpop.xlane.xlu0 %3310
    %v3312 = vsub.f32 %v3225, %v3308
    %v3313 = vsub.f32 %v3303, %v3311
    %v3314 = vmul.f32 %v3312, 1.442695
    %v3315 = vpow.pop %v3314
    %v3316 = vmul.f32 %v3313, 1.442695
    %v3317 = vpow.pop %v3316
    %v3318 = vsel %vm253, %v3315, 0.0
    %3319 = vadd.xlane.f32.xlu0 %v3318
    %v3320 = vpop.xlane.xlu0 %3319
    %v3321 = vsel %vm253, %v3317, 0.0
    %3322 = vadd.xlane.f32.xlu0 %v3321
    %v3323 = vpop.xlane.xlu0 %3322
    %v3324 = vrcp.pop %v3320
    %v3325 = vrcp.pop %v3323
    %v3326 = vmul.f32 %v3315, %v3324
    %v3327 = vmul.f32 %v3317, %v3325
    %3328 = vrot.lane.b32.xlu0 %v2318, 48
    %v3329 = vpop.permute.xlu0 %3328
    %v3332 = vsel %vm253, %v3326, 0
    %3334 = vmatprep.subr.mxu0 0.0
    %3335 = vmatpush1.msra.mxu0 %v3329
    %3336 = vmatprep.subr.mxu0 0.0
    %3337 = vmatpush1.msra.mxu0 0.0
    %3338 = vmatprep.subr.mxu0 0.0
    %3339 = vmatpush1.msra.mxu0 0.0
    %3340 = vmatprep.subr.mxu0 0.0
    %3341 = vmatpush1.msra.mxu0 0.0
    %3342 = vmatprep.subr.mxu0 0.0
    %3343 = vmatpush1.msra.mxu0 0.0
    %3344 = vmatprep.subr.mxu0 0.0
    %3345 = vmatpush1.msra.mxu0 0.0
    %3346 = vmatprep.subr.mxu0 0.0
    %3347 = vmatpush1.msra.mxu0 0.0
    %3348 = vmatprep.subr.mxu0 0.0
    %3349 = vmatpush1.msra.mxu0 0.0
    %3350 = vmatprep.subr.mxu0 0.0
    %3351 = vmatpush1.msra.mxu0 0.0
    %3352 = vmatprep.subr.mxu0 0.0
    %3353 = vmatpush1.msra.mxu0 0.0
    %3354 = vmatprep.subr.mxu0 0.0
    %3355 = vmatpush1.msra.mxu0 0.0
    %3356 = vmatprep.subr.mxu0 0.0
    %3357 = vmatpush1.msra.mxu0 0.0
    %3358 = vmatprep.subr.mxu0 0.0
    %3359 = vmatpush1.msra.mxu0 0.0
    %3360 = vmatprep.subr.mxu0 0.0
    %3361 = vmatpush1.msra.mxu0 0.0
    %3362 = vmatprep.subr.mxu0 0.0
    %3363 = vmatpush1.msra.mxu0 0.0
    %3364 = vmatprep.subr.mxu0 0.0
    %3365 = vmatpush1.msra.mxu0 0.0
    %3366 = vmatprep.subr.mxu0 0.0
    %3367 = vmatpush1.msra.mxu0 0.0
    %3368 = vmatprep.subr.mxu0 0.0
    %3369 = vmatpush1.msra.mxu0 0.0
    %3370 = vmatprep.subr.mxu0 0.0
    %3371 = vmatpush1.msra.mxu0 0.0
    %3372 = vmatprep.subr.mxu0 0.0
    %3373 = vmatpush1.msra.mxu0 0.0
    %3374 = vmatprep.subr.mxu0 0.0
    %3375 = vmatpush1.msra.mxu0 0.0
    %3376 = vmatprep.subr.mxu0 0.0
    %3377 = vmatpush1.msra.mxu0 0.0
    %3378 = vmatprep.subr.mxu0 0.0
    %3379 = vmatpush1.msra.mxu0 0.0
    %3380 = vmatprep.subr.mxu0 0.0
    %3381 = vmatpush1.msra.mxu0 0.0
    %3382 = vmatprep.subr.mxu0 0.0
    %3383 = vmatpush1.msra.mxu0 0.0
    %3384 = vmatprep.subr.mxu0 0.0
    %3385 = vmatpush1.msra.mxu0 0.0
    %3386 = vmatprep.subr.mxu0 0.0
    %3387 = vmatpush1.msra.mxu0 0.0
    %3388 = vmatprep.subr.mxu0 0.0
    %3389 = vmatpush1.msra.mxu0 0.0
    %3390 = vmatprep.subr.mxu0 0.0
    %3391 = vmatpush1.msra.mxu0 0.0
    %3392 = vmatprep.subr.mxu0 0.0
    %3393 = vmatpush1.msra.mxu0 0.0
    %3394 = vmatprep.subr.mxu0 0.0
    %3395 = vmatpush1.msra.mxu0 0.0
    %3396 = vmatprep.subr.mxu0 0.0
    %3397 = vmatpush1.msra.mxu0 0.0
    %3398 = vmatprep.mubr.f32.mxu0 0.0
    %3399 = vmatmul.mubr.f32.gmra.mrb[0].mxu0 %v3332
    %v3400 = vpop.f32.mrb[0].mxu0
    %v3401 = vadd.f32 0.0, %v3400
    %v3402 = vpop.f32.mrb[0].mxu0
    %3403 = vdwg.mxu0
    %3404 = vrot.lane.b32.xlu0 %v2323, 48
    %v3405 = vpop.permute.xlu0 %3404
    %v3408 = vsel %vm253, %v3327, 0
    %3410 = vmatprep.subr.mxu0 0.0
    %3411 = vmatpush1.msra.mxu0 %v3405
    %3412 = vmatprep.subr.mxu0 0.0
    %3413 = vmatpush1.msra.mxu0 0.0
    %3414 = vmatprep.subr.mxu0 0.0
    %3415 = vmatpush1.msra.mxu0 0.0
    %3416 = vmatprep.subr.mxu0 0.0
    %3417 = vmatpush1.msra.mxu0 0.0
    %3418 = vmatprep.subr.mxu0 0.0
    %3419 = vmatpush1.msra.mxu0 0.0
    %3420 = vmatprep.subr.mxu0 0.0
    %3421 = vmatpush1.msra.mxu0 0.0
    %3422 = vmatprep.subr.mxu0 0.0
    %3423 = vmatpush1.msra.mxu0 0.0
    %3424 = vmatprep.subr.mxu0 0.0
    %3425 = vmatpush1.msra.mxu0 0.0
    %3426 = vmatprep.subr.mxu0 0.0
    %3427 = vmatpush1.msra.mxu0 0.0
    %3428 = vmatprep.subr.mxu0 0.0
    %3429 = vmatpush1.msra.mxu0 0.0
    %3430 = vmatprep.subr.mxu0 0.0
    %3431 = vmatpush1.msra.mxu0 0.0
    %3432 = vmatprep.subr.mxu0 0.0
    %3433 = vmatpush1.msra.mxu0 0.0
    %3434 = vmatprep.subr.mxu0 0.0
    %3435 = vmatpush1.msra.mxu0 0.0
    %3436 = vmatprep.subr.mxu0 0.0
    %3437 = vmatpush1.msra.mxu0 0.0
    %3438 = vmatprep.subr.mxu0 0.0
    %3439 = vmatpush1.msra.mxu0 0.0
    %3440 = vmatprep.subr.mxu0 0.0
    %3441 = vmatpush1.msra.mxu0 0.0
    %3442 = vmatprep.subr.mxu0 0.0
    %3443 = vmatpush1.msra.mxu0 0.0
    %3444 = vmatprep.subr.mxu0 0.0
    %3445 = vmatpush1.msra.mxu0 0.0
    %3446 = vmatprep.subr.mxu0 0.0
    %3447 = vmatpush1.msra.mxu0 0.0
    %3448 = vmatprep.subr.mxu0 0.0
    %3449 = vmatpush1.msra.mxu0 0.0
    %3450 = vmatprep.subr.mxu0 0.0
    %3451 = vmatpush1.msra.mxu0 0.0
    %3452 = vmatprep.subr.mxu0 0.0
    %3453 = vmatpush1.msra.mxu0 0.0
    %3454 = vmatprep.subr.mxu0 0.0
    %3455 = vmatpush1.msra.mxu0 0.0
    %3456 = vmatprep.subr.mxu0 0.0
    %3457 = vmatpush1.msra.mxu0 0.0
    %3458 = vmatprep.subr.mxu0 0.0
    %3459 = vmatpush1.msra.mxu0 0.0
    %3460 = vmatprep.subr.mxu0 0.0
    %3461 = vmatpush1.msra.mxu0 0.0
    %3462 = vmatprep.subr.mxu0 0.0
    %3463 = vmatpush1.msra.mxu0 0.0
    %3464 = vmatprep.subr.mxu0 0.0
    %3465 = vmatpush1.msra.mxu0 0.0
    %3466 = vmatprep.subr.mxu0 0.0
    %3467 = vmatpush1.msra.mxu0 0.0
    %3468 = vmatprep.subr.mxu0 0.0
    %3469 = vmatpush1.msra.mxu0 0.0
    %3470 = vmatprep.subr.mxu0 0.0
    %3471 = vmatpush1.msra.mxu0 0.0
    %3472 = vmatprep.subr.mxu0 0.0
    %3473 = vmatpush1.msra.mxu0 0.0
    %3474 = vmatprep.mubr.f32.mxu0 0.0
    %3475 = vmatmul.mubr.f32.gmra.mrb[0].mxu0 %v3408
    %v3476 = vpop.f32.mrb[0].mxu0
    %v3477 = vadd.f32 0.0, %v3476
    %v3478 = vpop.f32.mrb[0].mxu0
    %3479 = vdwg.mxu0
    %s3480 = scalar_lea.vmem %s8, 48
    %v3481 = vld [vmem:[%s3480] sm:$0xff]
    %v3483 = vsel %vm253, %v3401, 0
    %v3486 = vsel %vm253, %v3477, 0
    %3488 = vmatprep.subr.mxu0 0.0
    %3489 = vmatpush1.msra.mxu0 %v3481
    %3490 = vmatprep.subr.mxu0 0.0
    %3491 = vmatpush1.msra.mxu0 0.0
    %3492 = vmatprep.subr.mxu0 0.0
    %3493 = vmatpush1.msra.mxu0 0.0
    %3494 = vmatprep.subr.mxu0 0.0
    %3495 = vmatpush1.msra.mxu0 0.0
    %3496 = vmatprep.subr.mxu0 0.0
    %3497 = vmatpush1.msra.mxu0 0.0
    %3498 = vmatprep.subr.mxu0 0.0
    %3499 = vmatpush1.msra.mxu0 0.0
    %3500 = vmatprep.subr.mxu0 0.0
    %3501 = vmatpush1.msra.mxu0 0.0
    %3502 = vmatprep.subr.mxu0 0.0
    %3503 = vmatpush1.msra.mxu0 0.0
    %3504 = vmatprep.subr.mxu0 0.0
    %3505 = vmatpush1.msra.mxu0 0.0
    %3506 = vmatprep.subr.mxu0 0.0
    %3507 = vmatpush1.msra.mxu0 0.0
    %3508 = vmatprep.subr.mxu0 0.0
    %3509 = vmatpush1.msra.mxu0 0.0
    %3510 = vmatprep.subr.mxu0 0.0
    %3511 = vmatpush1.msra.mxu0 0.0
    %3512 = vmatprep.subr.mxu0 0.0
    %3513 = vmatpush1.msra.mxu0 0.0
    %3514 = vmatprep.subr.mxu0 0.0
    %3515 = vmatpush1.msra.mxu0 0.0
    %3516 = vmatprep.subr.mxu0 0.0
    %3517 = vmatpush1.msra.mxu0 0.0
    %3518 = vmatprep.subr.mxu0 0.0
    %3519 = vmatpush1.msra.mxu0 0.0
    %3520 = vmatprep.subr.mxu0 0.0
    %3521 = vmatpush1.msra.mxu0 0.0
    %3522 = vmatprep.subr.mxu0 0.0
    %3523 = vmatpush1.msra.mxu0 0.0
    %3524 = vmatprep.subr.mxu0 0.0
    %3525 = vmatpush1.msra.mxu0 0.0
    %3526 = vmatprep.subr.mxu0 0.0
    %3527 = vmatpush1.msra.mxu0 0.0
    %3528 = vmatprep.subr.mxu0 0.0
    %3529 = vmatpush1.msra.mxu0 0.0
    %3530 = vmatprep.subr.mxu0 0.0
    %3531 = vmatpush1.msra.mxu0 0.0
    %3532 = vmatprep.subr.mxu0 0.0
    %3533 = vmatpush1.msra.mxu0 0.0
    %3534 = vmatprep.subr.mxu0 0.0
    %3535 = vmatpush1.msra.mxu0 0.0
    %3536 = vmatprep.subr.mxu0 0.0
    %3537 = vmatpush1.msra.mxu0 0.0
    %3538 = vmatprep.subr.mxu0 0.0
    %3539 = vmatpush1.msra.mxu0 0.0
    %3540 = vmatprep.subr.mxu0 0.0
    %3541 = vmatpush1.msra.mxu0 0.0
    %3542 = vmatprep.subr.mxu0 0.0
    %3543 = vmatpush1.msra.mxu0 0.0
    %3544 = vmatprep.subr.mxu0 0.0
    %3545 = vmatpush1.msra.mxu0 0.0
    %3546 = vmatprep.subr.mxu0 0.0
    %3547 = vmatpush1.msra.mxu0 0.0
    %3548 = vmatprep.subr.mxu0 0.0
    %3549 = vmatpush1.msra.mxu0 0.0
    %3550 = vmatprep.subr.mxu0 0.0
    %3551 = vmatpush1.msra.mxu0 0.0
    %3552 = vmatprep.mubr.f32.mxu0 0.0
    %3553 = vmatmul.mubr.f32.gmra.mrb[0].mxu0 %v3483
    %v3554 = vpop.f32.mrb[0].mxu0
    %v3555 = vadd.f32 0.0, %v3554
    %v3556 = vpop.f32.mrb[0].mxu0
    %3557 = vmatprep.mubr.f32.mxu0 0.0
    %3558 = vmatmul.mubr.f32.gmra.mrb[0].mxu0 %v3486
    %v3559 = vpop.f32.mrb[0].mxu0
    %v3560 = vadd.f32 0.0, %v3559
    %v3561 = vpop.f32.mrb[0].mxu0
    %3562 = vdwg.mxu0
    %v3563 = vadd.f32 %v3142, %v3555
    %v3564 = vadd.f32 %v3147, %v3560
    %3565 = vrot.lane.b32.xlu0 %v2318, 104
    %v3566 = vpop.permute.xlu0 %3565
    %3567 = vrot.lane.b32.xlu0 %v2318, 72
    %v3568 = vpop.permute.xlu0 %3567
    %v3569 = vsel %vm253, %v3566, 0
    %v3571 = vsel %vm253, %v3568, 0
    %3573 = vmatprep.subr.mxu0 0.0
    %3574 = vmatpush1.xpose.msra.mxu0 %v3571
    %3575 = vmatprep.subr.mxu0 0.0
    %3576 = vmatpush1.xpose.msra.mxu0 0.0
    %3577 = vmatprep.subr.mxu0 0.0
    %3578 = vmatpush1.xpose.msra.mxu0 0.0
    %3579 = vmatprep.subr.mxu0 0.0
    %3580 = vmatpush1.xpose.msra.mxu0 0.0
    %3581 = vmatprep.subr.mxu0 0.0
    %3582 = vmatpush1.xpose.msra.mxu0 0.0
    %3583 = vmatprep.subr.mxu0 0.0
    %3584 = vmatpush1.xpose.msra.mxu0 0.0
    %3585 = vmatprep.subr.mxu0 0.0
    %3586 = vmatpush1.xpose.msra.mxu0 0.0
    %3587 = vmatprep.subr.mxu0 0.0
    %3588 = vmatpush1.xpose.msra.mxu0 0.0
    %3589 = vmatprep.subr.mxu0 0.0
    %3590 = vmatpush1.xpose.msra.mxu0 0.0
    %3591 = vmatprep.subr.mxu0 0.0
    %3592 = vmatpush1.xpose.msra.mxu0 0.0
    %3593 = vmatprep.subr.mxu0 0.0
    %3594 = vmatpush1.xpose.msra.mxu0 0.0
    %3595 = vmatprep.subr.mxu0 0.0
    %3596 = vmatpush1.xpose.msra.mxu0 0.0
    %3597 = vmatprep.subr.mxu0 0.0
    %3598 = vmatpush1.xpose.msra.mxu0 0.0
    %3599 = vmatprep.subr.mxu0 0.0
    %3600 = vmatpush1.xpose.msra.mxu0 0.0
    %3601 = vmatprep.subr.mxu0 0.0
    %3602 = vmatpush1.xpose.msra.mxu0 0.0
    %3603 = vmatprep.subr.mxu0 0.0
    %3604 = vmatpush1.xpose.msra.mxu0 0.0
    %3605 = vmatprep.subr.mxu0 0.0
    %3606 = vmatpush1.xpose.msra.mxu0 0.0
    %3607 = vmatprep.subr.mxu0 0.0
    %3608 = vmatpush1.xpose.msra.mxu0 0.0
    %3609 = vmatprep.subr.mxu0 0.0
    %3610 = vmatpush1.xpose.msra.mxu0 0.0
    %3611 = vmatprep.subr.mxu0 0.0
    %3612 = vmatpush1.xpose.msra.mxu0 0.0
    %3613 = vmatprep.subr.mxu0 0.0
    %3614 = vmatpush1.xpose.msra.mxu0 0.0
    %3615 = vmatprep.subr.mxu0 0.0
    %3616 = vmatpush1.xpose.msra.mxu0 0.0
    %3617 = vmatprep.subr.mxu0 0.0
    %3618 = vmatpush1.xpose.msra.mxu0 0.0
    %3619 = vmatprep.subr.mxu0 0.0
    %3620 = vmatpush1.xpose.msra.mxu0 0.0
    %3621 = vmatprep.subr.mxu0 0.0
    %3622 = vmatpush1.xpose.msra.mxu0 0.0
    %3623 = vmatprep.subr.mxu0 0.0
    %3624 = vmatpush1.xpose.msra.mxu0 0.0
    %3625 = vmatprep.subr.mxu0 0.0
    %3626 = vmatpush1.xpose.msra.mxu0 0.0
    %3627 = vmatprep.subr.mxu0 0.0
    %3628 = vmatpush1.xpose.msra.mxu0 0.0
    %3629 = vmatprep.subr.mxu0 0.0
    %3630 = vmatpush1.xpose.msra.mxu0 0.0
    %3631 = vmatprep.subr.mxu0 0.0
    %3632 = vmatpush1.xpose.msra.mxu0 0.0
    %3633 = vmatprep.subr.mxu0 0.0
    %3634 = vmatpush1.xpose.msra.mxu0 0.0
    %3635 = vmatprep.subr.mxu0 0.0
    %3636 = vmatpush1.xpose.msra.mxu0 0.0
    %3637 = vmatprep.mubr.f32.mxu0 0.0
    %3638 = vmatmul.mubr.f32.gmra.mrb[0].mxu0 %v3569
    %v3639 = vpop.f32.mrb[0].mxu0
    %v3640 = vadd.f32 %v92, %v3639
    %v3641 = vpop.f32.mrb[0].mxu0
    %3642 = vdwg.mxu0
    %3643 = vrot.lane.b32.xlu0 %v2323, 104
    %v3644 = vpop.permute.xlu0 %3643
    %3645 = vrot.lane.b32.xlu0 %v2323, 72
    %v3646 = vpop.permute.xlu0 %3645
    %v3647 = vsel %vm253, %v3644, 0
    %v3649 = vsel %vm253, %v3646, 0
    %3651 = vmatprep.subr.mxu0 0.0
    %3652 = vmatpush1.xpose.msra.mxu0 %v3649
    %3653 = vmatprep.subr.mxu0 0.0
    %3654 = vmatpush1.xpose.msra.mxu0 0.0
    %3655 = vmatprep.subr.mxu0 0.0
    %3656 = vmatpush1.xpose.msra.mxu0 0.0
    %3657 = vmatprep.subr.mxu0 0.0
    %3658 = vmatpush1.xpose.msra.mxu0 0.0
    %3659 = vmatprep.subr.mxu0 0.0
    %3660 = vmatpush1.xpose.msra.mxu0 0.0
    %3661 = vmatprep.subr.mxu0 0.0
    %3662 = vmatpush1.xpose.msra.mxu0 0.0
    %3663 = vmatprep.subr.mxu0 0.0
    %3664 = vmatpush1.xpose.msra.mxu0 0.0
    %3665 = vmatprep.subr.mxu0 0.0
    %3666 = vmatpush1.xpose.msra.mxu0 0.0
    %3667 = vmatprep.subr.mxu0 0.0
    %3668 = vmatpush1.xpose.msra.mxu0 0.0
    %3669 = vmatprep.subr.mxu0 0.0
    %3670 = vmatpush1.xpose.msra.mxu0 0.0
    %3671 = vmatprep.subr.mxu0 0.0
    %3672 = vmatpush1.xpose.msra.mxu0 0.0
    %3673 = vmatprep.subr.mxu0 0.0
    %3674 = vmatpush1.xpose.msra.mxu0 0.0
    %3675 = vmatprep.subr.mxu0 0.0
    %3676 = vmatpush1.xpose.msra.mxu0 0.0
    %3677 = vmatprep.subr.mxu0 0.0
    %3678 = vmatpush1.xpose.msra.mxu0 0.0
    %3679 = vmatprep.subr.mxu0 0.0
    %3680 = vmatpush1.xpose.msra.mxu0 0.0
    %3681 = vmatprep.subr.mxu0 0.0
    %3682 = vmatpush1.xpose.msra.mxu0 0.0
    %3683 = vmatprep.subr.mxu0 0.0
    %3684 = vmatpush1.xpose.msra.mxu0 0.0
    %3685 = vmatprep.subr.mxu0 0.0
    %3686 = vmatpush1.xpose.msra.mxu0 0.0
    %3687 = vmatprep.subr.mxu0 0.0
    %3688 = vmatpush1.xpose.msra.mxu0 0.0
    %3689 = vmatprep.subr.mxu0 0.0
    %3690 = vmatpush1.xpose.msra.mxu0 0.0
    %3691 = vmatprep.subr.mxu0 0.0
    %3692 = vmatpush1.xpose.msra.mxu0 0.0
    %3693 = vmatprep.subr.mxu0 0.0
    %3694 = vmatpush1.xpose.msra.mxu0 0.0
    %3695 = vmatprep.subr.mxu0 0.0
    %3696 = vmatpush1.xpose.msra.mxu0 0.0
    %3697 = vmatprep.subr.mxu0 0.0
    %3698 = vmatpush1.xpose.msra.mxu0 0.0
    %3699 = vmatprep.subr.mxu0 0.0
    %3700 = vmatpush1.xpose.msra.mxu0 0.0
    %3701 = vmatprep.subr.mxu0 0.0
    %3702 = vmatpush1.xpose.msra.mxu0 0.0
    %3703 = vmatprep.subr.mxu0 0.0
    %3704 = vmatpush1.xpose.msra.mxu0 0.0
    %3705 = vmatprep.subr.mxu0 0.0
    %3706 = vmatpush1.xpose.msra.mxu0 0.0
    %3707 = vmatprep.subr.mxu0 0.0
    %3708 = vmatpush1.xpose.msra.mxu0 0.0
    %3709 = vmatprep.subr.mxu0 0.0
    %3710 = vmatpush1.xpose.msra.mxu0 0.0
    %3711 = vmatprep.subr.mxu0 0.0
    %3712 = vmatpush1.xpose.msra.mxu0 0.0
    %3713 = vmatprep.subr.mxu0 0.0
    %3714 = vmatpush1.xpose.msra.mxu0 0.0
    %3715 = vmatprep.mubr.f32.mxu0 0.0
    %3716 = vmatmul.mubr.f32.gmra.mrb[0].mxu0 %v3647
    %v3717 = vpop.f32.mrb[0].mxu0
    %v3718 = vadd.f32 %v96, %v3717
    %v3719 = vpop.f32.mrb[0].mxu0
    %3720 = vdwg.mxu0
    %v3721 = vsel %vm253, %v3640, -inf
    %3722 = vmax.xlane.f32.xlu0 %v3721
    %v3723 = vpop.xlane.xlu0 %3722
    %v3724 = vsel %vm253, %v3718, -inf
    %3725 = vmax.xlane.f32.xlu0 %v3724
    %v3726 = vpop.xlane.xlu0 %3725
    %v3727 = vsub.f32 %v3640, %v3723
    %v3728 = vsub.f32 %v3718, %v3726
    %v3729 = vmul.f32 %v3727, 1.442695
    %v3730 = vpow.pop %v3729
    %v3731 = vmul.f32 %v3728, 1.442695
    %v3732 = vpow.pop %v3731
    %v3733 = vsel %vm253, %v3730, 0.0
    %3734 = vadd.xlane.f32.xlu0 %v3733
    %v3735 = vpop.xlane.xlu0 %3734
    %v3736 = vsel %vm253, %v3732, 0.0
    %3737 = vadd.xlane.f32.xlu0 %v3736
    %v3738 = vpop.xlane.xlu0 %3737
    %v3739 = vrcp.pop %v3735
    %v3740 = vrcp.pop %v3738
    %v3741 = vmul.f32 %v3730, %v3739
    %v3742 = vmul.f32 %v3732, %v3740
    %3743 = vrot.lane.b32.xlu0 %v2318, 40
    %v3744 = vpop.permute.xlu0 %3743
    %v3747 = vsel %vm253, %v3741, 0
    %3749 = vmatprep.subr.mxu0 0.0
    %3750 = vmatpush1.msra.mxu0 %v3744
    %3751 = vmatprep.subr.mxu0 0.0
    %3752 = vmatpush1.msra.mxu0 0.0
    %3753 = vmatprep.subr.mxu0 0.0
    %3754 = vmatpush1.msra.mxu0 0.0
    %3755 = vmatprep.subr.mxu0 0.0
    %3756 = vmatpush1.msra.mxu0 0.0
    %3757 = vmatprep.subr.mxu0 0.0
    %3758 = vmatpush1.msra.mxu0 0.0
    %3759 = vmatprep.subr.mxu0 0.0
    %3760 = vmatpush1.msra.mxu0 0.0
    %3761 = vmatprep.subr.mxu0 0.0
    %3762 = vmatpush1.msra.mxu0 0.0
    %3763 = vmatprep.subr.mxu0 0.0
    %3764 = vmatpush1.msra.mxu0 0.0
    %3765 = vmatprep.subr.mxu0 0.0
    %3766 = vmatpush1.msra.mxu0 0.0
    %3767 = vmatprep.subr.mxu0 0.0
    %3768 = vmatpush1.msra.mxu0 0.0
    %3769 = vmatprep.subr.mxu0 0.0
    %3770 = vmatpush1.msra.mxu0 0.0
    %3771 = vmatprep.subr.mxu0 0.0
    %3772 = vmatpush1.msra.mxu0 0.0
    %3773 = vmatprep.subr.mxu0 0.0
    %3774 = vmatpush1.msra.mxu0 0.0
    %3775 = vmatprep.subr.mxu0 0.0
    %3776 = vmatpush1.msra.mxu0 0.0
    %3777 = vmatprep.subr.mxu0 0.0
    %3778 = vmatpush1.msra.mxu0 0.0
    %3779 = vmatprep.subr.mxu0 0.0
    %3780 = vmatpush1.msra.mxu0 0.0
    %3781 = vmatprep.subr.mxu0 0.0
    %3782 = vmatpush1.msra.mxu0 0.0
    %3783 = vmatprep.subr.mxu0 0.0
    %3784 = vmatpush1.msra.mxu0 0.0
    %3785 = vmatprep.subr.mxu0 0.0
    %3786 = vmatpush1.msra.mxu0 0.0
    %3787 = vmatprep.subr.mxu0 0.0
    %3788 = vmatpush1.msra.mxu0 0.0
    %3789 = vmatprep.subr.mxu0 0.0
    %3790 = vmatpush1.msra.mxu0 0.0
    %3791 = vmatprep.subr.mxu0 0.0
    %3792 = vmatpush1.msra.mxu0 0.0
    %3793 = vmatprep.subr.mxu0 0.0
    %3794 = vmatpush1.msra.mxu0 0.0
    %3795 = vmatprep.subr.mxu0 0.0
    %3796 = vmatpush1.msra.mxu0 0.0
    %3797 = vmatprep.subr.mxu0 0.0
    %3798 = vmatpush1.msra.mxu0 0.0
    %3799 = vmatprep.subr.mxu0 0.0
    %3800 = vmatpush1.msra.mxu0 0.0
    %3801 = vmatprep.subr.mxu0 0.0
    %3802 = vmatpush1.msra.mxu0 0.0
    %3803 = vmatprep.subr.mxu0 0.0
    %3804 = vmatpush1.msra.mxu0 0.0
    %3805 = vmatprep.subr.mxu0 0.0
    %3806 = vmatpush1.msra.mxu0 0.0
    %3807 = vmatprep.subr.mxu0 0.0
    %3808 = vmatpush1.msra.mxu0 0.0
    %3809 = vmatprep.subr.mxu0 0.0
    %3810 = vmatpush1.msra.mxu0 0.0
    %3811 = vmatprep.subr.mxu0 0.0
    %3812 = vmatpush1.msra.mxu0 0.0
    %3813 = vmatprep.mubr.f32.mxu0 0.0
    %3814 = vmatmul.mubr.f32.gmra.mrb[0].mxu0 %v3747
    %v3815 = vpop.f32.mrb[0].mxu0
    %v3816 = vadd.f32 0.0, %v3815
    %v3817 = vpop.f32.mrb[0].mxu0
    %3818 = vdwg.mxu0
    %3819 = vrot.lane.b32.xlu0 %v2323, 40
    %v3820 = vpop.permute.xlu0 %3819
    %v3823 = vsel %vm253, %v3742, 0
    %3825 = vmatprep.subr.mxu0 0.0
    %3826 = vmatpush1.msra.mxu0 %v3820
    %3827 = vmatprep.subr.mxu0 0.0
    %3828 = vmatpush1.msra.mxu0 0.0
    %3829 = vmatprep.subr.mxu0 0.0
    %3830 = vmatpush1.msra.mxu0 0.0
    %3831 = vmatprep.subr.mxu0 0.0
    %3832 = vmatpush1.msra.mxu0 0.0
    %3833 = vmatprep.subr.mxu0 0.0
    %3834 = vmatpush1.msra.mxu0 0.0
    %3835 = vmatprep.subr.mxu0 0.0
    %3836 = vmatpush1.msra.mxu0 0.0
    %3837 = vmatprep.subr.mxu0 0.0
    %3838 = vmatpush1.msra.mxu0 0.0
    %3839 = vmatprep.subr.mxu0 0.0
    %3840 = vmatpush1.msra.mxu0 0.0
    %3841 = vmatprep.subr.mxu0 0.0
    %3842 = vmatpush1.msra.mxu0 0.0
    %3843 = vmatprep.subr.mxu0 0.0
    %3844 = vmatpush1.msra.mxu0 0.0
    %3845 = vmatprep.subr.mxu0 0.0
    %3846 = vmatpush1.msra.mxu0 0.0
    %3847 = vmatprep.subr.mxu0 0.0
    %3848 = vmatpush1.msra.mxu0 0.0
    %3849 = vmatprep.subr.mxu0 0.0
    %3850 = vmatpush1.msra.mxu0 0.0
    %3851 = vmatprep.subr.mxu0 0.0
    %3852 = vmatpush1.msra.mxu0 0.0
    %3853 = vmatprep.subr.mxu0 0.0
    %3854 = vmatpush1.msra.mxu0 0.0
    %3855 = vmatprep.subr.mxu0 0.0
    %3856 = vmatpush1.msra.mxu0 0.0
    %3857 = vmatprep.subr.mxu0 0.0
    %3858 = vmatpush1.msra.mxu0 0.0
    %3859 = vmatprep.subr.mxu0 0.0
    %3860 = vmatpush1.msra.mxu0 0.0
    %3861 = vmatprep.subr.mxu0 0.0
    %3862 = vmatpush1.msra.mxu0 0.0
    %3863 = vmatprep.subr.mxu0 0.0
    %3864 = vmatpush1.msra.mxu0 0.0
    %3865 = vmatprep.subr.mxu0 0.0
    %3866 = vmatpush1.msra.mxu0 0.0
    %3867 = vmatprep.subr.mxu0 0.0
    %3868 = vmatpush1.msra.mxu0 0.0
    %3869 = vmatprep.subr.mxu0 0.0
    %3870 = vmatpush1.msra.mxu0 0.0
    %3871 = vmatprep.subr.mxu0 0.0
    %3872 = vmatpush1.msra.mxu0 0.0
    %3873 = vmatprep.subr.mxu0 0.0
    %3874 = vmatpush1.msra.mxu0 0.0
    %3875 = vmatprep.subr.mxu0 0.0
    %3876 = vmatpush1.msra.mxu0 0.0
    %3877 = vmatprep.subr.mxu0 0.0
    %3878 = vmatpush1.msra.mxu0 0.0
    %3879 = vmatprep.subr.mxu0 0.0
    %3880 = vmatpush1.msra.mxu0 0.0
    %3881 = vmatprep.subr.mxu0 0.0
    %3882 = vmatpush1.msra.mxu0 0.0
    %3883 = vmatprep.subr.mxu0 0.0
    %3884 = vmatpush1.msra.mxu0 0.0
    %3885 = vmatprep.subr.mxu0 0.0
    %3886 = vmatpush1.msra.mxu0 0.0
    %3887 = vmatprep.subr.mxu0 0.0
    %3888 = vmatpush1.msra.mxu0 0.0
    %3889 = vmatprep.mubr.f32.mxu0 0.0
    %3890 = vmatmul.mubr.f32.gmra.mrb[0].mxu0 %v3823
    %v3891 = vpop.f32.mrb[0].mxu0
    %v3892 = vadd.f32 0.0, %v3891
    %v3893 = vpop.f32.mrb[0].mxu0
    %3894 = vdwg.mxu0
    %s3895 = scalar_lea.vmem %s8, 56
    %v3896 = vld [vmem:[%s3895] sm:$0xff]
    %v3898 = vsel %vm253, %v3816, 0
    %v3901 = vsel %vm253, %v3892, 0
    %3903 = vmatprep.subr.mxu0 0.0
    %3904 = vmatpush1.msra.mxu0 %v3896
    %3905 = vmatprep.subr.mxu0 0.0
    %3906 = vmatpush1.msra.mxu0 0.0
    %3907 = vmatprep.subr.mxu0 0.0
    %3908 = vmatpush1.msra.mxu0 0.0
    %3909 = vmatprep.subr.mxu0 0.0
    %3910 = vmatpush1.msra.mxu0 0.0
    %3911 = vmatprep.subr.mxu0 0.0
    %3912 = vmatpush1.msra.mxu0 0.0
    %3913 = vmatprep.subr.mxu0 0.0
    %3914 = vmatpush1.msra.mxu0 0.0
    %3915 = vmatprep.subr.mxu0 0.0
    %3916 = vmatpush1.msra.mxu0 0.0
    %3917 = vmatprep.subr.mxu0 0.0
    %3918 = vmatpush1.msra.mxu0 0.0
    %3919 = vmatprep.subr.mxu0 0.0
    %3920 = vmatpush1.msra.mxu0 0.0
    %3921 = vmatprep.subr.mxu0 0.0
    %3922 = vmatpush1.msra.mxu0 0.0
    %3923 = vmatprep.subr.mxu0 0.0
    %3924 = vmatpush1.msra.mxu0 0.0
    %3925 = vmatprep.subr.mxu0 0.0
    %3926 = vmatpush1.msra.mxu0 0.0
    %3927 = vmatprep.subr.mxu0 0.0
    %3928 = vmatpush1.msra.mxu0 0.0
    %3929 = vmatprep.subr.mxu0 0.0
    %3930 = vmatpush1.msra.mxu0 0.0
    %3931 = vmatprep.subr.mxu0 0.0
    %3932 = vmatpush1.msra.mxu0 0.0
    %3933 = vmatprep.subr.mxu0 0.0
    %3934 = vmatpush1.msra.mxu0 0.0
    %3935 = vmatprep.subr.mxu0 0.0
    %3936 = vmatpush1.msra.mxu0 0.0
    %3937 = vmatprep.subr.mxu0 0.0
    %3938 = vmatpush1.msra.mxu0 0.0
    %3939 = vmatprep.subr.mxu0 0.0
    %3940 = vmatpush1.msra.mxu0 0.0
    %3941 = vmatprep.subr.mxu0 0.0
    %3942 = vmatpush1.msra.mxu0 0.0
    %3943 = vmatprep.subr.mxu0 0.0
    %3944 = vmatpush1.msra.mxu0 0.0
    %3945 = vmatprep.subr.mxu0 0.0
    %3946 = vmatpush1.msra.mxu0 0.0
    %3947 = vmatprep.subr.mxu0 0.0
    %3948 = vmatpush1.msra.mxu0 0.0
    %3949 = vmatprep.subr.mxu0 0.0
    %3950 = vmatpush1.msra.mxu0 0.0
    %3951 = vmatprep.subr.mxu0 0.0
    %3952 = vmatpush1.msra.mxu0 0.0
    %3953 = vmatprep.subr.mxu0 0.0
    %3954 = vmatpush1.msra.mxu0 0.0
    %3955 = vmatprep.subr.mxu0 0.0
    %3956 = vmatpush1.msra.mxu0 0.0
    %3957 = vmatprep.subr.mxu0 0.0
    %3958 = vmatpush1.msra.mxu0 0.0
    %3959 = vmatprep.subr.mxu0 0.0
    %3960 = vmatpush1.msra.mxu0 0.0
    %3961 = vmatprep.subr.mxu0 0.0
    %3962 = vmatpush1.msra.mxu0 0.0
    %3963 = vmatprep.subr.mxu0 0.0
    %3964 = vmatpush1.msra.mxu0 0.0
    %3965 = vmatprep.subr.mxu0 0.0
    %3966 = vmatpush1.msra.mxu0 0.0
    %3967 = vmatprep.mubr.f32.mxu0 0.0
    %3968 = vmatmul.mubr.f32.gmra.mrb[0].mxu0 %v3898
    %v3969 = vpop.f32.mrb[0].mxu0
    %v3970 = vadd.f32 0.0, %v3969
    %v3971 = vpop.f32.mrb[0].mxu0
    %3972 = vmatprep.mubr.f32.mxu0 0.0
    %3973 = vmatmul.mubr.f32.gmra.mrb[0].mxu0 %v3901
    %v3974 = vpop.f32.mrb[0].mxu0
    %v3975 = vadd.f32 0.0, %v3974
    %v3976 = vpop.f32.mrb[0].mxu0
    %3977 = vdwg.mxu0
    %v3978 = vadd.f32 %v3563, %v3970
    %v3979 = vadd.f32 %v3564, %v3975
    %s3980 = scalar_lea.vmem %s9, 1
    %v3981 = vld [vmem:[%s3980] sm:$0x1]
    %v3983 = vlaneseq
    %v3984 = vshrl.u32 %v3983, 7
    %v3985 = vsub.s32 0, %v3984
    %v3986 = vrot.slane %v3981, %v3985
    %v3988 = vadd.f32 %v3978, %v3986
    %v3989 = vadd.f32 %v3979, %v3986
    %v3990 = vadd.f32 %v3988, %v2211
    %v3991 = vadd.f32 %v3989, %v2212
    %s3992 = scalar_lea.vmem %s10, 1
    %v3993 = vld [vmem:[%s3992] sm:$0x1]
    %s3994 = scalar_lea.vmem %s11, 1
    %v3995 = vld [vmem:[%s3994] sm:$0x1]
    %v3996 = vsel %vm114, %v3990, 0.0
    %3997 = vadd.xlane.f32.xlu0 %v3996
    %v3998 = vpop.xlane.xlu0 %3997
    %v3999 = vsel %vm114, %v3991, 0.0
    %4000 = vadd.xlane.f32.xlu0 %v3999
    %v4001 = vpop.xlane.xlu0 %4000
    %v4002 = vmul.f32 %v3998, %v121
    %v4003 = vmul.f32 %v4001, %v121
    %v4004 = vsub.f32 %v3990, %v4002
    %v4005 = vsub.f32 %v3991, %v4003
    %v4006 = vmul.f32 %v4004, %v4004
    %v4007 = vmul.f32 %v4005, %v4005
    %v4008 = vsel %vm114, %v4006, 0.0
    %4009 = vadd.xlane.f32.xlu0 %v4008
    %v4010 = vpop.xlane.xlu0 %4009
    %v4011 = vsel %vm114, %v4007, 0.0
    %4012 = vadd.xlane.f32.xlu0 %v4011
    %v4013 = vpop.xlane.xlu0 %4012
    %v4014 = vmul.f32 %v4010, %v121
    %v4015 = vmul.f32 %v4013, %v121
    %v4016 = vadd.f32 %v4014, 1e-12
    %v4017 = vadd.f32 %v4015, 1e-12
    %v4018 = vrsqrt.pop %v4016
    %v4019 = vrsqrt.pop %v4017
    %v4020 = vmul.f32 %v4004, %v4018
    %v4021 = vmul.f32 %v4005, %v4019
    %v4023 = vlaneseq
    %v4024 = vshrl.u32 %v4023, 7
    %v4025 = vsub.s32 0, %v4024
    %v4026 = vrot.slane %v3993, %v4025
    %v4028 = vmul.f32 %v4020, %v4026
    %v4029 = vmul.f32 %v4021, %v4026
    %v4031 = vlaneseq
    %v4032 = vshrl.u32 %v4031, 7
    %v4033 = vsub.s32 0, %v4032
    %v4034 = vrot.slane %v3995, %v4033
    %v4036 = vadd.f32 %v4028, %v4034
    %v4037 = vadd.f32 %v4029, %v4034
    %s4038 = scalar_lea.vmem %s12, 32
    %v4039 = vld [vmem:[%s4038] sm:$0xff]
    %v4040 = vld [vmem:[%s4038 + $0x8] sm:$0xff]
    %v4041 = vld [vmem:[%s4038 + $0x10] sm:$0xff]
    %v4042 = vld [vmem:[%s4038 + $0x18] sm:$0xff]
    %s4043 = scalar_lea.vmem %s13, 1
    %v4044 = vld [vmem:[%s4043] sm:$0x1]
    %v4046 = vlaneseq
    %v4047 = vshrl.u32 %v4046, 7
    %v4048 = vsub.s32 0, %v4047
    %v4049 = vrot.slane %v4044, %v4048
    %v4052 = vsel %vm114, %v4036, 0
    %v4055 = vsel %vm114, %v4037, 0
    %4057 = vmatprep.subr.mxu0 0.0
    %4058 = vmatpush1.msra.mxu0 %v4039
    %4059 = vmatprep.subr.mxu0 0.0
    %4060 = vmatpush1.msra.mxu0 %v4040
    %4061 = vmatprep.subr.mxu0 0.0
    %4062 = vmatpush1.msra.mxu0 %v4041
    %4063 = vmatprep.subr.mxu0 0.0
    %4064 = vmatpush1.msra.mxu0 %v4042
    %4065 = vmatprep.subr.mxu0 0.0
    %4066 = vmatpush1.msra.mxu0 0.0
    %4067 = vmatprep.subr.mxu0 0.0
    %4068 = vmatpush1.msra.mxu0 0.0
    %4069 = vmatprep.subr.mxu0 0.0
    %4070 = vmatpush1.msra.mxu0 0.0
    %4071 = vmatprep.subr.mxu0 0.0
    %4072 = vmatpush1.msra.mxu0 0.0
    %4073 = vmatprep.subr.mxu0 0.0
    %4074 = vmatpush1.msra.mxu0 0.0
    %4075 = vmatprep.subr.mxu0 0.0
    %4076 = vmatpush1.msra.mxu0 0.0
    %4077 = vmatprep.subr.mxu0 0.0
    %4078 = vmatpush1.msra.mxu0 0.0
    %4079 = vmatprep.subr.mxu0 0.0
    %4080 = vmatpush1.msra.mxu0 0.0
    %4081 = vmatprep.subr.mxu0 0.0
    %4082 = vmatpush1.msra.mxu0 0.0
    %4083 = vmatprep.subr.mxu0 0.0
    %4084 = vmatpush1.msra.mxu0 0.0
    %4085 = vmatprep.subr.mxu0 0.0
    %4086 = vmatpush1.msra.mxu0 0.0
    %4087 = vmatprep.subr.mxu0 0.0
    %4088 = vmatpush1.msra.mxu0 0.0
    %4089 = vmatprep.subr.mxu0 0.0
    %4090 = vmatpush1.msra.mxu0 0.0
    %4091 = vmatprep.subr.mxu0 0.0
    %4092 = vmatpush1.msra.mxu0 0.0
    %4093 = vmatprep.subr.mxu0 0.0
    %4094 = vmatpush1.msra.mxu0 0.0
    %4095 = vmatprep.subr.mxu0 0.0
    %4096 = vmatpush1.msra.mxu0 0.0
    %4097 = vmatprep.subr.mxu0 0.0
    %4098 = vmatpush1.msra.mxu0 0.0
    %4099 = vmatprep.subr.mxu0 0.0
    %4100 = vmatpush1.msra.mxu0 0.0
    %4101 = vmatprep.subr.mxu0 0.0
    %4102 = vmatpush1.msra.mxu0 0.0
    %4103 = vmatprep.subr.mxu0 0.0
    %4104 = vmatpush1.msra.mxu0 0.0
    %4105 = vmatprep.subr.mxu0 0.0
    %4106 = vmatpush1.msra.mxu0 0.0
    %4107 = vmatprep.subr.mxu0 0.0
    %4108 = vmatpush1.msra.mxu0 0.0
    %4109 = vmatprep.subr.mxu0 0.0
    %4110 = vmatpush1.msra.mxu0 0.0
    %4111 = vmatprep.subr.mxu0 0.0
    %4112 = vmatpush1.msra.mxu0 0.0
    %4113 = vmatprep.subr.mxu0 0.0
    %4114 = vmatpush1.msra.mxu0 0.0
    %4115 = vmatprep.subr.mxu0 0.0
    %4116 = vmatpush1.msra.mxu0 0.0
    %4117 = vmatprep.subr.mxu0 0.0
    %4118 = vmatpush1.msra.mxu0 0.0
    %4119 = vmatprep.subr.mxu0 0.0
    %4120 = vmatpush1.msra.mxu0 0.0
    %4121 = vmatprep.mubr.f32.mxu0 0.0
    %4122 = vmatmul.mubr.f32.gmra.mrb[0].mxu0 %v4052
    %v4123 = vpop.f32.mrb[0].mxu0
    %v4124 = vadd.f32 %v4049, %v4123
    %v4125 = vpop.f32.mrb[0].mxu0
    %4126 = vmatprep.mubr.f32.mxu0 0.0
    %4127 = vmatmul.mubr.f32.gmra.mrb[0].mxu0 %v4055
    %v4128 = vpop.f32.mrb[0].mxu0
    %v4129 = vadd.f32 %v4049, %v4128
    %v4130 = vpop.f32.mrb[0].mxu0
    %4131 = vdwg.mxu0
    %v4132 = vmul.f32 %v4124, 0.5
    %v4133 = vmul.f32 %v4129, 0.5
    %v4134 = vmul.f32 %v4124, 0.044715
    %v4135 = vmul.f32 %v4129, 0.044715
    %v4136 = vmul.f32 %v4134, %v4124
    %v4137 = vmul.f32 %v4135, %v4129
    %v4138 = vmul.f32 %v4136, %v4124
    %v4139 = vmul.f32 %v4137, %v4129
    %v4140 = vadd.f32 %v4124, %v4138
    %v4141 = vadd.f32 %v4129, %v4139
    %v4142 = vmul.f32 %v4140, 0.7978846
    %v4143 = vmul.f32 %v4141, 0.7978846
    %v4144 = vtanh.pop %v4142
    %v4145 = vtanh.pop %v4143
    %v4146 = vadd.f32 %v4144, 1.0
    %v4147 = vadd.f32 %v4145, 1.0
    %v4148 = vmul.f32 %v4132, %v4146
    %v4149 = vmul.f32 %v4133, %v4147
    %s4150 = scalar_lea.vmem %s14, 128
    %v4151 = vld [vmem:[%s4150] sm:$0xff]
    %v4152 = vld [vmem:[%s4150 + $0x8] sm:$0xff]
    %v4153 = vld [vmem:[%s4150 + $0x10] sm:$0xff]
    %v4154 = vld [vmem:[%s4150 + $0x18] sm:$0xff]
    %v4155 = vld [vmem:[%s4150 + $0x20] sm:$0xff]
    %v4156 = vld [vmem:[%s4150 + $0x28] sm:$0xff]
    %v4157 = vld [vmem:[%s4150 + $0x30] sm:$0xff]
    %v4158 = vld [vmem:[%s4150 + $0x38] sm:$0xff]
    %v4159 = vld [vmem:[%s4150 + $0x40] sm:$0xff]
    %v4160 = vld [vmem:[%s4150 + $0x48] sm:$0xff]
    %v4161 = vld [vmem:[%s4150 + $0x50] sm:$0xff]
    %v4162 = vld [vmem:[%s4150 + $0x58] sm:$0xff]
    %v4163 = vld [vmem:[%s4150 + $0x60] sm:$0xff]
    %v4164 = vld [vmem:[%s4150 + $0x68] sm:$0xff]
    %v4165 = vld [vmem:[%s4150 + $0x70] sm:$0xff]
    %v4166 = vld [vmem:[%s4150 + $0x78] sm:$0xff]
    %s4167 = scalar_lea.vmem %s15, 1
    %v4168 = vld [vmem:[%s4167] sm:$0x1]
    %v4170 = vlaneseq
    %v4171 = vshrl.u32 %v4170, 7
    %v4172 = vsub.s32 0, %v4171
    %v4173 = vrot.slane %v4168, %v4172
    %4175 = vmatprep.subr.mxu0 0.0
    %4176 = vmatpush1.msra.mxu0 %v4151
    %4177 = vmatprep.subr.mxu0 0.0
    %4178 = vmatpush1.msra.mxu0 %v4152
    %4179 = vmatprep.subr.mxu0 0.0
    %4180 = vmatpush1.msra.mxu0 %v4153
    %4181 = vmatprep.subr.mxu0 0.0
    %4182 = vmatpush1.msra.mxu0 %v4154
    %4183 = vmatprep.subr.mxu0 0.0
    %4184 = vmatpush1.msra.mxu0 %v4155
    %4185 = vmatprep.subr.mxu0 0.0
    %4186 = vmatpush1.msra.mxu0 %v4156
    %4187 = vmatprep.subr.mxu0 0.0
    %4188 = vmatpush1.msra.mxu0 %v4157
    %4189 = vmatprep.subr.mxu0 0.0
    %4190 = vmatpush1.msra.mxu0 %v4158
    %4191 = vmatprep.subr.mxu0 0.0
    %4192 = vmatpush1.msra.mxu0 %v4159
    %4193 = vmatprep.subr.mxu0 0.0
    %4194 = vmatpush1.msra.mxu0 %v4160
    %4195 = vmatprep.subr.mxu0 0.0
    %4196 = vmatpush1.msra.mxu0 %v4161
    %4197 = vmatprep.subr.mxu0 0.0
    %4198 = vmatpush1.msra.mxu0 %v4162
    %4199 = vmatprep.subr.mxu0 0.0
    %4200 = vmatpush1.msra.mxu0 %v4163
    %4201 = vmatprep.subr.mxu0 0.0
    %4202 = vmatpush1.msra.mxu0 %v4164
    %4203 = vmatprep.subr.mxu0 0.0
    %4204 = vmatpush1.msra.mxu0 %v4165
    %4205 = vmatprep.subr.mxu0 0.0
    %4206 = vmatpush1.msra.mxu0 %v4166
    %4207 = vmatprep.subr.mxu0 0.0
    %4208 = vmatpush1.msra.mxu0 0.0
    %4209 = vmatprep.subr.mxu0 0.0
    %4210 = vmatpush1.msra.mxu0 0.0
    %4211 = vmatprep.subr.mxu0 0.0
    %4212 = vmatpush1.msra.mxu0 0.0
    %4213 = vmatprep.subr.mxu0 0.0
    %4214 = vmatpush1.msra.mxu0 0.0
    %4215 = vmatprep.subr.mxu0 0.0
    %4216 = vmatpush1.msra.mxu0 0.0
    %4217 = vmatprep.subr.mxu0 0.0
    %4218 = vmatpush1.msra.mxu0 0.0
    %4219 = vmatprep.subr.mxu0 0.0
    %4220 = vmatpush1.msra.mxu0 0.0
    %4221 = vmatprep.subr.mxu0 0.0
    %4222 = vmatpush1.msra.mxu0 0.0
    %4223 = vmatprep.subr.mxu0 0.0
    %4224 = vmatpush1.msra.mxu0 0.0
    %4225 = vmatprep.subr.mxu0 0.0
    %4226 = vmatpush1.msra.mxu0 0.0
    %4227 = vmatprep.subr.mxu0 0.0
    %4228 = vmatpush1.msra.mxu0 0.0
    %4229 = vmatprep.subr.mxu0 0.0
    %4230 = vmatpush1.msra.mxu0 0.0
    %4231 = vmatprep.subr.mxu0 0.0
    %4232 = vmatpush1.msra.mxu0 0.0
    %4233 = vmatprep.subr.mxu0 0.0
    %4234 = vmatpush1.msra.mxu0 0.0
    %4235 = vmatprep.subr.mxu0 0.0
    %4236 = vmatpush1.msra.mxu0 0.0
    %4237 = vmatprep.subr.mxu0 0.0
    %4238 = vmatpush1.msra.mxu0 0.0
    %4239 = vmatprep.mubr.f32.mxu0 0.0
    %4240 = vmatmul.mubr.f32.gmra.mrb[0].mxu0 %v4148
    %v4241 = vpop.f32.mrb[0].mxu0
    %v4242 = vadd.f32 %v4173, %v4241
    %v4243 = vpop.f32.mrb[0].mxu0
    %4244 = vmatprep.mubr.f32.mxu0 0.0
    %4245 = vmatmul.mubr.f32.gmra.mrb[0].mxu0 %v4149
    %v4246 = vpop.f32.mrb[0].mxu0
    %v4247 = vadd.f32 %v4173, %v4246
    %v4248 = vpop.f32.mrb[0].mxu0
    %4249 = vdwg.mxu0
    %v4250 = vadd.f32 %v4242, %v4036
    %v4251 = vadd.f32 %v4247, %v4037
    %s4252 = scalar_lea.vmem %s16, 1
    %v4253 = vld [vmem:[%s4252] sm:$0x1]
    %s4254 = scalar_lea.vmem %s17, 1
    %v4255 = vld [vmem:[%s4254] sm:$0x1]
    %v4256 = vsel %vm114, %v4250, 0.0
    %4257 = vadd.xlane.f32.xlu0 %v4256
    %v4258 = vpop.xlane.xlu0 %4257
    %v4259 = vsel %vm114, %v4251, 0.0
    %4260 = vadd.xlane.f32.xlu0 %v4259
    %v4261 = vpop.xlane.xlu0 %4260
    %v4262 = vmul.f32 %v4258, %v121
    %v4263 = vmul.f32 %v4261, %v121
    %v4264 = vsub.f32 %v4250, %v4262
    %v4265 = vsub.f32 %v4251, %v4263
    %v4266 = vmul.f32 %v4264, %v4264
    %v4267 = vmul.f32 %v4265, %v4265
    %v4268 = vsel %vm114, %v4266, 0.0
    %4269 = vadd.xlane.f32.xlu0 %v4268
    %v4270 = vpop.xlane.xlu0 %4269
    %v4271 = vsel %vm114, %v4267, 0.0
    %4272 = vadd.xlane.f32.xlu0 %v4271
    %v4273 = vpop.xlane.xlu0 %4272
    %v4274 = vmul.f32 %v4270, %v121
    %v4275 = vmul.f32 %v4273, %v121
    %v4276 = vadd.f32 %v4274, 1e-12
    %v4277 = vadd.f32 %v4275, 1e-12
    %v4278 = vrsqrt.pop %v4276
    %v4279 = vrsqrt.pop %v4277
    %v4280 = vmul.f32 %v4264, %v4278
    %v4281 = vmul.f32 %v4265, %v4279
    %v4283 = vlaneseq
    %v4284 = vshrl.u32 %v4283, 7
    %v4285 = vsub.s32 0, %v4284
    %v4286 = vrot.slane %v4253, %v4285
    %v4288 = vmul.f32 %v4280, %v4286
    %v4289 = vmul.f32 %v4281, %v4286
    %v4291 = vlaneseq
    %v4292 = vshrl.u32 %v4291, 7
    %v4293 = vsub.s32 0, %v4292
    %v4294 = vrot.slane %v4255, %v4293
    %v4296 = vadd.f32 %v4288, %v4294
    %v4297 = vadd.f32 %v4289, %v4294
    %v4298 = vsel %vm114, %v4296, 0.0
    %v4299 = vrot.slane %v4298, 4
    %v4300 = vadd.f32 %v4298, %v4299
    %v4301 = vrot.slane %v4300, 2
    %v4302 = vadd.f32 %v4300, %v4301
    %v4303 = vrot.slane %v4302, 1
    %v4304 = vadd.f32 %v4302, %v4303
    %v4305 = vsel %vm114, %v4297, 0.0
    %v4306 = vrot.slane %v4305, 4
    %v4307 = vadd.f32 %v4305, %v4306
    %v4308 = vrot.slane %v4307, 2
    %v4309 = vadd.f32 %v4307, %v4308
    %v4310 = vrot.slane %v4309, 1
    %v4311 = vadd.f32 %v4309, %v4310
    %v4312 = vmul.f32 %v4304, %v2227
    %v4313 = vmul.f32 %v4311, %v2227
    %v4314 = vadd.f32 %v2230, %v4312
    %v4315 = vadd.f32 %v2231, %v4313
    %s4316 = scalar_lea.vmem %s6, 64
    %v4317 = vld [vmem:[%s4316] sm:$0xff]
    %v4318 = vld [vmem:[%s4316 + $0x8] sm:$0xff]
    %v4319 = vld [vmem:[%s4316 + $0x10] sm:$0xff]
    %v4320 = vld [vmem:[%s4316 + $0x18] sm:$0xff]
    %s4321 = scalar_lea.vmem %s7, 2
    %v4322 = vld [vmem:[%s4321] sm:$0x1]
    %v4324 = vlaneseq
    %v4325 = vshrl.u32 %v4324, 7
    %v4326 = vsub.s32 0, %v4325
    %v4327 = vrot.slane %v4322, %v4326
    %v4330 = vsel %vm114, %v4296, 0
    %v4333 = vsel %vm114, %v4297, 0
    %4335 = vmatprep.subr.mxu0 0.0
    %4336 = vmatpush1.msra.mxu0 %v4317
    %4337 = vmatprep.subr.mxu0 0.0
    %4338 = vmatpush1.msra.mxu0 %v4318
    %4339 = vmatprep.subr.mxu0 0.0
    %4340 = vmatpush1.msra.mxu0 %v4319
    %4341 = vmatprep.subr.mxu0 0.0
    %4342 = vmatpush1.msra.mxu0 %v4320
    %4343 = vmatprep.subr.mxu0 0.0
    %4344 = vmatpush1.msra.mxu0 0.0
    %4345 = vmatprep.subr.mxu0 0.0
    %4346 = vmatpush1.msra.mxu0 0.0
    %4347 = vmatprep.subr.mxu0 0.0
    %4348 = vmatpush1.msra.mxu0 0.0
    %4349 = vmatprep.subr.mxu0 0.0
    %4350 = vmatpush1.msra.mxu0 0.0
    %4351 = vmatprep.subr.mxu0 0.0
    %4352 = vmatpush1.msra.mxu0 0.0
    %4353 = vmatprep.subr.mxu0 0.0
    %4354 = vmatpush1.msra.mxu0 0.0
    %4355 = vmatprep.subr.mxu0 0.0
    %4356 = vmatpush1.msra.mxu0 0.0
    %4357 = vmatprep.subr.mxu0 0.0
    %4358 = vmatpush1.msra.mxu0 0.0
    %4359 = vmatprep.subr.mxu0 0.0
    %4360 = vmatpush1.msra.mxu0 0.0
    %4361 = vmatprep.subr.mxu0 0.0
    %4362 = vmatpush1.msra.mxu0 0.0
    %4363 = vmatprep.subr.mxu0 0.0
    %4364 = vmatpush1.msra.mxu0 0.0
    %4365 = vmatprep.subr.mxu0 0.0
    %4366 = vmatpush1.msra.mxu0 0.0
    %4367 = vmatprep.subr.mxu0 0.0
    %4368 = vmatpush1.msra.mxu0 0.0
    %4369 = vmatprep.subr.mxu0 0.0
    %4370 = vmatpush1.msra.mxu0 0.0
    %4371 = vmatprep.subr.mxu0 0.0
    %4372 = vmatpush1.msra.mxu0 0.0
    %4373 = vmatprep.subr.mxu0 0.0
    %4374 = vmatpush1.msra.mxu0 0.0
    %4375 = vmatprep.subr.mxu0 0.0
    %4376 = vmatpush1.msra.mxu0 0.0
    %4377 = vmatprep.subr.mxu0 0.0
    %4378 = vmatpush1.msra.mxu0 0.0
    %4379 = vmatprep.subr.mxu0 0.0
    %4380 = vmatpush1.msra.mxu0 0.0
    %4381 = vmatprep.subr.mxu0 0.0
    %4382 = vmatpush1.msra.mxu0 0.0
    %4383 = vmatprep.subr.mxu0 0.0
    %4384 = vmatpush1.msra.mxu0 0.0
    %4385 = vmatprep.subr.mxu0 0.0
    %4386 = vmatpush1.msra.mxu0 0.0
    %4387 = vmatprep.subr.mxu0 0.0
    %4388 = vmatpush1.msra.mxu0 0.0
    %4389 = vmatprep.subr.mxu0 0.0
    %4390 = vmatpush1.msra.mxu0 0.0
    %4391 = vmatprep.subr.mxu0 0.0
    %4392 = vmatpush1.msra.mxu0 0.0
    %4393 = vmatprep.subr.mxu0 0.0
    %4394 = vmatpush1.msra.mxu0 0.0
    %4395 = vmatprep.subr.mxu0 0.0
    %4396 = vmatpush1.msra.mxu0 0.0
    %4397 = vmatprep.subr.mxu0 0.0
    %4398 = vmatpush1.msra.mxu0 0.0
    %4399 = vmatprep.mubr.f32.mxu0 0.0
    %4400 = vmatmul.mubr.f32.gmra.mrb[0].mxu0 %v4330
    %v4401 = vpop.f32.mrb[0].mxu0
    %v4402 = vadd.f32 %v4327, %v4401
    %v4403 = vpop.f32.mrb[0].mxu0
    %4404 = vmatprep.mubr.f32.mxu0 0.0
    %4405 = vmatmul.mubr.f32.gmra.mrb[0].mxu0 %v4333
    %v4406 = vpop.f32.mrb[0].mxu0
    %v4407 = vadd.f32 %v4327, %v4406
    %v4408 = vpop.f32.mrb[0].mxu0
    %4409 = vdwg.mxu0
    %4411 = vrot.lane.b32.xlu0 %v4402, 96
    %v4412 = vpop.permute.xlu0 %4411
    %v4413 = vsel %vm253, %v4402, 0
    %v4415 = vsel %vm253, %v4412, 0
    %4417 = vmatprep.subr.mxu0 0.0
    %4418 = vmatpush1.xpose.msra.mxu0 %v4415
    %4419 = vmatprep.subr.mxu0 0.0
    %4420 = vmatpush1.xpose.msra.mxu0 0.0
    %4421 = vmatprep.subr.mxu0 0.0
    %4422 = vmatpush1.xpose.msra.mxu0 0.0
    %4423 = vmatprep.subr.mxu0 0.0
    %4424 = vmatpush1.xpose.msra.mxu0 0.0
    %4425 = vmatprep.subr.mxu0 0.0
    %4426 = vmatpush1.xpose.msra.mxu0 0.0
    %4427 = vmatprep.subr.mxu0 0.0
    %4428 = vmatpush1.xpose.msra.mxu0 0.0
    %4429 = vmatprep.subr.mxu0 0.0
    %4430 = vmatpush1.xpose.msra.mxu0 0.0
    %4431 = vmatprep.subr.mxu0 0.0
    %4432 = vmatpush1.xpose.msra.mxu0 0.0
    %4433 = vmatprep.subr.mxu0 0.0
    %4434 = vmatpush1.xpose.msra.mxu0 0.0
    %4435 = vmatprep.subr.mxu0 0.0
    %4436 = vmatpush1.xpose.msra.mxu0 0.0
    %4437 = vmatprep.subr.mxu0 0.0
    %4438 = vmatpush1.xpose.msra.mxu0 0.0
    %4439 = vmatprep.subr.mxu0 0.0
    %4440 = vmatpush1.xpose.msra.mxu0 0.0
    %4441 = vmatprep.subr.mxu0 0.0
    %4442 = vmatpush1.xpose.msra.mxu0 0.0
    %4443 = vmatprep.subr.mxu0 0.0
    %4444 = vmatpush1.xpose.msra.mxu0 0.0
    %4445 = vmatprep.subr.mxu0 0.0
    %4446 = vmatpush1.xpose.msra.mxu0 0.0
    %4447 = vmatprep.subr.mxu0 0.0
    %4448 = vmatpush1.xpose.msra.mxu0 0.0
    %4449 = vmatprep.subr.mxu0 0.0
    %4450 = vmatpush1.xpose.msra.mxu0 0.0
    %4451 = vmatprep.subr.mxu0 0.0
    %4452 = vmatpush1.xpose.msra.mxu0 0.0
    %4453 = vmatprep.subr.mxu0 0.0
    %4454 = vmatpush1.xpose.msra.mxu0 0.0
    %4455 = vmatprep.subr.mxu0 0.0
    %4456 = vmatpush1.xpose.msra.mxu0 0.0
    %4457 = vmatprep.subr.mxu0 0.0
    %4458 = vmatpush1.xpose.msra.mxu0 0.0
    %4459 = vmatprep.subr.mxu0 0.0
    %4460 = vmatpush1.xpose.msra.mxu0 0.0
    %4461 = vmatprep.subr.mxu0 0.0
    %4462 = vmatpush1.xpose.msra.mxu0 0.0
    %4463 = vmatprep.subr.mxu0 0.0
    %4464 = vmatpush1.xpose.msra.mxu0 0.0
    %4465 = vmatprep.subr.mxu0 0.0
    %4466 = vmatpush1.xpose.msra.mxu0 0.0
    %4467 = vmatprep.subr.mxu0 0.0
    %4468 = vmatpush1.xpose.msra.mxu0 0.0
    %4469 = vmatprep.subr.mxu0 0.0
    %4470 = vmatpush1.xpose.msra.mxu0 0.0
    %4471 = vmatprep.subr.mxu0 0.0
    %4472 = vmatpush1.xpose.msra.mxu0 0.0
    %4473 = vmatprep.subr.mxu0 0.0
    %4474 = vmatpush1.xpose.msra.mxu0 0.0
    %4475 = vmatprep.subr.mxu0 0.0
    %4476 = vmatpush1.xpose.msra.mxu0 0.0
    %4477 = vmatprep.subr.mxu0 0.0
    %4478 = vmatpush1.xpose.msra.mxu0 0.0
    %4479 = vmatprep.subr.mxu0 0.0
    %4480 = vmatpush1.xpose.msra.mxu0 0.0
    %4481 = vmatprep.mubr.f32.mxu0 0.0
    %4482 = vmatmul.mubr.f32.gmra.mrb[0].mxu0 %v4413
    %v4483 = vpop.f32.mrb[0].mxu0
    %v4484 = vadd.f32 %v92, %v4483
    %v4485 = vpop.f32.mrb[0].mxu0
    %4486 = vdwg.mxu0
    %4488 = vrot.lane.b32.xlu0 %v4407, 96
    %v4489 = vpop.permute.xlu0 %4488
    %v4490 = vsel %vm253, %v4407, 0
    %v4492 = vsel %vm253, %v4489, 0
    %4494 = vmatprep.subr.mxu0 0.0
    %4495 = vmatpush1.xpose.msra.mxu0 %v4492
    %4496 = vmatprep.subr.mxu0 0.0
    %4497 = vmatpush1.xpose.msra.mxu0 0.0
    %4498 = vmatprep.subr.mxu0 0.0
    %4499 = vmatpush1.xpose.msra.mxu0 0.0
    %4500 = vmatprep.subr.mxu0 0.0
    %4501 = vmatpush1.xpose.msra.mxu0 0.0
    %4502 = vmatprep.subr.mxu0 0.0
    %4503 = vmatpush1.xpose.msra.mxu0 0.0
    %4504 = vmatprep.subr.mxu0 0.0
    %4505 = vmatpush1.xpose.msra.mxu0 0.0
    %4506 = vmatprep.subr.mxu0 0.0
    %4507 = vmatpush1.xpose.msra.mxu0 0.0
    %4508 = vmatprep.subr.mxu0 0.0
    %4509 = vmatpush1.xpose.msra.mxu0 0.0
    %4510 = vmatprep.subr.mxu0 0.0
    %4511 = vmatpush1.xpose.msra.mxu0 0.0
    %4512 = vmatprep.subr.mxu0 0.0
    %4513 = vmatpush1.xpose.msra.mxu0 0.0
    %4514 = vmatprep.subr.mxu0 0.0
    %4515 = vmatpush1.xpose.msra.mxu0 0.0
    %4516 = vmatprep.subr.mxu0 0.0
    %4517 = vmatpush1.xpose.msra.mxu0 0.0
    %4518 = vmatprep.subr.mxu0 0.0
    %4519 = vmatpush1.xpose.msra.mxu0 0.0
    %4520 = vmatprep.subr.mxu0 0.0
    %4521 = vmatpush1.xpose.msra.mxu0 0.0
    %4522 = vmatprep.subr.mxu0 0.0
    %4523 = vmatpush1.xpose.msra.mxu0 0.0
    %4524 = vmatprep.subr.mxu0 0.0
    %4525 = vmatpush1.xpose.msra.mxu0 0.0
    %4526 = vmatprep.subr.mxu0 0.0
    %4527 = vmatpush1.xpose.msra.mxu0 0.0
    %4528 = vmatprep.subr.mxu0 0.0
    %4529 = vmatpush1.xpose.msra.mxu0 0.0
    %4530 = vmatprep.subr.mxu0 0.0
    %4531 = vmatpush1.xpose.msra.mxu0 0.0
    %4532 = vmatprep.subr.mxu0 0.0
    %4533 = vmatpush1.xpose.msra.mxu0 0.0
    %4534 = vmatprep.subr.mxu0 0.0
    %4535 = vmatpush1.xpose.msra.mxu0 0.0
    %4536 = vmatprep.subr.mxu0 0.0
    %4537 = vmatpush1.xpose.msra.mxu0 0.0
    %4538 = vmatprep.subr.mxu0 0.0
    %4539 = vmatpush1.xpose.msra.mxu0 0.0
    %4540 = vmatprep.subr.mxu0 0.0
    %4541 = vmatpush1.xpose.msra.mxu0 0.0
    %4542 = vmatprep.subr.mxu0 0.0
    %4543 = vmatpush1.xpose.msra.mxu0 0.0
    %4544 = vmatprep.subr.mxu0 0.0
    %4545 = vmatpush1.xpose.msra.mxu0 0.0
    %4546 = vmatprep.subr.mxu0 0.0
    %4547 = vmatpush1.xpose.msra.mxu0 0.0
    %4548 = vmatprep.subr.mxu0 0.0
    %4549 = vmatpush1.xpose.msra.mxu0 0.0
    %4550 = vmatprep.subr.mxu0 0.0
    %4551 = vmatpush1.xpose.msra.mxu0 0.0
    %4552 = vmatprep.subr.mxu0 0.0
    %4553 = vmatpush1.xpose.msra.mxu0 0.0
    %4554 = vmatprep.subr.mxu0 0.0
    %4555 = vmatpush1.xpose.msra.mxu0 0.0
    %4556 = vmatprep.subr.mxu0 0.0
    %4557 = vmatpush1.xpose.msra.mxu0 0.0
    %4558 = vmatprep.mubr.f32.mxu0 0.0
    %4559 = vmatmul.mubr.f32.gmra.mrb[0].mxu0 %v4490
    %v4560 = vpop.f32.mrb[0].mxu0
    %v4561 = vadd.f32 %v96, %v4560
    %v4562 = vpop.f32.mrb[0].mxu0
    %4563 = vdwg.mxu0
    %v4564 = vsel %vm253, %v4484, -inf
    %4565 = vmax.xlane.f32.xlu0 %v4564
    %v4566 = vpop.xlane.xlu0 %4565
    %v4567 = vsel %vm253, %v4561, -inf
    %4568 = vmax.xlane.f32.xlu0 %v4567
    %v4569 = vpop.xlane.xlu0 %4568
    %v4570 = vsub.f32 %v4484, %v4566
    %v4571 = vsub.f32 %v4561, %v4569
    %v4572 = vmul.f32 %v4570, 1.442695
    %v4573 = vpow.pop %v4572
    %v4574 = vmul.f32 %v4571, 1.442695
    %v4575 = vpow.pop %v4574
    %v4576 = vsel %vm253, %v4573, 0.0
    %4577 = vadd.xlane.f32.xlu0 %v4576
    %v4578 = vpop.xlane.xlu0 %4577
    %v4579 = vsel %vm253, %v4575, 0.0
    %4580 = vadd.xlane.f32.xlu0 %v4579
    %v4581 = vpop.xlane.xlu0 %4580
    %v4582 = vrcp.pop %v4578
    %v4583 = vrcp.pop %v4581
    %v4584 = vmul.f32 %v4573, %v4582
    %v4585 = vmul.f32 %v4575, %v4583
    %4586 = vrot.lane.b32.xlu0 %v4402, 64
    %v4587 = vpop.permute.xlu0 %4586
    %v4590 = vsel %vm253, %v4584, 0
    %4592 = vmatprep.subr.mxu0 0.0
    %4593 = vmatpush1.msra.mxu0 %v4587
    %4594 = vmatprep.subr.mxu0 0.0
    %4595 = vmatpush1.msra.mxu0 0.0
    %4596 = vmatprep.subr.mxu0 0.0
    %4597 = vmatpush1.msra.mxu0 0.0
    %4598 = vmatprep.subr.mxu0 0.0
    %4599 = vmatpush1.msra.mxu0 0.0
    %4600 = vmatprep.subr.mxu0 0.0
    %4601 = vmatpush1.msra.mxu0 0.0
    %4602 = vmatprep.subr.mxu0 0.0
    %4603 = vmatpush1.msra.mxu0 0.0
    %4604 = vmatprep.subr.mxu0 0.0
    %4605 = vmatpush1.msra.mxu0 0.0
    %4606 = vmatprep.subr.mxu0 0.0
    %4607 = vmatpush1.msra.mxu0 0.0
    %4608 = vmatprep.subr.mxu0 0.0
    %4609 = vmatpush1.msra.mxu0 0.0
    %4610 = vmatprep.subr.mxu0 0.0
    %4611 = vmatpush1.msra.mxu0 0.0
    %4612 = vmatprep.subr.mxu0 0.0
    %4613 = vmatpush1.msra.mxu0 0.0
    %4614 = vmatprep.subr.mxu0 0.0
    %4615 = vmatpush1.msra.mxu0 0.0
    %4616 = vmatprep.subr.mxu0 0.0
    %4617 = vmatpush1.msra.mxu0 0.0
    %4618 = vmatprep.subr.mxu0 0.0
    %4619 = vmatpush1.msra.mxu0 0.0
    %4620 = vmatprep.subr.mxu0 0.0
    %4621 = vmatpush1.msra.mxu0 0.0
    %4622 = vmatprep.subr.mxu0 0.0
    %4623 = vmatpush1.msra.mxu0 0.0
    %4624 = vmatprep.subr.mxu0 0.0
    %4625 = vmatpush1.msra.mxu0 0.0
    %4626 = vmatprep.subr.mxu0 0.0
    %4627 = vmatpush1.msra.mxu0 0.0
    %4628 = vmatprep.subr.mxu0 0.0
    %4629 = vmatpush1.msra.mxu0 0.0
    %4630 = vmatprep.subr.mxu0 0.0
    %4631 = vmatpush1.msra.mxu0 0.0
    %4632 = vmatprep.subr.mxu0 0.0
    %4633 = vmatpush1.msra.mxu0 0.0
    %4634 = vmatprep.subr.mxu0 0.0
    %4635 = vmatpush1.msra.mxu0 0.0
    %4636 = vmatprep.subr.mxu0 0.0
    %4637 = vmatpush1.msra.mxu0 0.0
    %4638 = vmatprep.subr.mxu0 0.0
    %4639 = vmatpush1.msra.mxu0 0.0
    %4640 = vmatprep.subr.mxu0 0.0
    %4641 = vmatpush1.msra.mxu0 0.0
    %4642 = vmatprep.subr.mxu0 0.0
    %4643 = vmatpush1.msra.mxu0 0.0
    %4644 = vmatprep.subr.mxu0 0.0
    %4645 = vmatpush1.msra.mxu0 0.0
    %4646 = vmatprep.subr.mxu0 0.0
    %4647 = vmatpush1.msra.mxu0 0.0
    %4648 = vmatprep.subr.mxu0 0.0
    %4649 = vmatpush1.msra.mxu0 0.0
    %4650 = vmatprep.subr.mxu0 0.0
    %4651 = vmatpush1.msra.mxu0 0.0
    %4652 = vmatprep.subr.mxu0 0.0
    %4653 = vmatpush1.msra.mxu0 0.0
    %4654 = vmatprep.subr.mxu0 0.0
    %4655 = vmatpush1.msra.mxu0 0.0
    %4656 = vmatprep.mubr.f32.mxu0 0.0
    %4657 = vmatmul.mubr.f32.gmra.mrb[0].mxu0 %v4590
    %v4658 = vpop.f32.mrb[0].mxu0
    %v4659 = vadd.f32 0.0, %v4658
    %v4660 = vpop.f32.mrb[0].mxu0
    %4661 = vdwg.mxu0
    %4662 = vrot.lane.b32.xlu0 %v4407, 64
    %v4663 = vpop.permute.xlu0 %4662
    %v4666 = vsel %vm253, %v4585, 0
    %4668 = vmatprep.subr.mxu0 0.0
    %4669 = vmatpush1.msra.mxu0 %v4663
    %4670 = vmatprep.subr.mxu0 0.0
    %4671 = vmatpush1.msra.mxu0 0.0
    %4672 = vmatprep.subr.mxu0 0.0
    %4673 = vmatpush1.msra.mxu0 0.0
    %4674 = vmatprep.subr.mxu0 0.0
    %4675 = vmatpush1.msra.mxu0 0.0
    %4676 = vmatprep.subr.mxu0 0.0
    %4677 = vmatpush1.msra.mxu0 0.0
    %4678 = vmatprep.subr.mxu0 0.0
    %4679 = vmatpush1.msra.mxu0 0.0
    %4680 = vmatprep.subr.mxu0 0.0
    %4681 = vmatpush1.msra.mxu0 0.0
    %4682 = vmatprep.subr.mxu0 0.0
    %4683 = vmatpush1.msra.mxu0 0.0
    %4684 = vmatprep.subr.mxu0 0.0
    %4685 = vmatpush1.msra.mxu0 0.0
    %4686 = vmatprep.subr.mxu0 0.0
    %4687 = vmatpush1.msra.mxu0 0.0
    %4688 = vmatprep.subr.mxu0 0.0
    %4689 = vmatpush1.msra.mxu0 0.0
    %4690 = vmatprep.subr.mxu0 0.0
    %4691 = vmatpush1.msra.mxu0 0.0
    %4692 = vmatprep.subr.mxu0 0.0
    %4693 = vmatpush1.msra.mxu0 0.0
    %4694 = vmatprep.subr.mxu0 0.0
    %4695 = vmatpush1.msra.mxu0 0.0
    %4696 = vmatprep.subr.mxu0 0.0
    %4697 = vmatpush1.msra.mxu0 0.0
    %4698 = vmatprep.subr.mxu0 0.0
    %4699 = vmatpush1.msra.mxu0 0.0
    %4700 = vmatprep.subr.mxu0 0.0
    %4701 = vmatpush1.msra.mxu0 0.0
    %4702 = vmatprep.subr.mxu0 0.0
    %4703 = vmatpush1.msra.mxu0 0.0
    %4704 = vmatprep.subr.mxu0 0.0
    %4705 = vmatpush1.msra.mxu0 0.0
    %4706 = vmatprep.subr.mxu0 0.0
    %4707 = vmatpush1.msra.mxu0 0.0
    %4708 = vmatprep.subr.mxu0 0.0
    %4709 = vmatpush1.msra.mxu0 0.0
    %4710 = vmatprep.subr.mxu0 0.0
    %4711 = vmatpush1.msra.mxu0 0.0
    %4712 = vmatprep.subr.mxu0 0.0
    %4713 = vmatpush1.msra.mxu0 0.0
    %4714 = vmatprep.subr.mxu0 0.0
    %4715 = vmatpush1.msra.mxu0 0.0
    %4716 = vmatprep.subr.mxu0 0.0
    %4717 = vmatpush1.msra.mxu0 0.0
    %4718 = vmatprep.subr.mxu0 0.0
    %4719 = vmatpush1.msra.mxu0 0.0
    %4720 = vmatprep.subr.mxu0 0.0
    %4721 = vmatpush1.msra.mxu0 0.0
    %4722 = vmatprep.subr.mxu0 0.0
    %4723 = vmatpush1.msra.mxu0 0.0
    %4724 = vmatprep.subr.mxu0 0.0
    %4725 = vmatpush1.msra.mxu0 0.0
    %4726 = vmatprep.subr.mxu0 0.0
    %4727 = vmatpush1.msra.mxu0 0.0
    %4728 = vmatprep.subr.mxu0 0.0
    %4729 = vmatpush1.msra.mxu0 0.0
    %4730 = vmatprep.subr.mxu0 0.0
    %4731 = vmatpush1.msra.mxu0 0.0
    %4732 = vmatprep.mubr.f32.mxu0 0.0
    %4733 = vmatmul.mubr.f32.gmra.mrb[0].mxu0 %v4666
    %v4734 = vpop.f32.mrb[0].mxu0
    %v4735 = vadd.f32 0.0, %v4734
    %v4736 = vpop.f32.mrb[0].mxu0
    %4737 = vdwg.mxu0
    %s4738 = scalar_lea.vmem %s8, 64
    %v4739 = vld [vmem:[%s4738] sm:$0xff]
    %4740 = vrot.lane.b32.xlu0 %v4402, 120
    %v4741 = vpop.permute.xlu0 %4740
    %4742 = vrot.lane.b32.xlu0 %v4402, 88
    %v4743 = vpop.permute.xlu0 %4742
    %v4744 = vsel %vm253, %v4741, 0
    %v4746 = vsel %vm253, %v4743, 0
    %4748 = vmatprep.subr.mxu0 0.0
    %4749 = vmatpush1.xpose.msra.mxu0 %v4746
    %4750 = vmatprep.subr.mxu0 0.0
    %4751 = vmatpush1.xpose.msra.mxu0 0.0
    %4752 = vmatprep.subr.mxu0 0.0
    %4753 = vmatpush1.xpose.msra.mxu0 0.0
    %4754 = vmatprep.subr.mxu0 0.0
    %4755 = vmatpush1.xpose.msra.mxu0 0.0
    %4756 = vmatprep.subr.mxu0 0.0
    %4757 = vmatpush1.xpose.msra.mxu0 0.0
    %4758 = vmatprep.subr.mxu0 0.0
    %4759 = vmatpush1.xpose.msra.mxu0 0.0
    %4760 = vmatprep.subr.mxu0 0.0
    %4761 = vmatpush1.xpose.msra.mxu0 0.0
    %4762 = vmatprep.subr.mxu0 0.0
    %4763 = vmatpush1.xpose.msra.mxu0 0.0
    %4764 = vmatprep.subr.mxu0 0.0
    %4765 = vmatpush1.xpose.msra.mxu0 0.0
    %4766 = vmatprep.subr.mxu0 0.0
    %4767 = vmatpush1.xpose.msra.mxu0 0.0
    %4768 = vmatprep.subr.mxu0 0.0
    %4769 = vmatpush1.xpose.msra.mxu0 0.0
    %4770 = vmatprep.subr.mxu0 0.0
    %4771 = vmatpush1.xpose.msra.mxu0 0.0
    %4772 = vmatprep.subr.mxu0 0.0
    %4773 = vmatpush1.xpose.msra.mxu0 0.0
    %4774 = vmatprep.subr.mxu0 0.0
    %4775 = vmatpush1.xpose.msra.mxu0 0.0
    %4776 = vmatprep.subr.mxu0 0.0
    %4777 = vmatpush1.xpose.msra.mxu0 0.0
    %4778 = vmatprep.subr.mxu0 0.0
    %4779 = vmatpush1.xpose.msra.mxu0 0.0
    %4780 = vmatprep.subr.mxu0 0.0
    %4781 = vmatpush1.xpose.msra.mxu0 0.0
    %4782 = vmatprep.subr.mxu0 0.0
    %4783 = vmatpush1.xpose.msra.mxu0 0.0
    %4784 = vmatprep.subr.mxu0 0.0
    %4785 = vmatpush1.xpose.msra.mxu0 0.0
    %4786 = vmatprep.subr.mxu0 0.0
    %4787 = vmatpush1.xpose.msra.mxu0 0.0
    %4788 = vmatprep.subr.mxu0 0.0
    %4789 = vmatpush1.xpose.msra.mxu0 0.0
    %4790 = vmatprep.subr.mxu0 0.0
    %4791 = vmatpush1.xpose.msra.mxu0 0.0
    %4792 = vmatprep.subr.mxu0 0.0
    %4793 = vmatpush1.xpose.msra.mxu0 0.0
    %4794 = vmatprep.subr.mxu0 0.0
    %4795 = vmatpush1.xpose.msra.mxu0 0.0
    %4796 = vmatprep.subr.mxu0 0.0
    %4797 = vmatpush1.xpose.msra.mxu0 0.0
    %4798 = vmatprep.subr.mxu0 0.0
    %4799 = vmatpush1.xpose.msra.mxu0 0.0
    %4800 = vmatprep.subr.mxu0 0.0
    %4801 = vmatpush1.xpose.msra.mxu0 0.0
    %4802 = vmatprep.subr.mxu0 0.0
    %4803 = vmatpush1.xpose.msra.mxu0 0.0
    %4804 = vmatprep.subr.mxu0 0.0
    %4805 = vmatpush1.xpose.msra.mxu0 0.0
    %4806 = vmatprep.subr.mxu0 0.0
    %4807 = vmatpush1.xpose.msra.mxu0 0.0
    %4808 = vmatprep.subr.mxu0 0.0
    %4809 = vmatpush1.xpose.msra.mxu0 0.0
    %4810 = vmatprep.subr.mxu0 0.0
    %4811 = vmatpush1.xpose.msra.mxu0 0.0
    %4812 = vmatprep.mubr.f32.mxu0 0.0
    %4813 = vmatmul.mubr.f32.gmra.mrb[0].mxu0 %v4744
    %v4814 = vpop.f32.mrb[0].mxu0
    %v4815 = vadd.f32 %v92, %v4814
    %v4816 = vpop.f32.mrb[0].mxu0
    %4817 = vdwg.mxu0
    %4818 = vrot.lane.b32.xlu0 %v4407, 120
    %v4819 = vpop.permute.xlu0 %4818
    %4820 = vrot.lane.b32.xlu0 %v4407, 88
    %v4821 = vpop.permute.xlu0 %4820
    %v4822 = vsel %vm253, %v4819, 0
    %v4824 = vsel %vm253, %v4821, 0
    %4826 = vmatprep.subr.mxu0 0.0
    %4827 = vmatpush1.xpose.msra.mxu0 %v4824
    %4828 = vmatprep.subr.mxu0 0.0
    %4829 = vmatpush1.xpose.msra.mxu0 0.0
    %4830 = vmatprep.subr.mxu0 0.0
    %4831 = vmatpush1.xpose.msra.mxu0 0.0
    %4832 = vmatprep.subr.mxu0 0.0
    %4833 = vmatpush1.xpose.msra.mxu0 0.0
    %4834 = vmatprep.subr.mxu0 0.0
    %4835 = vmatpush1.xpose.msra.mxu0 0.0
    %4836 = vmatprep.subr.mxu0 0.0
    %4837 = vmatpush1.xpose.msra.mxu0 0.0
    %4838 = vmatprep.subr.mxu0 0.0
    %4839 = vmatpush1.xpose.msra.mxu0 0.0
    %4840 = vmatprep.subr.mxu0 0.0
    %4841 = vmatpush1.xpose.msra.mxu0 0.0
    %4842 = vmatprep.subr.mxu0 0.0
    %4843 = vmatpush1.xpose.msra.mxu0 0.0
    %4844 = vmatprep.subr.mxu0 0.0
    %4845 = vmatpush1.xpose.msra.mxu0 0.0
    %4846 = vmatprep.subr.mxu0 0.0
    %4847 = vmatpush1.xpose.msra.mxu0 0.0
    %4848 = vmatprep.subr.mxu0 0.0
    %4849 = vmatpush1.xpose.msra.mxu0 0.0
    %4850 = vmatprep.subr.mxu0 0.0
    %4851 = vmatpush1.xpose.msra.mxu0 0.0
    %4852 = vmatprep.subr.mxu0 0.0
    %4853 = vmatpush1.xpose.msra.mxu0 0.0
    %4854 = vmatprep.subr.mxu0 0.0
    %4855 = vmatpush1.xpose.msra.mxu0 0.0
    %4856 = vmatprep.subr.mxu0 0.0
    %4857 = vmatpush1.xpose.msra.mxu0 0.0
    %4858 = vmatprep.subr.mxu0 0.0
    %4859 = vmatpush1.xpose.msra.mxu0 0.0
    %4860 = vmatprep.subr.mxu0 0.0
    %4861 = vmatpush1.xpose.msra.mxu0 0.0
    %4862 = vmatprep.subr.mxu0 0.0
    %4863 = vmatpush1.xpose.msra.mxu0 0.0
    %4864 = vmatprep.subr.mxu0 0.0
    %4865 = vmatpush1.xpose.msra.mxu0 0.0
    %4866 = vmatprep.subr.mxu0 0.0
    %4867 = vmatpush1.xpose.msra.mxu0 0.0
    %4868 = vmatprep.subr.mxu0 0.0
    %4869 = vmatpush1.xpose.msra.mxu0 0.0
    %4870 = vmatprep.subr.mxu0 0.0
    %4871 = vmatpush1.xpose.msra.mxu0 0.0
    %4872 = vmatprep.subr.mxu0 0.0
    %4873 = vmatpush1.xpose.msra.mxu0 0.0
    %4874 = vmatprep.subr.mxu0 0.0
    %4875 = vmatpush1.xpose.msra.mxu0 0.0
    %4876 = vmatprep.subr.mxu0 0.0
    %4877 = vmatpush1.xpose.msra.mxu0 0.0
    %4878 = vmatprep.subr.mxu0 0.0
    %4879 = vmatpush1.xpose.msra.mxu0 0.0
    %4880 = vmatprep.subr.mxu0 0.0
    %4881 = vmatpush1.xpose.msra.mxu0 0.0
    %4882 = vmatprep.subr.mxu0 0.0
    %4883 = vmatpush1.xpose.msra.mxu0 0.0
    %4884 = vmatprep.subr.mxu0 0.0
    %4885 = vmatpush1.xpose.msra.mxu0 0.0
    %4886 = vmatprep.subr.mxu0 0.0
    %4887 = vmatpush1.xpose.msra.mxu0 0.0
    %4888 = vmatprep.subr.mxu0 0.0
    %4889 = vmatpush1.xpose.msra.mxu0 0.0
    %4890 = vmatprep.mubr.f32.mxu0 0.0
    %4891 = vmatmul.mubr.f32.gmra.mrb[0].mxu0 %v4822
    %v4892 = vpop.f32.mrb[0].mxu0
    %v4893 = vadd.f32 %v96, %v4892
    %v4894 = vpop.f32.mrb[0].mxu0
    %4895 = vdwg.mxu0
    %v4896 = vsel %vm253, %v4815, -inf
    %4897 = vmax.xlane.f32.xlu0 %v4896
    %v4898 = vpop.xlane.xlu0 %4897
    %v4899 = vsel %vm253, %v4893, -inf
    %4900 = vmax.xlane.f32.xlu0 %v4899
    %v4901 = vpop.xlane.xlu0 %4900
    %v4902 = vsub.f32 %v4815, %v4898
    %v4903 = vsub.f32 %v4893, %v4901
    %v4904 = vmul.f32 %v4902, 1.442695
    %v4905 = vpow.pop %v4904
    %v4906 = vmul.f32 %v4903, 1.442695
    %v4907 = vpow.pop %v4906
    %v4908 = vsel %vm253, %v4905, 0.0
    %4909 = vadd.xlane.f32.xlu0 %v4908
    %v4910 = vpop.xlane.xlu0 %4909
    %v4911 = vsel %vm253, %v4907, 0.0
    %4912 = vadd.xlane.f32.xlu0 %v4911
    %v4913 = vpop.xlane.xlu0 %4912
    %v4914 = vrcp.pop %v4910
    %v4915 = vrcp.pop %v4913
    %v4916 = vmul.f32 %v4905, %v4914
    %v4917 = vmul.f32 %v4907, %v4915
    %4918 = vrot.lane.b32.xlu0 %v4402, 56
    %v4919 = vpop.permute.xlu0 %4918
    %v4922 = vsel %vm253, %v4916, 0
    %4924 = vmatprep.subr.mxu0 0.0
    %4925 = vmatpush1.msra.mxu0 %v4919
    %4926 = vmatprep.subr.mxu0 0.0
    %4927 = vmatpush1.msra.mxu0 0.0
    %4928 = vmatprep.subr.mxu0 0.0
    %4929 = vmatpush1.msra.mxu0 0.0
    %4930 = vmatprep.subr.mxu0 0.0
    %4931 = vmatpush1.msra.mxu0 0.0
    %4932 = vmatprep.subr.mxu0 0.0
    %4933 = vmatpush1.msra.mxu0 0.0
    %4934 = vmatprep.subr.mxu0 0.0
    %4935 = vmatpush1.msra.mxu0 0.0
    %4936 = vmatprep.subr.mxu0 0.0
    %4937 = vmatpush1.msra.mxu0 0.0
    %4938 = vmatprep.subr.mxu0 0.0
    %4939 = vmatpush1.msra.mxu0 0.0
    %4940 = vmatprep.subr.mxu0 0.0
    %4941 = vmatpush1.msra.mxu0 0.0
    %4942 = vmatprep.subr.mxu0 0.0
    %4943 = vmatpush1.msra.mxu0 0.0
    %4944 = vmatprep.subr.mxu0 0.0
    %4945 = vmatpush1.msra.mxu0 0.0
    %4946 = vmatprep.subr.mxu0 0.0
    %4947 = vmatpush1.msra.mxu0 0.0
    %4948 = vmatprep.subr.mxu0 0.0
    %4949 = vmatpush1.msra.mxu0 0.0
    %4950 = vmatprep.subr.mxu0 0.0
    %4951 = vmatpush1.msra.mxu0 0.0
    %4952 = vmatprep.subr.mxu0 0.0
    %4953 = vmatpush1.msra.mxu0 0.0
    %4954 = vmatprep.subr.mxu0 0.0
    %4955 = vmatpush1.msra.mxu0 0.0
    %4956 = vmatprep.subr.mxu0 0.0
    %4957 = vmatpush1.msra.mxu0 0.0
    %4958 = vmatprep.subr.mxu0 0.0
    %4959 = vmatpush1.msra.mxu0 0.0
    %4960 = vmatprep.subr.mxu0 0.0
    %4961 = vmatpush1.msra.mxu0 0.0
    %4962 = vmatprep.subr.mxu0 0.0
    %4963 = vmatpush1.msra.mxu0 0.0
    %4964 = vmatprep.subr.mxu0 0.0
    %4965 = vmatpush1.msra.mxu0 0.0
    %4966 = vmatprep.subr.mxu0 0.0
    %4967 = vmatpush1.msra.mxu0 0.0
    %4968 = vmatprep.subr.mxu0 0.0
    %4969 = vmatpush1.msra.mxu0 0.0
    %4970 = vmatprep.subr.mxu0 0.0
    %4971 = vmatpush1.msra.mxu0 0.0
    %4972 = vmatprep.subr.mxu0 0.0
    %4973 = vmatpush1.msra.mxu0 0.0
    %4974 = vmatprep.subr.mxu0 0.0
    %4975 = vmatpush1.msra.mxu0 0.0
    %4976 = vmatprep.subr.mxu0 0.0
    %4977 = vmatpush1.msra.mxu0 0.0
    %4978 = vmatprep.subr.mxu0 0.0
    %4979 = vmatpush1.msra.mxu0 0.0
    %4980 = vmatprep.subr.mxu0 0.0
    %4981 = vmatpush1.msra.mxu0 0.0
    %4982 = vmatprep.subr.mxu0 0.0
    %4983 = vmatpush1.msra.mxu0 0.0
    %4984 = vmatprep.subr.mxu0 0.0
    %4985 = vmatpush1.msra.mxu0 0.0
    %4986 = vmatprep.subr.mxu0 0.0
    %4987 = vmatpush1.msra.mxu0 0.0
    %4988 = vmatprep.mubr.f32.mxu0 0.0
    %4989 = vmatmul.mubr.f32.gmra.mrb[0].mxu0 %v4922
    %v4990 = vpop.f32.mrb[0].mxu0
    %v4991 = vadd.f32 0.0, %v4990
    %v4992 = vpop.f32.mrb[0].mxu0
    %4993 = vdwg.mxu0
    %4994 = vrot.lane.b32.xlu0 %v4407, 56
    %v4995 = vpop.permute.xlu0 %4994
    %v4998 = vsel %vm253, %v4917, 0
    %5000 = vmatprep.subr.mxu0 0.0
    %5001 = vmatpush1.msra.mxu0 %v4995
    %5002 = vmatprep.subr.mxu0 0.0
    %5003 = vmatpush1.msra.mxu0 0.0
    %5004 = vmatprep.subr.mxu0 0.0
    %5005 = vmatpush1.msra.mxu0 0.0
    %5006 = vmatprep.subr.mxu0 0.0
    %5007 = vmatpush1.msra.mxu0 0.0
    %5008 = vmatprep.subr.mxu0 0.0
    %5009 = vmatpush1.msra.mxu0 0.0
    %5010 = vmatprep.subr.mxu0 0.0
    %5011 = vmatpush1.msra.mxu0 0.0
    %5012 = vmatprep.subr.mxu0 0.0
    %5013 = vmatpush1.msra.mxu0 0.0
    %5014 = vmatprep.subr.mxu0 0.0
    %5015 = vmatpush1.msra.mxu0 0.0
    %5016 = vmatprep.subr.mxu0 0.0
    %5017 = vmatpush1.msra.mxu0 0.0
    %5018 = vmatprep.subr.mxu0 0.0
    %5019 = vmatpush1.msra.mxu0 0.0
    %5020 = vmatprep.subr.mxu0 0.0
    %5021 = vmatpush1.msra.mxu0 0.0
    %5022 = vmatprep.subr.mxu0 0.0
    %5023 = vmatpush1.msra.mxu0 0.0
    %5024 = vmatprep.subr.mxu0 0.0
    %5025 = vmatpush1.msra.mxu0 0.0
    %5026 = vmatprep.subr.mxu0 0.0
    %5027 = vmatpush1.msra.mxu0 0.0
    %5028 = vmatprep.subr.mxu0 0.0
    %5029 = vmatpush1.msra.mxu0 0.0
    %5030 = vmatprep.subr.mxu0 0.0
    %5031 = vmatpush1.msra.mxu0 0.0
    %5032 = vmatprep.subr.mxu0 0.0
    %5033 = vmatpush1.msra.mxu0 0.0
    %5034 = vmatprep.subr.mxu0 0.0
    %5035 = vmatpush1.msra.mxu0 0.0
    %5036 = vmatprep.subr.mxu0 0.0
    %5037 = vmatpush1.msra.mxu0 0.0
    %5038 = vmatprep.subr.mxu0 0.0
    %5039 = vmatpush1.msra.mxu0 0.0
    %5040 = vmatprep.subr.mxu0 0.0
    %5041 = vmatpush1.msra.mxu0 0.0
    %5042 = vmatprep.subr.mxu0 0.0
    %5043 = vmatpush1.msra.mxu0 0.0
    %5044 = vmatprep.subr.mxu0 0.0
    %5045 = vmatpush1.msra.mxu0 0.0
    %5046 = vmatprep.subr.mxu0 0.0
    %5047 = vmatpush1.msra.mxu0 0.0
    %5048 = vmatprep.subr.mxu0 0.0
    %5049 = vmatpush1.msra.mxu0 0.0
    %5050 = vmatprep.subr.mxu0 0.0
    %5051 = vmatpush1.msra.mxu0 0.0
    %5052 = vmatprep.subr.mxu0 0.0
    %5053 = vmatpush1.msra.mxu0 0.0
    %5054 = vmatprep.subr.mxu0 0.0
    %5055 = vmatpush1.msra.mxu0 0.0
    %5056 = vmatprep.subr.mxu0 0.0
    %5057 = vmatpush1.msra.mxu0 0.0
    %5058 = vmatprep.subr.mxu0 0.0
    %5059 = vmatpush1.msra.mxu0 0.0
    %5060 = vmatprep.subr.mxu0 0.0
    %5061 = vmatpush1.msra.mxu0 0.0
    %5062 = vmatprep.subr.mxu0 0.0
    %5063 = vmatpush1.msra.mxu0 0.0
    %5064 = vmatprep.mubr.f32.mxu0 0.0
    %5065 = vmatmul.mubr.f32.gmra.mrb[0].mxu0 %v4998
    %v5066 = vpop.f32.mrb[0].mxu0
    %v5067 = vadd.f32 0.0, %v5066
    %v5068 = vpop.f32.mrb[0].mxu0
    %5069 = vdwg.mxu0
    %s5070 = scalar_lea.vmem %s8, 72
    %v5071 = vld [vmem:[%s5070] sm:$0xff]
    %v5073 = vsel %vm253, %v4991, 0
    %v5076 = vsel %vm253, %v5067, 0
    %5078 = vmatprep.subr.mxu0 0.0
    %5079 = vmatpush1.msra.mxu0 %v5071
    %5080 = vmatprep.subr.mxu0 0.0
    %5081 = vmatpush1.msra.mxu0 0.0
    %5082 = vmatprep.subr.mxu0 0.0
    %5083 = vmatpush1.msra.mxu0 0.0
    %5084 = vmatprep.subr.mxu0 0.0
    %5085 = vmatpush1.msra.mxu0 0.0
    %5086 = vmatprep.subr.mxu0 0.0
    %5087 = vmatpush1.msra.mxu0 0.0
    %5088 = vmatprep.subr.mxu0 0.0
    %5089 = vmatpush1.msra.mxu0 0.0
    %5090 = vmatprep.subr.mxu0 0.0
    %5091 = vmatpush1.msra.mxu0 0.0
    %5092 = vmatprep.subr.mxu0 0.0
    %5093 = vmatpush1.msra.mxu0 0.0
    %5094 = vmatprep.subr.mxu0 0.0
    %5095 = vmatpush1.msra.mxu0 0.0
    %5096 = vmatprep.subr.mxu0 0.0
    %5097 = vmatpush1.msra.mxu0 0.0
    %5098 = vmatprep.subr.mxu0 0.0
    %5099 = vmatpush1.msra.mxu0 0.0
    %5100 = vmatprep.subr.mxu0 0.0
    %5101 = vmatpush1.msra.mxu0 0.0
    %5102 = vmatprep.subr.mxu0 0.0
    %5103 = vmatpush1.msra.mxu0 0.0
    %5104 = vmatprep.subr.mxu0 0.0
    %5105 = vmatpush1.msra.mxu0 0.0
    %5106 = vmatprep.subr.mxu0 0.0
    %5107 = vmatpush1.msra.mxu0 0.0
    %5108 = vmatprep.subr.mxu0 0.0
    %5109 = vmatpush1.msra.mxu0 0.0
    %5110 = vmatprep.subr.mxu0 0.0
    %5111 = vmatpush1.msra.mxu0 0.0
    %5112 = vmatprep.subr.mxu0 0.0
    %5113 = vmatpush1.msra.mxu0 0.0
    %5114 = vmatprep.subr.mxu0 0.0
    %5115 = vmatpush1.msra.mxu0 0.0
    %5116 = vmatprep.subr.mxu0 0.0
    %5117 = vmatpush1.msra.mxu0 0.0
    %5118 = vmatprep.subr.mxu0 0.0
    %5119 = vmatpush1.msra.mxu0 0.0
    %5120 = vmatprep.subr.mxu0 0.0
    %5121 = vmatpush1.msra.mxu0 0.0
    %5122 = vmatprep.subr.mxu0 0.0
    %5123 = vmatpush1.msra.mxu0 0.0
    %5124 = vmatprep.subr.mxu0 0.0
    %5125 = vmatpush1.msra.mxu0 0.0
    %5126 = vmatprep.subr.mxu0 0.0
    %5127 = vmatpush1.msra.mxu0 0.0
    %5128 = vmatprep.subr.mxu0 0.0
    %5129 = vmatpush1.msra.mxu0 0.0
    %5130 = vmatprep.subr.mxu0 0.0
    %5131 = vmatpush1.msra.mxu0 0.0
    %5132 = vmatprep.subr.mxu0 0.0
    %5133 = vmatpush1.msra.mxu0 0.0
    %5134 = vmatprep.subr.mxu0 0.0
    %5135 = vmatpush1.msra.mxu0 0.0
    %5136 = vmatprep.subr.mxu0 0.0
    %5137 = vmatpush1.msra.mxu0 0.0
    %5138 = vmatprep.subr.mxu0 0.0
    %5139 = vmatpush1.msra.mxu0 0.0
    %5140 = vmatprep.subr.mxu0 0.0
    %5141 = vmatpush1.msra.mxu0 0.0
    %5142 = vmatprep.mubr.f32.mxu0 0.0
    %5143 = vmatmul.mubr.f32.gmra.mrb[0].mxu0 %v5073
    %v5144 = vpop.f32.mrb[0].mxu0
    %v5145 = vadd.f32 0.0, %v5144
    %v5146 = vpop.f32.mrb[0].mxu0
    %5147 = vmatprep.mubr.f32.mxu0 0.0
    %5148 = vmatmul.mubr.f32.gmra.mrb[0].mxu0 %v5076
    %v5149 = vpop.f32.mrb[0].mxu0
    %v5150 = vadd.f32 0.0, %v5149
    %v5151 = vpop.f32.mrb[0].mxu0
    %5152 = vdwg.mxu0
    %v5154 = vsel %vm253, %v4659, 0
    %v5157 = vsel %vm253, %v4735, 0
    %5159 = vmatprep.subr.mxu0 0.0
    %5160 = vmatpush1.msra.mxu0 %v4739
    %5161 = vmatprep.subr.mxu0 0.0
    %5162 = vmatpush1.msra.mxu0 0.0
    %5163 = vmatprep.subr.mxu0 0.0
    %5164 = vmatpush1.msra.mxu0 0.0
    %5165 = vmatprep.subr.mxu0 0.0
    %5166 = vmatpush1.msra.mxu0 0.0
    %5167 = vmatprep.subr.mxu0 0.0
    %5168 = vmatpush1.msra.mxu0 0.0
    %5169 = vmatprep.subr.mxu0 0.0
    %5170 = vmatpush1.msra.mxu0 0.0
    %5171 = vmatprep.subr.mxu0 0.0
    %5172 = vmatpush1.msra.mxu0 0.0
    %5173 = vmatprep.subr.mxu0 0.0
    %5174 = vmatpush1.msra.mxu0 0.0
    %5175 = vmatprep.subr.mxu0 0.0
    %5176 = vmatpush1.msra.mxu0 0.0
    %5177 = vmatprep.subr.mxu0 0.0
    %5178 = vmatpush1.msra.mxu0 0.0
    %5179 = vmatprep.subr.mxu0 0.0
    %5180 = vmatpush1.msra.mxu0 0.0
    %5181 = vmatprep.subr.mxu0 0.0
    %5182 = vmatpush1.msra.mxu0 0.0
    %5183 = vmatprep.subr.mxu0 0.0
    %5184 = vmatpush1.msra.mxu0 0.0
    %5185 = vmatprep.subr.mxu0 0.0
    %5186 = vmatpush1.msra.mxu0 0.0
    %5187 = vmatprep.subr.mxu0 0.0
    %5188 = vmatpush1.msra.mxu0 0.0
    %5189 = vmatprep.subr.mxu0 0.0
    %5190 = vmatpush1.msra.mxu0 0.0
    %5191 = vmatprep.subr.mxu0 0.0
    %5192 = vmatpush1.msra.mxu0 0.0
    %5193 = vmatprep.subr.mxu0 0.0
    %5194 = vmatpush1.msra.mxu0 0.0
    %5195 = vmatprep.subr.mxu0 0.0
    %5196 = vmatpush1.msra.mxu0 0.0
    %5197 = vmatprep.subr.mxu0 0.0
    %5198 = vmatpush1.msra.mxu0 0.0
    %5199 = vmatprep.subr.mxu0 0.0
    %5200 = vmatpush1.msra.mxu0 0.0
    %5201 = vmatprep.subr.mxu0 0.0
    %5202 = vmatpush1.msra.mxu0 0.0
    %5203 = vmatprep.subr.mxu0 0.0
    %5204 = vmatpush1.msra.mxu0 0.0
    %5205 = vmatprep.subr.mxu0 0.0
    %5206 = vmatpush1.msra.mxu0 0.0
    %5207 = vmatprep.subr.mxu0 0.0
    %5208 = vmatpush1.msra.mxu0 0.0
    %5209 = vmatprep.subr.mxu0 0.0
    %5210 = vmatpush1.msra.mxu0 0.0
    %5211 = vmatprep.subr.mxu0 0.0
    %5212 = vmatpush1.msra.mxu0 0.0
    %5213 = vmatprep.subr.mxu0 0.0
    %5214 = vmatpush1.msra.mxu0 0.0
    %5215 = vmatprep.subr.mxu0 0.0
    %5216 = vmatpush1.msra.mxu0 0.0
    %5217 = vmatprep.subr.mxu0 0.0
    %5218 = vmatpush1.msra.mxu0 0.0
    %5219 = vmatprep.subr.mxu0 0.0
    %5220 = vmatpush1.msra.mxu0 0.0
    %5221 = vmatprep.subr.mxu0 0.0
    %5222 = vmatpush1.msra.mxu0 0.0
    %5223 = vmatprep.mubr.f32.mxu0 0.0
    %5224 = vmatmul.mubr.f32.gmra.mrb[0].mxu0 %v5154
    %v5225 = vpop.f32.mrb[0].mxu0
    %v5226 = vadd.f32 %v5145, %v5225
    %v5227 = vpop.f32.mrb[0].mxu0
    %5228 = vmatprep.mubr.f32.mxu0 0.0
    %5229 = vmatmul.mubr.f32.gmra.mrb[0].mxu0 %v5157
    %v5230 = vpop.f32.mrb[0].mxu0
    %v5231 = vadd.f32 %v5150, %v5230
    %v5232 = vpop.f32.mrb[0].mxu0
    %5233 = vdwg.mxu0
    %5234 = vrot.lane.b32.xlu0 %v4402, 112
    %v5235 = vpop.permute.xlu0 %5234
    %5236 = vrot.lane.b32.xlu0 %v4402, 80
    %v5237 = vpop.permute.xlu0 %5236
    %v5238 = vsel %vm253, %v5235, 0
    %v5240 = vsel %vm253, %v5237, 0
    %5242 = vmatprep.subr.mxu0 0.0
    %5243 = vmatpush1.xpose.msra.mxu0 %v5240
    %5244 = vmatprep.subr.mxu0 0.0
    %5245 = vmatpush1.xpose.msra.mxu0 0.0
    %5246 = vmatprep.subr.mxu0 0.0
    %5247 = vmatpush1.xpose.msra.mxu0 0.0
    %5248 = vmatprep.subr.mxu0 0.0
    %5249 = vmatpush1.xpose.msra.mxu0 0.0
    %5250 = vmatprep.subr.mxu0 0.0
    %5251 = vmatpush1.xpose.msra.mxu0 0.0
    %5252 = vmatprep.subr.mxu0 0.0
    %5253 = vmatpush1.xpose.msra.mxu0 0.0
    %5254 = vmatprep.subr.mxu0 0.0
    %5255 = vmatpush1.xpose.msra.mxu0 0.0
    %5256 = vmatprep.subr.mxu0 0.0
    %5257 = vmatpush1.xpose.msra.mxu0 0.0
    %5258 = vmatprep.subr.mxu0 0.0
    %5259 = vmatpush1.xpose.msra.mxu0 0.0
    %5260 = vmatprep.subr.mxu0 0.0
    %5261 = vmatpush1.xpose.msra.mxu0 0.0
    %5262 = vmatprep.subr.mxu0 0.0
    %5263 = vmatpush1.xpose.msra.mxu0 0.0
    %5264 = vmatprep.subr.mxu0 0.0
    %5265 = vmatpush1.xpose.msra.mxu0 0.0
    %5266 = vmatprep.subr.mxu0 0.0
    %5267 = vmatpush1.xpose.msra.mxu0 0.0
    %5268 = vmatprep.subr.mxu0 0.0
    %5269 = vmatpush1.xpose.msra.mxu0 0.0
    %5270 = vmatprep.subr.mxu0 0.0
    %5271 = vmatpush1.xpose.msra.mxu0 0.0
    %5272 = vmatprep.subr.mxu0 0.0
    %5273 = vmatpush1.xpose.msra.mxu0 0.0
    %5274 = vmatprep.subr.mxu0 0.0
    %5275 = vmatpush1.xpose.msra.mxu0 0.0
    %5276 = vmatprep.subr.mxu0 0.0
    %5277 = vmatpush1.xpose.msra.mxu0 0.0
    %5278 = vmatprep.subr.mxu0 0.0
    %5279 = vmatpush1.xpose.msra.mxu0 0.0
    %5280 = vmatprep.subr.mxu0 0.0
    %5281 = vmatpush1.xpose.msra.mxu0 0.0
    %5282 = vmatprep.subr.mxu0 0.0
    %5283 = vmatpush1.xpose.msra.mxu0 0.0
    %5284 = vmatprep.subr.mxu0 0.0
    %5285 = vmatpush1.xpose.msra.mxu0 0.0
    %5286 = vmatprep.subr.mxu0 0.0
    %5287 = vmatpush1.xpose.msra.mxu0 0.0
    %5288 = vmatprep.subr.mxu0 0.0
    %5289 = vmatpush1.xpose.msra.mxu0 0.0
    %5290 = vmatprep.subr.mxu0 0.0
    %5291 = vmatpush1.xpose.msra.mxu0 0.0
    %5292 = vmatprep.subr.mxu0 0.0
    %5293 = vmatpush1.xpose.msra.mxu0 0.0
    %5294 = vmatprep.subr.mxu0 0.0
    %5295 = vmatpush1.xpose.msra.mxu0 0.0
    %5296 = vmatprep.subr.mxu0 0.0
    %5297 = vmatpush1.xpose.msra.mxu0 0.0
    %5298 = vmatprep.subr.mxu0 0.0
    %5299 = vmatpush1.xpose.msra.mxu0 0.0
    %5300 = vmatprep.subr.mxu0 0.0
    %5301 = vmatpush1.xpose.msra.mxu0 0.0
    %5302 = vmatprep.subr.mxu0 0.0
    %5303 = vmatpush1.xpose.msra.mxu0 0.0
    %5304 = vmatprep.subr.mxu0 0.0
    %5305 = vmatpush1.xpose.msra.mxu0 0.0
    %5306 = vmatprep.mubr.f32.mxu0 0.0
    %5307 = vmatmul.mubr.f32.gmra.mrb[0].mxu0 %v5238
    %v5308 = vpop.f32.mrb[0].mxu0
    %v5309 = vadd.f32 %v92, %v5308
    %v5310 = vpop.f32.mrb[0].mxu0
    %5311 = vdwg.mxu0
    %5312 = vrot.lane.b32.xlu0 %v4407, 112
    %v5313 = vpop.permute.xlu0 %5312
    %5314 = vrot.lane.b32.xlu0 %v4407, 80
    %v5315 = vpop.permute.xlu0 %5314
    %v5316 = vsel %vm253, %v5313, 0
    %v5318 = vsel %vm253, %v5315, 0
    %5320 = vmatprep.subr.mxu0 0.0
    %5321 = vmatpush1.xpose.msra.mxu0 %v5318
    %5322 = vmatprep.subr.mxu0 0.0
    %5323 = vmatpush1.xpose.msra.mxu0 0.0
    %5324 = vmatprep.subr.mxu0 0.0
    %5325 = vmatpush1.xpose.msra.mxu0 0.0
    %5326 = vmatprep.subr.mxu0 0.0
    %5327 = vmatpush1.xpose.msra.mxu0 0.0
    %5328 = vmatprep.subr.mxu0 0.0
    %5329 = vmatpush1.xpose.msra.mxu0 0.0
    %5330 = vmatprep.subr.mxu0 0.0
    %5331 = vmatpush1.xpose.msra.mxu0 0.0
    %5332 = vmatprep.subr.mxu0 0.0
    %5333 = vmatpush1.xpose.msra.mxu0 0.0
    %5334 = vmatprep.subr.mxu0 0.0
    %5335 = vmatpush1.xpose.msra.mxu0 0.0
    %5336 = vmatprep.subr.mxu0 0.0
    %5337 = vmatpush1.xpose.msra.mxu0 0.0
    %5338 = vmatprep.subr.mxu0 0.0
    %5339 = vmatpush1.xpose.msra.mxu0 0.0
    %5340 = vmatprep.subr.mxu0 0.0
    %5341 = vmatpush1.xpose.msra.mxu0 0.0
    %5342 = vmatprep.subr.mxu0 0.0
    %5343 = vmatpush1.xpose.msra.mxu0 0.0
    %5344 = vmatprep.subr.mxu0 0.0
    %5345 = vmatpush1.xpose.msra.mxu0 0.0
    %5346 = vmatprep.subr.mxu0 0.0
    %5347 = vmatpush1.xpose.msra.mxu0 0.0
    %5348 = vmatprep.subr.mxu0 0.0
    %5349 = vmatpush1.xpose.msra.mxu0 0.0
    %5350 = vmatprep.subr.mxu0 0.0
    %5351 = vmatpush1.xpose.msra.mxu0 0.0
    %5352 = vmatprep.subr.mxu0 0.0
    %5353 = vmatpush1.xpose.msra.mxu0 0.0
    %5354 = vmatprep.subr.mxu0 0.0
    %5355 = vmatpush1.xpose.msra.mxu0 0.0
    %5356 = vmatprep.subr.mxu0 0.0
    %5357 = vmatpush1.xpose.msra.mxu0 0.0
    %5358 = vmatprep.subr.mxu0 0.0
    %5359 = vmatpush1.xpose.msra.mxu0 0.0
    %5360 = vmatprep.subr.mxu0 0.0
    %5361 = vmatpush1.xpose.msra.mxu0 0.0
    %5362 = vmatprep.subr.mxu0 0.0
    %5363 = vmatpush1.xpose.msra.mxu0 0.0
    %5364 = vmatprep.subr.mxu0 0.0
    %5365 = vmatpush1.xpose.msra.mxu0 0.0
    %5366 = vmatprep.subr.mxu0 0.0
    %5367 = vmatpush1.xpose.msra.mxu0 0.0
    %5368 = vmatprep.subr.mxu0 0.0
    %5369 = vmatpush1.xpose.msra.mxu0 0.0
    %5370 = vmatprep.subr.mxu0 0.0
    %5371 = vmatpush1.xpose.msra.mxu0 0.0
    %5372 = vmatprep.subr.mxu0 0.0
    %5373 = vmatpush1.xpose.msra.mxu0 0.0
    %5374 = vmatprep.subr.mxu0 0.0
    %5375 = vmatpush1.xpose.msra.mxu0 0.0
    %5376 = vmatprep.subr.mxu0 0.0
    %5377 = vmatpush1.xpose.msra.mxu0 0.0
    %5378 = vmatprep.subr.mxu0 0.0
    %5379 = vmatpush1.xpose.msra.mxu0 0.0
    %5380 = vmatprep.subr.mxu0 0.0
    %5381 = vmatpush1.xpose.msra.mxu0 0.0
    %5382 = vmatprep.subr.mxu0 0.0
    %5383 = vmatpush1.xpose.msra.mxu0 0.0
    %5384 = vmatprep.mubr.f32.mxu0 0.0
    %5385 = vmatmul.mubr.f32.gmra.mrb[0].mxu0 %v5316
    %v5386 = vpop.f32.mrb[0].mxu0
    %v5387 = vadd.f32 %v96, %v5386
    %v5388 = vpop.f32.mrb[0].mxu0
    %5389 = vdwg.mxu0
    %v5390 = vsel %vm253, %v5309, -inf
    %5391 = vmax.xlane.f32.xlu0 %v5390
    %v5392 = vpop.xlane.xlu0 %5391
    %v5393 = vsel %vm253, %v5387, -inf
    %5394 = vmax.xlane.f32.xlu0 %v5393
    %v5395 = vpop.xlane.xlu0 %5394
    %v5396 = vsub.f32 %v5309, %v5392
    %v5397 = vsub.f32 %v5387, %v5395
    %v5398 = vmul.f32 %v5396, 1.442695
    %v5399 = vpow.pop %v5398
    %v5400 = vmul.f32 %v5397, 1.442695
    %v5401 = vpow.pop %v5400
    %v5402 = vsel %vm253, %v5399, 0.0
    %5403 = vadd.xlane.f32.xlu0 %v5402
    %v5404 = vpop.xlane.xlu0 %5403
    %v5405 = vsel %vm253, %v5401, 0.0
    %5406 = vadd.xlane.f32.xlu0 %v5405
    %v5407 = vpop.xlane.xlu0 %5406
    %v5408 = vrcp.pop %v5404
    %v5409 = vrcp.pop %v5407
    %v5410 = vmul.f32 %v5399, %v5408
    %v5411 = vmul.f32 %v5401, %v5409
    %5412 = vrot.lane.b32.xlu0 %v4402, 48
    %v5413 = vpop.permute.xlu0 %5412
    %v5416 = vsel %vm253, %v5410, 0
    %5418 = vmatprep.subr.mxu0 0.0
    %5419 = vmatpush1.msra.mxu0 %v5413
    %5420 = vmatprep.subr.mxu0 0.0
    %5421 = vmatpush1.msra.mxu0 0.0
    %5422 = vmatprep.subr.mxu0 0.0
    %5423 = vmatpush1.msra.mxu0 0.0
    %5424 = vmatprep.subr.mxu0 0.0
    %5425 = vmatpush1.msra.mxu0 0.0
    %5426 = vmatprep.subr.mxu0 0.0
    %5427 = vmatpush1.msra.mxu0 0.0
    %5428 = vmatprep.subr.mxu0 0.0
    %5429 = vmatpush1.msra.mxu0 0.0
    %5430 = vmatprep.subr.mxu0 0.0
    %5431 = vmatpush1.msra.mxu0 0.0
    %5432 = vmatprep.subr.mxu0 0.0
    %5433 = vmatpush1.msra.mxu0 0.0
    %5434 = vmatprep.subr.mxu0 0.0
    %5435 = vmatpush1.msra.mxu0 0.0
    %5436 = vmatprep.subr.mxu0 0.0
    %5437 = vmatpush1.msra.mxu0 0.0
    %5438 = vmatprep.subr.mxu0 0.0
    %5439 = vmatpush1.msra.mxu0 0.0
    %5440 = vmatprep.subr.mxu0 0.0
    %5441 = vmatpush1.msra.mxu0 0.0
    %5442 = vmatprep.subr.mxu0 0.0
    %5443 = vmatpush1.msra.mxu0 0.0
    %5444 = vmatprep.subr.mxu0 0.0
    %5445 = vmatpush1.msra.mxu0 0.0
    %5446 = vmatprep.subr.mxu0 0.0
    %5447 = vmatpush1.msra.mxu0 0.0
    %5448 = vmatprep.subr.mxu0 0.0
    %5449 = vmatpush1.msra.mxu0 0.0
    %5450 = vmatprep.subr.mxu0 0.0
    %5451 = vmatpush1.msra.mxu0 0.0
    %5452 = vmatprep.subr.mxu0 0.0
    %5453 = vmatpush1.msra.mxu0 0.0
    %5454 = vmatprep.subr.mxu0 0.0
    %5455 = vmatpush1.msra.mxu0 0.0
    %5456 = vmatprep.subr.mxu0 0.0
    %5457 = vmatpush1.msra.mxu0 0.0
    %5458 = vmatprep.subr.mxu0 0.0
    %5459 = vmatpush1.msra.mxu0 0.0
    %5460 = vmatprep.subr.mxu0 0.0
    %5461 = vmatpush1.msra.mxu0 0.0
    %5462 = vmatprep.subr.mxu0 0.0
    %5463 = vmatpush1.msra.mxu0 0.0
    %5464 = vmatprep.subr.mxu0 0.0
    %5465 = vmatpush1.msra.mxu0 0.0
    %5466 = vmatprep.subr.mxu0 0.0
    %5467 = vmatpush1.msra.mxu0 0.0
    %5468 = vmatprep.subr.mxu0 0.0
    %5469 = vmatpush1.msra.mxu0 0.0
    %5470 = vmatprep.subr.mxu0 0.0
    %5471 = vmatpush1.msra.mxu0 0.0
    %5472 = vmatprep.subr.mxu0 0.0
    %5473 = vmatpush1.msra.mxu0 0.0
    %5474 = vmatprep.subr.mxu0 0.0
    %5475 = vmatpush1.msra.mxu0 0.0
    %5476 = vmatprep.subr.mxu0 0.0
    %5477 = vmatpush1.msra.mxu0 0.0
    %5478 = vmatprep.subr.mxu0 0.0
    %5479 = vmatpush1.msra.mxu0 0.0
    %5480 = vmatprep.subr.mxu0 0.0
    %5481 = vmatpush1.msra.mxu0 0.0
    %5482 = vmatprep.mubr.f32.mxu0 0.0
    %5483 = vmatmul.mubr.f32.gmra.mrb[0].mxu0 %v5416
    %v5484 = vpop.f32.mrb[0].mxu0
    %v5485 = vadd.f32 0.0, %v5484
    %v5486 = vpop.f32.mrb[0].mxu0
    %5487 = vdwg.mxu0
    %5488 = vrot.lane.b32.xlu0 %v4407, 48
    %v5489 = vpop.permute.xlu0 %5488
    %v5492 = vsel %vm253, %v5411, 0
    %5494 = vmatprep.subr.mxu0 0.0
    %5495 = vmatpush1.msra.mxu0 %v5489
    %5496 = vmatprep.subr.mxu0 0.0
    %5497 = vmatpush1.msra.mxu0 0.0
    %5498 = vmatprep.subr.mxu0 0.0
    %5499 = vmatpush1.msra.mxu0 0.0
    %5500 = vmatprep.subr.mxu0 0.0
    %5501 = vmatpush1.msra.mxu0 0.0
    %5502 = vmatprep.subr.mxu0 0.0
    %5503 = vmatpush1.msra.mxu0 0.0
    %5504 = vmatprep.subr.mxu0 0.0
    %5505 = vmatpush1.msra.mxu0 0.0
    %5506 = vmatprep.subr.mxu0 0.0
    %5507 = vmatpush1.msra.mxu0 0.0
    %5508 = vmatprep.subr.mxu0 0.0
    %5509 = vmatpush1.msra.mxu0 0.0
    %5510 = vmatprep.subr.mxu0 0.0
    %5511 = vmatpush1.msra.mxu0 0.0
    %5512 = vmatprep.subr.mxu0 0.0
    %5513 = vmatpush1.msra.mxu0 0.0
    %5514 = vmatprep.subr.mxu0 0.0
    %5515 = vmatpush1.msra.mxu0 0.0
    %5516 = vmatprep.subr.mxu0 0.0
    %5517 = vmatpush1.msra.mxu0 0.0
    %5518 = vmatprep.subr.mxu0 0.0
    %5519 = vmatpush1.msra.mxu0 0.0
    %5520 = vmatprep.subr.mxu0 0.0
    %5521 = vmatpush1.msra.mxu0 0.0
    %5522 = vmatprep.subr.mxu0 0.0
    %5523 = vmatpush1.msra.mxu0 0.0
    %5524 = vmatprep.subr.mxu0 0.0
    %5525 = vmatpush1.msra.mxu0 0.0
    %5526 = vmatprep.subr.mxu0 0.0
    %5527 = vmatpush1.msra.mxu0 0.0
    %5528 = vmatprep.subr.mxu0 0.0
    %5529 = vmatpush1.msra.mxu0 0.0
    %5530 = vmatprep.subr.mxu0 0.0
    %5531 = vmatpush1.msra.mxu0 0.0
    %5532 = vmatprep.subr.mxu0 0.0
    %5533 = vmatpush1.msra.mxu0 0.0
    %5534 = vmatprep.subr.mxu0 0.0
    %5535 = vmatpush1.msra.mxu0 0.0
    %5536 = vmatprep.subr.mxu0 0.0
    %5537 = vmatpush1.msra.mxu0 0.0
    %5538 = vmatprep.subr.mxu0 0.0
    %5539 = vmatpush1.msra.mxu0 0.0
    %5540 = vmatprep.subr.mxu0 0.0
    %5541 = vmatpush1.msra.mxu0 0.0
    %5542 = vmatprep.subr.mxu0 0.0
    %5543 = vmatpush1.msra.mxu0 0.0
    %5544 = vmatprep.subr.mxu0 0.0
    %5545 = vmatpush1.msra.mxu0 0.0
    %5546 = vmatprep.subr.mxu0 0.0
    %5547 = vmatpush1.msra.mxu0 0.0
    %5548 = vmatprep.subr.mxu0 0.0
    %5549 = vmatpush1.msra.mxu0 0.0
    %5550 = vmatprep.subr.mxu0 0.0
    %5551 = vmatpush1.msra.mxu0 0.0
    %5552 = vmatprep.subr.mxu0 0.0
    %5553 = vmatpush1.msra.mxu0 0.0
    %5554 = vmatprep.subr.mxu0 0.0
    %5555 = vmatpush1.msra.mxu0 0.0
    %5556 = vmatprep.subr.mxu0 0.0
    %5557 = vmatpush1.msra.mxu0 0.0
    %5558 = vmatprep.mubr.f32.mxu0 0.0
    %5559 = vmatmul.mubr.f32.gmra.mrb[0].mxu0 %v5492
    %v5560 = vpop.f32.mrb[0].mxu0
    %v5561 = vadd.f32 0.0, %v5560
    %v5562 = vpop.f32.mrb[0].mxu0
    %5563 = vdwg.mxu0
    %s5564 = scalar_lea.vmem %s8, 80
    %v5565 = vld [vmem:[%s5564] sm:$0xff]
    %v5567 = vsel %vm253, %v5485, 0
    %v5570 = vsel %vm253, %v5561, 0
    %5572 = vmatprep.subr.mxu0 0.0
    %5573 = vmatpush1.msra.mxu0 %v5565
    %5574 = vmatprep.subr.mxu0 0.0
    %5575 = vmatpush1.msra.mxu0 0.0
    %5576 = vmatprep.subr.mxu0 0.0
    %5577 = vmatpush1.msra.mxu0 0.0
    %5578 = vmatprep.subr.mxu0 0.0
    %5579 = vmatpush1.msra.mxu0 0.0
    %5580 = vmatprep.subr.mxu0 0.0
    %5581 = vmatpush1.msra.mxu0 0.0
    %5582 = vmatprep.subr.mxu0 0.0
    %5583 = vmatpush1.msra.mxu0 0.0
    %5584 = vmatprep.subr.mxu0 0.0
    %5585 = vmatpush1.msra.mxu0 0.0
    %5586 = vmatprep.subr.mxu0 0.0
    %5587 = vmatpush1.msra.mxu0 0.0
    %5588 = vmatprep.subr.mxu0 0.0
    %5589 = vmatpush1.msra.mxu0 0.0
    %5590 = vmatprep.subr.mxu0 0.0
    %5591 = vmatpush1.msra.mxu0 0.0
    %5592 = vmatprep.subr.mxu0 0.0
    %5593 = vmatpush1.msra.mxu0 0.0
    %5594 = vmatprep.subr.mxu0 0.0
    %5595 = vmatpush1.msra.mxu0 0.0
    %5596 = vmatprep.subr.mxu0 0.0
    %5597 = vmatpush1.msra.mxu0 0.0
    %5598 = vmatprep.subr.mxu0 0.0
    %5599 = vmatpush1.msra.mxu0 0.0
    %5600 = vmatprep.subr.mxu0 0.0
    %5601 = vmatpush1.msra.mxu0 0.0
    %5602 = vmatprep.subr.mxu0 0.0
    %5603 = vmatpush1.msra.mxu0 0.0
    %5604 = vmatprep.subr.mxu0 0.0
    %5605 = vmatpush1.msra.mxu0 0.0
    %5606 = vmatprep.subr.mxu0 0.0
    %5607 = vmatpush1.msra.mxu0 0.0
    %5608 = vmatprep.subr.mxu0 0.0
    %5609 = vmatpush1.msra.mxu0 0.0
    %5610 = vmatprep.subr.mxu0 0.0
    %5611 = vmatpush1.msra.mxu0 0.0
    %5612 = vmatprep.subr.mxu0 0.0
    %5613 = vmatpush1.msra.mxu0 0.0
    %5614 = vmatprep.subr.mxu0 0.0
    %5615 = vmatpush1.msra.mxu0 0.0
    %5616 = vmatprep.subr.mxu0 0.0
    %5617 = vmatpush1.msra.mxu0 0.0
    %5618 = vmatprep.subr.mxu0 0.0
    %5619 = vmatpush1.msra.mxu0 0.0
    %5620 = vmatprep.subr.mxu0 0.0
    %5621 = vmatpush1.msra.mxu0 0.0
    %5622 = vmatprep.subr.mxu0 0.0
    %5623 = vmatpush1.msra.mxu0 0.0
    %5624 = vmatprep.subr.mxu0 0.0
    %5625 = vmatpush1.msra.mxu0 0.0
    %5626 = vmatprep.subr.mxu0 0.0
    %5627 = vmatpush1.msra.mxu0 0.0
    %5628 = vmatprep.subr.mxu0 0.0
    %5629 = vmatpush1.msra.mxu0 0.0
    %5630 = vmatprep.subr.mxu0 0.0
    %5631 = vmatpush1.msra.mxu0 0.0
    %5632 = vmatprep.subr.mxu0 0.0
    %5633 = vmatpush1.msra.mxu0 0.0
    %5634 = vmatprep.subr.mxu0 0.0
    %5635 = vmatpush1.msra.mxu0 0.0
    %5636 = vmatprep.mubr.f32.mxu0 0.0
    %5637 = vmatmul.mubr.f32.gmra.mrb[0].mxu0 %v5567
    %v5638 = vpop.f32.mrb[0].mxu0
    %v5639 = vadd.f32 0.0, %v5638
    %v5640 = vpop.f32.mrb[0].mxu0
    %5641 = vmatprep.mubr.f32.mxu0 0.0
    %5642 = vmatmul.mubr.f32.gmra.mrb[0].mxu0 %v5570
    %v5643 = vpop.f32.mrb[0].mxu0
    %v5644 = vadd.f32 0.0, %v5643
    %v5645 = vpop.f32.mrb[0].mxu0
    %5646 = vdwg.mxu0
    %v5647 = vadd.f32 %v5226, %v5639
    %v5648 = vadd.f32 %v5231, %v5644
    %5649 = vrot.lane.b32.xlu0 %v4402, 104
    %v5650 = vpop.permute.xlu0 %5649
    %5651 = vrot.lane.b32.xlu0 %v4402, 72
    %v5652 = vpop.permute.xlu0 %5651
    %v5653 = vsel %vm253, %v5650, 0
    %v5655 = vsel %vm253, %v5652, 0
    %5657 = vmatprep.subr.mxu0 0.0
    %5658 = vmatpush1.xpose.msra.mxu0 %v5655
    %5659 = vmatprep.subr.mxu0 0.0
    %5660 = vmatpush1.xpose.msra.mxu0 0.0
    %5661 = vmatprep.subr.mxu0 0.0
    %5662 = vmatpush1.xpose.msra.mxu0 0.0
    %5663 = vmatprep.subr.mxu0 0.0
    %5664 = vmatpush1.xpose.msra.mxu0 0.0
    %5665 = vmatprep.subr.mxu0 0.0
    %5666 = vmatpush1.xpose.msra.mxu0 0.0
    %5667 = vmatprep.subr.mxu0 0.0
    %5668 = vmatpush1.xpose.msra.mxu0 0.0
    %5669 = vmatprep.subr.mxu0 0.0
    %5670 = vmatpush1.xpose.msra.mxu0 0.0
    %5671 = vmatprep.subr.mxu0 0.0
    %5672 = vmatpush1.xpose.msra.mxu0 0.0
    %5673 = vmatprep.subr.mxu0 0.0
    %5674 = vmatpush1.xpose.msra.mxu0 0.0
    %5675 = vmatprep.subr.mxu0 0.0
    %5676 = vmatpush1.xpose.msra.mxu0 0.0
    %5677 = vmatprep.subr.mxu0 0.0
    %5678 = vmatpush1.xpose.msra.mxu0 0.0
    %5679 = vmatprep.subr.mxu0 0.0
    %5680 = vmatpush1.xpose.msra.mxu0 0.0
    %5681 = vmatprep.subr.mxu0 0.0
    %5682 = vmatpush1.xpose.msra.mxu0 0.0
    %5683 = vmatprep.subr.mxu0 0.0
    %5684 = vmatpush1.xpose.msra.mxu0 0.0
    %5685 = vmatprep.subr.mxu0 0.0
    %5686 = vmatpush1.xpose.msra.mxu0 0.0
    %5687 = vmatprep.subr.mxu0 0.0
    %5688 = vmatpush1.xpose.msra.mxu0 0.0
    %5689 = vmatprep.subr.mxu0 0.0
    %5690 = vmatpush1.xpose.msra.mxu0 0.0
    %5691 = vmatprep.subr.mxu0 0.0
    %5692 = vmatpush1.xpose.msra.mxu0 0.0
    %5693 = vmatprep.subr.mxu0 0.0
    %5694 = vmatpush1.xpose.msra.mxu0 0.0
    %5695 = vmatprep.subr.mxu0 0.0
    %5696 = vmatpush1.xpose.msra.mxu0 0.0
    %5697 = vmatprep.subr.mxu0 0.0
    %5698 = vmatpush1.xpose.msra.mxu0 0.0
    %5699 = vmatprep.subr.mxu0 0.0
    %5700 = vmatpush1.xpose.msra.mxu0 0.0
    %5701 = vmatprep.subr.mxu0 0.0
    %5702 = vmatpush1.xpose.msra.mxu0 0.0
    %5703 = vmatprep.subr.mxu0 0.0
    %5704 = vmatpush1.xpose.msra.mxu0 0.0
    %5705 = vmatprep.subr.mxu0 0.0
    %5706 = vmatpush1.xpose.msra.mxu0 0.0
    %5707 = vmatprep.subr.mxu0 0.0
    %5708 = vmatpush1.xpose.msra.mxu0 0.0
    %5709 = vmatprep.subr.mxu0 0.0
    %5710 = vmatpush1.xpose.msra.mxu0 0.0
    %5711 = vmatprep.subr.mxu0 0.0
    %5712 = vmatpush1.xpose.msra.mxu0 0.0
    %5713 = vmatprep.subr.mxu0 0.0
    %5714 = vmatpush1.xpose.msra.mxu0 0.0
    %5715 = vmatprep.subr.mxu0 0.0
    %5716 = vmatpush1.xpose.msra.mxu0 0.0
    %5717 = vmatprep.subr.mxu0 0.0
    %5718 = vmatpush1.xpose.msra.mxu0 0.0
    %5719 = vmatprep.subr.mxu0 0.0
    %5720 = vmatpush1.xpose.msra.mxu0 0.0
    %5721 = vmatprep.mubr.f32.mxu0 0.0
    %5722 = vmatmul.mubr.f32.gmra.mrb[0].mxu0 %v5653
    %v5723 = vpop.f32.mrb[0].mxu0
    %v5724 = vadd.f32 %v92, %v5723
    %v5725 = vpop.f32.mrb[0].mxu0
    %5726 = vdwg.mxu0
    %5727 = vrot.lane.b32.xlu0 %v4407, 104
    %v5728 = vpop.permute.xlu0 %5727
    %5729 = vrot.lane.b32.xlu0 %v4407, 72
    %v5730 = vpop.permute.xlu0 %5729
    %v5731 = vsel %vm253, %v5728, 0
    %v5733 = vsel %vm253, %v5730, 0
    %5735 = vmatprep.subr.mxu0 0.0
    %5736 = vmatpush1.xpose.msra.mxu0 %v5733
    %5737 = vmatprep.subr.mxu0 0.0
    %5738 = vmatpush1.xpose.msra.mxu0 0.0
    %5739 = vmatprep.subr.mxu0 0.0
    %5740 = vmatpush1.xpose.msra.mxu0 0.0
    %5741 = vmatprep.subr.mxu0 0.0
    %5742 = vmatpush1.xpose.msra.mxu0 0.0
    %5743 = vmatprep.subr.mxu0 0.0
    %5744 = vmatpush1.xpose.msra.mxu0 0.0
    %5745 = vmatprep.subr.mxu0 0.0
    %5746 = vmatpush1.xpose.msra.mxu0 0.0
    %5747 = vmatprep.subr.mxu0 0.0
    %5748 = vmatpush1.xpose.msra.mxu0 0.0
    %5749 = vmatprep.subr.mxu0 0.0
    %5750 = vmatpush1.xpose.msra.mxu0 0.0
    %5751 = vmatprep.subr.mxu0 0.0
    %5752 = vmatpush1.xpose.msra.mxu0 0.0
    %5753 = vmatprep.subr.mxu0 0.0
    %5754 = vmatpush1.xpose.msra.mxu0 0.0
    %5755 = vmatprep.subr.mxu0 0.0
    %5756 = vmatpush1.xpose.msra.mxu0 0.0
    %5757 = vmatprep.subr.mxu0 0.0
    %5758 = vmatpush1.xpose.msra.mxu0 0.0
    %5759 = vmatprep.subr.mxu0 0.0
    %5760 = vmatpush1.xpose.msra.mxu0 0.0
    %5761 = vmatprep.subr.mxu0 0.0
    %5762 = vmatpush1.xpose.msra.mxu0 0.0
    %5763 = vmatprep.subr.mxu0 0.0
    %5764 = vmatpush1.xpose.msra.mxu0 0.0
    %5765 = vmatprep.subr.mxu0 0.0
    %5766 = vmatpush1.xpose.msra.mxu0 0.0
    %5767 = vmatprep.subr.mxu0 0.0
    %5768 = vmatpush1.xpose.msra.mxu0 0.0
    %5769 = vmatprep.subr.mxu0 0.0
    %5770 = vmatpush1.xpose.msra.mxu0 0.0
    %5771 = vmatprep.subr.mxu0 0.0
    %5772 = vmatpush1.xpose.msra.mxu0 0.0
    %5773 = vmatprep.subr.mxu0 0.0
    %5774 = vmatpush1.xpose.msra.mxu0 0.0
    %5775 = vmatprep.subr.mxu0 0.0
    %5776 = vmatpush1.xpose.msra.mxu0 0.0
    %5777 = vmatprep.subr.mxu0 0.0
    %5778 = vmatpush1.xpose.msra.mxu0 0.0
    %5779 = vmatprep.subr.mxu0 0.0
    %5780 = vmatpush1.xpose.msra.mxu0 0.0
    %5781 = vmatprep.subr.mxu0 0.0
    %5782 = vmatpush1.xpose.msra.mxu0 0.0
    %5783 = vmatprep.subr.mxu0 0.0
    %5784 = vmatpush1.xpose.msra.mxu0 0.0
    %5785 = vmatprep.subr.mxu0 0.0
    %5786 = vmatpush1.xpose.msra.mxu0 0.0
    %5787 = vmatprep.subr.mxu0 0.0
    %5788 = vmatpush1.xpose.msra.mxu0 0.0
    %5789 = vmatprep.subr.mxu0 0.0
    %5790 = vmatpush1.xpose.msra.mxu0 0.0
    %5791 = vmatprep.subr.mxu0 0.0
    %5792 = vmatpush1.xpose.msra.mxu0 0.0
    %5793 = vmatprep.subr.mxu0 0.0
    %5794 = vmatpush1.xpose.msra.mxu0 0.0
    %5795 = vmatprep.subr.mxu0 0.0
    %5796 = vmatpush1.xpose.msra.mxu0 0.0
    %5797 = vmatprep.subr.mxu0 0.0
    %5798 = vmatpush1.xpose.msra.mxu0 0.0
    %5799 = vmatprep.mubr.f32.mxu0 0.0
    %5800 = vmatmul.mubr.f32.gmra.mrb[0].mxu0 %v5731
    %v5801 = vpop.f32.mrb[0].mxu0
    %v5802 = vadd.f32 %v96, %v5801
    %v5803 = vpop.f32.mrb[0].mxu0
    %5804 = vdwg.mxu0
    %v5805 = vsel %vm253, %v5724, -inf
    %5806 = vmax.xlane.f32.xlu0 %v5805
    %v5807 = vpop.xlane.xlu0 %5806
    %v5808 = vsel %vm253, %v5802, -inf
    %5809 = vmax.xlane.f32.xlu0 %v5808
    %v5810 = vpop.xlane.xlu0 %5809
    %v5811 = vsub.f32 %v5724, %v5807
    %v5812 = vsub.f32 %v5802, %v5810
    %v5813 = vmul.f32 %v5811, 1.442695
    %v5814 = vpow.pop %v5813
    %v5815 = vmul.f32 %v5812, 1.442695
    %v5816 = vpow.pop %v5815
    %v5817 = vsel %vm253, %v5814, 0.0
    %5818 = vadd.xlane.f32.xlu0 %v5817
    %v5819 = vpop.xlane.xlu0 %5818
    %v5820 = vsel %vm253, %v5816, 0.0
    %5821 = vadd.xlane.f32.xlu0 %v5820
    %v5822 = vpop.xlane.xlu0 %5821
    %v5823 = vrcp.pop %v5819
    %v5824 = vrcp.pop %v5822
    %v5825 = vmul.f32 %v5814, %v5823
    %v5826 = vmul.f32 %v5816, %v5824
    %5827 = vrot.lane.b32.xlu0 %v4402, 40
    %v5828 = vpop.permute.xlu0 %5827
    %v5831 = vsel %vm253, %v5825, 0
    %5833 = vmatprep.subr.mxu0 0.0
    %5834 = vmatpush1.msra.mxu0 %v5828
    %5835 = vmatprep.subr.mxu0 0.0
    %5836 = vmatpush1.msra.mxu0 0.0
    %5837 = vmatprep.subr.mxu0 0.0
    %5838 = vmatpush1.msra.mxu0 0.0
    %5839 = vmatprep.subr.mxu0 0.0
    %5840 = vmatpush1.msra.mxu0 0.0
    %5841 = vmatprep.subr.mxu0 0.0
    %5842 = vmatpush1.msra.mxu0 0.0
    %5843 = vmatprep.subr.mxu0 0.0
    %5844 = vmatpush1.msra.mxu0 0.0
    %5845 = vmatprep.subr.mxu0 0.0
    %5846 = vmatpush1.msra.mxu0 0.0
    %5847 = vmatprep.subr.mxu0 0.0
    %5848 = vmatpush1.msra.mxu0 0.0
    %5849 = vmatprep.subr.mxu0 0.0
    %5850 = vmatpush1.msra.mxu0 0.0
    %5851 = vmatprep.subr.mxu0 0.0
    %5852 = vmatpush1.msra.mxu0 0.0
    %5853 = vmatprep.subr.mxu0 0.0
    %5854 = vmatpush1.msra.mxu0 0.0
    %5855 = vmatprep.subr.mxu0 0.0
    %5856 = vmatpush1.msra.mxu0 0.0
    %5857 = vmatprep.subr.mxu0 0.0
    %5858 = vmatpush1.msra.mxu0 0.0
    %5859 = vmatprep.subr.mxu0 0.0
    %5860 = vmatpush1.msra.mxu0 0.0
    %5861 = vmatprep.subr.mxu0 0.0
    %5862 = vmatpush1.msra.mxu0 0.0
    %5863 = vmatprep.subr.mxu0 0.0
    %5864 = vmatpush1.msra.mxu0 0.0
    %5865 = vmatprep.subr.mxu0 0.0
    %5866 = vmatpush1.msra.mxu0 0.0
    %5867 = vmatprep.subr.mxu0 0.0
    %5868 = vmatpush1.msra.mxu0 0.0
    %5869 = vmatprep.subr.mxu0 0.0
    %5870 = vmatpush1.msra.mxu0 0.0
    %5871 = vmatprep.subr.mxu0 0.0
    %5872 = vmatpush1.msra.mxu0 0.0
    %5873 = vmatprep.subr.mxu0 0.0
    %5874 = vmatpush1.msra.mxu0 0.0
    %5875 = vmatprep.subr.mxu0 0.0
    %5876 = vmatpush1.msra.mxu0 0.0
    %5877 = vmatprep.subr.mxu0 0.0
    %5878 = vmatpush1.msra.mxu0 0.0
    %5879 = vmatprep.subr.mxu0 0.0
    %5880 = vmatpush1.msra.mxu0 0.0
    %5881 = vmatprep.subr.mxu0 0.0
    %5882 = vmatpush1.msra.mxu0 0.0
    %5883 = vmatprep.subr.mxu0 0.0
    %5884 = vmatpush1.msra.mxu0 0.0
    %5885 = vmatprep.subr.mxu0 0.0
    %5886 = vmatpush1.msra.mxu0 0.0
    %5887 = vmatprep.subr.mxu0 0.0
    %5888 = vmatpush1.msra.mxu0 0.0
    %5889 = vmatprep.subr.mxu0 0.0
    %5890 = vmatpush1.msra.mxu0 0.0
    %5891 = vmatprep.subr.mxu0 0.0
    %5892 = vmatpush1.msra.mxu0 0.0
    %5893 = vmatprep.subr.mxu0 0.0
    %5894 = vmatpush1.msra.mxu0 0.0
    %5895 = vmatprep.subr.mxu0 0.0
    %5896 = vmatpush1.msra.mxu0 0.0
    %5897 = vmatprep.mubr.f32.mxu0 0.0
    %5898 = vmatmul.mubr.f32.gmra.mrb[0].mxu0 %v5831
    %v5899 = vpop.f32.mrb[0].mxu0
    %v5900 = vadd.f32 0.0, %v5899
    %v5901 = vpop.f32.mrb[0].mxu0
    %5902 = vdwg.mxu0
    %5903 = vrot.lane.b32.xlu0 %v4407, 40
    %v5904 = vpop.permute.xlu0 %5903
    %v5907 = vsel %vm253, %v5826, 0
    %5909 = vmatprep.subr.mxu0 0.0
    %5910 = vmatpush1.msra.mxu0 %v5904
    %5911 = vmatprep.subr.mxu0 0.0
    %5912 = vmatpush1.msra.mxu0 0.0
    %5913 = vmatprep.subr.mxu0 0.0
    %5914 = vmatpush1.msra.mxu0 0.0
    %5915 = vmatprep.subr.mxu0 0.0
    %5916 = vmatpush1.msra.mxu0 0.0
    %5917 = vmatprep.subr.mxu0 0.0
    %5918 = vmatpush1.msra.mxu0 0.0
    %5919 = vmatprep.subr.mxu0 0.0
    %5920 = vmatpush1.msra.mxu0 0.0
    %5921 = vmatprep.subr.mxu0 0.0
    %5922 = vmatpush1.msra.mxu0 0.0
    %5923 = vmatprep.subr.mxu0 0.0
    %5924 = vmatpush1.msra.mxu0 0.0
    %5925 = vmatprep.subr.mxu0 0.0
    %5926 = vmatpush1.msra.mxu0 0.0
    %5927 = vmatprep.subr.mxu0 0.0
    %5928 = vmatpush1.msra.mxu0 0.0
    %5929 = vmatprep.subr.mxu0 0.0
    %5930 = vmatpush1.msra.mxu0 0.0
    %5931 = vmatprep.subr.mxu0 0.0
    %5932 = vmatpush1.msra.mxu0 0.0
    %5933 = vmatprep.subr.mxu0 0.0
    %5934 = vmatpush1.msra.mxu0 0.0
    %5935 = vmatprep.subr.mxu0 0.0
    %5936 = vmatpush1.msra.mxu0 0.0
    %5937 = vmatprep.subr.mxu0 0.0
    %5938 = vmatpush1.msra.mxu0 0.0
    %5939 = vmatprep.subr.mxu0 0.0
    %5940 = vmatpush1.msra.mxu0 0.0
    %5941 = vmatprep.subr.mxu0 0.0
    %5942 = vmatpush1.msra.mxu0 0.0
    %5943 = vmatprep.subr.mxu0 0.0
    %5944 = vmatpush1.msra.mxu0 0.0
    %5945 = vmatprep.subr.mxu0 0.0
    %5946 = vmatpush1.msra.mxu0 0.0
    %5947 = vmatprep.subr.mxu0 0.0
    %5948 = vmatpush1.msra.mxu0 0.0
    %5949 = vmatprep.subr.mxu0 0.0
    %5950 = vmatpush1.msra.mxu0 0.0
    %5951 = vmatprep.subr.mxu0 0.0
    %5952 = vmatpush1.msra.mxu0 0.0
    %5953 = vmatprep.subr.mxu0 0.0
    %5954 = vmatpush1.msra.mxu0 0.0
    %5955 = vmatprep.subr.mxu0 0.0
    %5956 = vmatpush1.msra.mxu0 0.0
    %5957 = vmatprep.subr.mxu0 0.0
    %5958 = vmatpush1.msra.mxu0 0.0
    %5959 = vmatprep.subr.mxu0 0.0
    %5960 = vmatpush1.msra.mxu0 0.0
    %5961 = vmatprep.subr.mxu0 0.0
    %5962 = vmatpush1.msra.mxu0 0.0
    %5963 = vmatprep.subr.mxu0 0.0
    %5964 = vmatpush1.msra.mxu0 0.0
    %5965 = vmatprep.subr.mxu0 0.0
    %5966 = vmatpush1.msra.mxu0 0.0
    %5967 = vmatprep.subr.mxu0 0.0
    %5968 = vmatpush1.msra.mxu0 0.0
    %5969 = vmatprep.subr.mxu0 0.0
    %5970 = vmatpush1.msra.mxu0 0.0
    %5971 = vmatprep.subr.mxu0 0.0
    %5972 = vmatpush1.msra.mxu0 0.0
    %5973 = vmatprep.mubr.f32.mxu0 0.0
    %5974 = vmatmul.mubr.f32.gmra.mrb[0].mxu0 %v5907
    %v5975 = vpop.f32.mrb[0].mxu0
    %v5976 = vadd.f32 0.0, %v5975
    %v5977 = vpop.f32.mrb[0].mxu0
    %5978 = vdwg.mxu0
    %s5979 = scalar_lea.vmem %s8, 88
    %v5980 = vld [vmem:[%s5979] sm:$0xff]
    %v5982 = vsel %vm253, %v5900, 0
    %v5985 = vsel %vm253, %v5976, 0
    %5987 = vmatprep.subr.mxu0 0.0
    %5988 = vmatpush1.msra.mxu0 %v5980
    %5989 = vmatprep.subr.mxu0 0.0
    %5990 = vmatpush1.msra.mxu0 0.0
    %5991 = vmatprep.subr.mxu0 0.0
    %5992 = vmatpush1.msra.mxu0 0.0
    %5993 = vmatprep.subr.mxu0 0.0
    %5994 = vmatpush1.msra.mxu0 0.0
    %5995 = vmatprep.subr.mxu0 0.0
    %5996 = vmatpush1.msra.mxu0 0.0
    %5997 = vmatprep.subr.mxu0 0.0
    %5998 = vmatpush1.msra.mxu0 0.0
    %5999 = vmatprep.subr.mxu0 0.0
    %6000 = vmatpush1.msra.mxu0 0.0
    %6001 = vmatprep.subr.mxu0 0.0
    %6002 = vmatpush1.msra.mxu0 0.0
    %6003 = vmatprep.subr.mxu0 0.0
    %6004 = vmatpush1.msra.mxu0 0.0
    %6005 = vmatprep.subr.mxu0 0.0
    %6006 = vmatpush1.msra.mxu0 0.0
    %6007 = vmatprep.subr.mxu0 0.0
    %6008 = vmatpush1.msra.mxu0 0.0
    %6009 = vmatprep.subr.mxu0 0.0
    %6010 = vmatpush1.msra.mxu0 0.0
    %6011 = vmatprep.subr.mxu0 0.0
    %6012 = vmatpush1.msra.mxu0 0.0
    %6013 = vmatprep.subr.mxu0 0.0
    %6014 = vmatpush1.msra.mxu0 0.0
    %6015 = vmatprep.subr.mxu0 0.0
    %6016 = vmatpush1.msra.mxu0 0.0
    %6017 = vmatprep.subr.mxu0 0.0
    %6018 = vmatpush1.msra.mxu0 0.0
    %6019 = vmatprep.subr.mxu0 0.0
    %6020 = vmatpush1.msra.mxu0 0.0
    %6021 = vmatprep.subr.mxu0 0.0
    %6022 = vmatpush1.msra.mxu0 0.0
    %6023 = vmatprep.subr.mxu0 0.0
    %6024 = vmatpush1.msra.mxu0 0.0
    %6025 = vmatprep.subr.mxu0 0.0
    %6026 = vmatpush1.msra.mxu0 0.0
    %6027 = vmatprep.subr.mxu0 0.0
    %6028 = vmatpush1.msra.mxu0 0.0
    %6029 = vmatprep.subr.mxu0 0.0
    %6030 = vmatpush1.msra.mxu0 0.0
    %6031 = vmatprep.subr.mxu0 0.0
    %6032 = vmatpush1.msra.mxu0 0.0
    %6033 = vmatprep.subr.mxu0 0.0
    %6034 = vmatpush1.msra.mxu0 0.0
    %6035 = vmatprep.subr.mxu0 0.0
    %6036 = vmatpush1.msra.mxu0 0.0
    %6037 = vmatprep.subr.mxu0 0.0
    %6038 = vmatpush1.msra.mxu0 0.0
    %6039 = vmatprep.subr.mxu0 0.0
    %6040 = vmatpush1.msra.mxu0 0.0
    %6041 = vmatprep.subr.mxu0 0.0
    %6042 = vmatpush1.msra.mxu0 0.0
    %6043 = vmatprep.subr.mxu0 0.0
    %6044 = vmatpush1.msra.mxu0 0.0
    %6045 = vmatprep.subr.mxu0 0.0
    %6046 = vmatpush1.msra.mxu0 0.0
    %6047 = vmatprep.subr.mxu0 0.0
    %6048 = vmatpush1.msra.mxu0 0.0
    %6049 = vmatprep.subr.mxu0 0.0
    %6050 = vmatpush1.msra.mxu0 0.0
    %6051 = vmatprep.mubr.f32.mxu0 0.0
    %6052 = vmatmul.mubr.f32.gmra.mrb[0].mxu0 %v5982
    %v6053 = vpop.f32.mrb[0].mxu0
    %v6054 = vadd.f32 0.0, %v6053
    %v6055 = vpop.f32.mrb[0].mxu0
    %6056 = vmatprep.mubr.f32.mxu0 0.0
    %6057 = vmatmul.mubr.f32.gmra.mrb[0].mxu0 %v5985
    %v6058 = vpop.f32.mrb[0].mxu0
    %v6059 = vadd.f32 0.0, %v6058
    %v6060 = vpop.f32.mrb[0].mxu0
    %6061 = vdwg.mxu0
    %v6062 = vadd.f32 %v5647, %v6054
    %v6063 = vadd.f32 %v5648, %v6059
    %s6064 = scalar_lea.vmem %s9, 2
    %v6065 = vld [vmem:[%s6064] sm:$0x1]
    %v6067 = vlaneseq
    %v6068 = vshrl.u32 %v6067, 7
    %v6069 = vsub.s32 0, %v6068
    %v6070 = vrot.slane %v6065, %v6069
    %v6072 = vadd.f32 %v6062, %v6070
    %v6073 = vadd.f32 %v6063, %v6070
    %v6074 = vadd.f32 %v6072, %v4296
    %v6075 = vadd.f32 %v6073, %v4297
    %s6076 = scalar_lea.vmem %s10, 2
    %v6077 = vld [vmem:[%s6076] sm:$0x1]
    %s6078 = scalar_lea.vmem %s11, 2
    %v6079 = vld [vmem:[%s6078] sm:$0x1]
    %v6080 = vsel %vm114, %v6074, 0.0
    %6081 = vadd.xlane.f32.xlu0 %v6080
    %v6082 = vpop.xlane.xlu0 %6081
    %v6083 = vsel %vm114, %v6075, 0.0
    %6084 = vadd.xlane.f32.xlu0 %v6083
    %v6085 = vpop.xlane.xlu0 %6084
    %v6086 = vmul.f32 %v6082, %v121
    %v6087 = vmul.f32 %v6085, %v121
    %v6088 = vsub.f32 %v6074, %v6086
    %v6089 = vsub.f32 %v6075, %v6087
    %v6090 = vmul.f32 %v6088, %v6088
    %v6091 = vmul.f32 %v6089, %v6089
    %v6092 = vsel %vm114, %v6090, 0.0
    %6093 = vadd.xlane.f32.xlu0 %v6092
    %v6094 = vpop.xlane.xlu0 %6093
    %v6095 = vsel %vm114, %v6091, 0.0
    %6096 = vadd.xlane.f32.xlu0 %v6095
    %v6097 = vpop.xlane.xlu0 %6096
    %v6098 = vmul.f32 %v6094, %v121
    %v6099 = vmul.f32 %v6097, %v121
    %v6100 = vadd.f32 %v6098, 1e-12
    %v6101 = vadd.f32 %v6099, 1e-12
    %v6102 = vrsqrt.pop %v6100
    %v6103 = vrsqrt.pop %v6101
    %v6104 = vmul.f32 %v6088, %v6102
    %v6105 = vmul.f32 %v6089, %v6103
    %v6107 = vlaneseq
    %v6108 = vshrl.u32 %v6107, 7
    %v6109 = vsub.s32 0, %v6108
    %v6110 = vrot.slane %v6077, %v6109
    %v6112 = vmul.f32 %v6104, %v6110
    %v6113 = vmul.f32 %v6105, %v6110
    %v6115 = vlaneseq
    %v6116 = vshrl.u32 %v6115, 7
    %v6117 = vsub.s32 0, %v6116
    %v6118 = vrot.slane %v6079, %v6117
    %v6120 = vadd.f32 %v6112, %v6118
    %v6121 = vadd.f32 %v6113, %v6118
    %s6122 = scalar_lea.vmem %s12, 64
    %v6123 = vld [vmem:[%s6122] sm:$0xff]
    %v6124 = vld [vmem:[%s6122 + $0x8] sm:$0xff]
    %v6125 = vld [vmem:[%s6122 + $0x10] sm:$0xff]
    %v6126 = vld [vmem:[%s6122 + $0x18] sm:$0xff]
    %s6127 = scalar_lea.vmem %s13, 2
    %v6128 = vld [vmem:[%s6127] sm:$0x1]
    %v6130 = vlaneseq
    %v6131 = vshrl.u32 %v6130, 7
    %v6132 = vsub.s32 0, %v6131
    %v6133 = vrot.slane %v6128, %v6132
    %v6136 = vsel %vm114, %v6120, 0
    %v6139 = vsel %vm114, %v6121, 0
    %6141 = vmatprep.subr.mxu0 0.0
    %6142 = vmatpush1.msra.mxu0 %v6123
    %6143 = vmatprep.subr.mxu0 0.0
    %6144 = vmatpush1.msra.mxu0 %v6124
    %6145 = vmatprep.subr.mxu0 0.0
    %6146 = vmatpush1.msra.mxu0 %v6125
    %6147 = vmatprep.subr.mxu0 0.0
    %6148 = vmatpush1.msra.mxu0 %v6126
    %6149 = vmatprep.subr.mxu0 0.0
    %6150 = vmatpush1.msra.mxu0 0.0
    %6151 = vmatprep.subr.mxu0 0.0
    %6152 = vmatpush1.msra.mxu0 0.0
    %6153 = vmatprep.subr.mxu0 0.0
    %6154 = vmatpush1.msra.mxu0 0.0
    %6155 = vmatprep.subr.mxu0 0.0
    %6156 = vmatpush1.msra.mxu0 0.0
    %6157 = vmatprep.subr.mxu0 0.0
    %6158 = vmatpush1.msra.mxu0 0.0
    %6159 = vmatprep.subr.mxu0 0.0
    %6160 = vmatpush1.msra.mxu0 0.0
    %6161 = vmatprep.subr.mxu0 0.0
    %6162 = vmatpush1.msra.mxu0 0.0
    %6163 = vmatprep.subr.mxu0 0.0
    %6164 = vmatpush1.msra.mxu0 0.0
    %6165 = vmatprep.subr.mxu0 0.0
    %6166 = vmatpush1.msra.mxu0 0.0
    %6167 = vmatprep.subr.mxu0 0.0
    %6168 = vmatpush1.msra.mxu0 0.0
    %6169 = vmatprep.subr.mxu0 0.0
    %6170 = vmatpush1.msra.mxu0 0.0
    %6171 = vmatprep.subr.mxu0 0.0
    %6172 = vmatpush1.msra.mxu0 0.0
    %6173 = vmatprep.subr.mxu0 0.0
    %6174 = vmatpush1.msra.mxu0 0.0
    %6175 = vmatprep.subr.mxu0 0.0
    %6176 = vmatpush1.msra.mxu0 0.0
    %6177 = vmatprep.subr.mxu0 0.0
    %6178 = vmatpush1.msra.mxu0 0.0
    %6179 = vmatprep.subr.mxu0 0.0
    %6180 = vmatpush1.msra.mxu0 0.0
    %6181 = vmatprep.subr.mxu0 0.0
    %6182 = vmatpush1.msra.mxu0 0.0
    %6183 = vmatprep.subr.mxu0 0.0
    %6184 = vmatpush1.msra.mxu0 0.0
    %6185 = vmatprep.subr.mxu0 0.0
    %6186 = vmatpush1.msra.mxu0 0.0
    %6187 = vmatprep.subr.mxu0 0.0
    %6188 = vmatpush1.msra.mxu0 0.0
    %6189 = vmatprep.subr.mxu0 0.0
    %6190 = vmatpush1.msra.mxu0 0.0
    %6191 = vmatprep.subr.mxu0 0.0
    %6192 = vmatpush1.msra.mxu0 0.0
    %6193 = vmatprep.subr.mxu0 0.0
    %6194 = vmatpush1.msra.mxu0 0.0
    %6195 = vmatprep.subr.mxu0 0.0
    %6196 = vmatpush1.msra.mxu0 0.0
    %6197 = vmatprep.subr.mxu0 0.0
    %6198 = vmatpush1.msra.mxu0 0.0
    %6199 = vmatprep.subr.mxu0 0.0
    %6200 = vmatpush1.msra.mxu0 0.0
    %6201 = vmatprep.subr.mxu0 0.0
    %6202 = vmatpush1.msra.mxu0 0.0
    %6203 = vmatprep.subr.mxu0 0.0
    %6204 = vmatpush1.msra.mxu0 0.0
    %6205 = vmatprep.mubr.f32.mxu0 0.0
    %6206 = vmatmul.mubr.f32.gmra.mrb[0].mxu0 %v6136
    %v6207 = vpop.f32.mrb[0].mxu0
    %v6208 = vadd.f32 %v6133, %v6207
    %v6209 = vpop.f32.mrb[0].mxu0
    %6210 = vmatprep.mubr.f32.mxu0 0.0
    %6211 = vmatmul.mubr.f32.gmra.mrb[0].mxu0 %v6139
    %v6212 = vpop.f32.mrb[0].mxu0
    %v6213 = vadd.f32 %v6133, %v6212
    %v6214 = vpop.f32.mrb[0].mxu0
    %6215 = vdwg.mxu0
    %v6216 = vmul.f32 %v6208, 0.5
    %v6217 = vmul.f32 %v6213, 0.5
    %v6218 = vmul.f32 %v6208, 0.044715
    %v6219 = vmul.f32 %v6213, 0.044715
    %v6220 = vmul.f32 %v6218, %v6208
    %v6221 = vmul.f32 %v6219, %v6213
    %v6222 = vmul.f32 %v6220, %v6208
    %v6223 = vmul.f32 %v6221, %v6213
    %v6224 = vadd.f32 %v6208, %v6222
    %v6225 = vadd.f32 %v6213, %v6223
    %v6226 = vmul.f32 %v6224, 0.7978846
    %v6227 = vmul.f32 %v6225, 0.7978846
    %v6228 = vtanh.pop %v6226
    %v6229 = vtanh.pop %v6227
    %v6230 = vadd.f32 %v6228, 1.0
    %v6231 = vadd.f32 %v6229, 1.0
    %v6232 = vmul.f32 %v6216, %v6230
    %v6233 = vmul.f32 %v6217, %v6231
    %s6234 = scalar_lea.vmem %s14, 256
    %v6235 = vld [vmem:[%s6234] sm:$0xff]
    %v6236 = vld [vmem:[%s6234 + $0x8] sm:$0xff]
    %v6237 = vld [vmem:[%s6234 + $0x10] sm:$0xff]
    %v6238 = vld [vmem:[%s6234 + $0x18] sm:$0xff]
    %v6239 = vld [vmem:[%s6234 + $0x20] sm:$0xff]
    %v6240 = vld [vmem:[%s6234 + $0x28] sm:$0xff]
    %v6241 = vld [vmem:[%s6234 + $0x30] sm:$0xff]
    %v6242 = vld [vmem:[%s6234 + $0x38] sm:$0xff]
    %v6243 = vld [vmem:[%s6234 + $0x40] sm:$0xff]
    %v6244 = vld [vmem:[%s6234 + $0x48] sm:$0xff]
    %v6245 = vld [vmem:[%s6234 + $0x50] sm:$0xff]
    %v6246 = vld [vmem:[%s6234 + $0x58] sm:$0xff]
    %v6247 = vld [vmem:[%s6234 + $0x60] sm:$0xff]
    %v6248 = vld [vmem:[%s6234 + $0x68] sm:$0xff]
    %v6249 = vld [vmem:[%s6234 + $0x70] sm:$0xff]
    %v6250 = vld [vmem:[%s6234 + $0x78] sm:$0xff]
    %s6251 = scalar_lea.vmem %s15, 2
    %v6252 = vld [vmem:[%s6251] sm:$0x1]
    %v6254 = vlaneseq
    %v6255 = vshrl.u32 %v6254, 7
    %v6256 = vsub.s32 0, %v6255
    %v6257 = vrot.slane %v6252, %v6256
    %6259 = vmatprep.subr.mxu0 0.0
    %6260 = vmatpush1.msra.mxu0 %v6235
    %6261 = vmatprep.subr.mxu0 0.0
    %6262 = vmatpush1.msra.mxu0 %v6236
    %6263 = vmatprep.subr.mxu0 0.0
    %6264 = vmatpush1.msra.mxu0 %v6237
    %6265 = vmatprep.subr.mxu0 0.0
    %6266 = vmatpush1.msra.mxu0 %v6238
    %6267 = vmatprep.subr.mxu0 0.0
    %6268 = vmatpush1.msra.mxu0 %v6239
    %6269 = vmatprep.subr.mxu0 0.0
    %6270 = vmatpush1.msra.mxu0 %v6240
    %6271 = vmatprep.subr.mxu0 0.0
    %6272 = vmatpush1.msra.mxu0 %v6241
    %6273 = vmatprep.subr.mxu0 0.0
    %6274 = vmatpush1.msra.mxu0 %v6242
    %6275 = vmatprep.subr.mxu0 0.0
    %6276 = vmatpush1.msra.mxu0 %v6243
    %6277 = vmatprep.subr.mxu0 0.0
    %6278 = vmatpush1.msra.mxu0 %v6244
    %6279 = vmatprep.subr.mxu0 0.0
    %6280 = vmatpush1.msra.mxu0 %v6245
    %6281 = vmatprep.subr.mxu0 0.0
    %6282 = vmatpush1.msra.mxu0 %v6246
    %6283 = vmatprep.subr.mxu0 0.0
    %6284 = vmatpush1.msra.mxu0 %v6247
    %6285 = vmatprep.subr.mxu0 0.0
    %6286 = vmatpush1.msra.mxu0 %v6248
    %6287 = vmatprep.subr.mxu0 0.0
    %6288 = vmatpush1.msra.mxu0 %v6249
    %6289 = vmatprep.subr.mxu0 0.0
    %6290 = vmatpush1.msra.mxu0 %v6250
    %6291 = vmatprep.subr.mxu0 0.0
    %6292 = vmatpush1.msra.mxu0 0.0
    %6293 = vmatprep.subr.mxu0 0.0
    %6294 = vmatpush1.msra.mxu0 0.0
    %6295 = vmatprep.subr.mxu0 0.0
    %6296 = vmatpush1.msra.mxu0 0.0
    %6297 = vmatprep.subr.mxu0 0.0
    %6298 = vmatpush1.msra.mxu0 0.0
    %6299 = vmatprep.subr.mxu0 0.0
    %6300 = vmatpush1.msra.mxu0 0.0
    %6301 = vmatprep.subr.mxu0 0.0
    %6302 = vmatpush1.msra.mxu0 0.0
    %6303 = vmatprep.subr.mxu0 0.0
    %6304 = vmatpush1.msra.mxu0 0.0
    %6305 = vmatprep.subr.mxu0 0.0
    %6306 = vmatpush1.msra.mxu0 0.0
    %6307 = vmatprep.subr.mxu0 0.0
    %6308 = vmatpush1.msra.mxu0 0.0
    %6309 = vmatprep.subr.mxu0 0.0
    %6310 = vmatpush1.msra.mxu0 0.0
    %6311 = vmatprep.subr.mxu0 0.0
    %6312 = vmatpush1.msra.mxu0 0.0
    %6313 = vmatprep.subr.mxu0 0.0
    %6314 = vmatpush1.msra.mxu0 0.0
    %6315 = vmatprep.subr.mxu0 0.0
    %6316 = vmatpush1.msra.mxu0 0.0
    %6317 = vmatprep.subr.mxu0 0.0
    %6318 = vmatpush1.msra.mxu0 0.0
    %6319 = vmatprep.subr.mxu0 0.0
    %6320 = vmatpush1.msra.mxu0 0.0
    %6321 = vmatprep.subr.mxu0 0.0
    %6322 = vmatpush1.msra.mxu0 0.0
    %6323 = vmatprep.mubr.f32.mxu0 0.0
    %6324 = vmatmul.mubr.f32.gmra.mrb[0].mxu0 %v6232
    %v6325 = vpop.f32.mrb[0].mxu0
    %v6326 = vadd.f32 %v6257, %v6325
    %v6327 = vpop.f32.mrb[0].mxu0
    %6328 = vmatprep.mubr.f32.mxu0 0.0
    %6329 = vmatmul.mubr.f32.gmra.mrb[0].mxu0 %v6233
    %v6330 = vpop.f32.mrb[0].mxu0
    %v6331 = vadd.f32 %v6257, %v6330
    %v6332 = vpop.f32.mrb[0].mxu0
    %6333 = vdwg.mxu0
    %v6334 = vadd.f32 %v6326, %v6120
    %v6335 = vadd.f32 %v6331, %v6121
    %s6336 = scalar_lea.vmem %s16, 2
    %v6337 = vld [vmem:[%s6336] sm:$0x1]
    %s6338 = scalar_lea.vmem %s17, 2
    %v6339 = vld [vmem:[%s6338] sm:$0x1]
    %v6340 = vsel %vm114, %v6334, 0.0
    %6341 = vadd.xlane.f32.xlu0 %v6340
    %v6342 = vpop.xlane.xlu0 %6341
    %v6343 = vsel %vm114, %v6335, 0.0
    %6344 = vadd.xlane.f32.xlu0 %v6343
    %v6345 = vpop.xlane.xlu0 %6344
    %v6346 = vmul.f32 %v6342, %v121
    %v6347 = vmul.f32 %v6345, %v121
    %v6348 = vsub.f32 %v6334, %v6346
    %v6349 = vsub.f32 %v6335, %v6347
    %v6350 = vmul.f32 %v6348, %v6348
    %v6351 = vmul.f32 %v6349, %v6349
    %v6352 = vsel %vm114, %v6350, 0.0
    %6353 = vadd.xlane.f32.xlu0 %v6352
    %v6354 = vpop.xlane.xlu0 %6353
    %v6355 = vsel %vm114, %v6351, 0.0
    %6356 = vadd.xlane.f32.xlu0 %v6355
    %v6357 = vpop.xlane.xlu0 %6356
    %v6358 = vmul.f32 %v6354, %v121
    %v6359 = vmul.f32 %v6357, %v121
    %v6360 = vadd.f32 %v6358, 1e-12
    %v6361 = vadd.f32 %v6359, 1e-12
    %v6362 = vrsqrt.pop %v6360
    %v6363 = vrsqrt.pop %v6361
    %v6364 = vmul.f32 %v6348, %v6362
    %v6365 = vmul.f32 %v6349, %v6363
    %v6367 = vlaneseq
    %v6368 = vshrl.u32 %v6367, 7
    %v6369 = vsub.s32 0, %v6368
    %v6370 = vrot.slane %v6337, %v6369
    %v6372 = vmul.f32 %v6364, %v6370
    %v6373 = vmul.f32 %v6365, %v6370
    %v6375 = vlaneseq
    %v6376 = vshrl.u32 %v6375, 7
    %v6377 = vsub.s32 0, %v6376
    %v6378 = vrot.slane %v6339, %v6377
    %v6380 = vadd.f32 %v6372, %v6378
    %v6381 = vadd.f32 %v6373, %v6378
    %v6382 = vsel %vm114, %v6380, 0.0
    %v6383 = vrot.slane %v6382, 4
    %v6384 = vadd.f32 %v6382, %v6383
    %v6385 = vrot.slane %v6384, 2
    %v6386 = vadd.f32 %v6384, %v6385
    %v6387 = vrot.slane %v6386, 1
    %v6388 = vadd.f32 %v6386, %v6387
    %v6389 = vsel %vm114, %v6381, 0.0
    %v6390 = vrot.slane %v6389, 4
    %v6391 = vadd.f32 %v6389, %v6390
    %v6392 = vrot.slane %v6391, 2
    %v6393 = vadd.f32 %v6391, %v6392
    %v6394 = vrot.slane %v6393, 1
    %v6395 = vadd.f32 %v6393, %v6394
    %v6396 = vmul.f32 %v6388, %v2227
    %v6397 = vmul.f32 %v6395, %v2227
    %v6398 = vadd.f32 %v4314, %v6396
    %v6399 = vadd.f32 %v4315, %v6397
    %v6400 = vmul.f32 %v6398, 0.33333334
    %v6401 = vmul.f32 %v6399, 0.33333334
    %vm6404 = vcmask 1041409
    %v6405 = vsel %vm6404, %v6401, %v6400
    %vm6407 = vcmask 1041408
    %v6408 = vsel %vm6407, %v6405, 0.0
    %v6409 = vld [vmem:[%s18] sm:$0xff]
    %v6410 = vld [vmem:[%s18 + $0x8] sm:$0xff]
    %v6411 = vld [vmem:[%s18 + $0x10] sm:$0xff]
    %v6412 = vld [vmem:[%s18 + $0x18] sm:$0xff]
    %v6414 = vsel %vm114, %v6408, 0
    %6416 = vmatprep.subr.mxu0 0.0
    %6417 = vmatpush1.msra.mxu0 %v6409
    %6418 = vmatprep.subr.mxu0 0.0
    %6419 = vmatpush1.msra.mxu0 %v6410
    %6420 = vmatprep.subr.mxu0 0.0
    %6421 = vmatpush1.msra.mxu0 %v6411
    %6422 = vmatprep.subr.mxu0 0.0
    %6423 = vmatpush1.msra.mxu0 %v6412
    %6424 = vmatprep.subr.mxu0 0.0
    %6425 = vmatpush1.msra.mxu0 0.0
    %6426 = vmatprep.subr.mxu0 0.0
    %6427 = vmatpush1.msra.mxu0 0.0
    %6428 = vmatprep.subr.mxu0 0.0
    %6429 = vmatpush1.msra.mxu0 0.0
    %6430 = vmatprep.subr.mxu0 0.0
    %6431 = vmatpush1.msra.mxu0 0.0
    %6432 = vmatprep.subr.mxu0 0.0
    %6433 = vmatpush1.msra.mxu0 0.0
    %6434 = vmatprep.subr.mxu0 0.0
    %6435 = vmatpush1.msra.mxu0 0.0
    %6436 = vmatprep.subr.mxu0 0.0
    %6437 = vmatpush1.msra.mxu0 0.0
    %6438 = vmatprep.subr.mxu0 0.0
    %6439 = vmatpush1.msra.mxu0 0.0
    %6440 = vmatprep.subr.mxu0 0.0
    %6441 = vmatpush1.msra.mxu0 0.0
    %6442 = vmatprep.subr.mxu0 0.0
    %6443 = vmatpush1.msra.mxu0 0.0
    %6444 = vmatprep.subr.mxu0 0.0
    %6445 = vmatpush1.msra.mxu0 0.0
    %6446 = vmatprep.subr.mxu0 0.0
    %6447 = vmatpush1.msra.mxu0 0.0
    %6448 = vmatprep.subr.mxu0 0.0
    %6449 = vmatpush1.msra.mxu0 0.0
    %6450 = vmatprep.subr.mxu0 0.0
    %6451 = vmatpush1.msra.mxu0 0.0
    %6452 = vmatprep.subr.mxu0 0.0
    %6453 = vmatpush1.msra.mxu0 0.0
    %6454 = vmatprep.subr.mxu0 0.0
    %6455 = vmatpush1.msra.mxu0 0.0
    %6456 = vmatprep.subr.mxu0 0.0
    %6457 = vmatpush1.msra.mxu0 0.0
    %6458 = vmatprep.subr.mxu0 0.0
    %6459 = vmatpush1.msra.mxu0 0.0
    %6460 = vmatprep.subr.mxu0 0.0
    %6461 = vmatpush1.msra.mxu0 0.0
    %6462 = vmatprep.subr.mxu0 0.0
    %6463 = vmatpush1.msra.mxu0 0.0
    %6464 = vmatprep.subr.mxu0 0.0
    %6465 = vmatpush1.msra.mxu0 0.0
    %6466 = vmatprep.subr.mxu0 0.0
    %6467 = vmatpush1.msra.mxu0 0.0
    %6468 = vmatprep.subr.mxu0 0.0
    %6469 = vmatpush1.msra.mxu0 0.0
    %6470 = vmatprep.subr.mxu0 0.0
    %6471 = vmatpush1.msra.mxu0 0.0
    %6472 = vmatprep.subr.mxu0 0.0
    %6473 = vmatpush1.msra.mxu0 0.0
    %6474 = vmatprep.subr.mxu0 0.0
    %6475 = vmatpush1.msra.mxu0 0.0
    %6476 = vmatprep.subr.mxu0 0.0
    %6477 = vmatpush1.msra.mxu0 0.0
    %6478 = vmatprep.subr.mxu0 0.0
    %6479 = vmatpush1.msra.mxu0 0.0
    %6480 = vmatprep.mubr.f32.mxu0 0.0
    %6481 = vmatmul.mubr.f32.gmra.mrb[0].mxu0 %v6414
    %v6482 = vpop.f32.mrb[0].mxu0
    %v6483 = vadd.f32 0.0, %v6482
    %v6484 = vpop.f32.mrb[0].mxu0
    %6485 = vdwg.mxu0
    %6486 = vst [vmem:[#allocation2] sm:$0xff] %v6483
    // Predicated region
    $region78: #{tpu_custom_call.1} parent=1 // pred_check
      _
    $region79: #{tpu_custom_call.1} parent=1 // pred_check_branch
      %6488 = sbr.rel (0) target = $region81
    $region80: #{tpu_custom_call.1} parent=1 // pred_region
      %s6490 = ssub.s32 128, 128
      %6491 = vsyncadd [#allocation3], %s6490
      %s6493 = sshll.u32 [#allocation2], 4
      %s6494 = int_to_ptr.vmem [resolvable:$true] %s6493
      %6496 = dma.vmem_to_hbm [thread:$0]  %s6494, 128, %s19, [#allocation3]
    $region81: #{tpu_custom_call.1} parent=1 // pred_fallthru
      _
    // Predicated region
    $region82: #{tpu_custom_call.1} parent=1 // pred_check
      _
    $region83: #{tpu_custom_call.1} parent=1 // pred_check_branch
      %6498 = sbr.rel (0) target = $region85
    $region84: #{tpu_custom_call.1} parent=1 // pred_region
      %6499 = dma.done [#allocation3], 128
    $region85: #{tpu_custom_call.1} parent=1 // pred_fallthru
      _
    %6500 = vsyncpa [#allocation3], 1

</llo_original>
